<compile_context>
chip_gen: v6e
topology: v6e:2x2x1
jax: 0.10.0
libtpu: 0.0.40
codegen_flags: <defaults>
</compile_context>

<pallas_src>
import functools
import math

import jax
import jax.numpy as jnp
from jax.experimental import pallas as pl
from jax.experimental.pallas import tpu as pltpu


def _round_up(x, m):
    return (x + m - 1) // m * m


# ----------------------------------------------------------------------------
# Fused decoder-layer kernel (one grid step == one batch element)
# ----------------------------------------------------------------------------

def _decoder_layer_kernel(
    # per-batch tensors (batch dim squeezed away by BlockSpec)
    q_ref, kv_ref, bx_ref, by_ref,
    # per-(level, point) column metadata (shared)
    hcol_ref, wcol_ref, lsic_ref,
    # parameters
    in_w_ref, in_b_ref, outp_w_ref, outp_b_ref,
    n1g_ref, n1b_ref,
    val_w_ref, val_b_ref, off_w_ref, off_b_ref,
    aw_w_ref, aw_b_ref, dout_w_ref, dout_b_ref,
    n2g_ref, n2b_ref,
    l1_w_ref, l1_b_ref, l2_w_ref, l2_b_ref,
    n3g_ref, n3b_ref,
    # output
    o_ref,
    *, nhead, n_levels, n_points, eps=1e-5):
    f32 = jnp.float32
    bf16 = jnp.bfloat16
    Pq, C = q_ref.shape
    Dh = C // nhead
    LP = n_levels * n_points
    Pk = kv_ref.shape[0]                       # padded key length

    def layernorm(x, g_ref, b_ref):
        mean = jnp.mean(x, axis=-1, keepdims=True)
        xc = x - mean
        var = jnp.mean(xc * xc, axis=-1, keepdims=True)
        return xc * jax.lax.rsqrt(var + eps) * g_ref[...] + b_ref[...]

    def softmax_last(s):                       # exact denominator (f32)
        s = s - jnp.max(s, axis=-1, keepdims=True)
        e = jnp.exp(s)
        return e / jnp.sum(e, axis=-1, keepdims=True)

    x_in = q_ref[...].astype(f32)                                    # (Pq, C)

    # ---------------- self attention (nn.MultiheadAttention, eval) ----------
    # 1/sqrt(head_dim) already folded into the q columns of in_proj at init.
    qkv = jnp.dot(x_in.astype(bf16), in_w_ref[...],
                  preferred_element_type=f32) + in_b_ref[...]        # (Pq, 3C)
    q_h = jnp.stack([qkv[:, h * Dh:(h + 1) * Dh]
                     for h in range(nhead)], axis=0).astype(bf16)    # (H,Pq,Dh)
    k_h = jnp.stack([qkv[:, C + h * Dh:C + (h + 1) * Dh]
                     for h in range(nhead)], axis=0).astype(bf16)
    v_h = jnp.stack([qkv[:, 2 * C + h * Dh:2 * C + (h + 1) * Dh]
                     for h in range(nhead)], axis=0).astype(bf16)
    s = jnp.einsum('hqd,hkd->hqk', q_h, k_h,
                   preferred_element_type=f32)                       # (H,Pq,Pq)
    p_attn = softmax_last(s)
    o_h = jnp.einsum('hqk,hkd->hqd', p_attn.astype(bf16), v_h,
                     preferred_element_type=f32)                     # (H,Pq,Dh)
    sa_cat = jnp.concatenate([o_h[h] for h in range(nhead)], axis=-1)  # (Pq,C)
    sa = jnp.dot(sa_cat.astype(bf16), outp_w_ref[...],
                 preferred_element_type=f32) + outp_b_ref[...]
    x_sa = layernorm(x_in + sa, n1g_ref, n1b_ref)                    # (Pq, C)

    # ---------------- MS deformable cross attention --------------------------
    x_sa_bf = x_sa.astype(bf16)
    value = jnp.dot(kv_ref[...], val_w_ref[...],
                    preferred_element_type=f32) + val_b_ref[...]     # (Pk, C)
    samp = jnp.dot(x_sa_bf, off_w_ref[...],
                   preferred_element_type=f32) + off_b_ref[...]      # (Pq, 2*H*LP)
    aw_raw = jnp.dot(x_sa_bf, aw_w_ref[...],
                     preferred_element_type=f32) + aw_b_ref[...]     # (Pq, H*LP)

    # Softmax of the sampling attention weights: one pass over all heads.
    aw = softmax_last(jnp.stack([aw_raw[:, h * LP:(h + 1) * LP]
                                 for h in range(nhead)], axis=0))    # (H,Pq,LP)

    # Head-major sampling offsets (weight columns pre-permuted to
    # (head, xy, level, point) at init, so these are contiguous slices).
    off_x = jnp.stack([samp[:, (2 * h) * LP:(2 * h + 1) * LP]
                       for h in range(nhead)], axis=0)               # (H,Pq,LP)
    off_y = jnp.stack([samp[:, (2 * h + 1) * LP:(2 * h + 2) * LP]
                       for h in range(nhead)], axis=0)

    # grid_sample(align_corners=False) pixel coords:
    #   gx = ref_x*W - 0.5 + off_x  (base ref*size-0.5 precomputed in wrapper)
    gx = bx_ref[...][None, :, :] + off_x                             # (H,Pq,LP)
    gy = by_ref[...][None, :, :] + off_y

    w_i = wcol_ref[...]                         # (1, LP) int32 level width
    h_i = hcol_ref[...]                         # (1, LP) int32 level height
    lsi = lsic_ref[...]                         # (1, LP) int32 level start idx

    x0f = jnp.floor(gx)
    y0f = jnp.floor(gy)
    wx1 = gx - x0f
    wx0 = 1.0 - wx1
    wy1 = gy - y0f
    wy0 = 1.0 - wy1
    xi0 = x0f.astype(jnp.int32)
    yi0 = y0f.astype(jnp.int32)
    xi1 = xi0 + 1
    yi1 = yi0 + 1

    # Stack the 4 bilinear corners (for every head) into one flat-index /
    # weight pair -> a single where/sum pass builds (H, Pq, Pk).
    flats, wgts = [], []
    for (xc, yc, bw) in ((xi0, yi0, wx0 * wy0), (xi1, yi0, wx1 * wy0),
                         (xi0, yi1, wx0 * wy1), (xi1, yi1, wx1 * wy1)):
        valid = (xc >= 0) & (xc < w_i) & (yc >= 0) & (yc < h_i)
        xcc = jnp.clip(xc, 0, w_i - 1)
        ycc = jnp.clip(yc, 0, h_i - 1)
        flats.append(lsi + ycc * w_i + xcc)                          # (H,Pq,LP)
        wgts.append(jnp.where(valid, bw, 0.0) * aw)                  # (H,Pq,LP)
    flat_all = jnp.concatenate(flats, axis=-1)                       # (H,Pq,4LP)
    w_all = jnp.concatenate(wgts, axis=-1)                           # (H,Pq,4LP)

    pk_iota = jax.lax.broadcasted_iota(jnp.int32, flat_all.shape + (Pk,), 3)
    comb = jnp.sum(jnp.where(pk_iota == flat_all[..., None],
                             w_all[..., None], 0.0), axis=2)         # (H,Pq,Pk)

    vslab = jnp.stack([value[:, h * Dh:(h + 1) * Dh]
                       for h in range(nhead)], axis=0).astype(bf16)  # (H,Pk,Dh)
    d_h = jnp.einsum('hqk,hkd->hqd', comb.astype(bf16), vslab,
                     preferred_element_type=f32)                     # (H,Pq,Dh)
    d_cat = jnp.concatenate([d_h[h] for h in range(nhead)], axis=-1)  # (Pq,C)

    deform = jnp.dot(d_cat.astype(bf16), dout_w_ref[...],
                     preferred_element_type=f32) + dout_b_ref[...]
    x_ca = layernorm(x_sa + deform, n2g_ref, n2b_ref)

    # ---------------- feed-forward network -----------------------------------
    hdn = jnp.maximum(jnp.dot(x_ca.astype(bf16), l1_w_ref[...],
                              preferred_element_type=f32) + l1_b_ref[...], 0.0)
    ffn = jnp.dot(hdn.astype(bf16), l2_w_ref[...],
                  preferred_element_type=f32) + l2_b_ref[...]
    x_out = layernorm(x_ca + ffn, n3g_ref, n3b_ref)

    o_ref[...] = x_out.astype(o_ref.dtype)


# ----------------------------------------------------------------------------
# Parameters (deterministic synthetic init; weights pre-transposed + bf16)
# ----------------------------------------------------------------------------

def init_params(key, d_model, nhead, n_levels, n_points, dff):
    ks = jax.random.split(key, 12)
    f32 = jnp.float32
    bf16 = jnp.bfloat16

    def w(k, shape, scale=0.02):
        return (scale * jax.random.normal(k, shape)).astype(f32)

    head_dim = d_model // nhead
    scale = 1.0 / math.sqrt(head_dim)

    p = {}
    # nn.MultiheadAttention: generate in PyTorch (out, in) layout, store (in, out).
    in_w = w(ks[0], (3 * d_model, d_model)).T                        # (C, 3C)
    in_b = w(ks[1], (3 * d_model,), 0.01)
    # fold the 1/sqrt(head_dim) scaling into the q projection (weight AND bias)
    in_w = in_w.at[:, :d_model].multiply(scale)
    in_b = in_b.at[:d_model].multiply(scale)
    p["in_proj_w"] = in_w.astype(bf16)
    p["in_proj_b"] = in_b.reshape(1, -1)
    p["out_proj_w"] = w(ks[2], (d_model, d_model)).T.astype(bf16)
    p["out_proj_b"] = jnp.zeros((1, d_model), f32)

    # MSDeformAttn. sampling_offsets output columns re-ordered from
    # (head, level, point, xy) to (head, xy, level, point) so the kernel slices
    # contiguous per-head x / y blocks.
    so_w = w(ks[3], (nhead * n_levels * n_points * 2, d_model)).T    # (C, H*L*P*2)
    so_b = w(ks[4], (nhead * n_levels * n_points * 2,), 0.1)
    so_w = (so_w.reshape(d_model, nhead, n_levels, n_points, 2)
                .transpose(0, 1, 4, 2, 3)
                .reshape(d_model, nhead * 2 * n_levels * n_points))
    so_b = (so_b.reshape(nhead, n_levels, n_points, 2)
                .transpose(0, 3, 1, 2)
                .reshape(1, nhead * 2 * n_levels * n_points))
    p["samp_off_w"] = so_w.astype(bf16)
    p["samp_off_b"] = so_b
    p["attn_w_w"] = w(ks[5], (nhead * n_levels * n_points, d_model)).T.astype(bf16)
    p["attn_w_b"] = jnp.zeros((1, nhead * n_levels * n_points), f32)
    p["value_proj_w"] = w(ks[6], (d_model, d_model)).T.astype(bf16)
    p["value_proj_b"] = jnp.zeros((1, d_model), f32)
    p["output_proj_w"] = w(ks[7], (d_model, d_model)).T.astype(bf16)
    p["output_proj_b"] = jnp.zeros((1, d_model), f32)
    # FFN
    p["lin1_w"] = w(ks[8], (dff, d_model)).T.astype(bf16)
    p["lin1_b"] = w(ks[9], (dff,), 0.01).reshape(1, -1)
    p["lin2_w"] = w(ks[10], (d_model, dff)).T.astype(bf16)
    p["lin2_b"] = jnp.zeros((1, d_model), f32)
    # LayerNorms
    for i in (1, 2, 3):
        p[f"norm{i}_g"] = jnp.ones((1, d_model), f32)
        p[f"norm{i}_b"] = jnp.zeros((1, d_model), f32)
    return p


# ----------------------------------------------------------------------------
# Forward pass: one fused pallas_call (grid over batch)
# ----------------------------------------------------------------------------

def decoder_layer_forward(params, query, key, reference_points,
                          level_start_index, spatial_shapes, *, nhead):
    B, C, Pq = query.shape
    Pk = key.shape[2]
    Pk_pad = _round_up(Pk, 8)
    n_levels = spatial_shapes.shape[0]
    n_points = params["attn_w_w"].shape[1] // (nhead * n_levels)
    LP = n_levels * n_points
    dff = params["lin1_w"].shape[1]
    f32 = jnp.float32

    # (B, C, P) -> (B, P, C); key/value stream in bf16 (matmul operand only).
    # Padded key rows never contribute: gathered flat indices are always < Pk.
    q_bqc = jnp.transpose(query, (0, 2, 1)).astype(f32)
    k_bkc = jnp.transpose(key, (0, 2, 1)).astype(jnp.bfloat16)
    if Pk_pad != Pk:
        k_bkc = jnp.pad(k_bkc, ((0, 0), (0, Pk_pad - Pk), (0, 0)))

    ss = spatial_shapes.astype(jnp.int32)                 # (L, 2) as (H, W)
    lsi = level_start_index.astype(jnp.int32)             # (L,)

    # Per-(level, point) column metadata, computed once in XLA (head-invariant).
    hcol = jnp.repeat(ss[:, 0], n_points).reshape(1, LP)            # heights
    wcol = jnp.repeat(ss[:, 1], n_points).reshape(1, LP)            # widths
    lsicol = jnp.repeat(lsi, n_points).reshape(1, LP)               # level starts

    # Base pixel coordinates (align_corners=False): ref*size - 0.5, per column.
    ref_x = reference_points[..., 0].astype(f32)                    # (B, Pq, L)
    ref_y = reference_points[..., 1].astype(f32)
    base_x = jnp.repeat(ref_x, n_points, axis=-1) * wcol.astype(f32) - 0.5
    base_y = jnp.repeat(ref_y, n_points, axis=-1) * hcol.astype(f32) - 0.5

    def bspec(shape):
        n = len(shape)
        return pl.BlockSpec((None,) + shape, lambda b, _n=n: (b,) + (0,) * _n)

    def fspec(shape):
        n = len(shape)
        return pl.BlockSpec(shape, lambda b, _n=n: (0,) * _n)

    in_specs = [
        bspec((Pq, C)),                          # query
        bspec((Pk_pad, C)),                      # key / input_flatten (bf16)
        bspec((Pq, LP)),                         # base_x
        bspec((Pq, LP)),                         # base_y
        fspec((1, LP)), fspec((1, LP)), fspec((1, LP)),              # H, W, lsi
        fspec((C, 3 * C)), fspec((1, 3 * C)),                        # in_proj
        fspec((C, C)), fspec((1, C)),                                # out_proj
        fspec((1, C)), fspec((1, C)),                                # norm1
        fspec((C, C)), fspec((1, C)),                                # value_proj
        fspec((C, 2 * nhead * LP)), fspec((1, 2 * nhead * LP)),      # samp_off
        fspec((C, nhead * LP)), fspec((1, nhead * LP)),              # attn_w
        fspec((C, C)), fspec((1, C)),                                # output_proj
        fspec((1, C)), fspec((1, C)),                                # norm2
        fspec((C, dff)), fspec((1, dff)),                            # lin1
        fspec((dff, C)), fspec((1, C)),                              # lin2
        fspec((1, C)), fspec((1, C)),                                # norm3
    ]

    grid_spec = pltpu.PrefetchScalarGridSpec(
        num_scalar_prefetch=0,
        grid=(B,),
        in_specs=in_specs,
        out_specs=pl.BlockSpec((None, Pq, C), lambda b: (b, 0, 0)),
        scratch_shapes=[],
    )

    kernel = functools.partial(_decoder_layer_kernel, nhead=nhead,
                               n_levels=n_levels, n_points=n_points)

    out = pl.pallas_call(
        kernel,
        out_shape=jax.ShapeDtypeStruct((B, Pq, C), f32),
        grid_spec=grid_spec,
        compiler_params=pltpu.CompilerParams(
            dimension_semantics=("parallel",),
            vmem_limit_bytes=32 * 1024 * 1024,
        ),
    )(q_bqc, k_bkc, base_x, base_y,
      hcol, wcol, lsicol,
      params["in_proj_w"], params["in_proj_b"],
      params["out_proj_w"], params["out_proj_b"],
      params["norm1_g"], params["norm1_b"],
      params["value_proj_w"], params["value_proj_b"],
      params["samp_off_w"], params["samp_off_b"],
      params["attn_w_w"], params["attn_w_b"],
      params["output_proj_w"], params["output_proj_b"],
      params["norm2_g"], params["norm2_b"],
      params["lin1_w"], params["lin1_b"],
      params["lin2_w"], params["lin2_b"],
      params["norm3_g"], params["norm3_b"])

    return jnp.transpose(out, (0, 2, 1))                             # (B, C, Pq)


# ----------------------------------------------------------------------------
# Main
# ----------------------------------------------------------------------------

if __name__ == "__main__":
    d_model, nhead, n_levels, n_points, dff = 32, 4, 4, 4, 64
    B, Pq = 2, 8

    spatial_shapes = jnp.array([[8, 8], [4, 4], [2, 2], [1, 1]], dtype=jnp.int32)
    areas = spatial_shapes[:, 0] * spatial_shapes[:, 1]
    level_start_index = jnp.concatenate(
        [jnp.zeros((1,), jnp.int32), jnp.cumsum(areas)[:-1].astype(jnp.int32)])
    Pk = int(jnp.sum(areas))                                         # 85

    root = jax.random.PRNGKey(0)
    k1, k2, k3, kp = jax.random.split(root, 4)
    query = jax.random.normal(k1, (B, d_model, Pq), jnp.float32)
    key_feat = jax.random.normal(k2, (B, d_model, Pk), jnp.float32)
    reference_points = jax.random.uniform(k3, (B, Pq, n_levels, 2), jnp.float32)

    params = init_params(kp, d_model, nhead, n_levels, n_points, dff)

    fwd = jax.jit(functools.partial(decoder_layer_forward, nhead=nhead))
    out = fwd(params, query, key_feat, reference_points,
              level_start_index, spatial_shapes)
    jax.block_until_ready(out)
    assert out.shape == (B, d_model, Pq) and out.dtype == jnp.float32
    assert bool(jnp.all(jnp.isfinite(out)))
    print("KERNEL_OK")
</pallas_src>

<mosaic_0001>
module attributes {stable_mosaic.version = 11 : i64} {
  func.func @_decoder_layer_kernel(%arg0: i32, %arg1: memref<1x8x32xf32, #tpu.memory_space<vmem>>, %arg2: memref<1x88x32xbf16, #tpu.memory_space<vmem>>, %arg3: memref<1x8x16xf32, #tpu.memory_space<vmem>>, %arg4: memref<1x8x16xf32, #tpu.memory_space<vmem>>, %arg5: memref<1x16xi32, #tpu.memory_space<vmem>>, %arg6: memref<1x16xi32, #tpu.memory_space<vmem>>, %arg7: memref<1x16xi32, #tpu.memory_space<vmem>>, %arg8: memref<32x96xbf16, #tpu.memory_space<vmem>>, %arg9: memref<1x96xf32, #tpu.memory_space<vmem>>, %arg10: memref<32x32xbf16, #tpu.memory_space<vmem>>, %arg11: memref<1x32xf32, #tpu.memory_space<vmem>>, %arg12: memref<1x32xf32, #tpu.memory_space<vmem>>, %arg13: memref<1x32xf32, #tpu.memory_space<vmem>>, %arg14: memref<32x32xbf16, #tpu.memory_space<vmem>>, %arg15: memref<1x32xf32, #tpu.memory_space<vmem>>, %arg16: memref<32x128xbf16, #tpu.memory_space<vmem>>, %arg17: memref<1x128xf32, #tpu.memory_space<vmem>>, %arg18: memref<32x64xbf16, #tpu.memory_space<vmem>>, %arg19: memref<1x64xf32, #tpu.memory_space<vmem>>, %arg20: memref<32x32xbf16, #tpu.memory_space<vmem>>, %arg21: memref<1x32xf32, #tpu.memory_space<vmem>>, %arg22: memref<1x32xf32, #tpu.memory_space<vmem>>, %arg23: memref<1x32xf32, #tpu.memory_space<vmem>>, %arg24: memref<32x64xbf16, #tpu.memory_space<vmem>>, %arg25: memref<1x64xf32, #tpu.memory_space<vmem>>, %arg26: memref<64x32xbf16, #tpu.memory_space<vmem>>, %arg27: memref<1x32xf32, #tpu.memory_space<vmem>>, %arg28: memref<1x32xf32, #tpu.memory_space<vmem>>, %arg29: memref<1x32xf32, #tpu.memory_space<vmem>>, %arg30: memref<1x8x32xf32, #tpu.memory_space<vmem>>) attributes {dimension_semantics = [#tpu.dimension_semantics<parallel>], iteration_bounds = array<i64: 2>, scalar_prefetch = 0 : i64, scratch_operands = 0 : i64, tpu.core_type = #tpu.core_type<tc>, window_params = [{transform_indices = @transform_0, window_bounds = array<i64: 1, 8, 32>}, {transform_indices = @transform_1, window_bounds = array<i64: 1, 88, 32>}, {transform_indices = @transform_2, window_bounds = array<i64: 1, 8, 16>}, {transform_indices = @transform_3, window_bounds = array<i64: 1, 8, 16>}, {pipeline_mode = #tpu.pipeline_mode<synchronous>, transform_indices = @transform_4, window_bounds = array<i64: 1, 16>}, {pipeline_mode = #tpu.pipeline_mode<synchronous>, transform_indices = @transform_5, window_bounds = array<i64: 1, 16>}, {pipeline_mode = #tpu.pipeline_mode<synchronous>, transform_indices = @transform_6, window_bounds = array<i64: 1, 16>}, {pipeline_mode = #tpu.pipeline_mode<synchronous>, transform_indices = @transform_7, window_bounds = array<i64: 32, 96>}, {pipeline_mode = #tpu.pipeline_mode<synchronous>, transform_indices = @transform_8, window_bounds = array<i64: 1, 96>}, {pipeline_mode = #tpu.pipeline_mode<synchronous>, transform_indices = @transform_9, window_bounds = array<i64: 32, 32>}, {pipeline_mode = #tpu.pipeline_mode<synchronous>, transform_indices = @transform_10, window_bounds = array<i64: 1, 32>}, {pipeline_mode = #tpu.pipeline_mode<synchronous>, transform_indices = @transform_11, window_bounds = array<i64: 1, 32>}, {pipeline_mode = #tpu.pipeline_mode<synchronous>, transform_indices = @transform_12, window_bounds = array<i64: 1, 32>}, {pipeline_mode = #tpu.pipeline_mode<synchronous>, transform_indices = @transform_13, window_bounds = array<i64: 32, 32>}, {pipeline_mode = #tpu.pipeline_mode<synchronous>, transform_indices = @transform_14, window_bounds = array<i64: 1, 32>}, {pipeline_mode = #tpu.pipeline_mode<synchronous>, transform_indices = @transform_15, window_bounds = array<i64: 32, 128>}, {pipeline_mode = #tpu.pipeline_mode<synchronous>, transform_indices = @transform_16, window_bounds = array<i64: 1, 128>}, {pipeline_mode = #tpu.pipeline_mode<synchronous>, transform_indices = @transform_17, window_bounds = array<i64: 32, 64>}, {pipeline_mode = #tpu.pipeline_mode<synchronous>, transform_indices = @transform_18, window_bounds = array<i64: 1, 64>}, {pipeline_mode = #tpu.pipeline_mode<synchronous>, transform_indices = @transform_19, window_bounds = array<i64: 32, 32>}, {pipeline_mode = #tpu.pipeline_mode<synchronous>, transform_indices = @transform_20, window_bounds = array<i64: 1, 32>}, {pipeline_mode = #tpu.pipeline_mode<synchronous>, transform_indices = @transform_21, window_bounds = array<i64: 1, 32>}, {pipeline_mode = #tpu.pipeline_mode<synchronous>, transform_indices = @transform_22, window_bounds = array<i64: 1, 32>}, {pipeline_mode = #tpu.pipeline_mode<synchronous>, transform_indices = @transform_23, window_bounds = array<i64: 32, 64>}, {pipeline_mode = #tpu.pipeline_mode<synchronous>, transform_indices = @transform_24, window_bounds = array<i64: 1, 64>}, {pipeline_mode = #tpu.pipeline_mode<synchronous>, transform_indices = @transform_25, window_bounds = array<i64: 64, 32>}, {pipeline_mode = #tpu.pipeline_mode<synchronous>, transform_indices = @transform_26, window_bounds = array<i64: 1, 32>}, {pipeline_mode = #tpu.pipeline_mode<synchronous>, transform_indices = @transform_27, window_bounds = array<i64: 1, 32>}, {pipeline_mode = #tpu.pipeline_mode<synchronous>, transform_indices = @transform_28, window_bounds = array<i64: 1, 32>}, {transform_indices = @transform_29, window_bounds = array<i64: 1, 8, 32>}]} {
    %c0 = arith.constant 0 : index
    %c0_0 = arith.constant 0 : index
    %c0_1 = arith.constant 0 : index
    %0 = vector.load %arg1[%c0, %c0_0, %c0_1] : memref<1x8x32xf32, #tpu.memory_space<vmem>>, vector<1x8x32xf32>
    %1 = vector.shape_cast %0 : vector<1x8x32xf32> to vector<8x32xf32>
    %2 = arith.truncf %1 : vector<8x32xf32> to vector<8x32xbf16>
    %c0_2 = arith.constant 0 : index
    %c0_3 = arith.constant 0 : index
    %3 = vector.load %arg8[%c0_2, %c0_3] : memref<32x96xbf16, #tpu.memory_space<vmem>>, vector<32x96xbf16>
    %cst = arith.constant dense<0.000000e+00> : vector<8x96xf32>
    %4 = tpu.matmul %2, %3, %cst {dimension_numbers = #tpu.dot_dimension_numbers<[1], [0], [0], [1], [0, 0, 1, 1], [], []>} : vector<8x32xbf16>, vector<32x96xbf16>, vector<8x96xf32> -> vector<8x96xf32>
    %c0_4 = arith.constant 0 : index
    %c0_5 = arith.constant 0 : index
    %5 = vector.load %arg9[%c0_4, %c0_5] : memref<1x96xf32, #tpu.memory_space<vmem>>, vector<1x96xf32>
    %6 = vector.broadcast %5 : vector<1x96xf32> to vector<8x96xf32>
    %7 = arith.addf %4, %6 : vector<8x96xf32>
    %8 = vector.extract_strided_slice %7 {offsets = [0, 0], sizes = [8, 8], strides = [1, 1]} : vector<8x96xf32> to vector<8x8xf32>
    %9 = vector.extract_strided_slice %7 {offsets = [0, 8], sizes = [8, 8], strides = [1, 1]} : vector<8x96xf32> to vector<8x8xf32>
    %10 = vector.extract_strided_slice %7 {offsets = [0, 16], sizes = [8, 8], strides = [1, 1]} : vector<8x96xf32> to vector<8x8xf32>
    %11 = vector.extract_strided_slice %7 {offsets = [0, 24], sizes = [8, 8], strides = [1, 1]} : vector<8x96xf32> to vector<8x8xf32>
    %12 = vector.shape_cast %8 : vector<8x8xf32> to vector<1x8x8xf32>
    %13 = vector.shape_cast %9 : vector<8x8xf32> to vector<1x8x8xf32>
    %14 = vector.shape_cast %10 : vector<8x8xf32> to vector<1x8x8xf32>
    %15 = vector.shape_cast %11 : vector<8x8xf32> to vector<1x8x8xf32>
    %16 = tpu.concatenate %12, %13, %14, %15 in 0 : vector<1x8x8xf32>, vector<1x8x8xf32>, vector<1x8x8xf32>, vector<1x8x8xf32> -> vector<4x8x8xf32>
    %17 = arith.truncf %16 : vector<4x8x8xf32> to vector<4x8x8xbf16>
    %18 = vector.extract_strided_slice %7 {offsets = [0, 32], sizes = [8, 8], strides = [1, 1]} : vector<8x96xf32> to vector<8x8xf32>
    %19 = vector.extract_strided_slice %7 {offsets = [0, 40], sizes = [8, 8], strides = [1, 1]} : vector<8x96xf32> to vector<8x8xf32>
    %20 = vector.extract_strided_slice %7 {offsets = [0, 48], sizes = [8, 8], strides = [1, 1]} : vector<8x96xf32> to vector<8x8xf32>
    %21 = vector.extract_strided_slice %7 {offsets = [0, 56], sizes = [8, 8], strides = [1, 1]} : vector<8x96xf32> to vector<8x8xf32>
    %22 = vector.shape_cast %18 : vector<8x8xf32> to vector<1x8x8xf32>
    %23 = vector.shape_cast %19 : vector<8x8xf32> to vector<1x8x8xf32>
    %24 = vector.shape_cast %20 : vector<8x8xf32> to vector<1x8x8xf32>
    %25 = vector.shape_cast %21 : vector<8x8xf32> to vector<1x8x8xf32>
    %26 = tpu.concatenate %22, %23, %24, %25 in 0 : vector<1x8x8xf32>, vector<1x8x8xf32>, vector<1x8x8xf32>, vector<1x8x8xf32> -> vector<4x8x8xf32>
    %27 = arith.truncf %26 : vector<4x8x8xf32> to vector<4x8x8xbf16>
    %28 = vector.extract_strided_slice %7 {offsets = [0, 64], sizes = [8, 8], strides = [1, 1]} : vector<8x96xf32> to vector<8x8xf32>
    %29 = vector.extract_strided_slice %7 {offsets = [0, 72], sizes = [8, 8], strides = [1, 1]} : vector<8x96xf32> to vector<8x8xf32>
    %30 = vector.extract_strided_slice %7 {offsets = [0, 80], sizes = [8, 8], strides = [1, 1]} : vector<8x96xf32> to vector<8x8xf32>
    %31 = vector.extract_strided_slice %7 {offsets = [0, 88], sizes = [8, 8], strides = [1, 1]} : vector<8x96xf32> to vector<8x8xf32>
    %32 = vector.shape_cast %28 : vector<8x8xf32> to vector<1x8x8xf32>
    %33 = vector.shape_cast %29 : vector<8x8xf32> to vector<1x8x8xf32>
    %34 = vector.shape_cast %30 : vector<8x8xf32> to vector<1x8x8xf32>
    %35 = vector.shape_cast %31 : vector<8x8xf32> to vector<1x8x8xf32>
    %36 = tpu.concatenate %32, %33, %34, %35 in 0 : vector<1x8x8xf32>, vector<1x8x8xf32>, vector<1x8x8xf32>, vector<1x8x8xf32> -> vector<4x8x8xf32>
    %37 = arith.truncf %36 : vector<4x8x8xf32> to vector<4x8x8xbf16>
    "tpu.trace_start"() <{level = 10 : i32, message = "hqd,hkd->hqk"}> : () -> ()
    %cst_6 = arith.constant dense<0.000000e+00> : vector<4x8x8xf32>
    %38 = tpu.matmul %17, %27, %cst_6 {dimension_numbers = #tpu.dot_dimension_numbers<[2], [2], [1], [1], [0, 0, 0, 1, 1, 1], [0], [0]>} : vector<4x8x8xbf16>, vector<4x8x8xbf16>, vector<4x8x8xf32> -> vector<4x8x8xf32>
    "tpu.trace_stop"() : () -> ()
    %cst_7 = arith.constant dense<0xFF800000> : vector<4x8xf32>
    %39 = vector.multi_reduction <maximumf>, %38, %cst_7 [2] : vector<4x8x8xf32> to vector<4x8xf32>
    %40 = vector.shape_cast %39 : vector<4x8xf32> to vector<4x8x1xf32>
    %41 = vector.broadcast %40 : vector<4x8x1xf32> to vector<4x8x8xf32>
    %42 = arith.subf %38, %41 : vector<4x8x8xf32>
    %43 = math.exp %42 : vector<4x8x8xf32>
    %cst_8 = arith.constant dense<0.000000e+00> : vector<4x8xf32>
    %44 = vector.multi_reduction <add>, %43, %cst_8 [2] : vector<4x8x8xf32> to vector<4x8xf32>
    %45 = vector.shape_cast %44 : vector<4x8xf32> to vector<4x8x1xf32>
    %46 = vector.broadcast %45 : vector<4x8x1xf32> to vector<4x8x8xf32>
    %47 = arith.divf %43, %46 : vector<4x8x8xf32>
    %48 = arith.truncf %47 : vector<4x8x8xf32> to vector<4x8x8xbf16>
    "tpu.trace_start"() <{level = 10 : i32, message = "hqk,hkd->hqd"}> : () -> ()
    %cst_9 = arith.constant dense<0.000000e+00> : vector<4x8x8xf32>
    %49 = tpu.matmul %48, %37, %cst_9 {dimension_numbers = #tpu.dot_dimension_numbers<[2], [1], [1], [2], [0, 0, 0, 1, 1, 2], [0], [0]>} : vector<4x8x8xbf16>, vector<4x8x8xbf16>, vector<4x8x8xf32> -> vector<4x8x8xf32>
    "tpu.trace_stop"() : () -> ()
    %50 = vector.extract_strided_slice %49 {offsets = [0, 0, 0], sizes = [1, 8, 8], strides = [1, 1, 1]} : vector<4x8x8xf32> to vector<1x8x8xf32>
    %51 = vector.shape_cast %50 : vector<1x8x8xf32> to vector<8x8xf32>
    %52 = vector.extract_strided_slice %49 {offsets = [1, 0, 0], sizes = [1, 8, 8], strides = [1, 1, 1]} : vector<4x8x8xf32> to vector<1x8x8xf32>
    %53 = vector.shape_cast %52 : vector<1x8x8xf32> to vector<8x8xf32>
    %54 = vector.extract_strided_slice %49 {offsets = [2, 0, 0], sizes = [1, 8, 8], strides = [1, 1, 1]} : vector<4x8x8xf32> to vector<1x8x8xf32>
    %55 = vector.shape_cast %54 : vector<1x8x8xf32> to vector<8x8xf32>
    %56 = vector.extract_strided_slice %49 {offsets = [3, 0, 0], sizes = [1, 8, 8], strides = [1, 1, 1]} : vector<4x8x8xf32> to vector<1x8x8xf32>
    %57 = vector.shape_cast %56 : vector<1x8x8xf32> to vector<8x8xf32>
    %58 = tpu.concatenate %51, %53, %55, %57 in 1 : vector<8x8xf32>, vector<8x8xf32>, vector<8x8xf32>, vector<8x8xf32> -> vector<8x32xf32>
    %59 = arith.truncf %58 : vector<8x32xf32> to vector<8x32xbf16>
    %c0_10 = arith.constant 0 : index
    %c0_11 = arith.constant 0 : index
    %60 = vector.load %arg10[%c0_10, %c0_11] : memref<32x32xbf16, #tpu.memory_space<vmem>>, vector<32x32xbf16>
    %cst_12 = arith.constant dense<0.000000e+00> : vector<8x32xf32>
    %61 = tpu.matmul %59, %60, %cst_12 {dimension_numbers = #tpu.dot_dimension_numbers<[1], [0], [0], [1], [0, 0, 1, 1], [], []>} : vector<8x32xbf16>, vector<32x32xbf16>, vector<8x32xf32> -> vector<8x32xf32>
    %c0_13 = arith.constant 0 : index
    %c0_14 = arith.constant 0 : index
    %62 = vector.load %arg11[%c0_13, %c0_14] : memref<1x32xf32, #tpu.memory_space<vmem>>, vector<1x32xf32>
    %63 = vector.broadcast %62 : vector<1x32xf32> to vector<8x32xf32>
    %64 = arith.addf %61, %63 : vector<8x32xf32>
    %65 = arith.addf %1, %64 : vector<8x32xf32>
    %cst_15 = arith.constant dense<0.000000e+00> : vector<8xf32>
    %66 = vector.multi_reduction <add>, %65, %cst_15 [1] : vector<8x32xf32> to vector<8xf32>
    %67 = vector.shape_cast %66 : vector<8xf32> to vector<8x1xf32>
    %cst_16 = arith.constant 3.200000e+01 : f32
    %68 = vector.broadcast %cst_16 : f32 to vector<8x1xf32>
    %69 = arith.divf %67, %68 : vector<8x1xf32>
    %70 = vector.broadcast %69 : vector<8x1xf32> to vector<8x32xf32>
    %71 = arith.subf %65, %70 : vector<8x32xf32>
    %72 = arith.mulf %71, %71 : vector<8x32xf32>
    %cst_17 = arith.constant dense<0.000000e+00> : vector<8xf32>
    %73 = vector.multi_reduction <add>, %72, %cst_17 [1] : vector<8x32xf32> to vector<8xf32>
    %74 = vector.shape_cast %73 : vector<8xf32> to vector<8x1xf32>
    %cst_18 = arith.constant 3.200000e+01 : f32
    %75 = vector.broadcast %cst_18 : f32 to vector<8x1xf32>
    %76 = arith.divf %74, %75 : vector<8x1xf32>
    %cst_19 = arith.constant 9.99999974E-6 : f32
    %77 = vector.broadcast %cst_19 : f32 to vector<8x1xf32>
    %78 = arith.addf %76, %77 : vector<8x1xf32>
    %79 = math.rsqrt %78 : vector<8x1xf32>
    %80 = vector.broadcast %79 : vector<8x1xf32> to vector<8x32xf32>
    %81 = arith.mulf %71, %80 : vector<8x32xf32>
    %c0_20 = arith.constant 0 : index
    %c0_21 = arith.constant 0 : index
    %82 = vector.load %arg12[%c0_20, %c0_21] : memref<1x32xf32, #tpu.memory_space<vmem>>, vector<1x32xf32>
    %83 = vector.broadcast %82 : vector<1x32xf32> to vector<8x32xf32>
    %84 = arith.mulf %81, %83 : vector<8x32xf32>
    %c0_22 = arith.constant 0 : index
    %c0_23 = arith.constant 0 : index
    %85 = vector.load %arg13[%c0_22, %c0_23] : memref<1x32xf32, #tpu.memory_space<vmem>>, vector<1x32xf32>
    %86 = vector.broadcast %85 : vector<1x32xf32> to vector<8x32xf32>
    %87 = arith.addf %84, %86 : vector<8x32xf32>
    %88 = arith.truncf %87 : vector<8x32xf32> to vector<8x32xbf16>
    %c0_24 = arith.constant 0 : index
    %c0_25 = arith.constant 0 : index
    %c0_26 = arith.constant 0 : index
    %89 = vector.load %arg2[%c0_24, %c0_25, %c0_26] : memref<1x88x32xbf16, #tpu.memory_space<vmem>>, vector<1x88x32xbf16>
    %90 = vector.shape_cast %89 : vector<1x88x32xbf16> to vector<88x32xbf16>
    %c0_27 = arith.constant 0 : index
    %c0_28 = arith.constant 0 : index
    %91 = vector.load %arg14[%c0_27, %c0_28] : memref<32x32xbf16, #tpu.memory_space<vmem>>, vector<32x32xbf16>
    %cst_29 = arith.constant dense<0.000000e+00> : vector<88x32xf32>
    %92 = tpu.matmul %90, %91, %cst_29 {dimension_numbers = #tpu.dot_dimension_numbers<[1], [0], [0], [1], [0, 0, 1, 1], [], []>} : vector<88x32xbf16>, vector<32x32xbf16>, vector<88x32xf32> -> vector<88x32xf32>
    %c0_30 = arith.constant 0 : index
    %c0_31 = arith.constant 0 : index
    %93 = vector.load %arg15[%c0_30, %c0_31] : memref<1x32xf32, #tpu.memory_space<vmem>>, vector<1x32xf32>
    %94 = vector.broadcast %93 : vector<1x32xf32> to vector<88x32xf32>
    %95 = arith.addf %92, %94 : vector<88x32xf32>
    %c0_32 = arith.constant 0 : index
    %c0_33 = arith.constant 0 : index
    %96 = vector.load %arg16[%c0_32, %c0_33] : memref<32x128xbf16, #tpu.memory_space<vmem>>, vector<32x128xbf16>
    %cst_34 = arith.constant dense<0.000000e+00> : vector<8x128xf32>
    %97 = tpu.matmul %88, %96, %cst_34 {dimension_numbers = #tpu.dot_dimension_numbers<[1], [0], [0], [1], [0, 0, 1, 1], [], []>} : vector<8x32xbf16>, vector<32x128xbf16>, vector<8x128xf32> -> vector<8x128xf32>
    %c0_35 = arith.constant 0 : index
    %c0_36 = arith.constant 0 : index
    %98 = vector.load %arg17[%c0_35, %c0_36] : memref<1x128xf32, #tpu.memory_space<vmem>>, vector<1x128xf32>
    %99 = vector.broadcast %98 : vector<1x128xf32> to vector<8x128xf32>
    %100 = arith.addf %97, %99 : vector<8x128xf32>
    %c0_37 = arith.constant 0 : index
    %c0_38 = arith.constant 0 : index
    %101 = vector.load %arg18[%c0_37, %c0_38] : memref<32x64xbf16, #tpu.memory_space<vmem>>, vector<32x64xbf16>
    %cst_39 = arith.constant dense<0.000000e+00> : vector<8x64xf32>
    %102 = tpu.matmul %88, %101, %cst_39 {dimension_numbers = #tpu.dot_dimension_numbers<[1], [0], [0], [1], [0, 0, 1, 1], [], []>} : vector<8x32xbf16>, vector<32x64xbf16>, vector<8x64xf32> -> vector<8x64xf32>
    %c0_40 = arith.constant 0 : index
    %c0_41 = arith.constant 0 : index
    %103 = vector.load %arg19[%c0_40, %c0_41] : memref<1x64xf32, #tpu.memory_space<vmem>>, vector<1x64xf32>
    %104 = vector.broadcast %103 : vector<1x64xf32> to vector<8x64xf32>
    %105 = arith.addf %102, %104 : vector<8x64xf32>
    %106 = vector.extract_strided_slice %105 {offsets = [0, 0], sizes = [8, 16], strides = [1, 1]} : vector<8x64xf32> to vector<8x16xf32>
    %107 = vector.extract_strided_slice %105 {offsets = [0, 16], sizes = [8, 16], strides = [1, 1]} : vector<8x64xf32> to vector<8x16xf32>
    %108 = vector.extract_strided_slice %105 {offsets = [0, 32], sizes = [8, 16], strides = [1, 1]} : vector<8x64xf32> to vector<8x16xf32>
    %109 = vector.extract_strided_slice %105 {offsets = [0, 48], sizes = [8, 16], strides = [1, 1]} : vector<8x64xf32> to vector<8x16xf32>
    %110 = vector.shape_cast %106 : vector<8x16xf32> to vector<1x8x16xf32>
    %111 = vector.shape_cast %107 : vector<8x16xf32> to vector<1x8x16xf32>
    %112 = vector.shape_cast %108 : vector<8x16xf32> to vector<1x8x16xf32>
    %113 = vector.shape_cast %109 : vector<8x16xf32> to vector<1x8x16xf32>
    %114 = tpu.concatenate %110, %111, %112, %113 in 0 : vector<1x8x16xf32>, vector<1x8x16xf32>, vector<1x8x16xf32>, vector<1x8x16xf32> -> vector<4x8x16xf32>
    %cst_42 = arith.constant dense<0xFF800000> : vector<4x8xf32>
    %115 = vector.multi_reduction <maximumf>, %114, %cst_42 [2] : vector<4x8x16xf32> to vector<4x8xf32>
    %116 = vector.shape_cast %115 : vector<4x8xf32> to vector<4x8x1xf32>
    %117 = vector.broadcast %116 : vector<4x8x1xf32> to vector<4x8x16xf32>
    %118 = arith.subf %114, %117 : vector<4x8x16xf32>
    %119 = math.exp %118 : vector<4x8x16xf32>
    %cst_43 = arith.constant dense<0.000000e+00> : vector<4x8xf32>
    %120 = vector.multi_reduction <add>, %119, %cst_43 [2] : vector<4x8x16xf32> to vector<4x8xf32>
    %121 = vector.shape_cast %120 : vector<4x8xf32> to vector<4x8x1xf32>
    %122 = vector.broadcast %121 : vector<4x8x1xf32> to vector<4x8x16xf32>
    %123 = arith.divf %119, %122 : vector<4x8x16xf32>
    %124 = vector.extract_strided_slice %100 {offsets = [0, 0], sizes = [8, 16], strides = [1, 1]} : vector<8x128xf32> to vector<8x16xf32>
    %125 = vector.extract_strided_slice %100 {offsets = [0, 32], sizes = [8, 16], strides = [1, 1]} : vector<8x128xf32> to vector<8x16xf32>
    %126 = vector.extract_strided_slice %100 {offsets = [0, 64], sizes = [8, 16], strides = [1, 1]} : vector<8x128xf32> to vector<8x16xf32>
    %127 = vector.extract_strided_slice %100 {offsets = [0, 96], sizes = [8, 16], strides = [1, 1]} : vector<8x128xf32> to vector<8x16xf32>
    %128 = vector.shape_cast %124 : vector<8x16xf32> to vector<1x8x16xf32>
    %129 = vector.shape_cast %125 : vector<8x16xf32> to vector<1x8x16xf32>
    %130 = vector.shape_cast %126 : vector<8x16xf32> to vector<1x8x16xf32>
    %131 = vector.shape_cast %127 : vector<8x16xf32> to vector<1x8x16xf32>
    %132 = tpu.concatenate %128, %129, %130, %131 in 0 : vector<1x8x16xf32>, vector<1x8x16xf32>, vector<1x8x16xf32>, vector<1x8x16xf32> -> vector<4x8x16xf32>
    %133 = vector.extract_strided_slice %100 {offsets = [0, 16], sizes = [8, 16], strides = [1, 1]} : vector<8x128xf32> to vector<8x16xf32>
    %134 = vector.extract_strided_slice %100 {offsets = [0, 48], sizes = [8, 16], strides = [1, 1]} : vector<8x128xf32> to vector<8x16xf32>
    %135 = vector.extract_strided_slice %100 {offsets = [0, 80], sizes = [8, 16], strides = [1, 1]} : vector<8x128xf32> to vector<8x16xf32>
    %136 = vector.extract_strided_slice %100 {offsets = [0, 112], sizes = [8, 16], strides = [1, 1]} : vector<8x128xf32> to vector<8x16xf32>
    %137 = vector.shape_cast %133 : vector<8x16xf32> to vector<1x8x16xf32>
    %138 = vector.shape_cast %134 : vector<8x16xf32> to vector<1x8x16xf32>
    %139 = vector.shape_cast %135 : vector<8x16xf32> to vector<1x8x16xf32>
    %140 = vector.shape_cast %136 : vector<8x16xf32> to vector<1x8x16xf32>
    %141 = tpu.concatenate %137, %138, %139, %140 in 0 : vector<1x8x16xf32>, vector<1x8x16xf32>, vector<1x8x16xf32>, vector<1x8x16xf32> -> vector<4x8x16xf32>
    %c0_44 = arith.constant 0 : index
    %c0_45 = arith.constant 0 : index
    %c0_46 = arith.constant 0 : index
    %142 = vector.load %arg3[%c0_44, %c0_45, %c0_46] : memref<1x8x16xf32, #tpu.memory_space<vmem>>, vector<1x8x16xf32>
    %143 = vector.shape_cast %142 : vector<1x8x16xf32> to vector<8x16xf32>
    %144 = vector.shape_cast %143 : vector<8x16xf32> to vector<1x8x16xf32>
    %145 = vector.broadcast %144 : vector<1x8x16xf32> to vector<4x8x16xf32>
    %146 = arith.addf %145, %132 : vector<4x8x16xf32>
    %c0_47 = arith.constant 0 : index
    %c0_48 = arith.constant 0 : index
    %c0_49 = arith.constant 0 : index
    %147 = vector.load %arg4[%c0_47, %c0_48, %c0_49] : memref<1x8x16xf32, #tpu.memory_space<vmem>>, vector<1x8x16xf32>
    %148 = vector.shape_cast %147 : vector<1x8x16xf32> to vector<8x16xf32>
    %149 = vector.shape_cast %148 : vector<8x16xf32> to vector<1x8x16xf32>
    %150 = vector.broadcast %149 : vector<1x8x16xf32> to vector<4x8x16xf32>
    %151 = arith.addf %150, %141 : vector<4x8x16xf32>
    %c0_50 = arith.constant 0 : index
    %c0_51 = arith.constant 0 : index
    %152 = vector.load %arg6[%c0_50, %c0_51] : memref<1x16xi32, #tpu.memory_space<vmem>>, vector<1x16xi32>
    %c0_52 = arith.constant 0 : index
    %c0_53 = arith.constant 0 : index
    %153 = vector.load %arg5[%c0_52, %c0_53] : memref<1x16xi32, #tpu.memory_space<vmem>>, vector<1x16xi32>
    %c0_54 = arith.constant 0 : index
    %c0_55 = arith.constant 0 : index
    %154 = vector.load %arg7[%c0_54, %c0_55] : memref<1x16xi32, #tpu.memory_space<vmem>>, vector<1x16xi32>
    %155 = math.floor %146 : vector<4x8x16xf32>
    %156 = math.floor %151 : vector<4x8x16xf32>
    %157 = arith.subf %146, %155 : vector<4x8x16xf32>
    %cst_56 = arith.constant 1.000000e+00 : f32
    %158 = vector.broadcast %cst_56 : f32 to vector<4x8x16xf32>
    %159 = arith.subf %158, %157 : vector<4x8x16xf32>
    %160 = arith.subf %151, %156 : vector<4x8x16xf32>
    %cst_57 = arith.constant 1.000000e+00 : f32
    %161 = vector.broadcast %cst_57 : f32 to vector<4x8x16xf32>
    %162 = arith.subf %161, %160 : vector<4x8x16xf32>
    %163 = arith.fptosi %155 : vector<4x8x16xf32> to vector<4x8x16xi32>
    %164 = arith.fptosi %156 : vector<4x8x16xf32> to vector<4x8x16xi32>
    %c1_i32 = arith.constant 1 : i32
    %165 = vector.broadcast %c1_i32 : i32 to vector<4x8x16xi32>
    %166 = arith.addi %163, %165 : vector<4x8x16xi32>
    %c1_i32_58 = arith.constant 1 : i32
    %167 = vector.broadcast %c1_i32_58 : i32 to vector<4x8x16xi32>
    %168 = arith.addi %164, %167 : vector<4x8x16xi32>
    %169 = arith.mulf %159, %162 : vector<4x8x16xf32>
    %170 = arith.mulf %157, %162 : vector<4x8x16xf32>
    %171 = arith.mulf %159, %160 : vector<4x8x16xf32>
    %172 = arith.mulf %157, %160 : vector<4x8x16xf32>
    %c0_i32 = arith.constant 0 : i32
    %173 = vector.broadcast %c0_i32 : i32 to vector<4x8x16xi32>
    %174 = arith.cmpi sge, %163, %173 : vector<4x8x16xi32>
    %175 = vector.shape_cast %152 : vector<1x16xi32> to vector<1x1x16xi32>
    %176 = vector.broadcast %175 : vector<1x1x16xi32> to vector<4x8x16xi32>
    %177 = arith.cmpi slt, %163, %176 : vector<4x8x16xi32>
    %178 = arith.andi %174, %177 : vector<4x8x16xi1>
    %c0_i32_59 = arith.constant 0 : i32
    %179 = vector.broadcast %c0_i32_59 : i32 to vector<4x8x16xi32>
    %180 = arith.cmpi sge, %164, %179 : vector<4x8x16xi32>
    %181 = arith.andi %178, %180 : vector<4x8x16xi1>
    %182 = vector.shape_cast %153 : vector<1x16xi32> to vector<1x1x16xi32>
    %183 = vector.broadcast %182 : vector<1x1x16xi32> to vector<4x8x16xi32>
    %184 = arith.cmpi slt, %164, %183 : vector<4x8x16xi32>
    %185 = arith.andi %181, %184 : vector<4x8x16xi1>
    %c1_i32_60 = arith.constant 1 : i32
    %186 = vector.broadcast %c1_i32_60 : i32 to vector<1x16xi32>
    %187 = arith.subi %152, %186 : vector<1x16xi32>
    %c0_i32_61 = arith.constant 0 : i32
    %188 = vector.broadcast %c0_i32_61 : i32 to vector<4x8x16xi32>
    %189 = arith.maxsi %188, %163 : vector<4x8x16xi32>
    %190 = vector.shape_cast %187 : vector<1x16xi32> to vector<1x1x16xi32>
    %191 = vector.broadcast %190 : vector<1x1x16xi32> to vector<4x8x16xi32>
    %192 = arith.minsi %191, %189 : vector<4x8x16xi32>
    %c1_i32_62 = arith.constant 1 : i32
    %193 = vector.broadcast %c1_i32_62 : i32 to vector<1x16xi32>
    %194 = arith.subi %153, %193 : vector<1x16xi32>
    %c0_i32_63 = arith.constant 0 : i32
    %195 = vector.broadcast %c0_i32_63 : i32 to vector<4x8x16xi32>
    %196 = arith.maxsi %195, %164 : vector<4x8x16xi32>
    %197 = vector.shape_cast %194 : vector<1x16xi32> to vector<1x1x16xi32>
    %198 = vector.broadcast %197 : vector<1x1x16xi32> to vector<4x8x16xi32>
    %199 = arith.minsi %198, %196 : vector<4x8x16xi32>
    %200 = vector.shape_cast %152 : vector<1x16xi32> to vector<1x1x16xi32>
    %201 = vector.broadcast %200 : vector<1x1x16xi32> to vector<4x8x16xi32>
    %202 = arith.muli %199, %201 : vector<4x8x16xi32>
    %203 = vector.shape_cast %154 : vector<1x16xi32> to vector<1x1x16xi32>
    %204 = vector.broadcast %203 : vector<1x1x16xi32> to vector<4x8x16xi32>
    %205 = arith.addi %204, %202 : vector<4x8x16xi32>
    %206 = arith.addi %205, %192 : vector<4x8x16xi32>
    %cst_64 = arith.constant 0.000000e+00 : f32
    %207 = vector.broadcast %cst_64 : f32 to vector<4x8x16xf32>
    %208 = arith.select %185, %169, %207 : vector<4x8x16xi1>, vector<4x8x16xf32>
    %209 = arith.mulf %208, %123 : vector<4x8x16xf32>
    %c0_i32_65 = arith.constant 0 : i32
    %210 = vector.broadcast %c0_i32_65 : i32 to vector<4x8x16xi32>
    %211 = arith.cmpi sge, %166, %210 : vector<4x8x16xi32>
    %212 = vector.shape_cast %152 : vector<1x16xi32> to vector<1x1x16xi32>
    %213 = vector.broadcast %212 : vector<1x1x16xi32> to vector<4x8x16xi32>
    %214 = arith.cmpi slt, %166, %213 : vector<4x8x16xi32>
    %215 = arith.andi %211, %214 : vector<4x8x16xi1>
    %c0_i32_66 = arith.constant 0 : i32
    %216 = vector.broadcast %c0_i32_66 : i32 to vector<4x8x16xi32>
    %217 = arith.cmpi sge, %164, %216 : vector<4x8x16xi32>
    %218 = arith.andi %215, %217 : vector<4x8x16xi1>
    %219 = vector.shape_cast %153 : vector<1x16xi32> to vector<1x1x16xi32>
    %220 = vector.broadcast %219 : vector<1x1x16xi32> to vector<4x8x16xi32>
    %221 = arith.cmpi slt, %164, %220 : vector<4x8x16xi32>
    %222 = arith.andi %218, %221 : vector<4x8x16xi1>
    %c1_i32_67 = arith.constant 1 : i32
    %223 = vector.broadcast %c1_i32_67 : i32 to vector<1x16xi32>
    %224 = arith.subi %152, %223 : vector<1x16xi32>
    %c0_i32_68 = arith.constant 0 : i32
    %225 = vector.broadcast %c0_i32_68 : i32 to vector<4x8x16xi32>
    %226 = arith.maxsi %225, %166 : vector<4x8x16xi32>
    %227 = vector.shape_cast %224 : vector<1x16xi32> to vector<1x1x16xi32>
    %228 = vector.broadcast %227 : vector<1x1x16xi32> to vector<4x8x16xi32>
    %229 = arith.minsi %228, %226 : vector<4x8x16xi32>
    %c1_i32_69 = arith.constant 1 : i32
    %230 = vector.broadcast %c1_i32_69 : i32 to vector<1x16xi32>
    %231 = arith.subi %153, %230 : vector<1x16xi32>
    %c0_i32_70 = arith.constant 0 : i32
    %232 = vector.broadcast %c0_i32_70 : i32 to vector<4x8x16xi32>
    %233 = arith.maxsi %232, %164 : vector<4x8x16xi32>
    %234 = vector.shape_cast %231 : vector<1x16xi32> to vector<1x1x16xi32>
    %235 = vector.broadcast %234 : vector<1x1x16xi32> to vector<4x8x16xi32>
    %236 = arith.minsi %235, %233 : vector<4x8x16xi32>
    %237 = vector.shape_cast %152 : vector<1x16xi32> to vector<1x1x16xi32>
    %238 = vector.broadcast %237 : vector<1x1x16xi32> to vector<4x8x16xi32>
    %239 = arith.muli %236, %238 : vector<4x8x16xi32>
    %240 = vector.shape_cast %154 : vector<1x16xi32> to vector<1x1x16xi32>
    %241 = vector.broadcast %240 : vector<1x1x16xi32> to vector<4x8x16xi32>
    %242 = arith.addi %241, %239 : vector<4x8x16xi32>
    %243 = arith.addi %242, %229 : vector<4x8x16xi32>
    %cst_71 = arith.constant 0.000000e+00 : f32
    %244 = vector.broadcast %cst_71 : f32 to vector<4x8x16xf32>
    %245 = arith.select %222, %170, %244 : vector<4x8x16xi1>, vector<4x8x16xf32>
    %246 = arith.mulf %245, %123 : vector<4x8x16xf32>
    %c0_i32_72 = arith.constant 0 : i32
    %247 = vector.broadcast %c0_i32_72 : i32 to vector<4x8x16xi32>
    %248 = arith.cmpi sge, %163, %247 : vector<4x8x16xi32>
    %249 = vector.shape_cast %152 : vector<1x16xi32> to vector<1x1x16xi32>
    %250 = vector.broadcast %249 : vector<1x1x16xi32> to vector<4x8x16xi32>
    %251 = arith.cmpi slt, %163, %250 : vector<4x8x16xi32>
    %252 = arith.andi %248, %251 : vector<4x8x16xi1>
    %c0_i32_73 = arith.constant 0 : i32
    %253 = vector.broadcast %c0_i32_73 : i32 to vector<4x8x16xi32>
    %254 = arith.cmpi sge, %168, %253 : vector<4x8x16xi32>
    %255 = arith.andi %252, %254 : vector<4x8x16xi1>
    %256 = vector.shape_cast %153 : vector<1x16xi32> to vector<1x1x16xi32>
    %257 = vector.broadcast %256 : vector<1x1x16xi32> to vector<4x8x16xi32>
    %258 = arith.cmpi slt, %168, %257 : vector<4x8x16xi32>
    %259 = arith.andi %255, %258 : vector<4x8x16xi1>
    %c1_i32_74 = arith.constant 1 : i32
    %260 = vector.broadcast %c1_i32_74 : i32 to vector<1x16xi32>
    %261 = arith.subi %152, %260 : vector<1x16xi32>
    %c0_i32_75 = arith.constant 0 : i32
    %262 = vector.broadcast %c0_i32_75 : i32 to vector<4x8x16xi32>
    %263 = arith.maxsi %262, %163 : vector<4x8x16xi32>
    %264 = vector.shape_cast %261 : vector<1x16xi32> to vector<1x1x16xi32>
    %265 = vector.broadcast %264 : vector<1x1x16xi32> to vector<4x8x16xi32>
    %266 = arith.minsi %265, %263 : vector<4x8x16xi32>
    %c1_i32_76 = arith.constant 1 : i32
    %267 = vector.broadcast %c1_i32_76 : i32 to vector<1x16xi32>
    %268 = arith.subi %153, %267 : vector<1x16xi32>
    %c0_i32_77 = arith.constant 0 : i32
    %269 = vector.broadcast %c0_i32_77 : i32 to vector<4x8x16xi32>
    %270 = arith.maxsi %269, %168 : vector<4x8x16xi32>
    %271 = vector.shape_cast %268 : vector<1x16xi32> to vector<1x1x16xi32>
    %272 = vector.broadcast %271 : vector<1x1x16xi32> to vector<4x8x16xi32>
    %273 = arith.minsi %272, %270 : vector<4x8x16xi32>
    %274 = vector.shape_cast %152 : vector<1x16xi32> to vector<1x1x16xi32>
    %275 = vector.broadcast %274 : vector<1x1x16xi32> to vector<4x8x16xi32>
    %276 = arith.muli %273, %275 : vector<4x8x16xi32>
    %277 = vector.shape_cast %154 : vector<1x16xi32> to vector<1x1x16xi32>
    %278 = vector.broadcast %277 : vector<1x1x16xi32> to vector<4x8x16xi32>
    %279 = arith.addi %278, %276 : vector<4x8x16xi32>
    %280 = arith.addi %279, %266 : vector<4x8x16xi32>
    %cst_78 = arith.constant 0.000000e+00 : f32
    %281 = vector.broadcast %cst_78 : f32 to vector<4x8x16xf32>
    %282 = arith.select %259, %171, %281 : vector<4x8x16xi1>, vector<4x8x16xf32>
    %283 = arith.mulf %282, %123 : vector<4x8x16xf32>
    %c0_i32_79 = arith.constant 0 : i32
    %284 = vector.broadcast %c0_i32_79 : i32 to vector<4x8x16xi32>
    %285 = arith.cmpi sge, %166, %284 : vector<4x8x16xi32>
    %286 = vector.shape_cast %152 : vector<1x16xi32> to vector<1x1x16xi32>
    %287 = vector.broadcast %286 : vector<1x1x16xi32> to vector<4x8x16xi32>
    %288 = arith.cmpi slt, %166, %287 : vector<4x8x16xi32>
    %289 = arith.andi %285, %288 : vector<4x8x16xi1>
    %c0_i32_80 = arith.constant 0 : i32
    %290 = vector.broadcast %c0_i32_80 : i32 to vector<4x8x16xi32>
    %291 = arith.cmpi sge, %168, %290 : vector<4x8x16xi32>
    %292 = arith.andi %289, %291 : vector<4x8x16xi1>
    %293 = vector.shape_cast %153 : vector<1x16xi32> to vector<1x1x16xi32>
    %294 = vector.broadcast %293 : vector<1x1x16xi32> to vector<4x8x16xi32>
    %295 = arith.cmpi slt, %168, %294 : vector<4x8x16xi32>
    %296 = arith.andi %292, %295 : vector<4x8x16xi1>
    %c1_i32_81 = arith.constant 1 : i32
    %297 = vector.broadcast %c1_i32_81 : i32 to vector<1x16xi32>
    %298 = arith.subi %152, %297 : vector<1x16xi32>
    %c0_i32_82 = arith.constant 0 : i32
    %299 = vector.broadcast %c0_i32_82 : i32 to vector<4x8x16xi32>
    %300 = arith.maxsi %299, %166 : vector<4x8x16xi32>
    %301 = vector.shape_cast %298 : vector<1x16xi32> to vector<1x1x16xi32>
    %302 = vector.broadcast %301 : vector<1x1x16xi32> to vector<4x8x16xi32>
    %303 = arith.minsi %302, %300 : vector<4x8x16xi32>
    %c1_i32_83 = arith.constant 1 : i32
    %304 = vector.broadcast %c1_i32_83 : i32 to vector<1x16xi32>
    %305 = arith.subi %153, %304 : vector<1x16xi32>
    %c0_i32_84 = arith.constant 0 : i32
    %306 = vector.broadcast %c0_i32_84 : i32 to vector<4x8x16xi32>
    %307 = arith.maxsi %306, %168 : vector<4x8x16xi32>
    %308 = vector.shape_cast %305 : vector<1x16xi32> to vector<1x1x16xi32>
    %309 = vector.broadcast %308 : vector<1x1x16xi32> to vector<4x8x16xi32>
    %310 = arith.minsi %309, %307 : vector<4x8x16xi32>
    %311 = vector.shape_cast %152 : vector<1x16xi32> to vector<1x1x16xi32>
    %312 = vector.broadcast %311 : vector<1x1x16xi32> to vector<4x8x16xi32>
    %313 = arith.muli %310, %312 : vector<4x8x16xi32>
    %314 = vector.shape_cast %154 : vector<1x16xi32> to vector<1x1x16xi32>
    %315 = vector.broadcast %314 : vector<1x1x16xi32> to vector<4x8x16xi32>
    %316 = arith.addi %315, %313 : vector<4x8x16xi32>
    %317 = arith.addi %316, %303 : vector<4x8x16xi32>
    %cst_85 = arith.constant 0.000000e+00 : f32
    %318 = vector.broadcast %cst_85 : f32 to vector<4x8x16xf32>
    %319 = arith.select %296, %172, %318 : vector<4x8x16xi1>, vector<4x8x16xf32>
    %320 = arith.mulf %319, %123 : vector<4x8x16xf32>
    %321 = tpu.concatenate %206, %243, %280, %317 in 2 : vector<4x8x16xi32>, vector<4x8x16xi32>, vector<4x8x16xi32>, vector<4x8x16xi32> -> vector<4x8x64xi32>
    %322 = tpu.concatenate %209, %246, %283, %320 in 2 : vector<4x8x16xf32>, vector<4x8x16xf32>, vector<4x8x16xf32>, vector<4x8x16xf32> -> vector<4x8x64xf32>
    %323 = tpu.iota {dimensions = array<i32: 3>} : vector<4x8x64x88xi32>
    %324 = vector.shape_cast %321 : vector<4x8x64xi32> to vector<4x8x64x1xi32>
    %325 = vector.broadcast %324 : vector<4x8x64x1xi32> to vector<4x8x64x88xi32>
    %326 = arith.cmpi eq, %323, %325 : vector<4x8x64x88xi32>
    %327 = vector.shape_cast %322 : vector<4x8x64xf32> to vector<4x8x64x1xf32>
    %cst_86 = arith.constant 0.000000e+00 : f32
    %328 = vector.shape_cast %327 : vector<4x8x64x1xf32> to vector<4x8x64x1xf32>
    %329 = vector.broadcast %328 : vector<4x8x64x1xf32> to vector<4x8x64x88xf32>
    %330 = vector.broadcast %cst_86 : f32 to vector<4x8x64x88xf32>
    %331 = arith.select %326, %329, %330 : vector<4x8x64x88xi1>, vector<4x8x64x88xf32>
    %cst_87 = arith.constant dense<0.000000e+00> : vector<4x8x88xf32>
    %332 = vector.multi_reduction <add>, %331, %cst_87 [2] : vector<4x8x64x88xf32> to vector<4x8x88xf32>
    %333 = vector.extract_strided_slice %95 {offsets = [0, 0], sizes = [88, 8], strides = [1, 1]} : vector<88x32xf32> to vector<88x8xf32>
    %334 = vector.extract_strided_slice %95 {offsets = [0, 8], sizes = [88, 8], strides = [1, 1]} : vector<88x32xf32> to vector<88x8xf32>
    %335 = vector.extract_strided_slice %95 {offsets = [0, 16], sizes = [88, 8], strides = [1, 1]} : vector<88x32xf32> to vector<88x8xf32>
    %336 = vector.extract_strided_slice %95 {offsets = [0, 24], sizes = [88, 8], strides = [1, 1]} : vector<88x32xf32> to vector<88x8xf32>
    %337 = vector.shape_cast %333 : vector<88x8xf32> to vector<1x88x8xf32>
    %338 = vector.shape_cast %334 : vector<88x8xf32> to vector<1x88x8xf32>
    %339 = vector.shape_cast %335 : vector<88x8xf32> to vector<1x88x8xf32>
    %340 = vector.shape_cast %336 : vector<88x8xf32> to vector<1x88x8xf32>
    %341 = tpu.concatenate %337, %338, %339, %340 in 0 : vector<1x88x8xf32>, vector<1x88x8xf32>, vector<1x88x8xf32>, vector<1x88x8xf32> -> vector<4x88x8xf32>
    %342 = arith.truncf %341 : vector<4x88x8xf32> to vector<4x88x8xbf16>
    %343 = arith.truncf %332 : vector<4x8x88xf32> to vector<4x8x88xbf16>
    "tpu.trace_start"() <{level = 10 : i32, message = "hqk,hkd->hqd"}> : () -> ()
    %cst_88 = arith.constant dense<0.000000e+00> : vector<4x8x8xf32>
    %344 = tpu.matmul %343, %342, %cst_88 {dimension_numbers = #tpu.dot_dimension_numbers<[2], [1], [1], [2], [0, 0, 0, 1, 1, 2], [0], [0]>} : vector<4x8x88xbf16>, vector<4x88x8xbf16>, vector<4x8x8xf32> -> vector<4x8x8xf32>
    "tpu.trace_stop"() : () -> ()
    %345 = vector.extract_strided_slice %344 {offsets = [0, 0, 0], sizes = [1, 8, 8], strides = [1, 1, 1]} : vector<4x8x8xf32> to vector<1x8x8xf32>
    %346 = vector.shape_cast %345 : vector<1x8x8xf32> to vector<8x8xf32>
    %347 = vector.extract_strided_slice %344 {offsets = [1, 0, 0], sizes = [1, 8, 8], strides = [1, 1, 1]} : vector<4x8x8xf32> to vector<1x8x8xf32>
    %348 = vector.shape_cast %347 : vector<1x8x8xf32> to vector<8x8xf32>
    %349 = vector.extract_strided_slice %344 {offsets = [2, 0, 0], sizes = [1, 8, 8], strides = [1, 1, 1]} : vector<4x8x8xf32> to vector<1x8x8xf32>
    %350 = vector.shape_cast %349 : vector<1x8x8xf32> to vector<8x8xf32>
    %351 = vector.extract_strided_slice %344 {offsets = [3, 0, 0], sizes = [1, 8, 8], strides = [1, 1, 1]} : vector<4x8x8xf32> to vector<1x8x8xf32>
    %352 = vector.shape_cast %351 : vector<1x8x8xf32> to vector<8x8xf32>
    %353 = tpu.concatenate %346, %348, %350, %352 in 1 : vector<8x8xf32>, vector<8x8xf32>, vector<8x8xf32>, vector<8x8xf32> -> vector<8x32xf32>
    %354 = arith.truncf %353 : vector<8x32xf32> to vector<8x32xbf16>
    %c0_89 = arith.constant 0 : index
    %c0_90 = arith.constant 0 : index
    %355 = vector.load %arg20[%c0_89, %c0_90] : memref<32x32xbf16, #tpu.memory_space<vmem>>, vector<32x32xbf16>
    %cst_91 = arith.constant dense<0.000000e+00> : vector<8x32xf32>
    %356 = tpu.matmul %354, %355, %cst_91 {dimension_numbers = #tpu.dot_dimension_numbers<[1], [0], [0], [1], [0, 0, 1, 1], [], []>} : vector<8x32xbf16>, vector<32x32xbf16>, vector<8x32xf32> -> vector<8x32xf32>
    %c0_92 = arith.constant 0 : index
    %c0_93 = arith.constant 0 : index
    %357 = vector.load %arg21[%c0_92, %c0_93] : memref<1x32xf32, #tpu.memory_space<vmem>>, vector<1x32xf32>
    %358 = vector.broadcast %357 : vector<1x32xf32> to vector<8x32xf32>
    %359 = arith.addf %356, %358 : vector<8x32xf32>
    %360 = arith.addf %87, %359 : vector<8x32xf32>
    %cst_94 = arith.constant dense<0.000000e+00> : vector<8xf32>
    %361 = vector.multi_reduction <add>, %360, %cst_94 [1] : vector<8x32xf32> to vector<8xf32>
    %362 = vector.shape_cast %361 : vector<8xf32> to vector<8x1xf32>
    %cst_95 = arith.constant 3.200000e+01 : f32
    %363 = vector.broadcast %cst_95 : f32 to vector<8x1xf32>
    %364 = arith.divf %362, %363 : vector<8x1xf32>
    %365 = vector.broadcast %364 : vector<8x1xf32> to vector<8x32xf32>
    %366 = arith.subf %360, %365 : vector<8x32xf32>
    %367 = arith.mulf %366, %366 : vector<8x32xf32>
    %cst_96 = arith.constant dense<0.000000e+00> : vector<8xf32>
    %368 = vector.multi_reduction <add>, %367, %cst_96 [1] : vector<8x32xf32> to vector<8xf32>
    %369 = vector.shape_cast %368 : vector<8xf32> to vector<8x1xf32>
    %cst_97 = arith.constant 3.200000e+01 : f32
    %370 = vector.broadcast %cst_97 : f32 to vector<8x1xf32>
    %371 = arith.divf %369, %370 : vector<8x1xf32>
    %cst_98 = arith.constant 9.99999974E-6 : f32
    %372 = vector.broadcast %cst_98 : f32 to vector<8x1xf32>
    %373 = arith.addf %371, %372 : vector<8x1xf32>
    %374 = math.rsqrt %373 : vector<8x1xf32>
    %375 = vector.broadcast %374 : vector<8x1xf32> to vector<8x32xf32>
    %376 = arith.mulf %366, %375 : vector<8x32xf32>
    %c0_99 = arith.constant 0 : index
    %c0_100 = arith.constant 0 : index
    %377 = vector.load %arg22[%c0_99, %c0_100] : memref<1x32xf32, #tpu.memory_space<vmem>>, vector<1x32xf32>
    %378 = vector.broadcast %377 : vector<1x32xf32> to vector<8x32xf32>
    %379 = arith.mulf %376, %378 : vector<8x32xf32>
    %c0_101 = arith.constant 0 : index
    %c0_102 = arith.constant 0 : index
    %380 = vector.load %arg23[%c0_101, %c0_102] : memref<1x32xf32, #tpu.memory_space<vmem>>, vector<1x32xf32>
    %381 = vector.broadcast %380 : vector<1x32xf32> to vector<8x32xf32>
    %382 = arith.addf %379, %381 : vector<8x32xf32>
    %383 = arith.truncf %382 : vector<8x32xf32> to vector<8x32xbf16>
    %c0_103 = arith.constant 0 : index
    %c0_104 = arith.constant 0 : index
    %384 = vector.load %arg24[%c0_103, %c0_104] : memref<32x64xbf16, #tpu.memory_space<vmem>>, vector<32x64xbf16>
    %cst_105 = arith.constant dense<0.000000e+00> : vector<8x64xf32>
    %385 = tpu.matmul %383, %384, %cst_105 {dimension_numbers = #tpu.dot_dimension_numbers<[1], [0], [0], [1], [0, 0, 1, 1], [], []>} : vector<8x32xbf16>, vector<32x64xbf16>, vector<8x64xf32> -> vector<8x64xf32>
    %c0_106 = arith.constant 0 : index
    %c0_107 = arith.constant 0 : index
    %386 = vector.load %arg25[%c0_106, %c0_107] : memref<1x64xf32, #tpu.memory_space<vmem>>, vector<1x64xf32>
    %387 = vector.broadcast %386 : vector<1x64xf32> to vector<8x64xf32>
    %388 = arith.addf %385, %387 : vector<8x64xf32>
    %cst_108 = arith.constant 0.000000e+00 : f32
    %389 = vector.broadcast %cst_108 : f32 to vector<8x64xf32>
    %390 = arith.maximumf %388, %389 : vector<8x64xf32>
    %391 = arith.truncf %390 : vector<8x64xf32> to vector<8x64xbf16>
    %c0_109 = arith.constant 0 : index
    %c0_110 = arith.constant 0 : index
    %392 = vector.load %arg26[%c0_109, %c0_110] : memref<64x32xbf16, #tpu.memory_space<vmem>>, vector<64x32xbf16>
    %cst_111 = arith.constant dense<0.000000e+00> : vector<8x32xf32>
    %393 = tpu.matmul %391, %392, %cst_111 {dimension_numbers = #tpu.dot_dimension_numbers<[1], [0], [0], [1], [0, 0, 1, 1], [], []>} : vector<8x64xbf16>, vector<64x32xbf16>, vector<8x32xf32> -> vector<8x32xf32>
    %c0_112 = arith.constant 0 : index
    %c0_113 = arith.constant 0 : index
    %394 = vector.load %arg27[%c0_112, %c0_113] : memref<1x32xf32, #tpu.memory_space<vmem>>, vector<1x32xf32>
    %395 = vector.broadcast %394 : vector<1x32xf32> to vector<8x32xf32>
    %396 = arith.addf %393, %395 : vector<8x32xf32>
    %397 = arith.addf %382, %396 : vector<8x32xf32>
    %cst_114 = arith.constant dense<0.000000e+00> : vector<8xf32>
    %398 = vector.multi_reduction <add>, %397, %cst_114 [1] : vector<8x32xf32> to vector<8xf32>
    %399 = vector.shape_cast %398 : vector<8xf32> to vector<8x1xf32>
    %cst_115 = arith.constant 3.200000e+01 : f32
    %400 = vector.broadcast %cst_115 : f32 to vector<8x1xf32>
    %401 = arith.divf %399, %400 : vector<8x1xf32>
    %402 = vector.broadcast %401 : vector<8x1xf32> to vector<8x32xf32>
    %403 = arith.subf %397, %402 : vector<8x32xf32>
    %404 = arith.mulf %403, %403 : vector<8x32xf32>
    %cst_116 = arith.constant dense<0.000000e+00> : vector<8xf32>
    %405 = vector.multi_reduction <add>, %404, %cst_116 [1] : vector<8x32xf32> to vector<8xf32>
    %406 = vector.shape_cast %405 : vector<8xf32> to vector<8x1xf32>
    %cst_117 = arith.constant 3.200000e+01 : f32
    %407 = vector.broadcast %cst_117 : f32 to vector<8x1xf32>
    %408 = arith.divf %406, %407 : vector<8x1xf32>
    %cst_118 = arith.constant 9.99999974E-6 : f32
    %409 = vector.broadcast %cst_118 : f32 to vector<8x1xf32>
    %410 = arith.addf %408, %409 : vector<8x1xf32>
    %411 = math.rsqrt %410 : vector<8x1xf32>
    %412 = vector.broadcast %411 : vector<8x1xf32> to vector<8x32xf32>
    %413 = arith.mulf %403, %412 : vector<8x32xf32>
    %c0_119 = arith.constant 0 : index
    %c0_120 = arith.constant 0 : index
    %414 = vector.load %arg28[%c0_119, %c0_120] : memref<1x32xf32, #tpu.memory_space<vmem>>, vector<1x32xf32>
    %415 = vector.broadcast %414 : vector<1x32xf32> to vector<8x32xf32>
    %416 = arith.mulf %413, %415 : vector<8x32xf32>
    %c0_121 = arith.constant 0 : index
    %c0_122 = arith.constant 0 : index
    %417 = vector.load %arg29[%c0_121, %c0_122] : memref<1x32xf32, #tpu.memory_space<vmem>>, vector<1x32xf32>
    %418 = vector.broadcast %417 : vector<1x32xf32> to vector<8x32xf32>
    %419 = arith.addf %416, %418 : vector<8x32xf32>
    %c0_123 = arith.constant 0 : index
    %c0_124 = arith.constant 0 : index
    %c0_125 = arith.constant 0 : index
    %420 = vector.load %arg30[%c0_123, %c0_124, %c0_125] : memref<1x8x32xf32, #tpu.memory_space<vmem>>, vector<1x8x32xf32>
    %421 = vector.shape_cast %420 : vector<1x8x32xf32> to vector<8x32xf32>
    %422 = vector.shape_cast %419 : vector<8x32xf32> to vector<1x8x32xf32>
    tpu.vector_store %arg30[%c0_123, %c0_124, %c0_125], %422 {strides = array<i32>} : memref<1x8x32xf32, #tpu.memory_space<vmem>>, vector<1x8x32xf32>,
    return
  }
  func.func @transform_0(%arg0: i32) -> (i32, i32, i32) {
    %c0_i32 = arith.constant 0 : i32
    %c0_i32_0 = arith.constant 0 : i32
    %c0_i32_1 = arith.constant 0 : i32
    return %arg0, %c0_i32, %c0_i32_0 : i32, i32, i32
  }
  func.func @transform_1(%arg0: i32) -> (i32, i32, i32) {
    %c0_i32 = arith.constant 0 : i32
    %c0_i32_0 = arith.constant 0 : i32
    %c0_i32_1 = arith.constant 0 : i32
    return %arg0, %c0_i32, %c0_i32_0 : i32, i32, i32
  }
  func.func @transform_2(%arg0: i32) -> (i32, i32, i32) {
    %c0_i32 = arith.constant 0 : i32
    %c0_i32_0 = arith.constant 0 : i32
    %c0_i32_1 = arith.constant 0 : i32
    return %arg0, %c0_i32, %c0_i32_0 : i32, i32, i32
  }
  func.func @transform_3(%arg0: i32) -> (i32, i32, i32) {
    %c0_i32 = arith.constant 0 : i32
    %c0_i32_0 = arith.constant 0 : i32
    %c0_i32_1 = arith.constant 0 : i32
    return %arg0, %c0_i32, %c0_i32_0 : i32, i32, i32
  }
  func.func @transform_4(%arg0: i32) -> (i32, i32) {
    %c0_i32 = arith.constant 0 : i32
    %c0_i32_0 = arith.constant 0 : i32
    %c0_i32_1 = arith.constant 0 : i32
    return %c0_i32, %c0_i32_0 : i32, i32
  }
  func.func @transform_5(%arg0: i32) -> (i32, i32) {
    %c0_i32 = arith.constant 0 : i32
    %c0_i32_0 = arith.constant 0 : i32
    %c0_i32_1 = arith.constant 0 : i32
    return %c0_i32, %c0_i32_0 : i32, i32
  }
  func.func @transform_6(%arg0: i32) -> (i32, i32) {
    %c0_i32 = arith.constant 0 : i32
    %c0_i32_0 = arith.constant 0 : i32
    %c0_i32_1 = arith.constant 0 : i32
    return %c0_i32, %c0_i32_0 : i32, i32
  }
  func.func @transform_7(%arg0: i32) -> (i32, i32) {
    %c0_i32 = arith.constant 0 : i32
    %c0_i32_0 = arith.constant 0 : i32
    %c0_i32_1 = arith.constant 0 : i32
    return %c0_i32, %c0_i32_0 : i32, i32
  }
  func.func @transform_8(%arg0: i32) -> (i32, i32) {
    %c0_i32 = arith.constant 0 : i32
    %c0_i32_0 = arith.constant 0 : i32
    %c0_i32_1 = arith.constant 0 : i32
    return %c0_i32, %c0_i32_0 : i32, i32
  }
  func.func @transform_9(%arg0: i32) -> (i32, i32) {
    %c0_i32 = arith.constant 0 : i32
    %c0_i32_0 = arith.constant 0 : i32
    %c0_i32_1 = arith.constant 0 : i32
    return %c0_i32, %c0_i32_0 : i32, i32
  }
  func.func @transform_10(%arg0: i32) -> (i32, i32) {
    %c0_i32 = arith.constant 0 : i32
    %c0_i32_0 = arith.constant 0 : i32
    %c0_i32_1 = arith.constant 0 : i32
    return %c0_i32, %c0_i32_0 : i32, i32
  }
  func.func @transform_11(%arg0: i32) -> (i32, i32) {
    %c0_i32 = arith.constant 0 : i32
    %c0_i32_0 = arith.constant 0 : i32
    %c0_i32_1 = arith.constant 0 : i32
    return %c0_i32, %c0_i32_0 : i32, i32
  }
  func.func @transform_12(%arg0: i32) -> (i32, i32) {
    %c0_i32 = arith.constant 0 : i32
    %c0_i32_0 = arith.constant 0 : i32
    %c0_i32_1 = arith.constant 0 : i32
    return %c0_i32, %c0_i32_0 : i32, i32
  }
  func.func @transform_13(%arg0: i32) -> (i32, i32) {
    %c0_i32 = arith.constant 0 : i32
    %c0_i32_0 = arith.constant 0 : i32
    %c0_i32_1 = arith.constant 0 : i32
    return %c0_i32, %c0_i32_0 : i32, i32
  }
  func.func @transform_14(%arg0: i32) -> (i32, i32) {
    %c0_i32 = arith.constant 0 : i32
    %c0_i32_0 = arith.constant 0 : i32
    %c0_i32_1 = arith.constant 0 : i32
    return %c0_i32, %c0_i32_0 : i32, i32
  }
  func.func @transform_15(%arg0: i32) -> (i32, i32) {
    %c0_i32 = arith.constant 0 : i32
    %c0_i32_0 = arith.constant 0 : i32
    %c0_i32_1 = arith.constant 0 : i32
    return %c0_i32, %c0_i32_0 : i32, i32
  }
  func.func @transform_16(%arg0: i32) -> (i32, i32) {
    %c0_i32 = arith.constant 0 : i32
    %c0_i32_0 = arith.constant 0 : i32
    %c0_i32_1 = arith.constant 0 : i32
    return %c0_i32, %c0_i32_0 : i32, i32
  }
  func.func @transform_17(%arg0: i32) -> (i32, i32) {
    %c0_i32 = arith.constant 0 : i32
    %c0_i32_0 = arith.constant 0 : i32
    %c0_i32_1 = arith.constant 0 : i32
    return %c0_i32, %c0_i32_0 : i32, i32
  }
  func.func @transform_18(%arg0: i32) -> (i32, i32) {
    %c0_i32 = arith.constant 0 : i32
    %c0_i32_0 = arith.constant 0 : i32
    %c0_i32_1 = arith.constant 0 : i32
    return %c0_i32, %c0_i32_0 : i32, i32
  }
  func.func @transform_19(%arg0: i32) -> (i32, i32) {
    %c0_i32 = arith.constant 0 : i32
    %c0_i32_0 = arith.constant 0 : i32
    %c0_i32_1 = arith.constant 0 : i32
    return %c0_i32, %c0_i32_0 : i32, i32
  }
  func.func @transform_20(%arg0: i32) -> (i32, i32) {
    %c0_i32 = arith.constant 0 : i32
    %c0_i32_0 = arith.constant 0 : i32
    %c0_i32_1 = arith.constant 0 : i32
    return %c0_i32, %c0_i32_0 : i32, i32
  }
  func.func @transform_21(%arg0: i32) -> (i32, i32) {
    %c0_i32 = arith.constant 0 : i32
    %c0_i32_0 = arith.constant 0 : i32
    %c0_i32_1 = arith.constant 0 : i32
    return %c0_i32, %c0_i32_0 : i32, i32
  }
  func.func @transform_22(%arg0: i32) -> (i32, i32) {
    %c0_i32 = arith.constant 0 : i32
    %c0_i32_0 = arith.constant 0 : i32
    %c0_i32_1 = arith.constant 0 : i32
    return %c0_i32, %c0_i32_0 : i32, i32
  }
  func.func @transform_23(%arg0: i32) -> (i32, i32) {
    %c0_i32 = arith.constant 0 : i32
    %c0_i32_0 = arith.constant 0 : i32
    %c0_i32_1 = arith.constant 0 : i32
    return %c0_i32, %c0_i32_0 : i32, i32
  }
  func.func @transform_24(%arg0: i32) -> (i32, i32) {
    %c0_i32 = arith.constant 0 : i32
    %c0_i32_0 = arith.constant 0 : i32
    %c0_i32_1 = arith.constant 0 : i32
    return %c0_i32, %c0_i32_0 : i32, i32
  }
  func.func @transform_25(%arg0: i32) -> (i32, i32) {
    %c0_i32 = arith.constant 0 : i32
    %c0_i32_0 = arith.constant 0 : i32
    %c0_i32_1 = arith.constant 0 : i32
    return %c0_i32, %c0_i32_0 : i32, i32
  }
  func.func @transform_26(%arg0: i32) -> (i32, i32) {
    %c0_i32 = arith.constant 0 : i32
    %c0_i32_0 = arith.constant 0 : i32
    %c0_i32_1 = arith.constant 0 : i32
    return %c0_i32, %c0_i32_0 : i32, i32
  }
  func.func @transform_27(%arg0: i32) -> (i32, i32) {
    %c0_i32 = arith.constant 0 : i32
    %c0_i32_0 = arith.constant 0 : i32
    %c0_i32_1 = arith.constant 0 : i32
    return %c0_i32, %c0_i32_0 : i32, i32
  }
  func.func @transform_28(%arg0: i32) -> (i32, i32) {
    %c0_i32 = arith.constant 0 : i32
    %c0_i32_0 = arith.constant 0 : i32
    %c0_i32_1 = arith.constant 0 : i32
    return %c0_i32, %c0_i32_0 : i32, i32
  }
  func.func @transform_29(%arg0: i32) -> (i32, i32, i32) {
    %c0_i32 = arith.constant 0 : i32
    %c0_i32_0 = arith.constant 0 : i32
    %c0_i32_1 = arith.constant 0 : i32
    return %arg0, %c0_i32, %c0_i32_0 : i32, i32, i32
  }
}

</mosaic_0001>

<llo_original>
// kernel: decoder_layer_forward.1
$region0: #{decoder_layer_forward.1}
  #allocation0 [shape = 'u32[]', space=smem, size = 0x4, offset = 0x4, fixed_abs, tag = 'smem constant byte address 0x4 - core index']
  #allocation1 [shape = 'u32[144,128]{1,0:T(1,128)}', space=vmem, size = 0x12000, scoped, tag = 'internal scratch']
  %s0 = inlined_call_operand.smem [shape: u32[30], index: -1, kind: input, shape index: {}]
  %s1 = sld [smem:[%s0]]
  %s2 = scalar_lea.smem %s0, 1
  %s3 = sld [smem:[%s2]]
  %s4 = scalar_lea.smem %s0, 2
  %s5 = sld [smem:[%s4]]
  %s6 = scalar_lea.smem %s0, 3
  %s7 = sld [smem:[%s6]]
  %s8 = scalar_lea.smem %s0, 4
  %s9 = sld [smem:[%s8]]
  %s10 = scalar_lea.smem %s0, 5
  %s11 = sld [smem:[%s10]]
  %s12 = scalar_lea.smem %s0, 6
  %s13 = sld [smem:[%s12]]
  %s14 = scalar_lea.smem %s0, 7
  %s15 = sld [smem:[%s14]]
  %s16 = scalar_lea.smem %s0, 8
  %s17 = sld [smem:[%s16]]
  %s18 = scalar_lea.smem %s0, 9
  %s19 = sld [smem:[%s18]]
  %s20 = scalar_lea.smem %s0, 10
  %s21 = sld [smem:[%s20]]
  %s22 = scalar_lea.smem %s0, 11
  %s23 = sld [smem:[%s22]]
  %s24 = scalar_lea.smem %s0, 12
  %s25 = sld [smem:[%s24]]
  %s26 = scalar_lea.smem %s0, 13
  %s27 = sld [smem:[%s26]]
  %s28 = scalar_lea.smem %s0, 14
  %s29 = sld [smem:[%s28]]
  %s30 = scalar_lea.smem %s0, 15
  %s31 = sld [smem:[%s30]]
  %s32 = scalar_lea.smem %s0, 16
  %s33 = sld [smem:[%s32]]
  %s34 = scalar_lea.smem %s0, 17
  %s35 = sld [smem:[%s34]]
  %s36 = scalar_lea.smem %s0, 18
  %s37 = sld [smem:[%s36]]
  %s38 = scalar_lea.smem %s0, 19
  %s39 = sld [smem:[%s38]]
  %s40 = scalar_lea.smem %s0, 20
  %s41 = sld [smem:[%s40]]
  %s42 = scalar_lea.smem %s0, 21
  %s43 = sld [smem:[%s42]]
  %s44 = scalar_lea.smem %s0, 22
  %s45 = sld [smem:[%s44]]
  %s46 = scalar_lea.smem %s0, 23
  %s47 = sld [smem:[%s46]]
  %s48 = scalar_lea.smem %s0, 24
  %s49 = sld [smem:[%s48]]
  %s50 = scalar_lea.smem %s0, 25
  %s51 = sld [smem:[%s50]]
  %s52 = scalar_lea.smem %s0, 26
  %s53 = sld [smem:[%s52]]
  %s54 = scalar_lea.smem %s0, 27
  %s55 = sld [smem:[%s54]]
  %s56 = scalar_lea.smem %s0, 28
  %s57 = sld [smem:[%s56]]
  %s58 = scalar_lea.smem %s0, 29
  %s59 = sld [smem:[%s58]]
  %s60 = sld [smem:[#allocation0]]
  $region149: #{decoder_layer_forward.1} parent=0
    _
  %s62 = ssub.s32 1, %s60
  %s63 = scalar_select 0, %s62, %s60
  $region1: #{decoder_layer_forward.1} parent=0
    #allocation2 [shape = 'u8[8192]{0}', space=vmem, size = 0x2000, scoped, tag = 'output window, operand 0']
    #allocation3 [shape = 's32[2]{0}', space=sflag, size = 0x8, scoped, tag = 'scoped memory for decoder_layer_forward.1']
    %64 = vsyncpa [#allocation3], 0
    %s65 = scalar_lea.sflag [#allocation3], 1
    %66 = vsyncpa %s65, 0
    loop: start=0, step=1, limit=4
    $region2: #{decoder_layer_forward.1} parent=1 // loop_pre_header
      _
    $region3: #{decoder_layer_forward.1} parent=1 // loop_header
      %s68 = sphi 0, %s72
      %p69 = scmp.ge.s32.totalorder %s68, 4
      %s78 = sphi 0, %s80
      %s81 = sphi 0, %s78
      %s82 = sphi 0, %s81
      %s98 = sphi 0, %s82
      %s104 = sphi 0, %s106
      %s107 = sphi 0, %s104
      %s108 = sphi 0, %s107
      %s124 = sphi 0, %s108
      %s130 = sphi 0, %s132
      %s133 = sphi 0, %s130
      %s134 = sphi 0, %s133
      %s150 = sphi 0, %s134
      %s156 = sphi 0, %s158
      %s159 = sphi 0, %s156
      %s160 = sphi 0, %s159
      %s176 = sphi 0, %s160
      %s180 = sphi 0, %s180
      %s182 = sphi 0, %s180
      %s183 = sphi 0, %s182
      %s197 = sphi 0, %s183
      %s201 = sphi 0, %s201
      %s203 = sphi 0, %s201
      %s204 = sphi 0, %s203
      %s218 = sphi 0, %s204
      %s222 = sphi 0, %s222
      %s224 = sphi 0, %s222
      %s225 = sphi 0, %s224
      %s239 = sphi 0, %s225
      %s243 = sphi 0, %s243
      %s245 = sphi 0, %s243
      %s246 = sphi 0, %s245
      %s260 = sphi 0, %s246
      %s264 = sphi 0, %s264
      %s266 = sphi 0, %s264
      %s267 = sphi 0, %s266
      %s281 = sphi 0, %s267
      %s285 = sphi 0, %s285
      %s287 = sphi 0, %s285
      %s288 = sphi 0, %s287
      %s302 = sphi 0, %s288
      %s306 = sphi 0, %s306
      %s308 = sphi 0, %s306
      %s309 = sphi 0, %s308
      %s323 = sphi 0, %s309
      %s327 = sphi 0, %s327
      %s329 = sphi 0, %s327
      %s330 = sphi 0, %s329
      %s344 = sphi 0, %s330
      %s348 = sphi 0, %s348
      %s350 = sphi 0, %s348
      %s351 = sphi 0, %s350
      %s365 = sphi 0, %s351
      %s369 = sphi 0, %s369
      %s371 = sphi 0, %s369
      %s372 = sphi 0, %s371
      %s386 = sphi 0, %s372
      %s390 = sphi 0, %s390
      %s392 = sphi 0, %s390
      %s393 = sphi 0, %s392
      %s407 = sphi 0, %s393
      %s411 = sphi 0, %s411
      %s413 = sphi 0, %s411
      %s414 = sphi 0, %s413
      %s428 = sphi 0, %s414
      %s432 = sphi 0, %s432
      %s434 = sphi 0, %s432
      %s435 = sphi 0, %s434
      %s449 = sphi 0, %s435
      %s453 = sphi 0, %s453
      %s455 = sphi 0, %s453
      %s456 = sphi 0, %s455
      %s470 = sphi 0, %s456
      %s474 = sphi 0, %s474
      %s476 = sphi 0, %s474
      %s477 = sphi 0, %s476
      %s491 = sphi 0, %s477
      %s495 = sphi 0, %s495
      %s497 = sphi 0, %s495
      %s498 = sphi 0, %s497
      %s512 = sphi 0, %s498
      %s516 = sphi 0, %s516
      %s518 = sphi 0, %s516
      %s519 = sphi 0, %s518
      %s533 = sphi 0, %s519
      %s537 = sphi 0, %s537
      %s539 = sphi 0, %s537
      %s540 = sphi 0, %s539
      %s554 = sphi 0, %s540
      %s558 = sphi 0, %s558
      %s560 = sphi 0, %s558
      %s561 = sphi 0, %s560
      %s575 = sphi 0, %s561
      %s579 = sphi 0, %s579
      %s581 = sphi 0, %s579
      %s582 = sphi 0, %s581
      %s596 = sphi 0, %s582
      %s600 = sphi 0, %s600
      %s602 = sphi 0, %s600
      %s603 = sphi 0, %s602
      %s617 = sphi 0, %s603
      %s621 = sphi 0, %s621
      %s623 = sphi 0, %s621
      %s624 = sphi 0, %s623
      %s638 = sphi 0, %s624
      %s642 = sphi 0, %s642
      %s644 = sphi 0, %s642
      %s645 = sphi 0, %s644
      %s659 = sphi 0, %s645
      %s663 = sphi 0, %s663
      %s665 = sphi 0, %s663
      %s666 = sphi 0, %s665
      %s680 = sphi 0, %s666
      %s684 = sphi 0, %s684
      %s686 = sphi 0, %s684
      %s687 = sphi 0, %s686
      %s701 = sphi 0, %s687
      %s707 = sphi 0, %s709
      %s710 = sphi 0, %s707
      %s711 = sphi 0, %s710
      %s727 = sphi 0, %s711
    $region4: #{decoder_layer_forward.1} parent=1 // loop_header_branch
      %71 = sbr.rel (%p69) target = $region8
    $region5: #{decoder_layer_forward.1} parent=1 // loop_body
      %s73 = ssub.s32 %s68, 1
      %s74 = ssub.s32 %s68, 2
      %s75 = sadd.s32 %s68, 1
      %s76 = ssub.s32 %s68, %s75
      %p77 = scmp.eq.s32.totalorder %s76, 0
      %s79 = sadd.s32 %s78, 1
      %s80 = scalar_select %p77, %s78, %s79
      %p83 = pneg %p77
      %p84 = scmp.eq.s32.totalorder %s68, 1
      %p85 = por %p83, %p84
      %p86 = scmp.ne.s32.totalorder %s78, %s81
      %p87 = scmp.eq.s32.totalorder %s68, 0
      %p88 = por %p86, %p87
      %p89 = scmp.ne.s32.totalorder %s78, %s81
      %p90 = scmp.eq.s32.totalorder %s73, 1
      %p91 = por %p89, %p90
      %p92 = scmp.ne.s32.totalorder %s81, %s82
      %p93 = scmp.eq.s32.totalorder %s73, 0
      %p94 = por %p92, %p93
      %p95 = scmp.ne.s32.totalorder %s81, %s82
      %p96 = scmp.eq.s32.totalorder %s74, 1
      %p97 = por %p95, %p96
      %p99 = scmp.ne.s32.totalorder %s82, %s98
      %p100 = scmp.eq.s32.totalorder %s74, 0
      %p101 = por %p99, %p100
      %s102 = ssub.s32 %s68, %s75
      %p103 = scmp.eq.s32.totalorder %s102, 0
      %s105 = sadd.s32 %s104, 1
      %s106 = scalar_select %p103, %s104, %s105
      %p109 = pneg %p103
      %p110 = scmp.eq.s32.totalorder %s68, 1
      %p111 = por %p109, %p110
      %p112 = scmp.ne.s32.totalorder %s104, %s107
      %p113 = scmp.eq.s32.totalorder %s68, 0
      %p114 = por %p112, %p113
      %p115 = scmp.ne.s32.totalorder %s104, %s107
      %p116 = scmp.eq.s32.totalorder %s73, 1
      %p117 = por %p115, %p116
      %p118 = scmp.ne.s32.totalorder %s107, %s108
      %p119 = scmp.eq.s32.totalorder %s73, 0
      %p120 = por %p118, %p119
      %p121 = scmp.ne.s32.totalorder %s107, %s108
      %p122 = scmp.eq.s32.totalorder %s74, 1
      %p123 = por %p121, %p122
      %p125 = scmp.ne.s32.totalorder %s108, %s124
      %p126 = scmp.eq.s32.totalorder %s74, 0
      %p127 = por %p125, %p126
      %s128 = ssub.s32 %s68, %s75
      %p129 = scmp.eq.s32.totalorder %s128, 0
      %s131 = sadd.s32 %s130, 1
      %s132 = scalar_select %p129, %s130, %s131
      %p135 = pneg %p129
      %p136 = scmp.eq.s32.totalorder %s68, 1
      %p137 = por %p135, %p136
      %p138 = scmp.ne.s32.totalorder %s130, %s133
      %p139 = scmp.eq.s32.totalorder %s68, 0
      %p140 = por %p138, %p139
      %p141 = scmp.ne.s32.totalorder %s130, %s133
      %p142 = scmp.eq.s32.totalorder %s73, 1
      %p143 = por %p141, %p142
      %p144 = scmp.ne.s32.totalorder %s133, %s134
      %p145 = scmp.eq.s32.totalorder %s73, 0
      %p146 = por %p144, %p145
      %p147 = scmp.ne.s32.totalorder %s133, %s134
      %p148 = scmp.eq.s32.totalorder %s74, 1
      %p149 = por %p147, %p148
      %p151 = scmp.ne.s32.totalorder %s134, %s150
      %p152 = scmp.eq.s32.totalorder %s74, 0
      %p153 = por %p151, %p152
      %s154 = ssub.s32 %s68, %s75
      %p155 = scmp.eq.s32.totalorder %s154, 0
      %s157 = sadd.s32 %s156, 1
      %s158 = scalar_select %p155, %s156, %s157
      %p161 = pneg %p155
      %p162 = scmp.eq.s32.totalorder %s68, 1
      %p163 = por %p161, %p162
      %p164 = scmp.ne.s32.totalorder %s156, %s159
      %p165 = scmp.eq.s32.totalorder %s68, 0
      %p166 = por %p164, %p165
      %p167 = scmp.ne.s32.totalorder %s156, %s159
      %p168 = scmp.eq.s32.totalorder %s73, 1
      %p169 = por %p167, %p168
      %p170 = scmp.ne.s32.totalorder %s159, %s160
      %p171 = scmp.eq.s32.totalorder %s73, 0
      %p172 = por %p170, %p171
      %p173 = scmp.ne.s32.totalorder %s159, %s160
      %p174 = scmp.eq.s32.totalorder %s74, 1
      %p175 = por %p173, %p174
      %p177 = scmp.ne.s32.totalorder %s160, %s176
      %p178 = scmp.eq.s32.totalorder %s74, 0
      %p179 = por %p177, %p178
      %s181 = sadd.s32 %s180, 1
      %p184 = scmp.eq.s32.totalorder %s68, 1
      %p185 = scmp.ne.s32.totalorder %s180, %s182
      %p186 = scmp.eq.s32.totalorder %s68, 0
      %p187 = por %p185, %p186
      %p188 = scmp.ne.s32.totalorder %s180, %s182
      %p189 = scmp.eq.s32.totalorder %s73, 1
      %p190 = por %p188, %p189
      %p191 = scmp.ne.s32.totalorder %s182, %s183
      %p192 = scmp.eq.s32.totalorder %s73, 0
      %p193 = por %p191, %p192
      %p194 = scmp.ne.s32.totalorder %s182, %s183
      %p195 = scmp.eq.s32.totalorder %s74, 1
      %p196 = por %p194, %p195
      %p198 = scmp.ne.s32.totalorder %s183, %s197
      %p199 = scmp.eq.s32.totalorder %s74, 0
      %p200 = por %p198, %p199
      %s202 = sadd.s32 %s201, 1
      %p205 = scmp.eq.s32.totalorder %s68, 1
      %p206 = scmp.ne.s32.totalorder %s201, %s203
      %p207 = scmp.eq.s32.totalorder %s68, 0
      %p208 = por %p206, %p207
      %p209 = scmp.ne.s32.totalorder %s201, %s203
      %p210 = scmp.eq.s32.totalorder %s73, 1
      %p211 = por %p209, %p210
      %p212 = scmp.ne.s32.totalorder %s203, %s204
      %p213 = scmp.eq.s32.totalorder %s73, 0
      %p214 = por %p212, %p213
      %p215 = scmp.ne.s32.totalorder %s203, %s204
      %p216 = scmp.eq.s32.totalorder %s74, 1
      %p217 = por %p215, %p216
      %p219 = scmp.ne.s32.totalorder %s204, %s218
      %p220 = scmp.eq.s32.totalorder %s74, 0
      %p221 = por %p219, %p220
      %s223 = sadd.s32 %s222, 1
      %p226 = scmp.eq.s32.totalorder %s68, 1
      %p227 = scmp.ne.s32.totalorder %s222, %s224
      %p228 = scmp.eq.s32.totalorder %s68, 0
      %p229 = por %p227, %p228
      %p230 = scmp.ne.s32.totalorder %s222, %s224
      %p231 = scmp.eq.s32.totalorder %s73, 1
      %p232 = por %p230, %p231
      %p233 = scmp.ne.s32.totalorder %s224, %s225
      %p234 = scmp.eq.s32.totalorder %s73, 0
      %p235 = por %p233, %p234
      %p236 = scmp.ne.s32.totalorder %s224, %s225
      %p237 = scmp.eq.s32.totalorder %s74, 1
      %p238 = por %p236, %p237
      %p240 = scmp.ne.s32.totalorder %s225, %s239
      %p241 = scmp.eq.s32.totalorder %s74, 0
      %p242 = por %p240, %p241
      %s244 = sadd.s32 %s243, 1
      %p247 = scmp.eq.s32.totalorder %s68, 1
      %p248 = scmp.ne.s32.totalorder %s243, %s245
      %p249 = scmp.eq.s32.totalorder %s68, 0
      %p250 = por %p248, %p249
      %p251 = scmp.ne.s32.totalorder %s243, %s245
      %p252 = scmp.eq.s32.totalorder %s73, 1
      %p253 = por %p251, %p252
      %p254 = scmp.ne.s32.totalorder %s245, %s246
      %p255 = scmp.eq.s32.totalorder %s73, 0
      %p256 = por %p254, %p255
      %p257 = scmp.ne.s32.totalorder %s245, %s246
      %p258 = scmp.eq.s32.totalorder %s74, 1
      %p259 = por %p257, %p258
      %p261 = scmp.ne.s32.totalorder %s246, %s260
      %p262 = scmp.eq.s32.totalorder %s74, 0
      %p263 = por %p261, %p262
      %s265 = sadd.s32 %s264, 1
      %p268 = scmp.eq.s32.totalorder %s68, 1
      %p269 = scmp.ne.s32.totalorder %s264, %s266
      %p270 = scmp.eq.s32.totalorder %s68, 0
      %p271 = por %p269, %p270
      %p272 = scmp.ne.s32.totalorder %s264, %s266
      %p273 = scmp.eq.s32.totalorder %s73, 1
      %p274 = por %p272, %p273
      %p275 = scmp.ne.s32.totalorder %s266, %s267
      %p276 = scmp.eq.s32.totalorder %s73, 0
      %p277 = por %p275, %p276
      %p278 = scmp.ne.s32.totalorder %s266, %s267
      %p279 = scmp.eq.s32.totalorder %s74, 1
      %p280 = por %p278, %p279
      %p282 = scmp.ne.s32.totalorder %s267, %s281
      %p283 = scmp.eq.s32.totalorder %s74, 0
      %p284 = por %p282, %p283
      %s286 = sadd.s32 %s285, 1
      %p289 = scmp.eq.s32.totalorder %s68, 1
      %p290 = scmp.ne.s32.totalorder %s285, %s287
      %p291 = scmp.eq.s32.totalorder %s68, 0
      %p292 = por %p290, %p291
      %p293 = scmp.ne.s32.totalorder %s285, %s287
      %p294 = scmp.eq.s32.totalorder %s73, 1
      %p295 = por %p293, %p294
      %p296 = scmp.ne.s32.totalorder %s287, %s288
      %p297 = scmp.eq.s32.totalorder %s73, 0
      %p298 = por %p296, %p297
      %p299 = scmp.ne.s32.totalorder %s287, %s288
      %p300 = scmp.eq.s32.totalorder %s74, 1
      %p301 = por %p299, %p300
      %p303 = scmp.ne.s32.totalorder %s288, %s302
      %p304 = scmp.eq.s32.totalorder %s74, 0
      %p305 = por %p303, %p304
      %s307 = sadd.s32 %s306, 1
      %p310 = scmp.eq.s32.totalorder %s68, 1
      %p311 = scmp.ne.s32.totalorder %s306, %s308
      %p312 = scmp.eq.s32.totalorder %s68, 0
      %p313 = por %p311, %p312
      %p314 = scmp.ne.s32.totalorder %s306, %s308
      %p315 = scmp.eq.s32.totalorder %s73, 1
      %p316 = por %p314, %p315
      %p317 = scmp.ne.s32.totalorder %s308, %s309
      %p318 = scmp.eq.s32.totalorder %s73, 0
      %p319 = por %p317, %p318
      %p320 = scmp.ne.s32.totalorder %s308, %s309
      %p321 = scmp.eq.s32.totalorder %s74, 1
      %p322 = por %p320, %p321
      %p324 = scmp.ne.s32.totalorder %s309, %s323
      %p325 = scmp.eq.s32.totalorder %s74, 0
      %p326 = por %p324, %p325
      %s328 = sadd.s32 %s327, 1
      %p331 = scmp.eq.s32.totalorder %s68, 1
      %p332 = scmp.ne.s32.totalorder %s327, %s329
      %p333 = scmp.eq.s32.totalorder %s68, 0
      %p334 = por %p332, %p333
      %p335 = scmp.ne.s32.totalorder %s327, %s329
      %p336 = scmp.eq.s32.totalorder %s73, 1
      %p337 = por %p335, %p336
      %p338 = scmp.ne.s32.totalorder %s329, %s330
      %p339 = scmp.eq.s32.totalorder %s73, 0
      %p340 = por %p338, %p339
      %p341 = scmp.ne.s32.totalorder %s329, %s330
      %p342 = scmp.eq.s32.totalorder %s74, 1
      %p343 = por %p341, %p342
      %p345 = scmp.ne.s32.totalorder %s330, %s344
      %p346 = scmp.eq.s32.totalorder %s74, 0
      %p347 = por %p345, %p346
      %s349 = sadd.s32 %s348, 1
      %p352 = scmp.eq.s32.totalorder %s68, 1
      %p353 = scmp.ne.s32.totalorder %s348, %s350
      %p354 = scmp.eq.s32.totalorder %s68, 0
      %p355 = por %p353, %p354
      %p356 = scmp.ne.s32.totalorder %s348, %s350
      %p357 = scmp.eq.s32.totalorder %s73, 1
      %p358 = por %p356, %p357
      %p359 = scmp.ne.s32.totalorder %s350, %s351
      %p360 = scmp.eq.s32.totalorder %s73, 0
      %p361 = por %p359, %p360
      %p362 = scmp.ne.s32.totalorder %s350, %s351
      %p363 = scmp.eq.s32.totalorder %s74, 1
      %p364 = por %p362, %p363
      %p366 = scmp.ne.s32.totalorder %s351, %s365
      %p367 = scmp.eq.s32.totalorder %s74, 0
      %p368 = por %p366, %p367
      %s370 = sadd.s32 %s369, 1
      %p373 = scmp.eq.s32.totalorder %s68, 1
      %p374 = scmp.ne.s32.totalorder %s369, %s371
      %p375 = scmp.eq.s32.totalorder %s68, 0
      %p376 = por %p374, %p375
      %p377 = scmp.ne.s32.totalorder %s369, %s371
      %p378 = scmp.eq.s32.totalorder %s73, 1
      %p379 = por %p377, %p378
      %p380 = scmp.ne.s32.totalorder %s371, %s372
      %p381 = scmp.eq.s32.totalorder %s73, 0
      %p382 = por %p380, %p381
      %p383 = scmp.ne.s32.totalorder %s371, %s372
      %p384 = scmp.eq.s32.totalorder %s74, 1
      %p385 = por %p383, %p384
      %p387 = scmp.ne.s32.totalorder %s372, %s386
      %p388 = scmp.eq.s32.totalorder %s74, 0
      %p389 = por %p387, %p388
      %s391 = sadd.s32 %s390, 1
      %p394 = scmp.eq.s32.totalorder %s68, 1
      %p395 = scmp.ne.s32.totalorder %s390, %s392
      %p396 = scmp.eq.s32.totalorder %s68, 0
      %p397 = por %p395, %p396
      %p398 = scmp.ne.s32.totalorder %s390, %s392
      %p399 = scmp.eq.s32.totalorder %s73, 1
      %p400 = por %p398, %p399
      %p401 = scmp.ne.s32.totalorder %s392, %s393
      %p402 = scmp.eq.s32.totalorder %s73, 0
      %p403 = por %p401, %p402
      %p404 = scmp.ne.s32.totalorder %s392, %s393
      %p405 = scmp.eq.s32.totalorder %s74, 1
      %p406 = por %p404, %p405
      %p408 = scmp.ne.s32.totalorder %s393, %s407
      %p409 = scmp.eq.s32.totalorder %s74, 0
      %p410 = por %p408, %p409
      %s412 = sadd.s32 %s411, 1
      %p415 = scmp.eq.s32.totalorder %s68, 1
      %p416 = scmp.ne.s32.totalorder %s411, %s413
      %p417 = scmp.eq.s32.totalorder %s68, 0
      %p418 = por %p416, %p417
      %p419 = scmp.ne.s32.totalorder %s411, %s413
      %p420 = scmp.eq.s32.totalorder %s73, 1
      %p421 = por %p419, %p420
      %p422 = scmp.ne.s32.totalorder %s413, %s414
      %p423 = scmp.eq.s32.totalorder %s73, 0
      %p424 = por %p422, %p423
      %p425 = scmp.ne.s32.totalorder %s413, %s414
      %p426 = scmp.eq.s32.totalorder %s74, 1
      %p427 = por %p425, %p426
      %p429 = scmp.ne.s32.totalorder %s414, %s428
      %p430 = scmp.eq.s32.totalorder %s74, 0
      %p431 = por %p429, %p430
      %s433 = sadd.s32 %s432, 1
      %p436 = scmp.eq.s32.totalorder %s68, 1
      %p437 = scmp.ne.s32.totalorder %s432, %s434
      %p438 = scmp.eq.s32.totalorder %s68, 0
      %p439 = por %p437, %p438
      %p440 = scmp.ne.s32.totalorder %s432, %s434
      %p441 = scmp.eq.s32.totalorder %s73, 1
      %p442 = por %p440, %p441
      %p443 = scmp.ne.s32.totalorder %s434, %s435
      %p444 = scmp.eq.s32.totalorder %s73, 0
      %p445 = por %p443, %p444
      %p446 = scmp.ne.s32.totalorder %s434, %s435
      %p447 = scmp.eq.s32.totalorder %s74, 1
      %p448 = por %p446, %p447
      %p450 = scmp.ne.s32.totalorder %s435, %s449
      %p451 = scmp.eq.s32.totalorder %s74, 0
      %p452 = por %p450, %p451
      %s454 = sadd.s32 %s453, 1
      %p457 = scmp.eq.s32.totalorder %s68, 1
      %p458 = scmp.ne.s32.totalorder %s453, %s455
      %p459 = scmp.eq.s32.totalorder %s68, 0
      %p460 = por %p458, %p459
      %p461 = scmp.ne.s32.totalorder %s453, %s455
      %p462 = scmp.eq.s32.totalorder %s73, 1
      %p463 = por %p461, %p462
      %p464 = scmp.ne.s32.totalorder %s455, %s456
      %p465 = scmp.eq.s32.totalorder %s73, 0
      %p466 = por %p464, %p465
      %p467 = scmp.ne.s32.totalorder %s455, %s456
      %p468 = scmp.eq.s32.totalorder %s74, 1
      %p469 = por %p467, %p468
      %p471 = scmp.ne.s32.totalorder %s456, %s470
      %p472 = scmp.eq.s32.totalorder %s74, 0
      %p473 = por %p471, %p472
      %s475 = sadd.s32 %s474, 1
      %p478 = scmp.eq.s32.totalorder %s68, 1
      %p479 = scmp.ne.s32.totalorder %s474, %s476
      %p480 = scmp.eq.s32.totalorder %s68, 0
      %p481 = por %p479, %p480
      %p482 = scmp.ne.s32.totalorder %s474, %s476
      %p483 = scmp.eq.s32.totalorder %s73, 1
      %p484 = por %p482, %p483
      %p485 = scmp.ne.s32.totalorder %s476, %s477
      %p486 = scmp.eq.s32.totalorder %s73, 0
      %p487 = por %p485, %p486
      %p488 = scmp.ne.s32.totalorder %s476, %s477
      %p489 = scmp.eq.s32.totalorder %s74, 1
      %p490 = por %p488, %p489
      %p492 = scmp.ne.s32.totalorder %s477, %s491
      %p493 = scmp.eq.s32.totalorder %s74, 0
      %p494 = por %p492, %p493
      %s496 = sadd.s32 %s495, 1
      %p499 = scmp.eq.s32.totalorder %s68, 1
      %p500 = scmp.ne.s32.totalorder %s495, %s497
      %p501 = scmp.eq.s32.totalorder %s68, 0
      %p502 = por %p500, %p501
      %p503 = scmp.ne.s32.totalorder %s495, %s497
      %p504 = scmp.eq.s32.totalorder %s73, 1
      %p505 = por %p503, %p504
      %p506 = scmp.ne.s32.totalorder %s497, %s498
      %p507 = scmp.eq.s32.totalorder %s73, 0
      %p508 = por %p506, %p507
      %p509 = scmp.ne.s32.totalorder %s497, %s498
      %p510 = scmp.eq.s32.totalorder %s74, 1
      %p511 = por %p509, %p510
      %p513 = scmp.ne.s32.totalorder %s498, %s512
      %p514 = scmp.eq.s32.totalorder %s74, 0
      %p515 = por %p513, %p514
      %s517 = sadd.s32 %s516, 1
      %p520 = scmp.eq.s32.totalorder %s68, 1
      %p521 = scmp.ne.s32.totalorder %s516, %s518
      %p522 = scmp.eq.s32.totalorder %s68, 0
      %p523 = por %p521, %p522
      %p524 = scmp.ne.s32.totalorder %s516, %s518
      %p525 = scmp.eq.s32.totalorder %s73, 1
      %p526 = por %p524, %p525
      %p527 = scmp.ne.s32.totalorder %s518, %s519
      %p528 = scmp.eq.s32.totalorder %s73, 0
      %p529 = por %p527, %p528
      %p530 = scmp.ne.s32.totalorder %s518, %s519
      %p531 = scmp.eq.s32.totalorder %s74, 1
      %p532 = por %p530, %p531
      %p534 = scmp.ne.s32.totalorder %s519, %s533
      %p535 = scmp.eq.s32.totalorder %s74, 0
      %p536 = por %p534, %p535
      %s538 = sadd.s32 %s537, 1
      %p541 = scmp.eq.s32.totalorder %s68, 1
      %p542 = scmp.ne.s32.totalorder %s537, %s539
      %p543 = scmp.eq.s32.totalorder %s68, 0
      %p544 = por %p542, %p543
      %p545 = scmp.ne.s32.totalorder %s537, %s539
      %p546 = scmp.eq.s32.totalorder %s73, 1
      %p547 = por %p545, %p546
      %p548 = scmp.ne.s32.totalorder %s539, %s540
      %p549 = scmp.eq.s32.totalorder %s73, 0
      %p550 = por %p548, %p549
      %p551 = scmp.ne.s32.totalorder %s539, %s540
      %p552 = scmp.eq.s32.totalorder %s74, 1
      %p553 = por %p551, %p552
      %p555 = scmp.ne.s32.totalorder %s540, %s554
      %p556 = scmp.eq.s32.totalorder %s74, 0
      %p557 = por %p555, %p556
      %s559 = sadd.s32 %s558, 1
      %p562 = scmp.eq.s32.totalorder %s68, 1
      %p563 = scmp.ne.s32.totalorder %s558, %s560
      %p564 = scmp.eq.s32.totalorder %s68, 0
      %p565 = por %p563, %p564
      %p566 = scmp.ne.s32.totalorder %s558, %s560
      %p567 = scmp.eq.s32.totalorder %s73, 1
      %p568 = por %p566, %p567
      %p569 = scmp.ne.s32.totalorder %s560, %s561
      %p570 = scmp.eq.s32.totalorder %s73, 0
      %p571 = por %p569, %p570
      %p572 = scmp.ne.s32.totalorder %s560, %s561
      %p573 = scmp.eq.s32.totalorder %s74, 1
      %p574 = por %p572, %p573
      %p576 = scmp.ne.s32.totalorder %s561, %s575
      %p577 = scmp.eq.s32.totalorder %s74, 0
      %p578 = por %p576, %p577
      %s580 = sadd.s32 %s579, 1
      %p583 = scmp.eq.s32.totalorder %s68, 1
      %p584 = scmp.ne.s32.totalorder %s579, %s581
      %p585 = scmp.eq.s32.totalorder %s68, 0
      %p586 = por %p584, %p585
      %p587 = scmp.ne.s32.totalorder %s579, %s581
      %p588 = scmp.eq.s32.totalorder %s73, 1
      %p589 = por %p587, %p588
      %p590 = scmp.ne.s32.totalorder %s581, %s582
      %p591 = scmp.eq.s32.totalorder %s73, 0
      %p592 = por %p590, %p591
      %p593 = scmp.ne.s32.totalorder %s581, %s582
      %p594 = scmp.eq.s32.totalorder %s74, 1
      %p595 = por %p593, %p594
      %p597 = scmp.ne.s32.totalorder %s582, %s596
      %p598 = scmp.eq.s32.totalorder %s74, 0
      %p599 = por %p597, %p598
      %s601 = sadd.s32 %s600, 1
      %p604 = scmp.eq.s32.totalorder %s68, 1
      %p605 = scmp.ne.s32.totalorder %s600, %s602
      %p606 = scmp.eq.s32.totalorder %s68, 0
      %p607 = por %p605, %p606
      %p608 = scmp.ne.s32.totalorder %s600, %s602
      %p609 = scmp.eq.s32.totalorder %s73, 1
      %p610 = por %p608, %p609
      %p611 = scmp.ne.s32.totalorder %s602, %s603
      %p612 = scmp.eq.s32.totalorder %s73, 0
      %p613 = por %p611, %p612
      %p614 = scmp.ne.s32.totalorder %s602, %s603
      %p615 = scmp.eq.s32.totalorder %s74, 1
      %p616 = por %p614, %p615
      %p618 = scmp.ne.s32.totalorder %s603, %s617
      %p619 = scmp.eq.s32.totalorder %s74, 0
      %p620 = por %p618, %p619
      %s622 = sadd.s32 %s621, 1
      %p625 = scmp.eq.s32.totalorder %s68, 1
      %p626 = scmp.ne.s32.totalorder %s621, %s623
      %p627 = scmp.eq.s32.totalorder %s68, 0
      %p628 = por %p626, %p627
      %p629 = scmp.ne.s32.totalorder %s621, %s623
      %p630 = scmp.eq.s32.totalorder %s73, 1
      %p631 = por %p629, %p630
      %p632 = scmp.ne.s32.totalorder %s623, %s624
      %p633 = scmp.eq.s32.totalorder %s73, 0
      %p634 = por %p632, %p633
      %p635 = scmp.ne.s32.totalorder %s623, %s624
      %p636 = scmp.eq.s32.totalorder %s74, 1
      %p637 = por %p635, %p636
      %p639 = scmp.ne.s32.totalorder %s624, %s638
      %p640 = scmp.eq.s32.totalorder %s74, 0
      %p641 = por %p639, %p640
      %s643 = sadd.s32 %s642, 1
      %p646 = scmp.eq.s32.totalorder %s68, 1
      %p647 = scmp.ne.s32.totalorder %s642, %s644
      %p648 = scmp.eq.s32.totalorder %s68, 0
      %p649 = por %p647, %p648
      %p650 = scmp.ne.s32.totalorder %s642, %s644
      %p651 = scmp.eq.s32.totalorder %s73, 1
      %p652 = por %p650, %p651
      %p653 = scmp.ne.s32.totalorder %s644, %s645
      %p654 = scmp.eq.s32.totalorder %s73, 0
      %p655 = por %p653, %p654
      %p656 = scmp.ne.s32.totalorder %s644, %s645
      %p657 = scmp.eq.s32.totalorder %s74, 1
      %p658 = por %p656, %p657
      %p660 = scmp.ne.s32.totalorder %s645, %s659
      %p661 = scmp.eq.s32.totalorder %s74, 0
      %p662 = por %p660, %p661
      %s664 = sadd.s32 %s663, 1
      %p667 = scmp.eq.s32.totalorder %s68, 1
      %p668 = scmp.ne.s32.totalorder %s663, %s665
      %p669 = scmp.eq.s32.totalorder %s68, 0
      %p670 = por %p668, %p669
      %p671 = scmp.ne.s32.totalorder %s663, %s665
      %p672 = scmp.eq.s32.totalorder %s73, 1
      %p673 = por %p671, %p672
      %p674 = scmp.ne.s32.totalorder %s665, %s666
      %p675 = scmp.eq.s32.totalorder %s73, 0
      %p676 = por %p674, %p675
      %p677 = scmp.ne.s32.totalorder %s665, %s666
      %p678 = scmp.eq.s32.totalorder %s74, 1
      %p679 = por %p677, %p678
      %p681 = scmp.ne.s32.totalorder %s666, %s680
      %p682 = scmp.eq.s32.totalorder %s74, 0
      %p683 = por %p681, %p682
      %s685 = sadd.s32 %s684, 1
      %p688 = scmp.eq.s32.totalorder %s68, 1
      %p689 = scmp.ne.s32.totalorder %s684, %s686
      %p690 = scmp.eq.s32.totalorder %s68, 0
      %p691 = por %p689, %p690
      %p692 = scmp.ne.s32.totalorder %s684, %s686
      %p693 = scmp.eq.s32.totalorder %s73, 1
      %p694 = por %p692, %p693
      %p695 = scmp.ne.s32.totalorder %s686, %s687
      %p696 = scmp.eq.s32.totalorder %s73, 0
      %p697 = por %p695, %p696
      %p698 = scmp.ne.s32.totalorder %s686, %s687
      %p699 = scmp.eq.s32.totalorder %s74, 1
      %p700 = por %p698, %p699
      %p702 = scmp.ne.s32.totalorder %s687, %s701
      %p703 = scmp.eq.s32.totalorder %s74, 0
      %p704 = por %p702, %p703
      %s705 = ssub.s32 %s68, %s75
      %p706 = scmp.eq.s32.totalorder %s705, 0
      %s708 = sadd.s32 %s707, 1
      %s709 = scalar_select %p706, %s707, %s708
      %p712 = pneg %p706
      %p713 = scmp.eq.s32.totalorder %s68, 1
      %p714 = por %p712, %p713
      %p715 = scmp.ne.s32.totalorder %s707, %s710
      %p716 = scmp.eq.s32.totalorder %s68, 0
      %p717 = por %p715, %p716
      %p718 = scmp.ne.s32.totalorder %s707, %s710
      %p719 = scmp.eq.s32.totalorder %s73, 1
      %p720 = por %p718, %p719
      %p721 = scmp.ne.s32.totalorder %s710, %s711
      %p722 = scmp.eq.s32.totalorder %s73, 0
      %p723 = por %p721, %p722
      %p724 = scmp.ne.s32.totalorder %s710, %s711
      %p725 = scmp.eq.s32.totalorder %s74, 1
      %p726 = por %p724, %p725
      %p728 = scmp.ne.s32.totalorder %s711, %s727
      %p729 = scmp.eq.s32.totalorder %s74, 0
      %p730 = por %p728, %p729
      %p731 = scmp.le.s32.totalorder 1, %s68
      %p732 = scmp.lt.s32.totalorder %s68, 3
      %p733 = pnand %p731, %p732
      %p734 = pneg %p733
      // Predicated region
      $region9: #{decoder_layer_forward.1} parent=5 // pred_check
        _
      $region10: #{decoder_layer_forward.1} parent=5 // pred_check_branch
        %736 = sbr.rel (%p733) target = $region12
      $region11: #{decoder_layer_forward.1} parent=5 // pred_region
        %s737 = ssub.s32 %s68, 1
        // Predicated region
        $region13: #{decoder_layer_forward.1} parent=11 // pred_check
          %p738 = pneg %p193
        $region14: #{decoder_layer_forward.1} parent=11 // pred_check_branch
          %740 = sbr.rel (%p738) target = $region16
        $region15: #{decoder_layer_forward.1} parent=11 // pred_region
          _
        $region16: #{decoder_layer_forward.1} parent=11 // pred_fallthru
          _
        // Predicated region
        $region17: #{decoder_layer_forward.1} parent=11 // pred_check
          %p741 = pneg %p214
        $region18: #{decoder_layer_forward.1} parent=11 // pred_check_branch
          %743 = sbr.rel (%p741) target = $region20
        $region19: #{decoder_layer_forward.1} parent=11 // pred_region
          _
        $region20: #{decoder_layer_forward.1} parent=11 // pred_fallthru
          _
        // Predicated region
        $region21: #{decoder_layer_forward.1} parent=11 // pred_check
          %p744 = pneg %p235
        $region22: #{decoder_layer_forward.1} parent=11 // pred_check_branch
          %746 = sbr.rel (%p744) target = $region24
        $region23: #{decoder_layer_forward.1} parent=11 // pred_region
          _
        $region24: #{decoder_layer_forward.1} parent=11 // pred_fallthru
          _
        // Predicated region
        $region25: #{decoder_layer_forward.1} parent=11 // pred_check
          %p747 = pneg %p256
        $region26: #{decoder_layer_forward.1} parent=11 // pred_check_branch
          %749 = sbr.rel (%p747) target = $region28
        $region27: #{decoder_layer_forward.1} parent=11 // pred_region
          _
        $region28: #{decoder_layer_forward.1} parent=11 // pred_fallthru
          _
        // Predicated region
        $region29: #{decoder_layer_forward.1} parent=11 // pred_check
          %p750 = pneg %p277
        $region30: #{decoder_layer_forward.1} parent=11 // pred_check_branch
          %752 = sbr.rel (%p750) target = $region32
        $region31: #{decoder_layer_forward.1} parent=11 // pred_region
          _
        $region32: #{decoder_layer_forward.1} parent=11 // pred_fallthru
          _
        // Predicated region
        $region33: #{decoder_layer_forward.1} parent=11 // pred_check
          %p753 = pneg %p298
        $region34: #{decoder_layer_forward.1} parent=11 // pred_check_branch
          %755 = sbr.rel (%p753) target = $region36
        $region35: #{decoder_layer_forward.1} parent=11 // pred_region
          _
        $region36: #{decoder_layer_forward.1} parent=11 // pred_fallthru
          _
        // Predicated region
        $region37: #{decoder_layer_forward.1} parent=11 // pred_check
          %p756 = pneg %p319
        $region38: #{decoder_layer_forward.1} parent=11 // pred_check_branch
          %758 = sbr.rel (%p756) target = $region40
        $region39: #{decoder_layer_forward.1} parent=11 // pred_region
          _
        $region40: #{decoder_layer_forward.1} parent=11 // pred_fallthru
          _
        // Predicated region
        $region41: #{decoder_layer_forward.1} parent=11 // pred_check
          %p759 = pneg %p340
        $region42: #{decoder_layer_forward.1} parent=11 // pred_check_branch
          %761 = sbr.rel (%p759) target = $region44
        $region43: #{decoder_layer_forward.1} parent=11 // pred_region
          _
        $region44: #{decoder_layer_forward.1} parent=11 // pred_fallthru
          _
        // Predicated region
        $region45: #{decoder_layer_forward.1} parent=11 // pred_check
          %p762 = pneg %p361
        $region46: #{decoder_layer_forward.1} parent=11 // pred_check_branch
          %764 = sbr.rel (%p762) target = $region48
        $region47: #{decoder_layer_forward.1} parent=11 // pred_region
          _
        $region48: #{decoder_layer_forward.1} parent=11 // pred_fallthru
          _
        // Predicated region
        $region49: #{decoder_layer_forward.1} parent=11 // pred_check
          %p765 = pneg %p382
        $region50: #{decoder_layer_forward.1} parent=11 // pred_check_branch
          %767 = sbr.rel (%p765) target = $region52
        $region51: #{decoder_layer_forward.1} parent=11 // pred_region
          _
        $region52: #{decoder_layer_forward.1} parent=11 // pred_fallthru
          _
        // Predicated region
        $region53: #{decoder_layer_forward.1} parent=11 // pred_check
          %p768 = pneg %p403
        $region54: #{decoder_layer_forward.1} parent=11 // pred_check_branch
          %770 = sbr.rel (%p768) target = $region56
        $region55: #{decoder_layer_forward.1} parent=11 // pred_region
          _
        $region56: #{decoder_layer_forward.1} parent=11 // pred_fallthru
          _
        // Predicated region
        $region57: #{decoder_layer_forward.1} parent=11 // pred_check
          %p771 = pneg %p424
        $region58: #{decoder_layer_forward.1} parent=11 // pred_check_branch
          %773 = sbr.rel (%p771) target = $region60
        $region59: #{decoder_layer_forward.1} parent=11 // pred_region
          _
        $region60: #{decoder_layer_forward.1} parent=11 // pred_fallthru
          _
        // Predicated region
        $region61: #{decoder_layer_forward.1} parent=11 // pred_check
          %p774 = pneg %p445
        $region62: #{decoder_layer_forward.1} parent=11 // pred_check_branch
          %776 = sbr.rel (%p774) target = $region64
        $region63: #{decoder_layer_forward.1} parent=11 // pred_region
          _
        $region64: #{decoder_layer_forward.1} parent=11 // pred_fallthru
          _
        // Predicated region
        $region65: #{decoder_layer_forward.1} parent=11 // pred_check
          %p777 = pneg %p466
        $region66: #{decoder_layer_forward.1} parent=11 // pred_check_branch
          %779 = sbr.rel (%p777) target = $region68
        $region67: #{decoder_layer_forward.1} parent=11 // pred_region
          _
        $region68: #{decoder_layer_forward.1} parent=11 // pred_fallthru
          _
        // Predicated region
        $region69: #{decoder_layer_forward.1} parent=11 // pred_check
          %p780 = pneg %p487
        $region70: #{decoder_layer_forward.1} parent=11 // pred_check_branch
          %782 = sbr.rel (%p780) target = $region72
        $region71: #{decoder_layer_forward.1} parent=11 // pred_region
          _
        $region72: #{decoder_layer_forward.1} parent=11 // pred_fallthru
          _
        // Predicated region
        $region73: #{decoder_layer_forward.1} parent=11 // pred_check
          %p783 = pneg %p508
        $region74: #{decoder_layer_forward.1} parent=11 // pred_check_branch
          %785 = sbr.rel (%p783) target = $region76
        $region75: #{decoder_layer_forward.1} parent=11 // pred_region
          _
        $region76: #{decoder_layer_forward.1} parent=11 // pred_fallthru
          _
        // Predicated region
        $region77: #{decoder_layer_forward.1} parent=11 // pred_check
          %p786 = pneg %p529
        $region78: #{decoder_layer_forward.1} parent=11 // pred_check_branch
          %788 = sbr.rel (%p786) target = $region80
        $region79: #{decoder_layer_forward.1} parent=11 // pred_region
          _
        $region80: #{decoder_layer_forward.1} parent=11 // pred_fallthru
          _
        // Predicated region
        $region81: #{decoder_layer_forward.1} parent=11 // pred_check
          %p789 = pneg %p550
        $region82: #{decoder_layer_forward.1} parent=11 // pred_check_branch
          %791 = sbr.rel (%p789) target = $region84
        $region83: #{decoder_layer_forward.1} parent=11 // pred_region
          _
        $region84: #{decoder_layer_forward.1} parent=11 // pred_fallthru
          _
        // Predicated region
        $region85: #{decoder_layer_forward.1} parent=11 // pred_check
          %p792 = pneg %p571
        $region86: #{decoder_layer_forward.1} parent=11 // pred_check_branch
          %794 = sbr.rel (%p792) target = $region88
        $region87: #{decoder_layer_forward.1} parent=11 // pred_region
          _
        $region88: #{decoder_layer_forward.1} parent=11 // pred_fallthru
          _
        // Predicated region
        $region89: #{decoder_layer_forward.1} parent=11 // pred_check
          %p795 = pneg %p592
        $region90: #{decoder_layer_forward.1} parent=11 // pred_check_branch
          %797 = sbr.rel (%p795) target = $region92
        $region91: #{decoder_layer_forward.1} parent=11 // pred_region
          _
        $region92: #{decoder_layer_forward.1} parent=11 // pred_fallthru
          _
        // Predicated region
        $region93: #{decoder_layer_forward.1} parent=11 // pred_check
          %p798 = pneg %p613
        $region94: #{decoder_layer_forward.1} parent=11 // pred_check_branch
          %800 = sbr.rel (%p798) target = $region96
        $region95: #{decoder_layer_forward.1} parent=11 // pred_region
          _
        $region96: #{decoder_layer_forward.1} parent=11 // pred_fallthru
          _
        // Predicated region
        $region97: #{decoder_layer_forward.1} parent=11 // pred_check
          %p801 = pneg %p634
        $region98: #{decoder_layer_forward.1} parent=11 // pred_check_branch
          %803 = sbr.rel (%p801) target = $region100
        $region99: #{decoder_layer_forward.1} parent=11 // pred_region
          _
        $region100: #{decoder_layer_forward.1} parent=11 // pred_fallthru
          _
        // Predicated region
        $region101: #{decoder_layer_forward.1} parent=11 // pred_check
          %p804 = pneg %p655
        $region102: #{decoder_layer_forward.1} parent=11 // pred_check_branch
          %806 = sbr.rel (%p804) target = $region104
        $region103: #{decoder_layer_forward.1} parent=11 // pred_region
          _
        $region104: #{decoder_layer_forward.1} parent=11 // pred_fallthru
          _
        // Predicated region
        $region105: #{decoder_layer_forward.1} parent=11 // pred_check
          %p807 = pneg %p676
        $region106: #{decoder_layer_forward.1} parent=11 // pred_check_branch
          %809 = sbr.rel (%p807) target = $region108
        $region107: #{decoder_layer_forward.1} parent=11 // pred_region
          _
        $region108: #{decoder_layer_forward.1} parent=11 // pred_fallthru
          _
        // Predicated region
        $region109: #{decoder_layer_forward.1} parent=11 // pred_check
          %p810 = pneg %p697
        $region110: #{decoder_layer_forward.1} parent=11 // pred_check_branch
          %812 = sbr.rel (%p810) target = $region112
        $region111: #{decoder_layer_forward.1} parent=11 // pred_region
          _
        $region112: #{decoder_layer_forward.1} parent=11 // pred_fallthru
          _
      $region12: #{decoder_layer_forward.1} parent=5 // pred_fallthru
        _
      %p813 = scmp.lt.s32.totalorder %s68, 2
      // Predicated region
      $region113: #{decoder_layer_forward.1} parent=5 // pred_check
        %p814 = pneg %p813
      $region114: #{decoder_layer_forward.1} parent=5 // pred_check_branch
        %816 = sbr.rel (%p814) target = $region116
      $region115: #{decoder_layer_forward.1} parent=5 // pred_region
        // Predicated region
        $region117: #{decoder_layer_forward.1} parent=115 // pred_check
          %p817 = pneg %p88
        $region118: #{decoder_layer_forward.1} parent=115 // pred_check_branch
          %819 = sbr.rel (%p817) target = $region120
        $region119: #{decoder_layer_forward.1} parent=115 // pred_region
          %p820 = scmp.lt.s32.totalorder %s68, 1
          %s821 = scalar_select %p820, %s68, 1
          %s822 = smul.addr %s821, 8
          %s823 = scalar_lea.vmem %s1, %s822
        $region120: #{decoder_layer_forward.1} parent=115 // pred_fallthru
          _
        // Predicated region
        $region121: #{decoder_layer_forward.1} parent=115 // pred_check
          %p824 = pneg %p114
        $region122: #{decoder_layer_forward.1} parent=115 // pred_check_branch
          %826 = sbr.rel (%p824) target = $region124
        $region123: #{decoder_layer_forward.1} parent=115 // pred_region
          %p827 = scmp.lt.s32.totalorder %s68, 1
          %s828 = scalar_select %p827, %s68, 1
          %s829 = smul.addr %s828, 11
          %s830 = smul.addr %s829, 4
          %s831 = scalar_lea.vmem %s3, %s830
        $region124: #{decoder_layer_forward.1} parent=115 // pred_fallthru
          _
        // Predicated region
        $region125: #{decoder_layer_forward.1} parent=115 // pred_check
          %p832 = pneg %p140
        $region126: #{decoder_layer_forward.1} parent=115 // pred_check_branch
          %834 = sbr.rel (%p832) target = $region128
        $region127: #{decoder_layer_forward.1} parent=115 // pred_region
          %p835 = scmp.lt.s32.totalorder %s68, 1
          %s836 = scalar_select %p835, %s68, 1
          %s837 = smul.addr %s836, 8
          %s838 = scalar_lea.vmem %s5, %s837
        $region128: #{decoder_layer_forward.1} parent=115 // pred_fallthru
          _
        // Predicated region
        $region129: #{decoder_layer_forward.1} parent=115 // pred_check
          %p839 = pneg %p166
        $region130: #{decoder_layer_forward.1} parent=115 // pred_check_branch
          %841 = sbr.rel (%p839) target = $region132
        $region131: #{decoder_layer_forward.1} parent=115 // pred_region
          %p842 = scmp.lt.s32.totalorder %s68, 1
          %s843 = scalar_select %p842, %s68, 1
          %s844 = smul.addr %s843, 8
          %s845 = scalar_lea.vmem %s7, %s844
        $region132: #{decoder_layer_forward.1} parent=115 // pred_fallthru
          _
      $region116: #{decoder_layer_forward.1} parent=5 // pred_fallthru
        _
      %p846 = scmp.le.s32.totalorder 1, %s68
      %p847 = scmp.lt.s32.totalorder %s68, 3
      %p848 = pnand %p846, %p847
      %p849 = pneg %p848
      // Predicated region
      $region133: #{decoder_layer_forward.1} parent=5 // pred_check
        _
      $region134: #{decoder_layer_forward.1} parent=5 // pred_check_branch
        %851 = sbr.rel (%p848) target = $region136
      $region135: #{decoder_layer_forward.1} parent=5 // pred_region
        %s852 = ssub.s32 %s68, 1
        %p853 = scmp.lt.s32.totalorder %s73, 1
        %s854 = scalar_select %p853, %s73, 1
        %s855 = smul.addr %s854, 8
        %s856 = scalar_lea.vmem %s1, %s855
        %p857 = pneg %p94
        %p858 = pneg %p91
        %p859 = scmp.lt.s32.totalorder %s73, 1
        %s860 = scalar_select %p859, %s73, 1
        %s861 = smul.addr %s860, 11
        %s862 = smul.addr %s861, 4
        %s863 = scalar_lea.vmem %s3, %s862
        %p864 = pneg %p120
        %p865 = pneg %p117
        %p866 = scmp.lt.s32.totalorder %s73, 1
        %s867 = scalar_select %p866, %s73, 1
        %s868 = smul.addr %s867, 8
        %s869 = scalar_lea.vmem %s5, %s868
        %p870 = pneg %p146
        %p871 = pneg %p143
        %p872 = scmp.lt.s32.totalorder %s73, 1
        %s873 = scalar_select %p872, %s73, 1
        %s874 = smul.addr %s873, 8
        %s875 = scalar_lea.vmem %s7, %s874
        %p876 = pneg %p172
        %p877 = pneg %p169
        %p878 = pneg %p193
        %p879 = pneg %p190
        %p880 = pneg %p214
        %p881 = pneg %p211
        %p882 = pneg %p235
        %p883 = pneg %p232
        %p884 = pneg %p256
        %p885 = pneg %p253
        %p886 = pneg %p277
        %p887 = pneg %p274
        %p888 = pneg %p298
        %p889 = pneg %p295
        %p890 = pneg %p319
        %p891 = pneg %p316
        %p892 = pneg %p340
        %p893 = pneg %p337
        %p894 = pneg %p361
        %p895 = pneg %p358
        %p896 = pneg %p382
        %p897 = pneg %p379
        %p898 = pneg %p403
        %p899 = pneg %p400
        %p900 = pneg %p424
        %p901 = pneg %p421
        %p902 = pneg %p445
        %p903 = pneg %p442
        %p904 = pneg %p466
        %p905 = pneg %p463
        %p906 = pneg %p487
        %p907 = pneg %p484
        %p908 = pneg %p508
        %p909 = pneg %p505
        %p910 = pneg %p529
        %p911 = pneg %p526
        %p912 = pneg %p550
        %p913 = pneg %p547
        %p914 = pneg %p571
        %p915 = pneg %p568
        %p916 = pneg %p592
        %p917 = pneg %p589
        %p918 = pneg %p613
        %p919 = pneg %p610
        %p920 = pneg %p634
        %p921 = pneg %p631
        %p922 = pneg %p655
        %p923 = pneg %p652
        %p924 = pneg %p676
        %p925 = pneg %p673
        %p926 = pneg %p697
        %p927 = pneg %p694
        %p928 = pneg %p723
        %p929 = pneg %p720
        %s930 = sand.u32 %s710, 1
        %s931 = scalar_lea.sflag [#allocation3], %s930
        %s932 = sand.u32 %s710, 1
        %s933 = smul.addr %s932, 8
        %s934 = scalar_lea.vmem [#allocation2], %s933
        %p935 = scmp.lt.s32.totalorder %s73, 1
        %s936 = scalar_select %p935, %s73, 1
        %s937 = smul.addr %s936, 8
        %s938 = scalar_lea.vmem %s1, %s937
        %p939 = scmp.lt.s32.totalorder %s73, 1
        %s940 = scalar_select %p939, %s73, 1
        %s941 = smul.addr %s940, 11
        %s942 = smul.addr %s941, 4
        %s943 = scalar_lea.vmem %s3, %s942
        %p944 = scmp.lt.s32.totalorder %s73, 1
        %s945 = scalar_select %p944, %s73, 1
        %s946 = smul.addr %s945, 8
        %s947 = scalar_lea.vmem %s5, %s946
        %p948 = scmp.lt.s32.totalorder %s73, 1
        %s949 = scalar_select %p948, %s73, 1
        %s950 = smul.addr %s949, 8
        %s951 = scalar_lea.vmem %s7, %s950
        %v953 = vld [vmem:[%s938] sm:$0xff]
        %v954 = vpack.c.bf16 %v953, %v953
        %v955 = vld [vmem:[%s15] sm:$0xf]
        %v956 = vld [vmem:[%s15 + $0x4] sm:$0xf]
        %v957 = vld [vmem:[%s15 + $0x8] sm:$0xf]
        %v958 = vld [vmem:[%s15 + $0xc] sm:$0xf]
        %v959 = vld [vmem:[%s17] sm:$0x1]
        %v961 = vlaneseq
        %v962 = vshrl.u32 %v961, 7
        %v963 = vsub.s32 0, %v962
        %v964 = vrot.slane %v959, %v963
        %v970 = vunpack.c.l.b16 %v955
        %v971 = vunpack.c.l.b16 %v956
        %v972 = vunpack.c.l.b16 %v957
        %v973 = vunpack.c.l.b16 %v958
        %v974 = vpack.c.b16 %v971, %v970
        %v975 = vpack.c.b16 %v973, %v972
        %vm978 = vcmask 261120
        %v980 = vsel %vm978, %v954, 0
        %982 = vmatprep.subr.bf16.mxu0 0
        %983 = vmatpush1.bf16.msra.mxu0 0
        %984 = vmatprep.subr.bf16.mxu0 0
        %985 = vmatpush1.bf16.msra.mxu0 0
        %986 = vmatprep.subr.bf16.mxu0 0
        %987 = vmatpush1.bf16.msra.mxu0 0
        %988 = vmatprep.subr.bf16.mxu0 0
        %989 = vmatpush1.bf16.msra.mxu0 0
        %990 = vmatprep.subr.bf16.mxu0 0
        %991 = vmatpush1.bf16.msra.mxu0 0
        %992 = vmatprep.subr.bf16.mxu0 0
        %993 = vmatpush1.bf16.msra.mxu0 0
        %994 = vmatprep.subr.bf16.mxu0 0
        %995 = vmatpush1.bf16.msra.mxu0 %v975
        %996 = vmatprep.subr.bf16.mxu0 0
        %997 = vmatpush1.bf16.msra.mxu0 %v974
        %998 = vmatprep.subr.bf16.mxu0 0
        %999 = vmatpush2.bf16.msra.mxu0 0
        %1000 = vmatprep.subr.bf16.mxu0 0
        %1001 = vmatpush2.bf16.msra.mxu0 0
        %1002 = vmatprep.subr.bf16.mxu0 0
        %1003 = vmatpush2.bf16.msra.mxu0 0
        %1004 = vmatprep.subr.bf16.mxu0 0
        %1005 = vmatpush2.bf16.msra.mxu0 0
        %1006 = vmatprep.subr.bf16.mxu0 0
        %1007 = vmatpush2.bf16.msra.mxu0 0
        %1008 = vmatprep.subr.bf16.mxu0 0
        %1009 = vmatpush2.bf16.msra.mxu0 0
        %1010 = vmatprep.subr.bf16.mxu0 0
        %1011 = vmatpush2.bf16.msra.mxu0 0
        %1012 = vmatprep.subr.bf16.mxu0 0
        %1013 = vmatpush2.bf16.msra.mxu0 0
        %1014 = vmatprep.mubr.bf16.mxu0 0
        %1015 = vmatmul.mubr.bf16.gmra.mxu0 %v980
        %v1016 = vpop.f32.mrf.mxu0
        %v1017 = vadd.f32 %v964, %v1016
        %v1018 = vpop.f32.mrf.mxu0
        %v1019 = vpop.f32.mrf.mxu0
        %v1020 = vpop.f32.mrf.mxu0
        %1021 = vdwg.mxu0
        %1023 = vrot.lane.b32.xlu0 %v1017, 120
        %v1024 = vpop.permute.xlu0 %1023
        %1026 = vrot.lane.b32.xlu0 %v1017, 112
        %v1027 = vpop.permute.xlu0 %1026
        %1029 = vrot.lane.b32.xlu0 %v1017, 104
        %v1030 = vpop.permute.xlu0 %1029
        %v1032 = vpack.c.bf16 %v1017, %v1017
        %v1033 = vpack.c.bf16 %v1024, %v1024
        %v1034 = vpack.c.bf16 %v1027, %v1027
        %v1035 = vpack.c.bf16 %v1030, %v1030
        %1037 = vrot.lane.b32.xlu0 %v1032, 96
        %v1038 = vpop.permute.xlu0 %1037
        %vm1039 = vcmask 64512
        %v1041 = vsel %vm1039, %v1032, 0
        %v1044 = vsel %vm1039, %v1038, 0
        %1046 = vmatprep.subr.bf16.mxu0 0
        %1047 = vmatpush1.bf16.xpose.msra.mxu0 0
        %1048 = vmatprep.subr.bf16.mxu0 0
        %1049 = vmatpush1.bf16.xpose.msra.mxu0 0
        %1050 = vmatprep.subr.bf16.mxu0 0
        %1051 = vmatpush1.bf16.xpose.msra.mxu0 0
        %1052 = vmatprep.subr.bf16.mxu0 0
        %1053 = vmatpush1.bf16.xpose.msra.mxu0 0
        %1054 = vmatprep.subr.bf16.mxu0 0
        %1055 = vmatpush1.bf16.xpose.msra.mxu0 0
        %1056 = vmatprep.subr.bf16.mxu0 0
        %1057 = vmatpush1.bf16.xpose.msra.mxu0 0
        %1058 = vmatprep.subr.bf16.mxu0 0
        %1059 = vmatpush1.bf16.xpose.msra.mxu0 0
        %1060 = vmatprep.subr.bf16.mxu0 0
        %1061 = vmatpush1.bf16.xpose.msra.mxu0 %v1044
        %1062 = vmatprep.subr.bf16.mxu0 0
        %1063 = vmatpush2.bf16.xpose.msra.mxu0 0
        %1064 = vmatprep.subr.bf16.mxu0 0
        %1065 = vmatpush2.bf16.xpose.msra.mxu0 0
        %1066 = vmatprep.subr.bf16.mxu0 0
        %1067 = vmatpush2.bf16.xpose.msra.mxu0 0
        %1068 = vmatprep.subr.bf16.mxu0 0
        %1069 = vmatpush2.bf16.xpose.msra.mxu0 0
        %1070 = vmatprep.subr.bf16.mxu0 0
        %1071 = vmatpush2.bf16.xpose.msra.mxu0 0
        %1072 = vmatprep.subr.bf16.mxu0 0
        %1073 = vmatpush2.bf16.xpose.msra.mxu0 0
        %1074 = vmatprep.subr.bf16.mxu0 0
        %1075 = vmatpush2.bf16.xpose.msra.mxu0 0
        %1076 = vmatprep.subr.bf16.mxu0 0
        %1077 = vmatpush2.bf16.xpose.msra.mxu0 0
        %1078 = vmatprep.mubr.bf16.mxu0 0
        %1079 = vmatmul.mubr.bf16.gmra.mxu0 %v1041
        %v1080 = vpop.f32.mrf.mxu0
        %v1081 = vadd.f32 0.0, %v1080
        %v1082 = vpop.f32.mrf.mxu0
        %v1083 = vpop.f32.mrf.mxu0
        %v1084 = vpop.f32.mrf.mxu0
        %1085 = vdwg.mxu0
        %1087 = vrot.lane.b32.xlu0 %v1033, 96
        %v1088 = vpop.permute.xlu0 %1087
        %v1090 = vsel %vm1039, %v1033, 0
        %v1093 = vsel %vm1039, %v1088, 0
        %1095 = vmatprep.subr.bf16.mxu0 0
        %1096 = vmatpush1.bf16.xpose.msra.mxu0 0
        %1097 = vmatprep.subr.bf16.mxu0 0
        %1098 = vmatpush1.bf16.xpose.msra.mxu0 0
        %1099 = vmatprep.subr.bf16.mxu0 0
        %1100 = vmatpush1.bf16.xpose.msra.mxu0 0
        %1101 = vmatprep.subr.bf16.mxu0 0
        %1102 = vmatpush1.bf16.xpose.msra.mxu0 0
        %1103 = vmatprep.subr.bf16.mxu0 0
        %1104 = vmatpush1.bf16.xpose.msra.mxu0 0
        %1105 = vmatprep.subr.bf16.mxu0 0
        %1106 = vmatpush1.bf16.xpose.msra.mxu0 0
        %1107 = vmatprep.subr.bf16.mxu0 0
        %1108 = vmatpush1.bf16.xpose.msra.mxu0 0
        %1109 = vmatprep.subr.bf16.mxu0 0
        %1110 = vmatpush1.bf16.xpose.msra.mxu0 %v1093
        %1111 = vmatprep.subr.bf16.mxu0 0
        %1112 = vmatpush2.bf16.xpose.msra.mxu0 0
        %1113 = vmatprep.subr.bf16.mxu0 0
        %1114 = vmatpush2.bf16.xpose.msra.mxu0 0
        %1115 = vmatprep.subr.bf16.mxu0 0
        %1116 = vmatpush2.bf16.xpose.msra.mxu0 0
        %1117 = vmatprep.subr.bf16.mxu0 0
        %1118 = vmatpush2.bf16.xpose.msra.mxu0 0
        %1119 = vmatprep.subr.bf16.mxu0 0
        %1120 = vmatpush2.bf16.xpose.msra.mxu0 0
        %1121 = vmatprep.subr.bf16.mxu0 0
        %1122 = vmatpush2.bf16.xpose.msra.mxu0 0
        %1123 = vmatprep.subr.bf16.mxu0 0
        %1124 = vmatpush2.bf16.xpose.msra.mxu0 0
        %1125 = vmatprep.subr.bf16.mxu0 0
        %1126 = vmatpush2.bf16.xpose.msra.mxu0 0
        %1127 = vmatprep.mubr.bf16.mxu0 0
        %1128 = vmatmul.mubr.bf16.gmra.mxu0 %v1090
        %v1129 = vpop.f32.mrf.mxu0
        %v1130 = vadd.f32 0.0, %v1129
        %v1131 = vpop.f32.mrf.mxu0
        %v1132 = vpop.f32.mrf.mxu0
        %v1133 = vpop.f32.mrf.mxu0
        %1134 = vdwg.mxu0
        %1136 = vrot.lane.b32.xlu0 %v1034, 96
        %v1137 = vpop.permute.xlu0 %1136
        %v1139 = vsel %vm1039, %v1034, 0
        %v1142 = vsel %vm1039, %v1137, 0
        %1144 = vmatprep.subr.bf16.mxu0 0
        %1145 = vmatpush1.bf16.xpose.msra.mxu0 0
        %1146 = vmatprep.subr.bf16.mxu0 0
        %1147 = vmatpush1.bf16.xpose.msra.mxu0 0
        %1148 = vmatprep.subr.bf16.mxu0 0
        %1149 = vmatpush1.bf16.xpose.msra.mxu0 0
        %1150 = vmatprep.subr.bf16.mxu0 0
        %1151 = vmatpush1.bf16.xpose.msra.mxu0 0
        %1152 = vmatprep.subr.bf16.mxu0 0
        %1153 = vmatpush1.bf16.xpose.msra.mxu0 0
        %1154 = vmatprep.subr.bf16.mxu0 0
        %1155 = vmatpush1.bf16.xpose.msra.mxu0 0
        %1156 = vmatprep.subr.bf16.mxu0 0
        %1157 = vmatpush1.bf16.xpose.msra.mxu0 0
        %1158 = vmatprep.subr.bf16.mxu0 0
        %1159 = vmatpush1.bf16.xpose.msra.mxu0 %v1142
        %1160 = vmatprep.subr.bf16.mxu0 0
        %1161 = vmatpush2.bf16.xpose.msra.mxu0 0
        %1162 = vmatprep.subr.bf16.mxu0 0
        %1163 = vmatpush2.bf16.xpose.msra.mxu0 0
        %1164 = vmatprep.subr.bf16.mxu0 0
        %1165 = vmatpush2.bf16.xpose.msra.mxu0 0
        %1166 = vmatprep.subr.bf16.mxu0 0
        %1167 = vmatpush2.bf16.xpose.msra.mxu0 0
        %1168 = vmatprep.subr.bf16.mxu0 0
        %1169 = vmatpush2.bf16.xpose.msra.mxu0 0
        %1170 = vmatprep.subr.bf16.mxu0 0
        %1171 = vmatpush2.bf16.xpose.msra.mxu0 0
        %1172 = vmatprep.subr.bf16.mxu0 0
        %1173 = vmatpush2.bf16.xpose.msra.mxu0 0
        %1174 = vmatprep.subr.bf16.mxu0 0
        %1175 = vmatpush2.bf16.xpose.msra.mxu0 0
        %1176 = vmatprep.mubr.bf16.mxu0 0
        %1177 = vmatmul.mubr.bf16.gmra.mxu0 %v1139
        %v1178 = vpop.f32.mrf.mxu0
        %v1179 = vadd.f32 0.0, %v1178
        %v1180 = vpop.f32.mrf.mxu0
        %v1181 = vpop.f32.mrf.mxu0
        %v1182 = vpop.f32.mrf.mxu0
        %1183 = vdwg.mxu0
        %1185 = vrot.lane.b32.xlu0 %v1035, 96
        %v1186 = vpop.permute.xlu0 %1185
        %v1188 = vsel %vm1039, %v1035, 0
        %v1191 = vsel %vm1039, %v1186, 0
        %1193 = vmatprep.subr.bf16.mxu0 0
        %1194 = vmatpush1.bf16.xpose.msra.mxu0 0
        %1195 = vmatprep.subr.bf16.mxu0 0
        %1196 = vmatpush1.bf16.xpose.msra.mxu0 0
        %1197 = vmatprep.subr.bf16.mxu0 0
        %1198 = vmatpush1.bf16.xpose.msra.mxu0 0
        %1199 = vmatprep.subr.bf16.mxu0 0
        %1200 = vmatpush1.bf16.xpose.msra.mxu0 0
        %1201 = vmatprep.subr.bf16.mxu0 0
        %1202 = vmatpush1.bf16.xpose.msra.mxu0 0
        %1203 = vmatprep.subr.bf16.mxu0 0
        %1204 = vmatpush1.bf16.xpose.msra.mxu0 0
        %1205 = vmatprep.subr.bf16.mxu0 0
        %1206 = vmatpush1.bf16.xpose.msra.mxu0 0
        %1207 = vmatprep.subr.bf16.mxu0 0
        %1208 = vmatpush1.bf16.xpose.msra.mxu0 %v1191
        %1209 = vmatprep.subr.bf16.mxu0 0
        %1210 = vmatpush2.bf16.xpose.msra.mxu0 0
        %1211 = vmatprep.subr.bf16.mxu0 0
        %1212 = vmatpush2.bf16.xpose.msra.mxu0 0
        %1213 = vmatprep.subr.bf16.mxu0 0
        %1214 = vmatpush2.bf16.xpose.msra.mxu0 0
        %1215 = vmatprep.subr.bf16.mxu0 0
        %1216 = vmatpush2.bf16.xpose.msra.mxu0 0
        %1217 = vmatprep.subr.bf16.mxu0 0
        %1218 = vmatpush2.bf16.xpose.msra.mxu0 0
        %1219 = vmatprep.subr.bf16.mxu0 0
        %1220 = vmatpush2.bf16.xpose.msra.mxu0 0
        %1221 = vmatprep.subr.bf16.mxu0 0
        %1222 = vmatpush2.bf16.xpose.msra.mxu0 0
        %1223 = vmatprep.subr.bf16.mxu0 0
        %1224 = vmatpush2.bf16.xpose.msra.mxu0 0
        %1225 = vmatprep.mubr.bf16.mxu0 0
        %1226 = vmatmul.mubr.bf16.gmra.mxu0 %v1188
        %v1227 = vpop.f32.mrf.mxu0
        %v1228 = vadd.f32 0.0, %v1227
        %v1229 = vpop.f32.mrf.mxu0
        %v1230 = vpop.f32.mrf.mxu0
        %v1231 = vpop.f32.mrf.mxu0
        %1232 = vdwg.mxu0
        %v1233 = vsel %vm1039, %v1081, -inf
        %1234 = vmax.xlane.f32.xlu0 %v1233
        %v1235 = vpop.xlane.xlu0 %1234
        %v1236 = vsel %vm1039, %v1130, -inf
        %1237 = vmax.xlane.f32.xlu0 %v1236
        %v1238 = vpop.xlane.xlu0 %1237
        %v1239 = vsel %vm1039, %v1179, -inf
        %1240 = vmax.xlane.f32.xlu0 %v1239
        %v1241 = vpop.xlane.xlu0 %1240
        %v1242 = vsel %vm1039, %v1228, -inf
        %1243 = vmax.xlane.f32.xlu0 %v1242
        %v1244 = vpop.xlane.xlu0 %1243
        %v1245 = vsub.f32 %v1081, %v1235
        %v1246 = vsub.f32 %v1130, %v1238
        %v1247 = vsub.f32 %v1179, %v1241
        %v1248 = vsub.f32 %v1228, %v1244
        %v1249 = vmul.f32 %v1245, 1.442695
        %v1250 = vpow.pop %v1249
        %v1251 = vmul.f32 %v1246, 1.442695
        %v1252 = vpow.pop %v1251
        %v1253 = vmul.f32 %v1247, 1.442695
        %v1254 = vpow.pop %v1253
        %v1255 = vmul.f32 %v1248, 1.442695
        %v1256 = vpow.pop %v1255
        %v1257 = vsel %vm1039, %v1250, 0.0
        %1258 = vadd.xlane.f32.xlu0 %v1257
        %v1259 = vpop.xlane.xlu0 %1258
        %v1260 = vsel %vm1039, %v1252, 0.0
        %1261 = vadd.xlane.f32.xlu0 %v1260
        %v1262 = vpop.xlane.xlu0 %1261
        %v1263 = vsel %vm1039, %v1254, 0.0
        %1264 = vadd.xlane.f32.xlu0 %v1263
        %v1265 = vpop.xlane.xlu0 %1264
        %v1266 = vsel %vm1039, %v1256, 0.0
        %1267 = vadd.xlane.f32.xlu0 %v1266
        %v1268 = vpop.xlane.xlu0 %1267
        %v1269 = vrcp.pop %v1259
        %v1270 = vmul.f32 %v1250, %v1269
        %v1271 = vrcp.pop %v1262
        %v1272 = vmul.f32 %v1252, %v1271
        %v1273 = vrcp.pop %v1265
        %v1274 = vmul.f32 %v1254, %v1273
        %v1275 = vrcp.pop %v1268
        %v1276 = vmul.f32 %v1256, %v1275
        %v1277 = vpack.c.bf16 %v1270, %v1270
        %v1278 = vpack.c.bf16 %v1272, %v1272
        %v1279 = vpack.c.bf16 %v1274, %v1274
        %v1280 = vpack.c.bf16 %v1276, %v1276
        %1281 = vrot.lane.b32.xlu0 %v1032, 64
        %v1282 = vpop.permute.xlu0 %1281
        %v1284 = vsel %vm1039, %v1277, 0
        %vm1286 = vcmask 1043456
        %v1288 = vsel %vm1286, %v1282, 0
        %1290 = vmatprep.subr.bf16.mxu0 0
        %1291 = vmatpush1.bf16.msra.mxu0 0
        %1292 = vmatprep.subr.bf16.mxu0 0
        %1293 = vmatpush1.bf16.msra.mxu0 0
        %1294 = vmatprep.subr.bf16.mxu0 0
        %1295 = vmatpush1.bf16.msra.mxu0 0
        %1296 = vmatprep.subr.bf16.mxu0 0
        %1297 = vmatpush1.bf16.msra.mxu0 0
        %1298 = vmatprep.subr.bf16.mxu0 0
        %1299 = vmatpush1.bf16.msra.mxu0 0
        %1300 = vmatprep.subr.bf16.mxu0 0
        %1301 = vmatpush1.bf16.msra.mxu0 0
        %1302 = vmatprep.subr.bf16.mxu0 0
        %1303 = vmatpush1.bf16.msra.mxu0 0
        %1304 = vmatprep.subr.bf16.mxu0 0
        %1305 = vmatpush1.bf16.msra.mxu0 %v1288
        %1306 = vmatprep.subr.bf16.mxu0 0
        %1307 = vmatpush2.bf16.msra.mxu0 0
        %1308 = vmatprep.subr.bf16.mxu0 0
        %1309 = vmatpush2.bf16.msra.mxu0 0
        %1310 = vmatprep.subr.bf16.mxu0 0
        %1311 = vmatpush2.bf16.msra.mxu0 0
        %1312 = vmatprep.subr.bf16.mxu0 0
        %1313 = vmatpush2.bf16.msra.mxu0 0
        %1314 = vmatprep.subr.bf16.mxu0 0
        %1315 = vmatpush2.bf16.msra.mxu0 0
        %1316 = vmatprep.subr.bf16.mxu0 0
        %1317 = vmatpush2.bf16.msra.mxu0 0
        %1318 = vmatprep.subr.bf16.mxu0 0
        %1319 = vmatpush2.bf16.msra.mxu0 0
        %1320 = vmatprep.subr.bf16.mxu0 0
        %1321 = vmatpush2.bf16.msra.mxu0 0
        %1322 = vmatprep.mubr.bf16.mxu0 0
        %1323 = vmatmul.mubr.bf16.gmra.mxu0 %v1284
        %v1324 = vpop.f32.mrf.mxu0
        %v1325 = vadd.f32 0.0, %v1324
        %v1326 = vpop.f32.mrf.mxu0
        %v1327 = vpop.f32.mrf.mxu0
        %v1328 = vpop.f32.mrf.mxu0
        %1329 = vdwg.mxu0
        %1330 = vrot.lane.b32.xlu0 %v1033, 64
        %v1331 = vpop.permute.xlu0 %1330
        %v1333 = vsel %vm1039, %v1278, 0
        %v1336 = vsel %vm1286, %v1331, 0
        %1338 = vmatprep.subr.bf16.mxu0 0
        %1339 = vmatpush1.bf16.msra.mxu0 0
        %1340 = vmatprep.subr.bf16.mxu0 0
        %1341 = vmatpush1.bf16.msra.mxu0 0
        %1342 = vmatprep.subr.bf16.mxu0 0
        %1343 = vmatpush1.bf16.msra.mxu0 0
        %1344 = vmatprep.subr.bf16.mxu0 0
        %1345 = vmatpush1.bf16.msra.mxu0 0
        %1346 = vmatprep.subr.bf16.mxu0 0
        %1347 = vmatpush1.bf16.msra.mxu0 0
        %1348 = vmatprep.subr.bf16.mxu0 0
        %1349 = vmatpush1.bf16.msra.mxu0 0
        %1350 = vmatprep.subr.bf16.mxu0 0
        %1351 = vmatpush1.bf16.msra.mxu0 0
        %1352 = vmatprep.subr.bf16.mxu0 0
        %1353 = vmatpush1.bf16.msra.mxu0 %v1336
        %1354 = vmatprep.subr.bf16.mxu0 0
        %1355 = vmatpush2.bf16.msra.mxu0 0
        %1356 = vmatprep.subr.bf16.mxu0 0
        %1357 = vmatpush2.bf16.msra.mxu0 0
        %1358 = vmatprep.subr.bf16.mxu0 0
        %1359 = vmatpush2.bf16.msra.mxu0 0
        %1360 = vmatprep.subr.bf16.mxu0 0
        %1361 = vmatpush2.bf16.msra.mxu0 0
        %1362 = vmatprep.subr.bf16.mxu0 0
        %1363 = vmatpush2.bf16.msra.mxu0 0
        %1364 = vmatprep.subr.bf16.mxu0 0
        %1365 = vmatpush2.bf16.msra.mxu0 0
        %1366 = vmatprep.subr.bf16.mxu0 0
        %1367 = vmatpush2.bf16.msra.mxu0 0
        %1368 = vmatprep.subr.bf16.mxu0 0
        %1369 = vmatpush2.bf16.msra.mxu0 0
        %1370 = vmatprep.mubr.bf16.mxu0 0
        %1371 = vmatmul.mubr.bf16.gmra.mxu0 %v1333
        %v1372 = vpop.f32.mrf.mxu0
        %v1373 = vadd.f32 0.0, %v1372
        %v1374 = vpop.f32.mrf.mxu0
        %v1375 = vpop.f32.mrf.mxu0
        %v1376 = vpop.f32.mrf.mxu0
        %1377 = vdwg.mxu0
        %1378 = vrot.lane.b32.xlu0 %v1034, 64
        %v1379 = vpop.permute.xlu0 %1378
        %v1381 = vsel %vm1039, %v1279, 0
        %v1384 = vsel %vm1286, %v1379, 0
        %1386 = vmatprep.subr.bf16.mxu0 0
        %1387 = vmatpush1.bf16.msra.mxu0 0
        %1388 = vmatprep.subr.bf16.mxu0 0
        %1389 = vmatpush1.bf16.msra.mxu0 0
        %1390 = vmatprep.subr.bf16.mxu0 0
        %1391 = vmatpush1.bf16.msra.mxu0 0
        %1392 = vmatprep.subr.bf16.mxu0 0
        %1393 = vmatpush1.bf16.msra.mxu0 0
        %1394 = vmatprep.subr.bf16.mxu0 0
        %1395 = vmatpush1.bf16.msra.mxu0 0
        %1396 = vmatprep.subr.bf16.mxu0 0
        %1397 = vmatpush1.bf16.msra.mxu0 0
        %1398 = vmatprep.subr.bf16.mxu0 0
        %1399 = vmatpush1.bf16.msra.mxu0 0
        %1400 = vmatprep.subr.bf16.mxu0 0
        %1401 = vmatpush1.bf16.msra.mxu0 %v1384
        %1402 = vmatprep.subr.bf16.mxu0 0
        %1403 = vmatpush2.bf16.msra.mxu0 0
        %1404 = vmatprep.subr.bf16.mxu0 0
        %1405 = vmatpush2.bf16.msra.mxu0 0
        %1406 = vmatprep.subr.bf16.mxu0 0
        %1407 = vmatpush2.bf16.msra.mxu0 0
        %1408 = vmatprep.subr.bf16.mxu0 0
        %1409 = vmatpush2.bf16.msra.mxu0 0
        %1410 = vmatprep.subr.bf16.mxu0 0
        %1411 = vmatpush2.bf16.msra.mxu0 0
        %1412 = vmatprep.subr.bf16.mxu0 0
        %1413 = vmatpush2.bf16.msra.mxu0 0
        %1414 = vmatprep.subr.bf16.mxu0 0
        %1415 = vmatpush2.bf16.msra.mxu0 0
        %1416 = vmatprep.subr.bf16.mxu0 0
        %1417 = vmatpush2.bf16.msra.mxu0 0
        %1418 = vmatprep.mubr.bf16.mxu0 0
        %1419 = vmatmul.mubr.bf16.gmra.mxu0 %v1381
        %v1420 = vpop.f32.mrf.mxu0
        %v1421 = vadd.f32 0.0, %v1420
        %v1422 = vpop.f32.mrf.mxu0
        %v1423 = vpop.f32.mrf.mxu0
        %v1424 = vpop.f32.mrf.mxu0
        %1425 = vdwg.mxu0
        %1426 = vrot.lane.b32.xlu0 %v1035, 64
        %v1427 = vpop.permute.xlu0 %1426
        %v1429 = vsel %vm1039, %v1280, 0
        %v1432 = vsel %vm1286, %v1427, 0
        %1434 = vmatprep.subr.bf16.mxu0 0
        %1435 = vmatpush1.bf16.msra.mxu0 0
        %1436 = vmatprep.subr.bf16.mxu0 0
        %1437 = vmatpush1.bf16.msra.mxu0 0
        %1438 = vmatprep.subr.bf16.mxu0 0
        %1439 = vmatpush1.bf16.msra.mxu0 0
        %1440 = vmatprep.subr.bf16.mxu0 0
        %1441 = vmatpush1.bf16.msra.mxu0 0
        %1442 = vmatprep.subr.bf16.mxu0 0
        %1443 = vmatpush1.bf16.msra.mxu0 0
        %1444 = vmatprep.subr.bf16.mxu0 0
        %1445 = vmatpush1.bf16.msra.mxu0 0
        %1446 = vmatprep.subr.bf16.mxu0 0
        %1447 = vmatpush1.bf16.msra.mxu0 0
        %1448 = vmatprep.subr.bf16.mxu0 0
        %1449 = vmatpush1.bf16.msra.mxu0 %v1432
        %1450 = vmatprep.subr.bf16.mxu0 0
        %1451 = vmatpush2.bf16.msra.mxu0 0
        %1452 = vmatprep.subr.bf16.mxu0 0
        %1453 = vmatpush2.bf16.msra.mxu0 0
        %1454 = vmatprep.subr.bf16.mxu0 0
        %1455 = vmatpush2.bf16.msra.mxu0 0
        %1456 = vmatprep.subr.bf16.mxu0 0
        %1457 = vmatpush2.bf16.msra.mxu0 0
        %1458 = vmatprep.subr.bf16.mxu0 0
        %1459 = vmatpush2.bf16.msra.mxu0 0
        %1460 = vmatprep.subr.bf16.mxu0 0
        %1461 = vmatpush2.bf16.msra.mxu0 0
        %1462 = vmatprep.subr.bf16.mxu0 0
        %1463 = vmatpush2.bf16.msra.mxu0 0
        %1464 = vmatprep.subr.bf16.mxu0 0
        %1465 = vmatpush2.bf16.msra.mxu0 0
        %1466 = vmatprep.mubr.bf16.mxu0 0
        %1467 = vmatmul.mubr.bf16.gmra.mxu0 %v1429
        %v1468 = vpop.f32.mrf.mxu0
        %v1469 = vadd.f32 0.0, %v1468
        %v1470 = vpop.f32.mrf.mxu0
        %v1471 = vpop.f32.mrf.mxu0
        %v1472 = vpop.f32.mrf.mxu0
        %1473 = vdwg.mxu0
        %1475 = vrot.lane.b32.xlu0 %v1373, 8
        %v1476 = vpop.permute.xlu0 %1475
        %1479 = vrot.lane.b32.xlu0 %v1421, 16
        %v1480 = vpop.permute.xlu0 %1479
        %1483 = vrot.lane.b32.xlu0 %v1469, 24
        %v1484 = vpop.permute.xlu0 %1483
        %v1486 = vsel %vm1039, %v1325, %v1476
        %vm1487 = vcmask 130048
        %v1488 = vsel %vm1487, %v1486, %v1480
        %vm1489 = vcmask 195584
        %v1490 = vsel %vm1489, %v1488, %v1484
        %v1491 = vpack.c.bf16 %v1490, %v1490
        %v1492 = vld [vmem:[%s19] sm:$0xf]
        %v1493 = vld [vmem:[%s19 + $0x4] sm:$0xf]
        %v1494 = vld [vmem:[%s19 + $0x8] sm:$0xf]
        %v1495 = vld [vmem:[%s19 + $0xc] sm:$0xf]
        %v1496 = vld [vmem:[%s21] sm:$0x1]
        %v1498 = vlaneseq
        %v1499 = vshrl.u32 %v1498, 7
        %v1500 = vsub.s32 0, %v1499
        %v1501 = vrot.slane %v1496, %v1500
        %v1507 = vunpack.c.l.b16 %v1492
        %v1508 = vunpack.c.l.b16 %v1493
        %v1509 = vunpack.c.l.b16 %v1494
        %v1510 = vunpack.c.l.b16 %v1495
        %v1511 = vpack.c.b16 %v1508, %v1507
        %v1512 = vpack.c.b16 %v1510, %v1509
        %v1516 = vsel %vm978, %v1491, 0
        %1518 = vmatprep.subr.bf16.mxu0 0
        %1519 = vmatpush1.bf16.msra.mxu0 0
        %1520 = vmatprep.subr.bf16.mxu0 0
        %1521 = vmatpush1.bf16.msra.mxu0 0
        %1522 = vmatprep.subr.bf16.mxu0 0
        %1523 = vmatpush1.bf16.msra.mxu0 0
        %1524 = vmatprep.subr.bf16.mxu0 0
        %1525 = vmatpush1.bf16.msra.mxu0 0
        %1526 = vmatprep.subr.bf16.mxu0 0
        %1527 = vmatpush1.bf16.msra.mxu0 0
        %1528 = vmatprep.subr.bf16.mxu0 0
        %1529 = vmatpush1.bf16.msra.mxu0 0
        %1530 = vmatprep.subr.bf16.mxu0 0
        %1531 = vmatpush1.bf16.msra.mxu0 %v1512
        %1532 = vmatprep.subr.bf16.mxu0 0
        %1533 = vmatpush1.bf16.msra.mxu0 %v1511
        %1534 = vmatprep.subr.bf16.mxu0 0
        %1535 = vmatpush2.bf16.msra.mxu0 0
        %1536 = vmatprep.subr.bf16.mxu0 0
        %1537 = vmatpush2.bf16.msra.mxu0 0
        %1538 = vmatprep.subr.bf16.mxu0 0
        %1539 = vmatpush2.bf16.msra.mxu0 0
        %1540 = vmatprep.subr.bf16.mxu0 0
        %1541 = vmatpush2.bf16.msra.mxu0 0
        %1542 = vmatprep.subr.bf16.mxu0 0
        %1543 = vmatpush2.bf16.msra.mxu0 0
        %1544 = vmatprep.subr.bf16.mxu0 0
        %1545 = vmatpush2.bf16.msra.mxu0 0
        %1546 = vmatprep.subr.bf16.mxu0 0
        %1547 = vmatpush2.bf16.msra.mxu0 0
        %1548 = vmatprep.subr.bf16.mxu0 0
        %1549 = vmatpush2.bf16.msra.mxu0 0
        %1550 = vmatprep.mubr.bf16.mxu0 0
        %1551 = vmatmul.mubr.bf16.gmra.mxu0 %v1516
        %v1552 = vpop.f32.mrf.mxu0
        %v1553 = vadd.f32 %v1501, %v1552
        %v1554 = vpop.f32.mrf.mxu0
        %v1555 = vpop.f32.mrf.mxu0
        %v1556 = vpop.f32.mrf.mxu0
        %1557 = vdwg.mxu0
        %v1558 = vadd.f32 %v953, %v1553
        %v1559 = vsel %vm978, %v1558, 0.0
        %1560 = vadd.xlane.f32.xlu0 %v1559
        %v1561 = vpop.xlane.xlu0 %1560
        %v1562 = vrcp.pop 32.0
        %v1563 = vmul.f32 %v1561, %v1562
        %v1564 = vsub.f32 %v1558, %v1563
        %v1565 = vmul.f32 %v1564, %v1564
        %v1566 = vsel %vm978, %v1565, 0.0
        %1567 = vadd.xlane.f32.xlu0 %v1566
        %v1568 = vpop.xlane.xlu0 %1567
        %v1569 = vmul.f32 %v1568, %v1562
        %v1570 = vadd.f32 %v1569, 1e-05
        %v1571 = vrsqrt.pop %v1570
        %v1572 = vmul.f32 %v1564, %v1571
        %v1573 = vld [vmem:[%s23] sm:$0x1]
        %v1575 = vlaneseq
        %v1576 = vshrl.u32 %v1575, 7
        %v1577 = vsub.s32 0, %v1576
        %v1578 = vrot.slane %v1573, %v1577
        %v1580 = vmul.f32 %v1572, %v1578
        %v1581 = vld [vmem:[%s25] sm:$0x1]
        %v1583 = vlaneseq
        %v1584 = vshrl.u32 %v1583, 7
        %v1585 = vsub.s32 0, %v1584
        %v1586 = vrot.slane %v1581, %v1585
        %v1588 = vadd.f32 %v1580, %v1586
        %v1589 = vpack.c.bf16 %v1588, %v1588
        %v1590 = vld [vmem:[%s943] sm:$0xf]
        %v1591 = vld [vmem:[%s943 + $0x4] sm:$0xf]
        %v1592 = vld [vmem:[%s943 + $0x8] sm:$0xf]
        %v1593 = vld [vmem:[%s943 + $0xc] sm:$0xf]
        %v1594 = vld [vmem:[%s943 + $0x10] sm:$0xf]
        %v1595 = vld [vmem:[%s943 + $0x14] sm:$0xf]
        %v1596 = vld [vmem:[%s943 + $0x18] sm:$0xf]
        %v1597 = vld [vmem:[%s943 + $0x1c] sm:$0xf]
        %v1598 = vld [vmem:[%s943 + $0x20] sm:$0xf]
        %v1599 = vld [vmem:[%s943 + $0x24] sm:$0xf]
        %v1600 = vld [vmem:[%s943 + $0x28] sm:$0xf]
        %v1601 = vld [vmem:[%s27] sm:$0xf]
        %v1602 = vld [vmem:[%s27 + $0x4] sm:$0xf]
        %v1603 = vld [vmem:[%s27 + $0x8] sm:$0xf]
        %v1604 = vld [vmem:[%s27 + $0xc] sm:$0xf]
        %v1605 = vld [vmem:[%s29] sm:$0x1]
        %v1607 = vlaneseq
        %v1608 = vshrl.u32 %v1607, 7
        %v1609 = vsub.s32 0, %v1608
        %v1610 = vrot.slane %v1605, %v1609
        %v1623 = vunpack.c.l.b16 %v1590
        %v1624 = vunpack.c.l.b16 %v1591
        %v1625 = vunpack.c.l.b16 %v1592
        %v1626 = vunpack.c.l.b16 %v1593
        %v1627 = vunpack.c.l.b16 %v1594
        %v1628 = vunpack.c.l.b16 %v1595
        %v1629 = vunpack.c.l.b16 %v1596
        %v1630 = vunpack.c.l.b16 %v1597
        %v1631 = vunpack.c.l.b16 %v1598
        %v1632 = vunpack.c.l.b16 %v1599
        %v1633 = vunpack.c.l.b16 %v1600
        %v1634 = vpack.c.b16 %v1624, %v1623
        %v1635 = vpack.c.b16 %v1626, %v1625
        %v1636 = vpack.c.b16 %v1628, %v1627
        %v1637 = vpack.c.b16 %v1630, %v1629
        %v1638 = vpack.c.b16 %v1632, %v1631
        %v1639 = vpack.c.b16 %v1633, %v1633
        %v1644 = vunpack.c.l.b16 %v1601
        %v1645 = vunpack.c.l.b16 %v1602
        %v1646 = vunpack.c.l.b16 %v1603
        %v1647 = vunpack.c.l.b16 %v1604
        %v1648 = vpack.c.b16 %v1645, %v1644
        %v1649 = vpack.c.b16 %v1647, %v1646
        %v1653 = vsel %vm978, %v1634, 0
        %v1656 = vsel %vm978, %v1635, 0
        %v1659 = vsel %vm978, %v1636, 0
        %v1662 = vsel %vm978, %v1637, 0
        %v1665 = vsel %vm978, %v1638, 0
        %v1668 = vsel %vm978, %v1639, 0
        %1670 = vmatprep.subr.bf16.mxu0 0
        %1671 = vmatpush1.bf16.msra.mxu0 0
        %1672 = vmatprep.subr.bf16.mxu0 0
        %1673 = vmatpush1.bf16.msra.mxu0 0
        %1674 = vmatprep.subr.bf16.mxu0 0
        %1675 = vmatpush1.bf16.msra.mxu0 0
        %1676 = vmatprep.subr.bf16.mxu0 0
        %1677 = vmatpush1.bf16.msra.mxu0 0
        %1678 = vmatprep.subr.bf16.mxu0 0
        %1679 = vmatpush1.bf16.msra.mxu0 0
        %1680 = vmatprep.subr.bf16.mxu0 0
        %1681 = vmatpush1.bf16.msra.mxu0 0
        %1682 = vmatprep.subr.bf16.mxu0 0
        %1683 = vmatpush1.bf16.msra.mxu0 %v1649
        %1684 = vmatprep.subr.bf16.mxu0 0
        %1685 = vmatpush1.bf16.msra.mxu0 %v1648
        %1686 = vmatprep.subr.bf16.mxu0 0
        %1687 = vmatpush2.bf16.msra.mxu0 0
        %1688 = vmatprep.subr.bf16.mxu0 0
        %1689 = vmatpush2.bf16.msra.mxu0 0
        %1690 = vmatprep.subr.bf16.mxu0 0
        %1691 = vmatpush2.bf16.msra.mxu0 0
        %1692 = vmatprep.subr.bf16.mxu0 0
        %1693 = vmatpush2.bf16.msra.mxu0 0
        %1694 = vmatprep.subr.bf16.mxu0 0
        %1695 = vmatpush2.bf16.msra.mxu0 0
        %1696 = vmatprep.subr.bf16.mxu0 0
        %1697 = vmatpush2.bf16.msra.mxu0 0
        %1698 = vmatprep.subr.bf16.mxu0 0
        %1699 = vmatpush2.bf16.msra.mxu0 0
        %1700 = vmatprep.subr.bf16.mxu0 0
        %1701 = vmatpush2.bf16.msra.mxu0 0
        %1702 = vmatprep.mubr.bf16.mxu0 0
        %1703 = vmatmul.mubr.bf16.gmra.mxu0 %v1653
        %v1704 = vpop.f32.mrf.mxu0
        %v1705 = vadd.f32 %v1610, %v1704
        %v1706 = vpop.f32.mrf.mxu0
        %v1707 = vpop.f32.mrf.mxu0
        %v1708 = vadd.f32 %v1610, %v1707
        %v1709 = vpop.f32.mrf.mxu0
        %1710 = vmatprep.mubr.bf16.mxu0 0
        %1711 = vmatmul.mubr.bf16.gmra.mxu0 %v1656
        %v1712 = vpop.f32.mrf.mxu0
        %v1713 = vadd.f32 %v1610, %v1712
        %v1714 = vpop.f32.mrf.mxu0
        %v1715 = vpop.f32.mrf.mxu0
        %v1716 = vadd.f32 %v1610, %v1715
        %v1717 = vpop.f32.mrf.mxu0
        %1718 = vmatprep.mubr.bf16.mxu0 0
        %1719 = vmatmul.mubr.bf16.gmra.mxu0 %v1659
        %v1720 = vpop.f32.mrf.mxu0
        %v1721 = vadd.f32 %v1610, %v1720
        %v1722 = vpop.f32.mrf.mxu0
        %v1723 = vpop.f32.mrf.mxu0
        %v1724 = vadd.f32 %v1610, %v1723
        %v1725 = vpop.f32.mrf.mxu0
        %1726 = vmatprep.mubr.bf16.mxu0 0
        %1727 = vmatmul.mubr.bf16.gmra.mxu0 %v1662
        %v1728 = vpop.f32.mrf.mxu0
        %v1729 = vadd.f32 %v1610, %v1728
        %v1730 = vpop.f32.mrf.mxu0
        %v1731 = vpop.f32.mrf.mxu0
        %v1732 = vadd.f32 %v1610, %v1731
        %v1733 = vpop.f32.mrf.mxu0
        %1734 = vmatprep.mubr.bf16.mxu0 0
        %1735 = vmatmul.mubr.bf16.gmra.mxu0 %v1665
        %v1736 = vpop.f32.mrf.mxu0
        %v1737 = vadd.f32 %v1610, %v1736
        %v1738 = vpop.f32.mrf.mxu0
        %v1739 = vpop.f32.mrf.mxu0
        %v1740 = vadd.f32 %v1610, %v1739
        %v1741 = vpop.f32.mrf.mxu0
        %1742 = vmatprep.mubr.bf16.mxu0 0
        %1743 = vmatmul.mubr.bf16.gmra.mxu0 %v1668
        %v1744 = vpop.f32.mrf.mxu0
        %v1745 = vadd.f32 %v1610, %v1744
        %v1746 = vpop.f32.mrf.mxu0
        %v1747 = vpop.f32.mrf.mxu0
        %v1748 = vpop.f32.mrf.mxu0
        %1749 = vdwg.mxu0
        %v1750 = vld [vmem:[%s31] sm:$0xf]
        %v1751 = vld [vmem:[%s31 + $0x4] sm:$0xf]
        %v1752 = vld [vmem:[%s31 + $0x8] sm:$0xf]
        %v1753 = vld [vmem:[%s31 + $0xc] sm:$0xf]
        %v1754 = vld [vmem:[%s33] sm:$0x1]
        %v1756 = vlaneseq
        %v1757 = vshrl.u32 %v1756, 7
        %v1758 = vsub.s32 0, %v1757
        %v1759 = vrot.slane %v1754, %v1758
        %v1765 = vunpack.c.l.b16 %v1750
        %v1766 = vunpack.c.l.b16 %v1751
        %v1767 = vunpack.c.l.b16 %v1752
        %v1768 = vunpack.c.l.b16 %v1753
        %v1769 = vpack.c.b16 %v1766, %v1765
        %v1770 = vpack.c.b16 %v1768, %v1767
        %v1774 = vsel %vm978, %v1589, 0
        %1776 = vmatprep.subr.bf16.mxu0 0
        %1777 = vmatpush1.bf16.msra.mxu0 0
        %1778 = vmatprep.subr.bf16.mxu0 0
        %1779 = vmatpush1.bf16.msra.mxu0 0
        %1780 = vmatprep.subr.bf16.mxu0 0
        %1781 = vmatpush1.bf16.msra.mxu0 0
        %1782 = vmatprep.subr.bf16.mxu0 0
        %1783 = vmatpush1.bf16.msra.mxu0 0
        %1784 = vmatprep.subr.bf16.mxu0 0
        %1785 = vmatpush1.bf16.msra.mxu0 0
        %1786 = vmatprep.subr.bf16.mxu0 0
        %1787 = vmatpush1.bf16.msra.mxu0 0
        %1788 = vmatprep.subr.bf16.mxu0 0
        %1789 = vmatpush1.bf16.msra.mxu0 %v1770
        %1790 = vmatprep.subr.bf16.mxu0 0
        %1791 = vmatpush1.bf16.msra.mxu0 %v1769
        %1792 = vmatprep.subr.bf16.mxu0 0
        %1793 = vmatpush2.bf16.msra.mxu0 0
        %1794 = vmatprep.subr.bf16.mxu0 0
        %1795 = vmatpush2.bf16.msra.mxu0 0
        %1796 = vmatprep.subr.bf16.mxu0 0
        %1797 = vmatpush2.bf16.msra.mxu0 0
        %1798 = vmatprep.subr.bf16.mxu0 0
        %1799 = vmatpush2.bf16.msra.mxu0 0
        %1800 = vmatprep.subr.bf16.mxu0 0
        %1801 = vmatpush2.bf16.msra.mxu0 0
        %1802 = vmatprep.subr.bf16.mxu0 0
        %1803 = vmatpush2.bf16.msra.mxu0 0
        %1804 = vmatprep.subr.bf16.mxu0 0
        %1805 = vmatpush2.bf16.msra.mxu0 0
        %1806 = vmatprep.subr.bf16.mxu0 0
        %1807 = vmatpush2.bf16.msra.mxu0 0
        %1808 = vmatprep.mubr.bf16.mxu0 0
        %1809 = vmatmul.mubr.bf16.gmra.mxu0 %v1774
        %v1810 = vpop.f32.mrf.mxu0
        %v1811 = vadd.f32 %v1759, %v1810
        %v1812 = vpop.f32.mrf.mxu0
        %v1813 = vpop.f32.mrf.mxu0
        %v1814 = vpop.f32.mrf.mxu0
        %1815 = vdwg.mxu0
        %v1816 = vld [vmem:[%s35] sm:$0xf]
        %v1817 = vld [vmem:[%s35 + $0x4] sm:$0xf]
        %v1818 = vld [vmem:[%s35 + $0x8] sm:$0xf]
        %v1819 = vld [vmem:[%s35 + $0xc] sm:$0xf]
        %v1820 = vld [vmem:[%s37] sm:$0x1]
        %v1822 = vlaneseq
        %v1823 = vshrl.u32 %v1822, 7
        %v1824 = vsub.s32 0, %v1823
        %v1825 = vrot.slane %v1820, %v1824
        %v1831 = vunpack.c.l.b16 %v1816
        %v1832 = vunpack.c.l.b16 %v1817
        %v1833 = vunpack.c.l.b16 %v1818
        %v1834 = vunpack.c.l.b16 %v1819
        %v1835 = vpack.c.b16 %v1832, %v1831
        %v1836 = vpack.c.b16 %v1834, %v1833
        %1839 = vmatprep.subr.bf16.mxu0 0
        %1840 = vmatpush1.bf16.msra.mxu0 0
        %1841 = vmatprep.subr.bf16.mxu0 0
        %1842 = vmatpush1.bf16.msra.mxu0 0
        %1843 = vmatprep.subr.bf16.mxu0 0
        %1844 = vmatpush1.bf16.msra.mxu0 0
        %1845 = vmatprep.subr.bf16.mxu0 0
        %1846 = vmatpush1.bf16.msra.mxu0 0
        %1847 = vmatprep.subr.bf16.mxu0 0
        %1848 = vmatpush1.bf16.msra.mxu0 0
        %1849 = vmatprep.subr.bf16.mxu0 0
        %1850 = vmatpush1.bf16.msra.mxu0 0
        %1851 = vmatprep.subr.bf16.mxu0 0
        %1852 = vmatpush1.bf16.msra.mxu0 %v1836
        %1853 = vmatprep.subr.bf16.mxu0 0
        %1854 = vmatpush1.bf16.msra.mxu0 %v1835
        %1855 = vmatprep.subr.bf16.mxu0 0
        %1856 = vmatpush2.bf16.msra.mxu0 0
        %1857 = vmatprep.subr.bf16.mxu0 0
        %1858 = vmatpush2.bf16.msra.mxu0 0
        %1859 = vmatprep.subr.bf16.mxu0 0
        %1860 = vmatpush2.bf16.msra.mxu0 0
        %1861 = vmatprep.subr.bf16.mxu0 0
        %1862 = vmatpush2.bf16.msra.mxu0 0
        %1863 = vmatprep.subr.bf16.mxu0 0
        %1864 = vmatpush2.bf16.msra.mxu0 0
        %1865 = vmatprep.subr.bf16.mxu0 0
        %1866 = vmatpush2.bf16.msra.mxu0 0
        %1867 = vmatprep.subr.bf16.mxu0 0
        %1868 = vmatpush2.bf16.msra.mxu0 0
        %1869 = vmatprep.subr.bf16.mxu0 0
        %1870 = vmatpush2.bf16.msra.mxu0 0
        %1871 = vmatprep.mubr.bf16.mxu0 0
        %1872 = vmatmul.mubr.bf16.gmra.mxu0 %v1774
        %v1873 = vpop.f32.mrf.mxu0
        %v1874 = vadd.f32 %v1825, %v1873
        %v1875 = vpop.f32.mrf.mxu0
        %v1876 = vpop.f32.mrf.mxu0
        %v1877 = vpop.f32.mrf.mxu0
        %1878 = vdwg.mxu0
        %1880 = vrot.lane.b32.xlu0 %v1874, 112
        %v1881 = vpop.permute.xlu0 %1880
        %1883 = vrot.lane.b32.xlu0 %v1874, 96
        %v1884 = vpop.permute.xlu0 %1883
        %1886 = vrot.lane.b32.xlu0 %v1874, 80
        %v1887 = vpop.permute.xlu0 %1886
        %v1889 = vsel %vm1487, %v1874, -inf
        %1890 = vmax.xlane.f32.xlu0 %v1889
        %v1891 = vpop.xlane.xlu0 %1890
        %v1892 = vsel %vm1487, %v1881, -inf
        %1893 = vmax.xlane.f32.xlu0 %v1892
        %v1894 = vpop.xlane.xlu0 %1893
        %v1895 = vsel %vm1487, %v1884, -inf
        %1896 = vmax.xlane.f32.xlu0 %v1895
        %v1897 = vpop.xlane.xlu0 %1896
        %v1898 = vsel %vm1487, %v1887, -inf
        %1899 = vmax.xlane.f32.xlu0 %v1898
        %v1900 = vpop.xlane.xlu0 %1899
        %v1901 = vsub.f32 %v1874, %v1891
        %v1902 = vsub.f32 %v1881, %v1894
        %v1903 = vsub.f32 %v1884, %v1897
        %v1904 = vsub.f32 %v1887, %v1900
        %v1905 = vmul.f32 %v1901, 1.442695
        %v1906 = vpow.pop %v1905
        %v1907 = vmul.f32 %v1902, 1.442695
        %v1908 = vpow.pop %v1907
        %v1909 = vmul.f32 %v1903, 1.442695
        %v1910 = vpow.pop %v1909
        %v1911 = vmul.f32 %v1904, 1.442695
        %v1912 = vpow.pop %v1911
        %v1913 = vsel %vm1487, %v1906, 0.0
        %1914 = vadd.xlane.f32.xlu0 %v1913
        %v1915 = vpop.xlane.xlu0 %1914
        %v1916 = vsel %vm1487, %v1908, 0.0
        %1917 = vadd.xlane.f32.xlu0 %v1916
        %v1918 = vpop.xlane.xlu0 %1917
        %v1919 = vsel %vm1487, %v1910, 0.0
        %1920 = vadd.xlane.f32.xlu0 %v1919
        %v1921 = vpop.xlane.xlu0 %1920
        %v1922 = vsel %vm1487, %v1912, 0.0
        %1923 = vadd.xlane.f32.xlu0 %v1922
        %v1924 = vpop.xlane.xlu0 %1923
        %v1925 = vrcp.pop %v1915
        %v1926 = vmul.f32 %v1906, %v1925
        %v1927 = vrcp.pop %v1918
        %v1928 = vmul.f32 %v1908, %v1927
        %v1929 = vrcp.pop %v1921
        %v1930 = vmul.f32 %v1910, %v1929
        %v1931 = vrcp.pop %v1924
        %v1932 = vmul.f32 %v1912, %v1931
        %1934 = vrot.lane.b32.xlu0 %v1811, 96
        %v1935 = vpop.permute.xlu0 %1934
        %1937 = vrot.lane.b32.xlu0 %v1811, 64
        %v1938 = vpop.permute.xlu0 %1937
        %1940 = vrot.lane.b32.xlu0 %v1811, 32
        %v1941 = vpop.permute.xlu0 %1940
        %v1943 = vld [vmem:[%s947] sm:$0xff]
        %v1944 = vadd.f32 %v1943, %v1811
        %v1945 = vadd.f32 %v1943, %v1935
        %v1946 = vadd.f32 %v1943, %v1938
        %v1947 = vadd.f32 %v1943, %v1941
        %v1948 = vld [vmem:[%s951] sm:$0xff]
        %1949 = vrot.lane.b32.xlu0 %v1811, 112
        %v1950 = vpop.permute.xlu0 %1949
        %1951 = vrot.lane.b32.xlu0 %v1935, 112
        %v1952 = vpop.permute.xlu0 %1951
        %1953 = vrot.lane.b32.xlu0 %v1938, 112
        %v1954 = vpop.permute.xlu0 %1953
        %1955 = vrot.lane.b32.xlu0 %v1941, 112
        %v1956 = vpop.permute.xlu0 %1955
        %v1961 = vadd.f32 %v1948, %v1950
        %v1962 = vadd.f32 %v1948, %v1952
        %v1963 = vadd.f32 %v1948, %v1954
        %v1964 = vadd.f32 %v1948, %v1956
        %v1965 = vld [vmem:[%s11] sm:$0x1]
        %v1966 = vld [vmem:[%s9] sm:$0x1]
        %v1967 = vld [vmem:[%s13] sm:$0x1]
        %v1968 = vfloor.f32 %v1944
        %v1969 = vfloor.f32 %v1945
        %v1970 = vfloor.f32 %v1946
        %v1971 = vfloor.f32 %v1947
        %v1972 = vfloor.f32 %v1961
        %v1973 = vfloor.f32 %v1962
        %v1974 = vfloor.f32 %v1963
        %v1975 = vfloor.f32 %v1964
        %v1976 = vsub.f32 %v1944, %v1968
        %v1977 = vsub.f32 %v1945, %v1969
        %v1978 = vsub.f32 %v1946, %v1970
        %v1979 = vsub.f32 %v1947, %v1971
        %v1980 = vsub.f32 1.0, %v1976
        %v1981 = vsub.f32 1.0, %v1977
        %v1982 = vsub.f32 1.0, %v1978
        %v1983 = vsub.f32 1.0, %v1979
        %v1984 = vsub.f32 %v1961, %v1972
        %v1985 = vsub.f32 %v1962, %v1973
        %v1986 = vsub.f32 %v1963, %v1974
        %v1987 = vsub.f32 %v1964, %v1975
        %v1988 = vsub.f32 1.0, %v1984
        %v1989 = vsub.f32 1.0, %v1985
        %v1990 = vsub.f32 1.0, %v1986
        %v1991 = vsub.f32 1.0, %v1987
        %v1992 = vcvt.f32.s32.to.zero.pseudo %v1968
        %v1993 = vcvt.f32.s32.to.zero.pseudo %v1969
        %v1994 = vcvt.f32.s32.to.zero.pseudo %v1970
        %v1995 = vcvt.f32.s32.to.zero.pseudo %v1971
        %v1996 = vcvt.f32.s32.to.zero.pseudo %v1972
        %v1997 = vcvt.f32.s32.to.zero.pseudo %v1973
        %v1998 = vcvt.f32.s32.to.zero.pseudo %v1974
        %v1999 = vcvt.f32.s32.to.zero.pseudo %v1975
        %v2000 = vadd.s32 %v1992, 1
        %v2001 = vadd.s32 %v1993, 1
        %v2002 = vadd.s32 %v1994, 1
        %v2003 = vadd.s32 %v1995, 1
        %v2004 = vadd.s32 %v1996, 1
        %v2005 = vadd.s32 %v1997, 1
        %v2006 = vadd.s32 %v1998, 1
        %v2007 = vadd.s32 %v1999, 1
        %v2008 = vmul.f32 %v1980, %v1988
        %v2009 = vmul.f32 %v1981, %v1989
        %v2010 = vmul.f32 %v1982, %v1990
        %v2011 = vmul.f32 %v1983, %v1991
        %v2012 = vmul.f32 %v1976, %v1988
        %v2013 = vmul.f32 %v1977, %v1989
        %v2014 = vmul.f32 %v1978, %v1990
        %v2015 = vmul.f32 %v1979, %v1991
        %v2016 = vmul.f32 %v1980, %v1984
        %v2017 = vmul.f32 %v1981, %v1985
        %v2018 = vmul.f32 %v1982, %v1986
        %v2019 = vmul.f32 %v1983, %v1987
        %v2020 = vmul.f32 %v1976, %v1984
        %v2021 = vmul.f32 %v1977, %v1985
        %v2022 = vmul.f32 %v1978, %v1986
        %v2023 = vmul.f32 %v1979, %v1987
        %vm2024 = vcmp.ge.s32.totalorder %v1992, 0
        %vm2025 = vcmp.ge.s32.totalorder %v1993, 0
        %vm2026 = vcmp.ge.s32.totalorder %v1994, 0
        %vm2027 = vcmp.ge.s32.totalorder %v1995, 0
        %v2028 = vlaneseq
        %v2029 = vshrl.u32 %v2028, 7
        %v2030 = vsub.s32 0, %v2029
        %v2031 = vrot.slane %v1965, %v2030
        %vm2032 = vcmp.lt.s32.totalorder %v1992, %v2031
        %vm2033 = vcmp.lt.s32.totalorder %v1993, %v2031
        %vm2034 = vcmp.lt.s32.totalorder %v1994, %v2031
        %vm2035 = vcmp.lt.s32.totalorder %v1995, %v2031
        %vm2036 = vmand %vm2024, %vm2032
        %vm2037 = vmand %vm2025, %vm2033
        %vm2038 = vmand %vm2026, %vm2034
        %vm2039 = vmand %vm2027, %vm2035
        %vm2040 = vcmp.ge.s32.totalorder %v1996, 0
        %vm2041 = vcmp.ge.s32.totalorder %v1997, 0
        %vm2042 = vcmp.ge.s32.totalorder %v1998, 0
        %vm2043 = vcmp.ge.s32.totalorder %v1999, 0
        %vm2044 = vmand %vm2036, %vm2040
        %vm2045 = vmand %vm2037, %vm2041
        %vm2046 = vmand %vm2038, %vm2042
        %vm2047 = vmand %vm2039, %vm2043
        %v2048 = vlaneseq
        %v2049 = vshrl.u32 %v2048, 7
        %v2050 = vsub.s32 0, %v2049
        %v2051 = vrot.slane %v1966, %v2050
        %vm2052 = vcmp.lt.s32.totalorder %v1996, %v2051
        %vm2053 = vcmp.lt.s32.totalorder %v1997, %v2051
        %vm2054 = vcmp.lt.s32.totalorder %v1998, %v2051
        %vm2055 = vcmp.lt.s32.totalorder %v1999, %v2051
        %vm2056 = vmand %vm2044, %vm2052
        %vm2057 = vmand %vm2045, %vm2053
        %vm2058 = vmand %vm2046, %vm2054
        %vm2059 = vmand %vm2047, %vm2055
        %v2060 = vsub.s32 %v1965, 1
        %vm2061 = vcmp.gt.s32.totalorder %v1992, 0
        %v2062 = vsel %vm2061, %v1992, 0
        %vm2063 = vcmp.gt.s32.totalorder %v1993, 0
        %v2064 = vsel %vm2063, %v1993, 0
        %vm2065 = vcmp.gt.s32.totalorder %v1994, 0
        %v2066 = vsel %vm2065, %v1994, 0
        %vm2067 = vcmp.gt.s32.totalorder %v1995, 0
        %v2068 = vsel %vm2067, %v1995, 0
        %v2069 = vlaneseq
        %v2070 = vshrl.u32 %v2069, 7
        %v2071 = vsub.s32 0, %v2070
        %v2072 = vrot.slane %v2060, %v2071
        %vm2073 = vcmp.lt.s32.totalorder %v2072, %v2062
        %v2074 = vsel %vm2073, %v2072, %v2062
        %vm2075 = vcmp.lt.s32.totalorder %v2072, %v2064
        %v2076 = vsel %vm2075, %v2072, %v2064
        %vm2077 = vcmp.lt.s32.totalorder %v2072, %v2066
        %v2078 = vsel %vm2077, %v2072, %v2066
        %vm2079 = vcmp.lt.s32.totalorder %v2072, %v2068
        %v2080 = vsel %vm2079, %v2072, %v2068
        %v2081 = vsub.s32 %v1966, 1
        %vm2082 = vcmp.gt.s32.totalorder %v1996, 0
        %v2083 = vsel %vm2082, %v1996, 0
        %vm2084 = vcmp.gt.s32.totalorder %v1997, 0
        %v2085 = vsel %vm2084, %v1997, 0
        %vm2086 = vcmp.gt.s32.totalorder %v1998, 0
        %v2087 = vsel %vm2086, %v1998, 0
        %vm2088 = vcmp.gt.s32.totalorder %v1999, 0
        %v2089 = vsel %vm2088, %v1999, 0
        %v2090 = vlaneseq
        %v2091 = vshrl.u32 %v2090, 7
        %v2092 = vsub.s32 0, %v2091
        %v2093 = vrot.slane %v2081, %v2092
        %vm2094 = vcmp.lt.s32.totalorder %v2093, %v2083
        %v2095 = vsel %vm2094, %v2093, %v2083
        %vm2096 = vcmp.lt.s32.totalorder %v2093, %v2085
        %v2097 = vsel %vm2096, %v2093, %v2085
        %vm2098 = vcmp.lt.s32.totalorder %v2093, %v2087
        %v2099 = vsel %vm2098, %v2093, %v2087
        %vm2100 = vcmp.lt.s32.totalorder %v2093, %v2089
        %v2101 = vsel %vm2100, %v2093, %v2089
        %v2102 = vmul.u32 %v2095, %v2031
        %v2103 = vmul.u32 %v2097, %v2031
        %v2104 = vmul.u32 %v2099, %v2031
        %v2105 = vmul.u32 %v2101, %v2031
        %v2106 = vlaneseq
        %v2107 = vshrl.u32 %v2106, 7
        %v2108 = vsub.s32 0, %v2107
        %v2109 = vrot.slane %v1967, %v2108
        %v2110 = vadd.s32 %v2109, %v2102
        %v2111 = vadd.s32 %v2109, %v2103
        %v2112 = vadd.s32 %v2109, %v2104
        %v2113 = vadd.s32 %v2109, %v2105
        %v2114 = vadd.s32 %v2110, %v2074
        %v2115 = vadd.s32 %v2111, %v2076
        %v2116 = vadd.s32 %v2112, %v2078
        %v2117 = vadd.s32 %v2113, %v2080
        %v2118 = vsel %vm2056, %v2008, 0.0
        %v2119 = vsel %vm2057, %v2009, 0.0
        %v2120 = vsel %vm2058, %v2010, 0.0
        %v2121 = vsel %vm2059, %v2011, 0.0
        %v2122 = vmul.f32 %v2118, %v1926
        %v2123 = vmul.f32 %v2119, %v1928
        %v2124 = vmul.f32 %v2120, %v1930
        %v2125 = vmul.f32 %v2121, %v1932
        %vm2126 = vcmp.ge.s32.totalorder %v2000, 0
        %vm2127 = vcmp.ge.s32.totalorder %v2001, 0
        %vm2128 = vcmp.ge.s32.totalorder %v2002, 0
        %vm2129 = vcmp.ge.s32.totalorder %v2003, 0
        %vm2130 = vcmp.lt.s32.totalorder %v2000, %v2031
        %vm2131 = vcmp.lt.s32.totalorder %v2001, %v2031
        %vm2132 = vcmp.lt.s32.totalorder %v2002, %v2031
        %vm2133 = vcmp.lt.s32.totalorder %v2003, %v2031
        %vm2134 = vmand %vm2126, %vm2130
        %vm2135 = vmand %vm2127, %vm2131
        %vm2136 = vmand %vm2128, %vm2132
        %vm2137 = vmand %vm2129, %vm2133
        %vm2138 = vmand %vm2134, %vm2040
        %vm2139 = vmand %vm2135, %vm2041
        %vm2140 = vmand %vm2136, %vm2042
        %vm2141 = vmand %vm2137, %vm2043
        %vm2142 = vmand %vm2138, %vm2052
        %vm2143 = vmand %vm2139, %vm2053
        %vm2144 = vmand %vm2140, %vm2054
        %vm2145 = vmand %vm2141, %vm2055
        %vm2146 = vcmp.gt.s32.totalorder %v2000, 0
        %v2147 = vsel %vm2146, %v2000, 0
        %vm2148 = vcmp.gt.s32.totalorder %v2001, 0
        %v2149 = vsel %vm2148, %v2001, 0
        %vm2150 = vcmp.gt.s32.totalorder %v2002, 0
        %v2151 = vsel %vm2150, %v2002, 0
        %vm2152 = vcmp.gt.s32.totalorder %v2003, 0
        %v2153 = vsel %vm2152, %v2003, 0
        %vm2154 = vcmp.lt.s32.totalorder %v2072, %v2147
        %v2155 = vsel %vm2154, %v2072, %v2147
        %vm2156 = vcmp.lt.s32.totalorder %v2072, %v2149
        %v2157 = vsel %vm2156, %v2072, %v2149
        %vm2158 = vcmp.lt.s32.totalorder %v2072, %v2151
        %v2159 = vsel %vm2158, %v2072, %v2151
        %vm2160 = vcmp.lt.s32.totalorder %v2072, %v2153
        %v2161 = vsel %vm2160, %v2072, %v2153
        %v2162 = vadd.s32 %v2110, %v2155
        %v2163 = vadd.s32 %v2111, %v2157
        %v2164 = vadd.s32 %v2112, %v2159
        %v2165 = vadd.s32 %v2113, %v2161
        %v2166 = vsel %vm2142, %v2012, 0.0
        %v2167 = vsel %vm2143, %v2013, 0.0
        %v2168 = vsel %vm2144, %v2014, 0.0
        %v2169 = vsel %vm2145, %v2015, 0.0
        %v2170 = vmul.f32 %v2166, %v1926
        %v2171 = vmul.f32 %v2167, %v1928
        %v2172 = vmul.f32 %v2168, %v1930
        %v2173 = vmul.f32 %v2169, %v1932
        %vm2174 = vcmp.ge.s32.totalorder %v2004, 0
        %vm2175 = vcmp.ge.s32.totalorder %v2005, 0
        %vm2176 = vcmp.ge.s32.totalorder %v2006, 0
        %vm2177 = vcmp.ge.s32.totalorder %v2007, 0
        %vm2178 = vmand %vm2036, %vm2174
        %vm2179 = vmand %vm2037, %vm2175
        %vm2180 = vmand %vm2038, %vm2176
        %vm2181 = vmand %vm2039, %vm2177
        %vm2182 = vcmp.lt.s32.totalorder %v2004, %v2051
        %vm2183 = vcmp.lt.s32.totalorder %v2005, %v2051
        %vm2184 = vcmp.lt.s32.totalorder %v2006, %v2051
        %vm2185 = vcmp.lt.s32.totalorder %v2007, %v2051
        %vm2186 = vmand %vm2178, %vm2182
        %vm2187 = vmand %vm2179, %vm2183
        %vm2188 = vmand %vm2180, %vm2184
        %vm2189 = vmand %vm2181, %vm2185
        %vm2190 = vcmp.gt.s32.totalorder %v2004, 0
        %v2191 = vsel %vm2190, %v2004, 0
        %vm2192 = vcmp.gt.s32.totalorder %v2005, 0
        %v2193 = vsel %vm2192, %v2005, 0
        %vm2194 = vcmp.gt.s32.totalorder %v2006, 0
        %v2195 = vsel %vm2194, %v2006, 0
        %vm2196 = vcmp.gt.s32.totalorder %v2007, 0
        %v2197 = vsel %vm2196, %v2007, 0
        %vm2198 = vcmp.lt.s32.totalorder %v2093, %v2191
        %v2199 = vsel %vm2198, %v2093, %v2191
        %vm2200 = vcmp.lt.s32.totalorder %v2093, %v2193
        %v2201 = vsel %vm2200, %v2093, %v2193
        %vm2202 = vcmp.lt.s32.totalorder %v2093, %v2195
        %v2203 = vsel %vm2202, %v2093, %v2195
        %vm2204 = vcmp.lt.s32.totalorder %v2093, %v2197
        %v2205 = vsel %vm2204, %v2093, %v2197
        %v2206 = vmul.u32 %v2199, %v2031
        %v2207 = vmul.u32 %v2201, %v2031
        %v2208 = vmul.u32 %v2203, %v2031
        %v2209 = vmul.u32 %v2205, %v2031
        %v2210 = vadd.s32 %v2109, %v2206
        %v2211 = vadd.s32 %v2109, %v2207
        %v2212 = vadd.s32 %v2109, %v2208
        %v2213 = vadd.s32 %v2109, %v2209
        %v2214 = vadd.s32 %v2210, %v2074
        %v2215 = vadd.s32 %v2211, %v2076
        %v2216 = vadd.s32 %v2212, %v2078
        %v2217 = vadd.s32 %v2213, %v2080
        %v2218 = vsel %vm2186, %v2016, 0.0
        %v2219 = vsel %vm2187, %v2017, 0.0
        %v2220 = vsel %vm2188, %v2018, 0.0
        %v2221 = vsel %vm2189, %v2019, 0.0
        %v2222 = vmul.f32 %v2218, %v1926
        %v2223 = vmul.f32 %v2219, %v1928
        %v2224 = vmul.f32 %v2220, %v1930
        %v2225 = vmul.f32 %v2221, %v1932
        %vm2226 = vmand %vm2134, %vm2174
        %vm2227 = vmand %vm2135, %vm2175
        %vm2228 = vmand %vm2136, %vm2176
        %vm2229 = vmand %vm2137, %vm2177
        %vm2230 = vmand %vm2226, %vm2182
        %vm2231 = vmand %vm2227, %vm2183
        %vm2232 = vmand %vm2228, %vm2184
        %vm2233 = vmand %vm2229, %vm2185
        %v2234 = vadd.s32 %v2210, %v2155
        %v2235 = vadd.s32 %v2211, %v2157
        %v2236 = vadd.s32 %v2212, %v2159
        %v2237 = vadd.s32 %v2213, %v2161
        %v2238 = vsel %vm2230, %v2020, 0.0
        %v2239 = vsel %vm2231, %v2021, 0.0
        %v2240 = vsel %vm2232, %v2022, 0.0
        %v2241 = vsel %vm2233, %v2023, 0.0
        %v2242 = vmul.f32 %v2238, %v1926
        %v2243 = vmul.f32 %v2239, %v1928
        %v2244 = vmul.f32 %v2240, %v1930
        %v2245 = vmul.f32 %v2241, %v1932
        %2246 = vrot.lane.b32.xlu0 %v2162, 16
        %v2247 = vpop.permute.xlu0 %2246
        %2248 = vrot.lane.b32.xlu0 %v2163, 16
        %v2249 = vpop.permute.xlu0 %2248
        %2250 = vrot.lane.b32.xlu0 %v2164, 16
        %v2251 = vpop.permute.xlu0 %2250
        %2252 = vrot.lane.b32.xlu0 %v2165, 16
        %v2253 = vpop.permute.xlu0 %2252
        %2254 = vrot.lane.b32.xlu0 %v2214, 32
        %v2255 = vpop.permute.xlu0 %2254
        %2256 = vrot.lane.b32.xlu0 %v2215, 32
        %v2257 = vpop.permute.xlu0 %2256
        %2258 = vrot.lane.b32.xlu0 %v2216, 32
        %v2259 = vpop.permute.xlu0 %2258
        %2260 = vrot.lane.b32.xlu0 %v2217, 32
        %v2261 = vpop.permute.xlu0 %2260
        %2262 = vrot.lane.b32.xlu0 %v2234, 48
        %v2263 = vpop.permute.xlu0 %2262
        %2264 = vrot.lane.b32.xlu0 %v2235, 48
        %v2265 = vpop.permute.xlu0 %2264
        %2266 = vrot.lane.b32.xlu0 %v2236, 48
        %v2267 = vpop.permute.xlu0 %2266
        %2268 = vrot.lane.b32.xlu0 %v2237, 48
        %v2269 = vpop.permute.xlu0 %2268
        %v2270 = vsel %vm1487, %v2114, %v2247
        %v2271 = vsel %vm1487, %v2115, %v2249
        %v2272 = vsel %vm1487, %v2116, %v2251
        %v2273 = vsel %vm1487, %v2117, %v2253
        %v2274 = vsel %vm978, %v2270, %v2255
        %v2275 = vsel %vm978, %v2271, %v2257
        %v2276 = vsel %vm978, %v2272, %v2259
        %v2277 = vsel %vm978, %v2273, %v2261
        %vm2278 = vcmask 392192
        %v2279 = vsel %vm2278, %v2274, %v2263
        %v2280 = vsel %vm2278, %v2275, %v2265
        %v2281 = vsel %vm2278, %v2276, %v2267
        %v2282 = vsel %vm2278, %v2277, %v2269
        %2287 = vrot.lane.b32.xlu0 %v2170, 16
        %v2288 = vpop.permute.xlu0 %2287
        %2289 = vrot.lane.b32.xlu0 %v2171, 16
        %v2290 = vpop.permute.xlu0 %2289
        %2291 = vrot.lane.b32.xlu0 %v2172, 16
        %v2292 = vpop.permute.xlu0 %2291
        %2293 = vrot.lane.b32.xlu0 %v2173, 16
        %v2294 = vpop.permute.xlu0 %2293
        %2303 = vrot.lane.b32.xlu0 %v2222, 32
        %v2304 = vpop.permute.xlu0 %2303
        %2305 = vrot.lane.b32.xlu0 %v2223, 32
        %v2306 = vpop.permute.xlu0 %2305
        %2307 = vrot.lane.b32.xlu0 %v2224, 32
        %v2308 = vpop.permute.xlu0 %2307
        %2309 = vrot.lane.b32.xlu0 %v2225, 32
        %v2310 = vpop.permute.xlu0 %2309
        %2319 = vrot.lane.b32.xlu0 %v2242, 48
        %v2320 = vpop.permute.xlu0 %2319
        %2321 = vrot.lane.b32.xlu0 %v2243, 48
        %v2322 = vpop.permute.xlu0 %2321
        %2323 = vrot.lane.b32.xlu0 %v2244, 48
        %v2324 = vpop.permute.xlu0 %2323
        %2325 = vrot.lane.b32.xlu0 %v2245, 48
        %v2326 = vpop.permute.xlu0 %2325
        %v2331 = vsel %vm1487, %v2122, %v2288
        %v2332 = vsel %vm1487, %v2123, %v2290
        %v2333 = vsel %vm1487, %v2124, %v2292
        %v2334 = vsel %vm1487, %v2125, %v2294
        %v2335 = vsel %vm978, %v2331, %v2304
        %v2336 = vsel %vm978, %v2332, %v2306
        %v2337 = vsel %vm978, %v2333, %v2308
        %v2338 = vsel %vm978, %v2334, %v2310
        %v2339 = vsel %vm2278, %v2335, %v2320
        %v2340 = vsel %vm2278, %v2336, %v2322
        %v2341 = vsel %vm2278, %v2337, %v2324
        %v2342 = vsel %vm2278, %v2338, %v2326
        %v2343 = vlaneseq
        %v2344 = vand.u32 %v2343, 127
        %v2345 = vlaneseq
        %v2346 = vshrl.u32 %v2345, 7
        %v2347 = vsub.s32 0, %v2346
        %v2348 = vrot.slane %v2279, %v2347
        %2350 = vbcast.lane.b32.xlu0 %v2348, 256
        %v2351 = vpop.permute.xlu0 %2350
        %s2353 = sor.u32 256, 8
        %2354 = vbcast.lane.b32.xlu0 %v2348, %s2353
        %v2355 = vpop.permute.xlu0 %2354
        %s2357 = sor.u32 256, 16
        %2358 = vbcast.lane.b32.xlu0 %v2348, %s2357
        %v2359 = vpop.permute.xlu0 %2358
        %s2361 = sor.u32 256, 24
        %2362 = vbcast.lane.b32.xlu0 %v2348, %s2361
        %v2363 = vpop.permute.xlu0 %2362
        %s2365 = sor.u32 256, 32
        %2366 = vbcast.lane.b32.xlu0 %v2348, %s2365
        %v2367 = vpop.permute.xlu0 %2366
        %s2369 = sor.u32 256, 40
        %2370 = vbcast.lane.b32.xlu0 %v2348, %s2369
        %v2371 = vpop.permute.xlu0 %2370
        %s2373 = sor.u32 256, 48
        %2374 = vbcast.lane.b32.xlu0 %v2348, %s2373
        %v2375 = vpop.permute.xlu0 %2374
        %s2377 = sor.u32 256, 56
        %2378 = vbcast.lane.b32.xlu0 %v2348, %s2377
        %v2379 = vpop.permute.xlu0 %2378
        %v2380 = vlaneseq
        %v2381 = vshrl.u32 %v2380, 7
        %v2382 = vsub.s32 1, %v2381
        %v2383 = vrot.slane %v2279, %v2382
        %2385 = vbcast.lane.b32.xlu0 %v2383, 256
        %v2386 = vpop.permute.xlu0 %2385
        %s2388 = sor.u32 256, 8
        %2389 = vbcast.lane.b32.xlu0 %v2383, %s2388
        %v2390 = vpop.permute.xlu0 %2389
        %s2392 = sor.u32 256, 16
        %2393 = vbcast.lane.b32.xlu0 %v2383, %s2392
        %v2394 = vpop.permute.xlu0 %2393
        %s2396 = sor.u32 256, 24
        %2397 = vbcast.lane.b32.xlu0 %v2383, %s2396
        %v2398 = vpop.permute.xlu0 %2397
        %s2400 = sor.u32 256, 32
        %2401 = vbcast.lane.b32.xlu0 %v2383, %s2400
        %v2402 = vpop.permute.xlu0 %2401
        %s2404 = sor.u32 256, 40
        %2405 = vbcast.lane.b32.xlu0 %v2383, %s2404
        %v2406 = vpop.permute.xlu0 %2405
        %s2408 = sor.u32 256, 48
        %2409 = vbcast.lane.b32.xlu0 %v2383, %s2408
        %v2410 = vpop.permute.xlu0 %2409
        %s2412 = sor.u32 256, 56
        %2413 = vbcast.lane.b32.xlu0 %v2383, %s2412
        %v2414 = vpop.permute.xlu0 %2413
        %v2415 = vlaneseq
        %v2416 = vshrl.u32 %v2415, 7
        %v2417 = vsub.s32 2, %v2416
        %v2418 = vrot.slane %v2279, %v2417
        %2420 = vbcast.lane.b32.xlu0 %v2418, 256
        %v2421 = vpop.permute.xlu0 %2420
        %s2423 = sor.u32 256, 8
        %2424 = vbcast.lane.b32.xlu0 %v2418, %s2423
        %v2425 = vpop.permute.xlu0 %2424
        %s2427 = sor.u32 256, 16
        %2428 = vbcast.lane.b32.xlu0 %v2418, %s2427
        %v2429 = vpop.permute.xlu0 %2428
        %s2431 = sor.u32 256, 24
        %2432 = vbcast.lane.b32.xlu0 %v2418, %s2431
        %v2433 = vpop.permute.xlu0 %2432
        %s2435 = sor.u32 256, 32
        %2436 = vbcast.lane.b32.xlu0 %v2418, %s2435
        %v2437 = vpop.permute.xlu0 %2436
        %s2439 = sor.u32 256, 40
        %2440 = vbcast.lane.b32.xlu0 %v2418, %s2439
        %v2441 = vpop.permute.xlu0 %2440
        %s2443 = sor.u32 256, 48
        %2444 = vbcast.lane.b32.xlu0 %v2418, %s2443
        %v2445 = vpop.permute.xlu0 %2444
        %s2447 = sor.u32 256, 56
        %2448 = vbcast.lane.b32.xlu0 %v2418, %s2447
        %v2449 = vpop.permute.xlu0 %2448
        %v2450 = vlaneseq
        %v2451 = vshrl.u32 %v2450, 7
        %v2452 = vsub.s32 3, %v2451
        %v2453 = vrot.slane %v2279, %v2452
        %2455 = vbcast.lane.b32.xlu0 %v2453, 256
        %v2456 = vpop.permute.xlu0 %2455
        %s2458 = sor.u32 256, 8
        %2459 = vbcast.lane.b32.xlu0 %v2453, %s2458
        %v2460 = vpop.permute.xlu0 %2459
        %s2462 = sor.u32 256, 16
        %2463 = vbcast.lane.b32.xlu0 %v2453, %s2462
        %v2464 = vpop.permute.xlu0 %2463
        %s2466 = sor.u32 256, 24
        %2467 = vbcast.lane.b32.xlu0 %v2453, %s2466
        %v2468 = vpop.permute.xlu0 %2467
        %s2470 = sor.u32 256, 32
        %2471 = vbcast.lane.b32.xlu0 %v2453, %s2470
        %v2472 = vpop.permute.xlu0 %2471
        %s2474 = sor.u32 256, 40
        %2475 = vbcast.lane.b32.xlu0 %v2453, %s2474
        %v2476 = vpop.permute.xlu0 %2475
        %s2478 = sor.u32 256, 48
        %2479 = vbcast.lane.b32.xlu0 %v2453, %s2478
        %v2480 = vpop.permute.xlu0 %2479
        %s2482 = sor.u32 256, 56
        %2483 = vbcast.lane.b32.xlu0 %v2453, %s2482
        %v2484 = vpop.permute.xlu0 %2483
        %v2485 = vlaneseq
        %v2486 = vshrl.u32 %v2485, 7
        %v2487 = vsub.s32 4, %v2486
        %v2488 = vrot.slane %v2279, %v2487
        %2490 = vbcast.lane.b32.xlu0 %v2488, 256
        %v2491 = vpop.permute.xlu0 %2490
        %s2493 = sor.u32 256, 8
        %2494 = vbcast.lane.b32.xlu0 %v2488, %s2493
        %v2495 = vpop.permute.xlu0 %2494
        %s2497 = sor.u32 256, 16
        %2498 = vbcast.lane.b32.xlu0 %v2488, %s2497
        %v2499 = vpop.permute.xlu0 %2498
        %s2501 = sor.u32 256, 24
        %2502 = vbcast.lane.b32.xlu0 %v2488, %s2501
        %v2503 = vpop.permute.xlu0 %2502
        %s2505 = sor.u32 256, 32
        %2506 = vbcast.lane.b32.xlu0 %v2488, %s2505
        %v2507 = vpop.permute.xlu0 %2506
        %s2509 = sor.u32 256, 40
        %2510 = vbcast.lane.b32.xlu0 %v2488, %s2509
        %v2511 = vpop.permute.xlu0 %2510
        %s2513 = sor.u32 256, 48
        %2514 = vbcast.lane.b32.xlu0 %v2488, %s2513
        %v2515 = vpop.permute.xlu0 %2514
        %s2517 = sor.u32 256, 56
        %2518 = vbcast.lane.b32.xlu0 %v2488, %s2517
        %v2519 = vpop.permute.xlu0 %2518
        %v2520 = vlaneseq
        %v2521 = vshrl.u32 %v2520, 7
        %v2522 = vsub.s32 5, %v2521
        %v2523 = vrot.slane %v2279, %v2522
        %2525 = vbcast.lane.b32.xlu0 %v2523, 256
        %v2526 = vpop.permute.xlu0 %2525
        %s2528 = sor.u32 256, 8
        %2529 = vbcast.lane.b32.xlu0 %v2523, %s2528
        %v2530 = vpop.permute.xlu0 %2529
        %s2532 = sor.u32 256, 16
        %2533 = vbcast.lane.b32.xlu0 %v2523, %s2532
        %v2534 = vpop.permute.xlu0 %2533
        %s2536 = sor.u32 256, 24
        %2537 = vbcast.lane.b32.xlu0 %v2523, %s2536
        %v2538 = vpop.permute.xlu0 %2537
        %s2540 = sor.u32 256, 32
        %2541 = vbcast.lane.b32.xlu0 %v2523, %s2540
        %v2542 = vpop.permute.xlu0 %2541
        %s2544 = sor.u32 256, 40
        %2545 = vbcast.lane.b32.xlu0 %v2523, %s2544
        %v2546 = vpop.permute.xlu0 %2545
        %s2548 = sor.u32 256, 48
        %2549 = vbcast.lane.b32.xlu0 %v2523, %s2548
        %v2550 = vpop.permute.xlu0 %2549
        %s2552 = sor.u32 256, 56
        %2553 = vbcast.lane.b32.xlu0 %v2523, %s2552
        %v2554 = vpop.permute.xlu0 %2553
        %v2555 = vlaneseq
        %v2556 = vshrl.u32 %v2555, 7
        %v2557 = vsub.s32 6, %v2556
        %v2558 = vrot.slane %v2279, %v2557
        %2560 = vbcast.lane.b32.xlu0 %v2558, 256
        %v2561 = vpop.permute.xlu0 %2560
        %s2563 = sor.u32 256, 8
        %2564 = vbcast.lane.b32.xlu0 %v2558, %s2563
        %v2565 = vpop.permute.xlu0 %2564
        %s2567 = sor.u32 256, 16
        %2568 = vbcast.lane.b32.xlu0 %v2558, %s2567
        %v2569 = vpop.permute.xlu0 %2568
        %s2571 = sor.u32 256, 24
        %2572 = vbcast.lane.b32.xlu0 %v2558, %s2571
        %v2573 = vpop.permute.xlu0 %2572
        %s2575 = sor.u32 256, 32
        %2576 = vbcast.lane.b32.xlu0 %v2558, %s2575
        %v2577 = vpop.permute.xlu0 %2576
        %s2579 = sor.u32 256, 40
        %2580 = vbcast.lane.b32.xlu0 %v2558, %s2579
        %v2581 = vpop.permute.xlu0 %2580
        %s2583 = sor.u32 256, 48
        %2584 = vbcast.lane.b32.xlu0 %v2558, %s2583
        %v2585 = vpop.permute.xlu0 %2584
        %s2587 = sor.u32 256, 56
        %2588 = vbcast.lane.b32.xlu0 %v2558, %s2587
        %v2589 = vpop.permute.xlu0 %2588
        %v2590 = vlaneseq
        %v2591 = vshrl.u32 %v2590, 7
        %v2592 = vsub.s32 7, %v2591
        %v2593 = vrot.slane %v2279, %v2592
        %2595 = vbcast.lane.b32.xlu0 %v2593, 256
        %v2596 = vpop.permute.xlu0 %2595
        %s2598 = sor.u32 256, 8
        %2599 = vbcast.lane.b32.xlu0 %v2593, %s2598
        %v2600 = vpop.permute.xlu0 %2599
        %s2602 = sor.u32 256, 16
        %2603 = vbcast.lane.b32.xlu0 %v2593, %s2602
        %v2604 = vpop.permute.xlu0 %2603
        %s2606 = sor.u32 256, 24
        %2607 = vbcast.lane.b32.xlu0 %v2593, %s2606
        %v2608 = vpop.permute.xlu0 %2607
        %s2610 = sor.u32 256, 32
        %2611 = vbcast.lane.b32.xlu0 %v2593, %s2610
        %v2612 = vpop.permute.xlu0 %2611
        %s2614 = sor.u32 256, 40
        %2615 = vbcast.lane.b32.xlu0 %v2593, %s2614
        %v2616 = vpop.permute.xlu0 %2615
        %s2618 = sor.u32 256, 48
        %2619 = vbcast.lane.b32.xlu0 %v2593, %s2618
        %v2620 = vpop.permute.xlu0 %2619
        %s2622 = sor.u32 256, 56
        %2623 = vbcast.lane.b32.xlu0 %v2593, %s2622
        %v2624 = vpop.permute.xlu0 %2623
        %v2625 = vlaneseq
        %v2626 = vshrl.u32 %v2625, 7
        %v2627 = vsub.s32 0, %v2626
        %v2628 = vrot.slane %v2280, %v2627
        %2630 = vbcast.lane.b32.xlu0 %v2628, 256
        %v2631 = vpop.permute.xlu0 %2630
        %s2633 = sor.u32 256, 8
        %2634 = vbcast.lane.b32.xlu0 %v2628, %s2633
        %v2635 = vpop.permute.xlu0 %2634
        %s2637 = sor.u32 256, 16
        %2638 = vbcast.lane.b32.xlu0 %v2628, %s2637
        %v2639 = vpop.permute.xlu0 %2638
        %s2641 = sor.u32 256, 24
        %2642 = vbcast.lane.b32.xlu0 %v2628, %s2641
        %v2643 = vpop.permute.xlu0 %2642
        %s2645 = sor.u32 256, 32
        %2646 = vbcast.lane.b32.xlu0 %v2628, %s2645
        %v2647 = vpop.permute.xlu0 %2646
        %s2649 = sor.u32 256, 40
        %2650 = vbcast.lane.b32.xlu0 %v2628, %s2649
        %v2651 = vpop.permute.xlu0 %2650
        %s2653 = sor.u32 256, 48
        %2654 = vbcast.lane.b32.xlu0 %v2628, %s2653
        %v2655 = vpop.permute.xlu0 %2654
        %s2657 = sor.u32 256, 56
        %2658 = vbcast.lane.b32.xlu0 %v2628, %s2657
        %v2659 = vpop.permute.xlu0 %2658
        %v2660 = vlaneseq
        %v2661 = vshrl.u32 %v2660, 7
        %v2662 = vsub.s32 1, %v2661
        %v2663 = vrot.slane %v2280, %v2662
        %2665 = vbcast.lane.b32.xlu0 %v2663, 256
        %v2666 = vpop.permute.xlu0 %2665
        %s2668 = sor.u32 256, 8
        %2669 = vbcast.lane.b32.xlu0 %v2663, %s2668
        %v2670 = vpop.permute.xlu0 %2669
        %s2672 = sor.u32 256, 16
        %2673 = vbcast.lane.b32.xlu0 %v2663, %s2672
        %v2674 = vpop.permute.xlu0 %2673
        %s2676 = sor.u32 256, 24
        %2677 = vbcast.lane.b32.xlu0 %v2663, %s2676
        %v2678 = vpop.permute.xlu0 %2677
        %s2680 = sor.u32 256, 32
        %2681 = vbcast.lane.b32.xlu0 %v2663, %s2680
        %v2682 = vpop.permute.xlu0 %2681
        %s2684 = sor.u32 256, 40
        %2685 = vbcast.lane.b32.xlu0 %v2663, %s2684
        %v2686 = vpop.permute.xlu0 %2685
        %s2688 = sor.u32 256, 48
        %2689 = vbcast.lane.b32.xlu0 %v2663, %s2688
        %v2690 = vpop.permute.xlu0 %2689
        %s2692 = sor.u32 256, 56
        %2693 = vbcast.lane.b32.xlu0 %v2663, %s2692
        %v2694 = vpop.permute.xlu0 %2693
        %v2695 = vlaneseq
        %v2696 = vshrl.u32 %v2695, 7
        %v2697 = vsub.s32 2, %v2696
        %v2698 = vrot.slane %v2280, %v2697
        %2700 = vbcast.lane.b32.xlu0 %v2698, 256
        %v2701 = vpop.permute.xlu0 %2700
        %s2703 = sor.u32 256, 8
        %2704 = vbcast.lane.b32.xlu0 %v2698, %s2703
        %v2705 = vpop.permute.xlu0 %2704
        %s2707 = sor.u32 256, 16
        %2708 = vbcast.lane.b32.xlu0 %v2698, %s2707
        %v2709 = vpop.permute.xlu0 %2708
        %s2711 = sor.u32 256, 24
        %2712 = vbcast.lane.b32.xlu0 %v2698, %s2711
        %v2713 = vpop.permute.xlu0 %2712
        %s2715 = sor.u32 256, 32
        %2716 = vbcast.lane.b32.xlu0 %v2698, %s2715
        %v2717 = vpop.permute.xlu0 %2716
        %s2719 = sor.u32 256, 40
        %2720 = vbcast.lane.b32.xlu0 %v2698, %s2719
        %v2721 = vpop.permute.xlu0 %2720
        %s2723 = sor.u32 256, 48
        %2724 = vbcast.lane.b32.xlu0 %v2698, %s2723
        %v2725 = vpop.permute.xlu0 %2724
        %s2727 = sor.u32 256, 56
        %2728 = vbcast.lane.b32.xlu0 %v2698, %s2727
        %v2729 = vpop.permute.xlu0 %2728
        %v2730 = vlaneseq
        %v2731 = vshrl.u32 %v2730, 7
        %v2732 = vsub.s32 3, %v2731
        %v2733 = vrot.slane %v2280, %v2732
        %2735 = vbcast.lane.b32.xlu0 %v2733, 256
        %v2736 = vpop.permute.xlu0 %2735
        %s2738 = sor.u32 256, 8
        %2739 = vbcast.lane.b32.xlu0 %v2733, %s2738
        %v2740 = vpop.permute.xlu0 %2739
        %s2742 = sor.u32 256, 16
        %2743 = vbcast.lane.b32.xlu0 %v2733, %s2742
        %v2744 = vpop.permute.xlu0 %2743
        %s2746 = sor.u32 256, 24
        %2747 = vbcast.lane.b32.xlu0 %v2733, %s2746
        %v2748 = vpop.permute.xlu0 %2747
        %s2750 = sor.u32 256, 32
        %2751 = vbcast.lane.b32.xlu0 %v2733, %s2750
        %v2752 = vpop.permute.xlu0 %2751
        %s2754 = sor.u32 256, 40
        %2755 = vbcast.lane.b32.xlu0 %v2733, %s2754
        %v2756 = vpop.permute.xlu0 %2755
        %s2758 = sor.u32 256, 48
        %2759 = vbcast.lane.b32.xlu0 %v2733, %s2758
        %v2760 = vpop.permute.xlu0 %2759
        %s2762 = sor.u32 256, 56
        %2763 = vbcast.lane.b32.xlu0 %v2733, %s2762
        %v2764 = vpop.permute.xlu0 %2763
        %v2765 = vlaneseq
        %v2766 = vshrl.u32 %v2765, 7
        %v2767 = vsub.s32 4, %v2766
        %v2768 = vrot.slane %v2280, %v2767
        %2770 = vbcast.lane.b32.xlu0 %v2768, 256
        %v2771 = vpop.permute.xlu0 %2770
        %s2773 = sor.u32 256, 8
        %2774 = vbcast.lane.b32.xlu0 %v2768, %s2773
        %v2775 = vpop.permute.xlu0 %2774
        %s2777 = sor.u32 256, 16
        %2778 = vbcast.lane.b32.xlu0 %v2768, %s2777
        %v2779 = vpop.permute.xlu0 %2778
        %s2781 = sor.u32 256, 24
        %2782 = vbcast.lane.b32.xlu0 %v2768, %s2781
        %v2783 = vpop.permute.xlu0 %2782
        %s2785 = sor.u32 256, 32
        %2786 = vbcast.lane.b32.xlu0 %v2768, %s2785
        %v2787 = vpop.permute.xlu0 %2786
        %s2789 = sor.u32 256, 40
        %2790 = vbcast.lane.b32.xlu0 %v2768, %s2789
        %v2791 = vpop.permute.xlu0 %2790
        %s2793 = sor.u32 256, 48
        %2794 = vbcast.lane.b32.xlu0 %v2768, %s2793
        %v2795 = vpop.permute.xlu0 %2794
        %s2797 = sor.u32 256, 56
        %2798 = vbcast.lane.b32.xlu0 %v2768, %s2797
        %v2799 = vpop.permute.xlu0 %2798
        %v2800 = vlaneseq
        %v2801 = vshrl.u32 %v2800, 7
        %v2802 = vsub.s32 5, %v2801
        %v2803 = vrot.slane %v2280, %v2802
        %2805 = vbcast.lane.b32.xlu0 %v2803, 256
        %v2806 = vpop.permute.xlu0 %2805
        %s2808 = sor.u32 256, 8
        %2809 = vbcast.lane.b32.xlu0 %v2803, %s2808
        %v2810 = vpop.permute.xlu0 %2809
        %s2812 = sor.u32 256, 16
        %2813 = vbcast.lane.b32.xlu0 %v2803, %s2812
        %v2814 = vpop.permute.xlu0 %2813
        %s2816 = sor.u32 256, 24
        %2817 = vbcast.lane.b32.xlu0 %v2803, %s2816
        %v2818 = vpop.permute.xlu0 %2817
        %s2820 = sor.u32 256, 32
        %2821 = vbcast.lane.b32.xlu0 %v2803, %s2820
        %v2822 = vpop.permute.xlu0 %2821
        %s2824 = sor.u32 256, 40
        %2825 = vbcast.lane.b32.xlu0 %v2803, %s2824
        %v2826 = vpop.permute.xlu0 %2825
        %s2828 = sor.u32 256, 48
        %2829 = vbcast.lane.b32.xlu0 %v2803, %s2828
        %v2830 = vpop.permute.xlu0 %2829
        %s2832 = sor.u32 256, 56
        %2833 = vbcast.lane.b32.xlu0 %v2803, %s2832
        %v2834 = vpop.permute.xlu0 %2833
        %v2835 = vlaneseq
        %v2836 = vshrl.u32 %v2835, 7
        %v2837 = vsub.s32 6, %v2836
        %v2838 = vrot.slane %v2280, %v2837
        %2840 = vbcast.lane.b32.xlu0 %v2838, 256
        %v2841 = vpop.permute.xlu0 %2840
        %s2843 = sor.u32 256, 8
        %2844 = vbcast.lane.b32.xlu0 %v2838, %s2843
        %v2845 = vpop.permute.xlu0 %2844
        %s2847 = sor.u32 256, 16
        %2848 = vbcast.lane.b32.xlu0 %v2838, %s2847
        %v2849 = vpop.permute.xlu0 %2848
        %s2851 = sor.u32 256, 24
        %2852 = vbcast.lane.b32.xlu0 %v2838, %s2851
        %v2853 = vpop.permute.xlu0 %2852
        %s2855 = sor.u32 256, 32
        %2856 = vbcast.lane.b32.xlu0 %v2838, %s2855
        %v2857 = vpop.permute.xlu0 %2856
        %s2859 = sor.u32 256, 40
        %2860 = vbcast.lane.b32.xlu0 %v2838, %s2859
        %v2861 = vpop.permute.xlu0 %2860
        %s2863 = sor.u32 256, 48
        %2864 = vbcast.lane.b32.xlu0 %v2838, %s2863
        %v2865 = vpop.permute.xlu0 %2864
        %s2867 = sor.u32 256, 56
        %2868 = vbcast.lane.b32.xlu0 %v2838, %s2867
        %v2869 = vpop.permute.xlu0 %2868
        %v2870 = vlaneseq
        %v2871 = vshrl.u32 %v2870, 7
        %v2872 = vsub.s32 7, %v2871
        %v2873 = vrot.slane %v2280, %v2872
        %2875 = vbcast.lane.b32.xlu0 %v2873, 256
        %v2876 = vpop.permute.xlu0 %2875
        %s2878 = sor.u32 256, 8
        %2879 = vbcast.lane.b32.xlu0 %v2873, %s2878
        %v2880 = vpop.permute.xlu0 %2879
        %s2882 = sor.u32 256, 16
        %2883 = vbcast.lane.b32.xlu0 %v2873, %s2882
        %v2884 = vpop.permute.xlu0 %2883
        %s2886 = sor.u32 256, 24
        %2887 = vbcast.lane.b32.xlu0 %v2873, %s2886
        %v2888 = vpop.permute.xlu0 %2887
        %s2890 = sor.u32 256, 32
        %2891 = vbcast.lane.b32.xlu0 %v2873, %s2890
        %v2892 = vpop.permute.xlu0 %2891
        %s2894 = sor.u32 256, 40
        %2895 = vbcast.lane.b32.xlu0 %v2873, %s2894
        %v2896 = vpop.permute.xlu0 %2895
        %s2898 = sor.u32 256, 48
        %2899 = vbcast.lane.b32.xlu0 %v2873, %s2898
        %v2900 = vpop.permute.xlu0 %2899
        %s2902 = sor.u32 256, 56
        %2903 = vbcast.lane.b32.xlu0 %v2873, %s2902
        %v2904 = vpop.permute.xlu0 %2903
        %v2905 = vlaneseq
        %v2906 = vshrl.u32 %v2905, 7
        %v2907 = vsub.s32 0, %v2906
        %v2908 = vrot.slane %v2281, %v2907
        %2910 = vbcast.lane.b32.xlu0 %v2908, 256
        %v2911 = vpop.permute.xlu0 %2910
        %s2913 = sor.u32 256, 8
        %2914 = vbcast.lane.b32.xlu0 %v2908, %s2913
        %v2915 = vpop.permute.xlu0 %2914
        %s2917 = sor.u32 256, 16
        %2918 = vbcast.lane.b32.xlu0 %v2908, %s2917
        %v2919 = vpop.permute.xlu0 %2918
        %s2921 = sor.u32 256, 24
        %2922 = vbcast.lane.b32.xlu0 %v2908, %s2921
        %v2923 = vpop.permute.xlu0 %2922
        %s2925 = sor.u32 256, 32
        %2926 = vbcast.lane.b32.xlu0 %v2908, %s2925
        %v2927 = vpop.permute.xlu0 %2926
        %s2929 = sor.u32 256, 40
        %2930 = vbcast.lane.b32.xlu0 %v2908, %s2929
        %v2931 = vpop.permute.xlu0 %2930
        %s2933 = sor.u32 256, 48
        %2934 = vbcast.lane.b32.xlu0 %v2908, %s2933
        %v2935 = vpop.permute.xlu0 %2934
        %s2937 = sor.u32 256, 56
        %2938 = vbcast.lane.b32.xlu0 %v2908, %s2937
        %v2939 = vpop.permute.xlu0 %2938
        %v2940 = vlaneseq
        %v2941 = vshrl.u32 %v2940, 7
        %v2942 = vsub.s32 1, %v2941
        %v2943 = vrot.slane %v2281, %v2942
        %2945 = vbcast.lane.b32.xlu0 %v2943, 256
        %v2946 = vpop.permute.xlu0 %2945
        %s2948 = sor.u32 256, 8
        %2949 = vbcast.lane.b32.xlu0 %v2943, %s2948
        %v2950 = vpop.permute.xlu0 %2949
        %s2952 = sor.u32 256, 16
        %2953 = vbcast.lane.b32.xlu0 %v2943, %s2952
        %v2954 = vpop.permute.xlu0 %2953
        %s2956 = sor.u32 256, 24
        %2957 = vbcast.lane.b32.xlu0 %v2943, %s2956
        %v2958 = vpop.permute.xlu0 %2957
        %s2960 = sor.u32 256, 32
        %2961 = vbcast.lane.b32.xlu0 %v2943, %s2960
        %v2962 = vpop.permute.xlu0 %2961
        %s2964 = sor.u32 256, 40
        %2965 = vbcast.lane.b32.xlu0 %v2943, %s2964
        %v2966 = vpop.permute.xlu0 %2965
        %s2968 = sor.u32 256, 48
        %2969 = vbcast.lane.b32.xlu0 %v2943, %s2968
        %v2970 = vpop.permute.xlu0 %2969
        %s2972 = sor.u32 256, 56
        %2973 = vbcast.lane.b32.xlu0 %v2943, %s2972
        %v2974 = vpop.permute.xlu0 %2973
        %v2975 = vlaneseq
        %v2976 = vshrl.u32 %v2975, 7
        %v2977 = vsub.s32 2, %v2976
        %v2978 = vrot.slane %v2281, %v2977
        %2980 = vbcast.lane.b32.xlu0 %v2978, 256
        %v2981 = vpop.permute.xlu0 %2980
        %s2983 = sor.u32 256, 8
        %2984 = vbcast.lane.b32.xlu0 %v2978, %s2983
        %v2985 = vpop.permute.xlu0 %2984
        %s2987 = sor.u32 256, 16
        %2988 = vbcast.lane.b32.xlu0 %v2978, %s2987
        %v2989 = vpop.permute.xlu0 %2988
        %s2991 = sor.u32 256, 24
        %2992 = vbcast.lane.b32.xlu0 %v2978, %s2991
        %v2993 = vpop.permute.xlu0 %2992
        %s2995 = sor.u32 256, 32
        %2996 = vbcast.lane.b32.xlu0 %v2978, %s2995
        %v2997 = vpop.permute.xlu0 %2996
        %s2999 = sor.u32 256, 40
        %3000 = vbcast.lane.b32.xlu0 %v2978, %s2999
        %v3001 = vpop.permute.xlu0 %3000
        %s3003 = sor.u32 256, 48
        %3004 = vbcast.lane.b32.xlu0 %v2978, %s3003
        %v3005 = vpop.permute.xlu0 %3004
        %s3007 = sor.u32 256, 56
        %3008 = vbcast.lane.b32.xlu0 %v2978, %s3007
        %v3009 = vpop.permute.xlu0 %3008
        %v3010 = vlaneseq
        %v3011 = vshrl.u32 %v3010, 7
        %v3012 = vsub.s32 3, %v3011
        %v3013 = vrot.slane %v2281, %v3012
        %3015 = vbcast.lane.b32.xlu0 %v3013, 256
        %v3016 = vpop.permute.xlu0 %3015
        %s3018 = sor.u32 256, 8
        %3019 = vbcast.lane.b32.xlu0 %v3013, %s3018
        %v3020 = vpop.permute.xlu0 %3019
        %s3022 = sor.u32 256, 16
        %3023 = vbcast.lane.b32.xlu0 %v3013, %s3022
        %v3024 = vpop.permute.xlu0 %3023
        %s3026 = sor.u32 256, 24
        %3027 = vbcast.lane.b32.xlu0 %v3013, %s3026
        %v3028 = vpop.permute.xlu0 %3027
        %s3030 = sor.u32 256, 32
        %3031 = vbcast.lane.b32.xlu0 %v3013, %s3030
        %v3032 = vpop.permute.xlu0 %3031
        %s3034 = sor.u32 256, 40
        %3035 = vbcast.lane.b32.xlu0 %v3013, %s3034
        %v3036 = vpop.permute.xlu0 %3035
        %s3038 = sor.u32 256, 48
        %3039 = vbcast.lane.b32.xlu0 %v3013, %s3038
        %v3040 = vpop.permute.xlu0 %3039
        %s3042 = sor.u32 256, 56
        %3043 = vbcast.lane.b32.xlu0 %v3013, %s3042
        %v3044 = vpop.permute.xlu0 %3043
        %v3045 = vlaneseq
        %v3046 = vshrl.u32 %v3045, 7
        %v3047 = vsub.s32 4, %v3046
        %v3048 = vrot.slane %v2281, %v3047
        %3050 = vbcast.lane.b32.xlu0 %v3048, 256
        %v3051 = vpop.permute.xlu0 %3050
        %s3053 = sor.u32 256, 8
        %3054 = vbcast.lane.b32.xlu0 %v3048, %s3053
        %v3055 = vpop.permute.xlu0 %3054
        %s3057 = sor.u32 256, 16
        %3058 = vbcast.lane.b32.xlu0 %v3048, %s3057
        %v3059 = vpop.permute.xlu0 %3058
        %s3061 = sor.u32 256, 24
        %3062 = vbcast.lane.b32.xlu0 %v3048, %s3061
        %v3063 = vpop.permute.xlu0 %3062
        %s3065 = sor.u32 256, 32
        %3066 = vbcast.lane.b32.xlu0 %v3048, %s3065
        %v3067 = vpop.permute.xlu0 %3066
        %s3069 = sor.u32 256, 40
        %3070 = vbcast.lane.b32.xlu0 %v3048, %s3069
        %v3071 = vpop.permute.xlu0 %3070
        %s3073 = sor.u32 256, 48
        %3074 = vbcast.lane.b32.xlu0 %v3048, %s3073
        %v3075 = vpop.permute.xlu0 %3074
        %s3077 = sor.u32 256, 56
        %3078 = vbcast.lane.b32.xlu0 %v3048, %s3077
        %v3079 = vpop.permute.xlu0 %3078
        %v3080 = vlaneseq
        %v3081 = vshrl.u32 %v3080, 7
        %v3082 = vsub.s32 5, %v3081
        %v3083 = vrot.slane %v2281, %v3082
        %3085 = vbcast.lane.b32.xlu0 %v3083, 256
        %v3086 = vpop.permute.xlu0 %3085
        %s3088 = sor.u32 256, 8
        %3089 = vbcast.lane.b32.xlu0 %v3083, %s3088
        %v3090 = vpop.permute.xlu0 %3089
        %s3092 = sor.u32 256, 16
        %3093 = vbcast.lane.b32.xlu0 %v3083, %s3092
        %v3094 = vpop.permute.xlu0 %3093
        %s3096 = sor.u32 256, 24
        %3097 = vbcast.lane.b32.xlu0 %v3083, %s3096
        %v3098 = vpop.permute.xlu0 %3097
        %s3100 = sor.u32 256, 32
        %3101 = vbcast.lane.b32.xlu0 %v3083, %s3100
        %v3102 = vpop.permute.xlu0 %3101
        %s3104 = sor.u32 256, 40
        %3105 = vbcast.lane.b32.xlu0 %v3083, %s3104
        %v3106 = vpop.permute.xlu0 %3105
        %s3108 = sor.u32 256, 48
        %3109 = vbcast.lane.b32.xlu0 %v3083, %s3108
        %v3110 = vpop.permute.xlu0 %3109
        %s3112 = sor.u32 256, 56
        %3113 = vbcast.lane.b32.xlu0 %v3083, %s3112
        %v3114 = vpop.permute.xlu0 %3113
        %v3115 = vlaneseq
        %v3116 = vshrl.u32 %v3115, 7
        %v3117 = vsub.s32 6, %v3116
        %v3118 = vrot.slane %v2281, %v3117
        %3120 = vbcast.lane.b32.xlu0 %v3118, 256
        %v3121 = vpop.permute.xlu0 %3120
        %s3123 = sor.u32 256, 8
        %3124 = vbcast.lane.b32.xlu0 %v3118, %s3123
        %v3125 = vpop.permute.xlu0 %3124
        %s3127 = sor.u32 256, 16
        %3128 = vbcast.lane.b32.xlu0 %v3118, %s3127
        %v3129 = vpop.permute.xlu0 %3128
        %s3131 = sor.u32 256, 24
        %3132 = vbcast.lane.b32.xlu0 %v3118, %s3131
        %v3133 = vpop.permute.xlu0 %3132
        %s3135 = sor.u32 256, 32
        %3136 = vbcast.lane.b32.xlu0 %v3118, %s3135
        %v3137 = vpop.permute.xlu0 %3136
        %s3139 = sor.u32 256, 40
        %3140 = vbcast.lane.b32.xlu0 %v3118, %s3139
        %v3141 = vpop.permute.xlu0 %3140
        %s3143 = sor.u32 256, 48
        %3144 = vbcast.lane.b32.xlu0 %v3118, %s3143
        %v3145 = vpop.permute.xlu0 %3144
        %s3147 = sor.u32 256, 56
        %3148 = vbcast.lane.b32.xlu0 %v3118, %s3147
        %v3149 = vpop.permute.xlu0 %3148
        %v3150 = vlaneseq
        %v3151 = vshrl.u32 %v3150, 7
        %v3152 = vsub.s32 7, %v3151
        %v3153 = vrot.slane %v2281, %v3152
        %3155 = vbcast.lane.b32.xlu0 %v3153, 256
        %v3156 = vpop.permute.xlu0 %3155
        %s3158 = sor.u32 256, 8
        %3159 = vbcast.lane.b32.xlu0 %v3153, %s3158
        %v3160 = vpop.permute.xlu0 %3159
        %s3162 = sor.u32 256, 16
        %3163 = vbcast.lane.b32.xlu0 %v3153, %s3162
        %v3164 = vpop.permute.xlu0 %3163
        %s3166 = sor.u32 256, 24
        %3167 = vbcast.lane.b32.xlu0 %v3153, %s3166
        %v3168 = vpop.permute.xlu0 %3167
        %s3170 = sor.u32 256, 32
        %3171 = vbcast.lane.b32.xlu0 %v3153, %s3170
        %v3172 = vpop.permute.xlu0 %3171
        %s3174 = sor.u32 256, 40
        %3175 = vbcast.lane.b32.xlu0 %v3153, %s3174
        %v3176 = vpop.permute.xlu0 %3175
        %s3178 = sor.u32 256, 48
        %3179 = vbcast.lane.b32.xlu0 %v3153, %s3178
        %v3180 = vpop.permute.xlu0 %3179
        %s3182 = sor.u32 256, 56
        %3183 = vbcast.lane.b32.xlu0 %v3153, %s3182
        %v3184 = vpop.permute.xlu0 %3183
        %v3185 = vlaneseq
        %v3186 = vshrl.u32 %v3185, 7
        %v3187 = vsub.s32 0, %v3186
        %v3188 = vrot.slane %v2282, %v3187
        %3190 = vbcast.lane.b32.xlu0 %v3188, 256
        %v3191 = vpop.permute.xlu0 %3190
        %s3193 = sor.u32 256, 8
        %3194 = vbcast.lane.b32.xlu0 %v3188, %s3193
        %v3195 = vpop.permute.xlu0 %3194
        %s3197 = sor.u32 256, 16
        %3198 = vbcast.lane.b32.xlu0 %v3188, %s3197
        %v3199 = vpop.permute.xlu0 %3198
        %s3201 = sor.u32 256, 24
        %3202 = vbcast.lane.b32.xlu0 %v3188, %s3201
        %v3203 = vpop.permute.xlu0 %3202
        %s3205 = sor.u32 256, 32
        %3206 = vbcast.lane.b32.xlu0 %v3188, %s3205
        %v3207 = vpop.permute.xlu0 %3206
        %s3209 = sor.u32 256, 40
        %3210 = vbcast.lane.b32.xlu0 %v3188, %s3209
        %v3211 = vpop.permute.xlu0 %3210
        %s3213 = sor.u32 256, 48
        %3214 = vbcast.lane.b32.xlu0 %v3188, %s3213
        %v3215 = vpop.permute.xlu0 %3214
        %s3217 = sor.u32 256, 56
        %3218 = vbcast.lane.b32.xlu0 %v3188, %s3217
        %v3219 = vpop.permute.xlu0 %3218
        %v3220 = vlaneseq
        %v3221 = vshrl.u32 %v3220, 7
        %v3222 = vsub.s32 1, %v3221
        %v3223 = vrot.slane %v2282, %v3222
        %3225 = vbcast.lane.b32.xlu0 %v3223, 256
        %v3226 = vpop.permute.xlu0 %3225
        %s3228 = sor.u32 256, 8
        %3229 = vbcast.lane.b32.xlu0 %v3223, %s3228
        %v3230 = vpop.permute.xlu0 %3229
        %s3232 = sor.u32 256, 16
        %3233 = vbcast.lane.b32.xlu0 %v3223, %s3232
        %v3234 = vpop.permute.xlu0 %3233
        %s3236 = sor.u32 256, 24
        %3237 = vbcast.lane.b32.xlu0 %v3223, %s3236
        %v3238 = vpop.permute.xlu0 %3237
        %s3240 = sor.u32 256, 32
        %3241 = vbcast.lane.b32.xlu0 %v3223, %s3240
        %v3242 = vpop.permute.xlu0 %3241
        %s3244 = sor.u32 256, 40
        %3245 = vbcast.lane.b32.xlu0 %v3223, %s3244
        %v3246 = vpop.permute.xlu0 %3245
        %s3248 = sor.u32 256, 48
        %3249 = vbcast.lane.b32.xlu0 %v3223, %s3248
        %v3250 = vpop.permute.xlu0 %3249
        %s3252 = sor.u32 256, 56
        %3253 = vbcast.lane.b32.xlu0 %v3223, %s3252
        %v3254 = vpop.permute.xlu0 %3253
        %v3255 = vlaneseq
        %v3256 = vshrl.u32 %v3255, 7
        %v3257 = vsub.s32 2, %v3256
        %v3258 = vrot.slane %v2282, %v3257
        %3260 = vbcast.lane.b32.xlu0 %v3258, 256
        %v3261 = vpop.permute.xlu0 %3260
        %s3263 = sor.u32 256, 8
        %3264 = vbcast.lane.b32.xlu0 %v3258, %s3263
        %v3265 = vpop.permute.xlu0 %3264
        %s3267 = sor.u32 256, 16
        %3268 = vbcast.lane.b32.xlu0 %v3258, %s3267
        %v3269 = vpop.permute.xlu0 %3268
        %s3271 = sor.u32 256, 24
        %3272 = vbcast.lane.b32.xlu0 %v3258, %s3271
        %v3273 = vpop.permute.xlu0 %3272
        %s3275 = sor.u32 256, 32
        %3276 = vbcast.lane.b32.xlu0 %v3258, %s3275
        %v3277 = vpop.permute.xlu0 %3276
        %s3279 = sor.u32 256, 40
        %3280 = vbcast.lane.b32.xlu0 %v3258, %s3279
        %v3281 = vpop.permute.xlu0 %3280
        %s3283 = sor.u32 256, 48
        %3284 = vbcast.lane.b32.xlu0 %v3258, %s3283
        %v3285 = vpop.permute.xlu0 %3284
        %s3287 = sor.u32 256, 56
        %3288 = vbcast.lane.b32.xlu0 %v3258, %s3287
        %v3289 = vpop.permute.xlu0 %3288
        %v3290 = vlaneseq
        %v3291 = vshrl.u32 %v3290, 7
        %v3292 = vsub.s32 3, %v3291
        %v3293 = vrot.slane %v2282, %v3292
        %3295 = vbcast.lane.b32.xlu0 %v3293, 256
        %v3296 = vpop.permute.xlu0 %3295
        %s3298 = sor.u32 256, 8
        %3299 = vbcast.lane.b32.xlu0 %v3293, %s3298
        %v3300 = vpop.permute.xlu0 %3299
        %s3302 = sor.u32 256, 16
        %3303 = vbcast.lane.b32.xlu0 %v3293, %s3302
        %v3304 = vpop.permute.xlu0 %3303
        %s3306 = sor.u32 256, 24
        %3307 = vbcast.lane.b32.xlu0 %v3293, %s3306
        %v3308 = vpop.permute.xlu0 %3307
        %s3310 = sor.u32 256, 32
        %3311 = vbcast.lane.b32.xlu0 %v3293, %s3310
        %v3312 = vpop.permute.xlu0 %3311
        %s3314 = sor.u32 256, 40
        %3315 = vbcast.lane.b32.xlu0 %v3293, %s3314
        %v3316 = vpop.permute.xlu0 %3315
        %s3318 = sor.u32 256, 48
        %3319 = vbcast.lane.b32.xlu0 %v3293, %s3318
        %v3320 = vpop.permute.xlu0 %3319
        %s3322 = sor.u32 256, 56
        %3323 = vbcast.lane.b32.xlu0 %v3293, %s3322
        %v3324 = vpop.permute.xlu0 %3323
        %v3325 = vlaneseq
        %v3326 = vshrl.u32 %v3325, 7
        %v3327 = vsub.s32 4, %v3326
        %v3328 = vrot.slane %v2282, %v3327
        %3330 = vbcast.lane.b32.xlu0 %v3328, 256
        %v3331 = vpop.permute.xlu0 %3330
        %s3333 = sor.u32 256, 8
        %3334 = vbcast.lane.b32.xlu0 %v3328, %s3333
        %v3335 = vpop.permute.xlu0 %3334
        %s3337 = sor.u32 256, 16
        %3338 = vbcast.lane.b32.xlu0 %v3328, %s3337
        %v3339 = vpop.permute.xlu0 %3338
        %s3341 = sor.u32 256, 24
        %3342 = vbcast.lane.b32.xlu0 %v3328, %s3341
        %v3343 = vpop.permute.xlu0 %3342
        %s3345 = sor.u32 256, 32
        %3346 = vbcast.lane.b32.xlu0 %v3328, %s3345
        %v3347 = vpop.permute.xlu0 %3346
        %s3349 = sor.u32 256, 40
        %3350 = vbcast.lane.b32.xlu0 %v3328, %s3349
        %v3351 = vpop.permute.xlu0 %3350
        %s3353 = sor.u32 256, 48
        %3354 = vbcast.lane.b32.xlu0 %v3328, %s3353
        %v3355 = vpop.permute.xlu0 %3354
        %s3357 = sor.u32 256, 56
        %3358 = vbcast.lane.b32.xlu0 %v3328, %s3357
        %v3359 = vpop.permute.xlu0 %3358
        %v3360 = vlaneseq
        %v3361 = vshrl.u32 %v3360, 7
        %v3362 = vsub.s32 5, %v3361
        %v3363 = vrot.slane %v2282, %v3362
        %3365 = vbcast.lane.b32.xlu0 %v3363, 256
        %v3366 = vpop.permute.xlu0 %3365
        %s3368 = sor.u32 256, 8
        %3369 = vbcast.lane.b32.xlu0 %v3363, %s3368
        %v3370 = vpop.permute.xlu0 %3369
        %s3372 = sor.u32 256, 16
        %3373 = vbcast.lane.b32.xlu0 %v3363, %s3372
        %v3374 = vpop.permute.xlu0 %3373
        %s3376 = sor.u32 256, 24
        %3377 = vbcast.lane.b32.xlu0 %v3363, %s3376
        %v3378 = vpop.permute.xlu0 %3377
        %s3380 = sor.u32 256, 32
        %3381 = vbcast.lane.b32.xlu0 %v3363, %s3380
        %v3382 = vpop.permute.xlu0 %3381
        %s3384 = sor.u32 256, 40
        %3385 = vbcast.lane.b32.xlu0 %v3363, %s3384
        %v3386 = vpop.permute.xlu0 %3385
        %s3388 = sor.u32 256, 48
        %3389 = vbcast.lane.b32.xlu0 %v3363, %s3388
        %v3390 = vpop.permute.xlu0 %3389
        %s3392 = sor.u32 256, 56
        %3393 = vbcast.lane.b32.xlu0 %v3363, %s3392
        %v3394 = vpop.permute.xlu0 %3393
        %v3395 = vlaneseq
        %v3396 = vshrl.u32 %v3395, 7
        %v3397 = vsub.s32 6, %v3396
        %v3398 = vrot.slane %v2282, %v3397
        %3400 = vbcast.lane.b32.xlu0 %v3398, 256
        %v3401 = vpop.permute.xlu0 %3400
        %s3403 = sor.u32 256, 8
        %3404 = vbcast.lane.b32.xlu0 %v3398, %s3403
        %v3405 = vpop.permute.xlu0 %3404
        %s3407 = sor.u32 256, 16
        %3408 = vbcast.lane.b32.xlu0 %v3398, %s3407
        %v3409 = vpop.permute.xlu0 %3408
        %s3411 = sor.u32 256, 24
        %3412 = vbcast.lane.b32.xlu0 %v3398, %s3411
        %v3413 = vpop.permute.xlu0 %3412
        %s3415 = sor.u32 256, 32
        %3416 = vbcast.lane.b32.xlu0 %v3398, %s3415
        %v3417 = vpop.permute.xlu0 %3416
        %s3419 = sor.u32 256, 40
        %3420 = vbcast.lane.b32.xlu0 %v3398, %s3419
        %v3421 = vpop.permute.xlu0 %3420
        %s3423 = sor.u32 256, 48
        %3424 = vbcast.lane.b32.xlu0 %v3398, %s3423
        %v3425 = vpop.permute.xlu0 %3424
        %s3427 = sor.u32 256, 56
        %3428 = vbcast.lane.b32.xlu0 %v3398, %s3427
        %v3429 = vpop.permute.xlu0 %3428
        %v3430 = vlaneseq
        %v3431 = vshrl.u32 %v3430, 7
        %v3432 = vsub.s32 7, %v3431
        %v3433 = vrot.slane %v2282, %v3432
        %3435 = vbcast.lane.b32.xlu0 %v3433, 256
        %v3436 = vpop.permute.xlu0 %3435
        %s3438 = sor.u32 256, 8
        %3439 = vbcast.lane.b32.xlu0 %v3433, %s3438
        %v3440 = vpop.permute.xlu0 %3439
        %s3442 = sor.u32 256, 16
        %3443 = vbcast.lane.b32.xlu0 %v3433, %s3442
        %v3444 = vpop.permute.xlu0 %3443
        %s3446 = sor.u32 256, 24
        %3447 = vbcast.lane.b32.xlu0 %v3433, %s3446
        %v3448 = vpop.permute.xlu0 %3447
        %s3450 = sor.u32 256, 32
        %3451 = vbcast.lane.b32.xlu0 %v3433, %s3450
        %v3452 = vpop.permute.xlu0 %3451
        %s3454 = sor.u32 256, 40
        %3455 = vbcast.lane.b32.xlu0 %v3433, %s3454
        %v3456 = vpop.permute.xlu0 %3455
        %s3458 = sor.u32 256, 48
        %3459 = vbcast.lane.b32.xlu0 %v3433, %s3458
        %v3460 = vpop.permute.xlu0 %3459
        %s3462 = sor.u32 256, 56
        %3463 = vbcast.lane.b32.xlu0 %v3433, %s3462
        %v3464 = vpop.permute.xlu0 %3463
        %vm3465 = vcmp.eq.s32.totalorder %v2344, %v2351
        %vm3466 = vcmp.eq.s32.totalorder %v2344, %v2355
        %vm3467 = vcmp.eq.s32.totalorder %v2344, %v2359
        %vm3468 = vcmp.eq.s32.totalorder %v2344, %v2363
        %vm3469 = vcmp.eq.s32.totalorder %v2344, %v2367
        %vm3470 = vcmp.eq.s32.totalorder %v2344, %v2371
        %vm3471 = vcmp.eq.s32.totalorder %v2344, %v2375
        %vm3472 = vcmp.eq.s32.totalorder %v2344, %v2379
        %vm3473 = vcmp.eq.s32.totalorder %v2344, %v2386
        %vm3474 = vcmp.eq.s32.totalorder %v2344, %v2390
        %vm3475 = vcmp.eq.s32.totalorder %v2344, %v2394
        %vm3476 = vcmp.eq.s32.totalorder %v2344, %v2398
        %vm3477 = vcmp.eq.s32.totalorder %v2344, %v2402
        %vm3478 = vcmp.eq.s32.totalorder %v2344, %v2406
        %vm3479 = vcmp.eq.s32.totalorder %v2344, %v2410
        %vm3480 = vcmp.eq.s32.totalorder %v2344, %v2414
        %vm3481 = vcmp.eq.s32.totalorder %v2344, %v2421
        %vm3482 = vcmp.eq.s32.totalorder %v2344, %v2425
        %vm3483 = vcmp.eq.s32.totalorder %v2344, %v2429
        %vm3484 = vcmp.eq.s32.totalorder %v2344, %v2433
        %vm3485 = vcmp.eq.s32.totalorder %v2344, %v2437
        %vm3486 = vcmp.eq.s32.totalorder %v2344, %v2441
        %vm3487 = vcmp.eq.s32.totalorder %v2344, %v2445
        %vm3488 = vcmp.eq.s32.totalorder %v2344, %v2449
        %vm3489 = vcmp.eq.s32.totalorder %v2344, %v2456
        %vm3490 = vcmp.eq.s32.totalorder %v2344, %v2460
        %vm3491 = vcmp.eq.s32.totalorder %v2344, %v2464
        %vm3492 = vcmp.eq.s32.totalorder %v2344, %v2468
        %vm3493 = vcmp.eq.s32.totalorder %v2344, %v2472
        %vm3494 = vcmp.eq.s32.totalorder %v2344, %v2476
        %vm3495 = vcmp.eq.s32.totalorder %v2344, %v2480
        %vm3496 = vcmp.eq.s32.totalorder %v2344, %v2484
        %vm3497 = vcmp.eq.s32.totalorder %v2344, %v2491
        %vm3498 = vcmp.eq.s32.totalorder %v2344, %v2495
        %vm3499 = vcmp.eq.s32.totalorder %v2344, %v2499
        %vm3500 = vcmp.eq.s32.totalorder %v2344, %v2503
        %vm3501 = vcmp.eq.s32.totalorder %v2344, %v2507
        %vm3502 = vcmp.eq.s32.totalorder %v2344, %v2511
        %vm3503 = vcmp.eq.s32.totalorder %v2344, %v2515
        %vm3504 = vcmp.eq.s32.totalorder %v2344, %v2519
        %vm3505 = vcmp.eq.s32.totalorder %v2344, %v2526
        %vm3506 = vcmp.eq.s32.totalorder %v2344, %v2530
        %vm3507 = vcmp.eq.s32.totalorder %v2344, %v2534
        %vm3508 = vcmp.eq.s32.totalorder %v2344, %v2538
        %vm3509 = vcmp.eq.s32.totalorder %v2344, %v2542
        %vm3510 = vcmp.eq.s32.totalorder %v2344, %v2546
        %vm3511 = vcmp.eq.s32.totalorder %v2344, %v2550
        %vm3512 = vcmp.eq.s32.totalorder %v2344, %v2554
        %vm3513 = vcmp.eq.s32.totalorder %v2344, %v2561
        %vm3514 = vcmp.eq.s32.totalorder %v2344, %v2565
        %vm3515 = vcmp.eq.s32.totalorder %v2344, %v2569
        %vm3516 = vcmp.eq.s32.totalorder %v2344, %v2573
        %vm3517 = vcmp.eq.s32.totalorder %v2344, %v2577
        %vm3518 = vcmp.eq.s32.totalorder %v2344, %v2581
        %vm3519 = vcmp.eq.s32.totalorder %v2344, %v2585
        %vm3520 = vcmp.eq.s32.totalorder %v2344, %v2589
        %vm3521 = vcmp.eq.s32.totalorder %v2344, %v2596
        %vm3522 = vcmp.eq.s32.totalorder %v2344, %v2600
        %vm3523 = vcmp.eq.s32.totalorder %v2344, %v2604
        %vm3524 = vcmp.eq.s32.totalorder %v2344, %v2608
        %vm3525 = vcmp.eq.s32.totalorder %v2344, %v2612
        %vm3526 = vcmp.eq.s32.totalorder %v2344, %v2616
        %vm3527 = vcmp.eq.s32.totalorder %v2344, %v2620
        %vm3528 = vcmp.eq.s32.totalorder %v2344, %v2624
        %vm3529 = vcmp.eq.s32.totalorder %v2344, %v2631
        %vm3530 = vcmp.eq.s32.totalorder %v2344, %v2635
        %vm3531 = vcmp.eq.s32.totalorder %v2344, %v2639
        %vm3532 = vcmp.eq.s32.totalorder %v2344, %v2643
        %vm3533 = vcmp.eq.s32.totalorder %v2344, %v2647
        %vm3534 = vcmp.eq.s32.totalorder %v2344, %v2651
        %vm3535 = vcmp.eq.s32.totalorder %v2344, %v2655
        %vm3536 = vcmp.eq.s32.totalorder %v2344, %v2659
        %vm3537 = vcmp.eq.s32.totalorder %v2344, %v2666
        %vm3538 = vcmp.eq.s32.totalorder %v2344, %v2670
        %vm3539 = vcmp.eq.s32.totalorder %v2344, %v2674
        %vm3540 = vcmp.eq.s32.totalorder %v2344, %v2678
        %vm3541 = vcmp.eq.s32.totalorder %v2344, %v2682
        %vm3542 = vcmp.eq.s32.totalorder %v2344, %v2686
        %vm3543 = vcmp.eq.s32.totalorder %v2344, %v2690
        %vm3544 = vcmp.eq.s32.totalorder %v2344, %v2694
        %vm3545 = vcmp.eq.s32.totalorder %v2344, %v2701
        %vm3546 = vcmp.eq.s32.totalorder %v2344, %v2705
        %vm3547 = vcmp.eq.s32.totalorder %v2344, %v2709
        %vm3548 = vcmp.eq.s32.totalorder %v2344, %v2713
        %vm3549 = vcmp.eq.s32.totalorder %v2344, %v2717
        %vm3550 = vcmp.eq.s32.totalorder %v2344, %v2721
        %vm3551 = vcmp.eq.s32.totalorder %v2344, %v2725
        %vm3552 = vcmp.eq.s32.totalorder %v2344, %v2729
        %vm3553 = vcmp.eq.s32.totalorder %v2344, %v2736
        %vm3554 = vcmp.eq.s32.totalorder %v2344, %v2740
        %vm3555 = vcmp.eq.s32.totalorder %v2344, %v2744
        %vm3556 = vcmp.eq.s32.totalorder %v2344, %v2748
        %vm3557 = vcmp.eq.s32.totalorder %v2344, %v2752
        %vm3558 = vcmp.eq.s32.totalorder %v2344, %v2756
        %vm3559 = vcmp.eq.s32.totalorder %v2344, %v2760
        %vm3560 = vcmp.eq.s32.totalorder %v2344, %v2764
        %vm3561 = vcmp.eq.s32.totalorder %v2344, %v2771
        %vm3562 = vcmp.eq.s32.totalorder %v2344, %v2775
        %vm3563 = vcmp.eq.s32.totalorder %v2344, %v2779
        %vm3564 = vcmp.eq.s32.totalorder %v2344, %v2783
        %vm3565 = vcmp.eq.s32.totalorder %v2344, %v2787
        %vm3566 = vcmp.eq.s32.totalorder %v2344, %v2791
        %vm3567 = vcmp.eq.s32.totalorder %v2344, %v2795
        %vm3568 = vcmp.eq.s32.totalorder %v2344, %v2799
        %vm3569 = vcmp.eq.s32.totalorder %v2344, %v2806
        %vm3570 = vcmp.eq.s32.totalorder %v2344, %v2810
        %vm3571 = vcmp.eq.s32.totalorder %v2344, %v2814
        %vm3572 = vcmp.eq.s32.totalorder %v2344, %v2818
        %vm3573 = vcmp.eq.s32.totalorder %v2344, %v2822
        %vm3574 = vcmp.eq.s32.totalorder %v2344, %v2826
        %vm3575 = vcmp.eq.s32.totalorder %v2344, %v2830
        %vm3576 = vcmp.eq.s32.totalorder %v2344, %v2834
        %vm3577 = vcmp.eq.s32.totalorder %v2344, %v2841
        %vm3578 = vcmp.eq.s32.totalorder %v2344, %v2845
        %vm3579 = vcmp.eq.s32.totalorder %v2344, %v2849
        %vm3580 = vcmp.eq.s32.totalorder %v2344, %v2853
        %vm3581 = vcmp.eq.s32.totalorder %v2344, %v2857
        %vm3582 = vcmp.eq.s32.totalorder %v2344, %v2861
        %vm3583 = vcmp.eq.s32.totalorder %v2344, %v2865
        %vm3584 = vcmp.eq.s32.totalorder %v2344, %v2869
        %vm3585 = vcmp.eq.s32.totalorder %v2344, %v2876
        %vm3586 = vcmp.eq.s32.totalorder %v2344, %v2880
        %vm3587 = vcmp.eq.s32.totalorder %v2344, %v2884
        %vm3588 = vcmp.eq.s32.totalorder %v2344, %v2888
        %vm3589 = vcmp.eq.s32.totalorder %v2344, %v2892
        %vm3590 = vcmp.eq.s32.totalorder %v2344, %v2896
        %vm3591 = vcmp.eq.s32.totalorder %v2344, %v2900
        %vm3592 = vcmp.eq.s32.totalorder %v2344, %v2904
        %vm3593 = vcmp.eq.s32.totalorder %v2344, %v2911
        %vm3594 = vcmp.eq.s32.totalorder %v2344, %v2915
        %vm3595 = vcmp.eq.s32.totalorder %v2344, %v2919
        %vm3596 = vcmp.eq.s32.totalorder %v2344, %v2923
        %vm3597 = vcmp.eq.s32.totalorder %v2344, %v2927
        %vm3598 = vcmp.eq.s32.totalorder %v2344, %v2931
        %vm3599 = vcmp.eq.s32.totalorder %v2344, %v2935
        %vm3600 = vcmp.eq.s32.totalorder %v2344, %v2939
        %vm3601 = vcmp.eq.s32.totalorder %v2344, %v2946
        %vm3602 = vcmp.eq.s32.totalorder %v2344, %v2950
        %vm3603 = vcmp.eq.s32.totalorder %v2344, %v2954
        %vm3604 = vcmp.eq.s32.totalorder %v2344, %v2958
        %vm3605 = vcmp.eq.s32.totalorder %v2344, %v2962
        %vm3606 = vcmp.eq.s32.totalorder %v2344, %v2966
        %vm3607 = vcmp.eq.s32.totalorder %v2344, %v2970
        %vm3608 = vcmp.eq.s32.totalorder %v2344, %v2974
        %vm3609 = vcmp.eq.s32.totalorder %v2344, %v2981
        %vm3610 = vcmp.eq.s32.totalorder %v2344, %v2985
        %vm3611 = vcmp.eq.s32.totalorder %v2344, %v2989
        %vm3612 = vcmp.eq.s32.totalorder %v2344, %v2993
        %vm3613 = vcmp.eq.s32.totalorder %v2344, %v2997
        %vm3614 = vcmp.eq.s32.totalorder %v2344, %v3001
        %vm3615 = vcmp.eq.s32.totalorder %v2344, %v3005
        %vm3616 = vcmp.eq.s32.totalorder %v2344, %v3009
        %vm3617 = vcmp.eq.s32.totalorder %v2344, %v3016
        %vm3618 = vcmp.eq.s32.totalorder %v2344, %v3020
        %vm3619 = vcmp.eq.s32.totalorder %v2344, %v3024
        %vm3620 = vcmp.eq.s32.totalorder %v2344, %v3028
        %vm3621 = vcmp.eq.s32.totalorder %v2344, %v3032
        %vm3622 = vcmp.eq.s32.totalorder %v2344, %v3036
        %vm3623 = vcmp.eq.s32.totalorder %v2344, %v3040
        %vm3624 = vcmp.eq.s32.totalorder %v2344, %v3044
        %vm3625 = vcmp.eq.s32.totalorder %v2344, %v3051
        %vm3626 = vcmp.eq.s32.totalorder %v2344, %v3055
        %vm3627 = vcmp.eq.s32.totalorder %v2344, %v3059
        %vm3628 = vcmp.eq.s32.totalorder %v2344, %v3063
        %vm3629 = vcmp.eq.s32.totalorder %v2344, %v3067
        %vm3630 = vcmp.eq.s32.totalorder %v2344, %v3071
        %vm3631 = vcmp.eq.s32.totalorder %v2344, %v3075
        %vm3632 = vcmp.eq.s32.totalorder %v2344, %v3079
        %vm3633 = vcmp.eq.s32.totalorder %v2344, %v3086
        %vm3634 = vcmp.eq.s32.totalorder %v2344, %v3090
        %vm3635 = vcmp.eq.s32.totalorder %v2344, %v3094
        %vm3636 = vcmp.eq.s32.totalorder %v2344, %v3098
        %vm3637 = vcmp.eq.s32.totalorder %v2344, %v3102
        %vm3638 = vcmp.eq.s32.totalorder %v2344, %v3106
        %vm3639 = vcmp.eq.s32.totalorder %v2344, %v3110
        %vm3640 = vcmp.eq.s32.totalorder %v2344, %v3114
        %vm3641 = vcmp.eq.s32.totalorder %v2344, %v3121
        %vm3642 = vcmp.eq.s32.totalorder %v2344, %v3125
        %vm3643 = vcmp.eq.s32.totalorder %v2344, %v3129
        %vm3644 = vcmp.eq.s32.totalorder %v2344, %v3133
        %vm3645 = vcmp.eq.s32.totalorder %v2344, %v3137
        %vm3646 = vcmp.eq.s32.totalorder %v2344, %v3141
        %vm3647 = vcmp.eq.s32.totalorder %v2344, %v3145
        %vm3648 = vcmp.eq.s32.totalorder %v2344, %v3149
        %vm3649 = vcmp.eq.s32.totalorder %v2344, %v3156
        %vm3650 = vcmp.eq.s32.totalorder %v2344, %v3160
        %vm3651 = vcmp.eq.s32.totalorder %v2344, %v3164
        %vm3652 = vcmp.eq.s32.totalorder %v2344, %v3168
        %vm3653 = vcmp.eq.s32.totalorder %v2344, %v3172
        %vm3654 = vcmp.eq.s32.totalorder %v2344, %v3176
        %vm3655 = vcmp.eq.s32.totalorder %v2344, %v3180
        %vm3656 = vcmp.eq.s32.totalorder %v2344, %v3184
        %vm3657 = vcmp.eq.s32.totalorder %v2344, %v3191
        %vm3658 = vcmp.eq.s32.totalorder %v2344, %v3195
        %vm3659 = vcmp.eq.s32.totalorder %v2344, %v3199
        %vm3660 = vcmp.eq.s32.totalorder %v2344, %v3203
        %vm3661 = vcmp.eq.s32.totalorder %v2344, %v3207
        %vm3662 = vcmp.eq.s32.totalorder %v2344, %v3211
        %vm3663 = vcmp.eq.s32.totalorder %v2344, %v3215
        %vm3664 = vcmp.eq.s32.totalorder %v2344, %v3219
        %vm3665 = vcmp.eq.s32.totalorder %v2344, %v3226
        %vm3666 = vcmp.eq.s32.totalorder %v2344, %v3230
        %vm3667 = vcmp.eq.s32.totalorder %v2344, %v3234
        %vm3668 = vcmp.eq.s32.totalorder %v2344, %v3238
        %vm3669 = vcmp.eq.s32.totalorder %v2344, %v3242
        %vm3670 = vcmp.eq.s32.totalorder %v2344, %v3246
        %vm3671 = vcmp.eq.s32.totalorder %v2344, %v3250
        %vm3672 = vcmp.eq.s32.totalorder %v2344, %v3254
        %vm3673 = vcmp.eq.s32.totalorder %v2344, %v3261
        %vm3674 = vcmp.eq.s32.totalorder %v2344, %v3265
        %vm3675 = vcmp.eq.s32.totalorder %v2344, %v3269
        %vm3676 = vcmp.eq.s32.totalorder %v2344, %v3273
        %vm3677 = vcmp.eq.s32.totalorder %v2344, %v3277
        %vm3678 = vcmp.eq.s32.totalorder %v2344, %v3281
        %vm3679 = vcmp.eq.s32.totalorder %v2344, %v3285
        %vm3680 = vcmp.eq.s32.totalorder %v2344, %v3289
        %vm3681 = vcmp.eq.s32.totalorder %v2344, %v3296
        %vm3682 = vcmp.eq.s32.totalorder %v2344, %v3300
        %vm3683 = vcmp.eq.s32.totalorder %v2344, %v3304
        %vm3684 = vcmp.eq.s32.totalorder %v2344, %v3308
        %vm3685 = vcmp.eq.s32.totalorder %v2344, %v3312
        %vm3686 = vcmp.eq.s32.totalorder %v2344, %v3316
        %vm3687 = vcmp.eq.s32.totalorder %v2344, %v3320
        %vm3688 = vcmp.eq.s32.totalorder %v2344, %v3324
        %vm3689 = vcmp.eq.s32.totalorder %v2344, %v3331
        %vm3690 = vcmp.eq.s32.totalorder %v2344, %v3335
        %vm3691 = vcmp.eq.s32.totalorder %v2344, %v3339
        %vm3692 = vcmp.eq.s32.totalorder %v2344, %v3343
        %vm3693 = vcmp.eq.s32.totalorder %v2344, %v3347
        %vm3694 = vcmp.eq.s32.totalorder %v2344, %v3351
        %vm3695 = vcmp.eq.s32.totalorder %v2344, %v3355
        %vm3696 = vcmp.eq.s32.totalorder %v2344, %v3359
        %vm3697 = vcmp.eq.s32.totalorder %v2344, %v3366
        %vm3698 = vcmp.eq.s32.totalorder %v2344, %v3370
        %vm3699 = vcmp.eq.s32.totalorder %v2344, %v3374
        %vm3700 = vcmp.eq.s32.totalorder %v2344, %v3378
        %vm3701 = vcmp.eq.s32.totalorder %v2344, %v3382
        %vm3702 = vcmp.eq.s32.totalorder %v2344, %v3386
        %vm3703 = vcmp.eq.s32.totalorder %v2344, %v3390
        %vm3704 = vcmp.eq.s32.totalorder %v2344, %v3394
        %vm3705 = vcmp.eq.s32.totalorder %v2344, %v3401
        %vm3706 = vcmp.eq.s32.totalorder %v2344, %v3405
        %vm3707 = vcmp.eq.s32.totalorder %v2344, %v3409
        %vm3708 = vcmp.eq.s32.totalorder %v2344, %v3413
        %vm3709 = vcmp.eq.s32.totalorder %v2344, %v3417
        %vm3710 = vcmp.eq.s32.totalorder %v2344, %v3421
        %vm3711 = vcmp.eq.s32.totalorder %v2344, %v3425
        %vm3712 = vcmp.eq.s32.totalorder %v2344, %v3429
        %vm3713 = vcmp.eq.s32.totalorder %v2344, %v3436
        %vm3714 = vcmp.eq.s32.totalorder %v2344, %v3440
        %vm3715 = vcmp.eq.s32.totalorder %v2344, %v3444
        %vm3716 = vcmp.eq.s32.totalorder %v2344, %v3448
        %vm3717 = vcmp.eq.s32.totalorder %v2344, %v3452
        %vm3718 = vcmp.eq.s32.totalorder %v2344, %v3456
        %vm3719 = vcmp.eq.s32.totalorder %v2344, %v3460
        %vm3720 = vcmp.eq.s32.totalorder %v2344, %v3464
        %v3721 = vlaneseq
        %v3722 = vshrl.u32 %v3721, 7
        %v3723 = vsub.s32 0, %v3722
        %v3724 = vrot.slane %v2339, %v3723
        %3726 = vbcast.lane.b32.xlu0 %v3724, 256
        %v3727 = vpop.permute.xlu0 %3726
        %s3729 = sor.u32 256, 8
        %3730 = vbcast.lane.b32.xlu0 %v3724, %s3729
        %v3731 = vpop.permute.xlu0 %3730
        %s3733 = sor.u32 256, 16
        %3734 = vbcast.lane.b32.xlu0 %v3724, %s3733
        %v3735 = vpop.permute.xlu0 %3734
        %s3737 = sor.u32 256, 24
        %3738 = vbcast.lane.b32.xlu0 %v3724, %s3737
        %v3739 = vpop.permute.xlu0 %3738
        %s3741 = sor.u32 256, 32
        %3742 = vbcast.lane.b32.xlu0 %v3724, %s3741
        %v3743 = vpop.permute.xlu0 %3742
        %s3745 = sor.u32 256, 40
        %3746 = vbcast.lane.b32.xlu0 %v3724, %s3745
        %v3747 = vpop.permute.xlu0 %3746
        %s3749 = sor.u32 256, 48
        %3750 = vbcast.lane.b32.xlu0 %v3724, %s3749
        %v3751 = vpop.permute.xlu0 %3750
        %s3753 = sor.u32 256, 56
        %3754 = vbcast.lane.b32.xlu0 %v3724, %s3753
        %v3755 = vpop.permute.xlu0 %3754
        %v3756 = vlaneseq
        %v3757 = vshrl.u32 %v3756, 7
        %v3758 = vsub.s32 1, %v3757
        %v3759 = vrot.slane %v2339, %v3758
        %3761 = vbcast.lane.b32.xlu0 %v3759, 256
        %v3762 = vpop.permute.xlu0 %3761
        %s3764 = sor.u32 256, 8
        %3765 = vbcast.lane.b32.xlu0 %v3759, %s3764
        %v3766 = vpop.permute.xlu0 %3765
        %s3768 = sor.u32 256, 16
        %3769 = vbcast.lane.b32.xlu0 %v3759, %s3768
        %v3770 = vpop.permute.xlu0 %3769
        %s3772 = sor.u32 256, 24
        %3773 = vbcast.lane.b32.xlu0 %v3759, %s3772
        %v3774 = vpop.permute.xlu0 %3773
        %s3776 = sor.u32 256, 32
        %3777 = vbcast.lane.b32.xlu0 %v3759, %s3776
        %v3778 = vpop.permute.xlu0 %3777
        %s3780 = sor.u32 256, 40
        %3781 = vbcast.lane.b32.xlu0 %v3759, %s3780
        %v3782 = vpop.permute.xlu0 %3781
        %s3784 = sor.u32 256, 48
        %3785 = vbcast.lane.b32.xlu0 %v3759, %s3784
        %v3786 = vpop.permute.xlu0 %3785
        %s3788 = sor.u32 256, 56
        %3789 = vbcast.lane.b32.xlu0 %v3759, %s3788
        %v3790 = vpop.permute.xlu0 %3789
        %v3791 = vlaneseq
        %v3792 = vshrl.u32 %v3791, 7
        %v3793 = vsub.s32 2, %v3792
        %v3794 = vrot.slane %v2339, %v3793
        %3796 = vbcast.lane.b32.xlu0 %v3794, 256
        %v3797 = vpop.permute.xlu0 %3796
        %s3799 = sor.u32 256, 8
        %3800 = vbcast.lane.b32.xlu0 %v3794, %s3799
        %v3801 = vpop.permute.xlu0 %3800
        %s3803 = sor.u32 256, 16
        %3804 = vbcast.lane.b32.xlu0 %v3794, %s3803
        %v3805 = vpop.permute.xlu0 %3804
        %s3807 = sor.u32 256, 24
        %3808 = vbcast.lane.b32.xlu0 %v3794, %s3807
        %v3809 = vpop.permute.xlu0 %3808
        %s3811 = sor.u32 256, 32
        %3812 = vbcast.lane.b32.xlu0 %v3794, %s3811
        %v3813 = vpop.permute.xlu0 %3812
        %s3815 = sor.u32 256, 40
        %3816 = vbcast.lane.b32.xlu0 %v3794, %s3815
        %v3817 = vpop.permute.xlu0 %3816
        %s3819 = sor.u32 256, 48
        %3820 = vbcast.lane.b32.xlu0 %v3794, %s3819
        %v3821 = vpop.permute.xlu0 %3820
        %s3823 = sor.u32 256, 56
        %3824 = vbcast.lane.b32.xlu0 %v3794, %s3823
        %v3825 = vpop.permute.xlu0 %3824
        %v3826 = vlaneseq
        %v3827 = vshrl.u32 %v3826, 7
        %v3828 = vsub.s32 3, %v3827
        %v3829 = vrot.slane %v2339, %v3828
        %3831 = vbcast.lane.b32.xlu0 %v3829, 256
        %v3832 = vpop.permute.xlu0 %3831
        %s3834 = sor.u32 256, 8
        %3835 = vbcast.lane.b32.xlu0 %v3829, %s3834
        %v3836 = vpop.permute.xlu0 %3835
        %s3838 = sor.u32 256, 16
        %3839 = vbcast.lane.b32.xlu0 %v3829, %s3838
        %v3840 = vpop.permute.xlu0 %3839
        %s3842 = sor.u32 256, 24
        %3843 = vbcast.lane.b32.xlu0 %v3829, %s3842
        %v3844 = vpop.permute.xlu0 %3843
        %s3846 = sor.u32 256, 32
        %3847 = vbcast.lane.b32.xlu0 %v3829, %s3846
        %v3848 = vpop.permute.xlu0 %3847
        %s3850 = sor.u32 256, 40
        %3851 = vbcast.lane.b32.xlu0 %v3829, %s3850
        %v3852 = vpop.permute.xlu0 %3851
        %s3854 = sor.u32 256, 48
        %3855 = vbcast.lane.b32.xlu0 %v3829, %s3854
        %v3856 = vpop.permute.xlu0 %3855
        %s3858 = sor.u32 256, 56
        %3859 = vbcast.lane.b32.xlu0 %v3829, %s3858
        %v3860 = vpop.permute.xlu0 %3859
        %v3861 = vlaneseq
        %v3862 = vshrl.u32 %v3861, 7
        %v3863 = vsub.s32 4, %v3862
        %v3864 = vrot.slane %v2339, %v3863
        %3866 = vbcast.lane.b32.xlu0 %v3864, 256
        %v3867 = vpop.permute.xlu0 %3866
        %s3869 = sor.u32 256, 8
        %3870 = vbcast.lane.b32.xlu0 %v3864, %s3869
        %v3871 = vpop.permute.xlu0 %3870
        %s3873 = sor.u32 256, 16
        %3874 = vbcast.lane.b32.xlu0 %v3864, %s3873
        %v3875 = vpop.permute.xlu0 %3874
        %s3877 = sor.u32 256, 24
        %3878 = vbcast.lane.b32.xlu0 %v3864, %s3877
        %v3879 = vpop.permute.xlu0 %3878
        %s3881 = sor.u32 256, 32
        %3882 = vbcast.lane.b32.xlu0 %v3864, %s3881
        %v3883 = vpop.permute.xlu0 %3882
        %s3885 = sor.u32 256, 40
        %3886 = vbcast.lane.b32.xlu0 %v3864, %s3885
        %v3887 = vpop.permute.xlu0 %3886
        %s3889 = sor.u32 256, 48
        %3890 = vbcast.lane.b32.xlu0 %v3864, %s3889
        %v3891 = vpop.permute.xlu0 %3890
        %s3893 = sor.u32 256, 56
        %3894 = vbcast.lane.b32.xlu0 %v3864, %s3893
        %v3895 = vpop.permute.xlu0 %3894
        %v3896 = vlaneseq
        %v3897 = vshrl.u32 %v3896, 7
        %v3898 = vsub.s32 5, %v3897
        %v3899 = vrot.slane %v2339, %v3898
        %3901 = vbcast.lane.b32.xlu0 %v3899, 256
        %v3902 = vpop.permute.xlu0 %3901
        %s3904 = sor.u32 256, 8
        %3905 = vbcast.lane.b32.xlu0 %v3899, %s3904
        %v3906 = vpop.permute.xlu0 %3905
        %s3908 = sor.u32 256, 16
        %3909 = vbcast.lane.b32.xlu0 %v3899, %s3908
        %v3910 = vpop.permute.xlu0 %3909
        %s3912 = sor.u32 256, 24
        %3913 = vbcast.lane.b32.xlu0 %v3899, %s3912
        %v3914 = vpop.permute.xlu0 %3913
        %s3916 = sor.u32 256, 32
        %3917 = vbcast.lane.b32.xlu0 %v3899, %s3916
        %v3918 = vpop.permute.xlu0 %3917
        %s3920 = sor.u32 256, 40
        %3921 = vbcast.lane.b32.xlu0 %v3899, %s3920
        %v3922 = vpop.permute.xlu0 %3921
        %s3924 = sor.u32 256, 48
        %3925 = vbcast.lane.b32.xlu0 %v3899, %s3924
        %v3926 = vpop.permute.xlu0 %3925
        %s3928 = sor.u32 256, 56
        %3929 = vbcast.lane.b32.xlu0 %v3899, %s3928
        %v3930 = vpop.permute.xlu0 %3929
        %v3931 = vlaneseq
        %v3932 = vshrl.u32 %v3931, 7
        %v3933 = vsub.s32 6, %v3932
        %v3934 = vrot.slane %v2339, %v3933
        %3936 = vbcast.lane.b32.xlu0 %v3934, 256
        %v3937 = vpop.permute.xlu0 %3936
        %s3939 = sor.u32 256, 8
        %3940 = vbcast.lane.b32.xlu0 %v3934, %s3939
        %v3941 = vpop.permute.xlu0 %3940
        %s3943 = sor.u32 256, 16
        %3944 = vbcast.lane.b32.xlu0 %v3934, %s3943
        %v3945 = vpop.permute.xlu0 %3944
        %s3947 = sor.u32 256, 24
        %3948 = vbcast.lane.b32.xlu0 %v3934, %s3947
        %v3949 = vpop.permute.xlu0 %3948
        %s3951 = sor.u32 256, 32
        %3952 = vbcast.lane.b32.xlu0 %v3934, %s3951
        %v3953 = vpop.permute.xlu0 %3952
        %s3955 = sor.u32 256, 40
        %3956 = vbcast.lane.b32.xlu0 %v3934, %s3955
        %v3957 = vpop.permute.xlu0 %3956
        %s3959 = sor.u32 256, 48
        %3960 = vbcast.lane.b32.xlu0 %v3934, %s3959
        %v3961 = vpop.permute.xlu0 %3960
        %s3963 = sor.u32 256, 56
        %3964 = vbcast.lane.b32.xlu0 %v3934, %s3963
        %v3965 = vpop.permute.xlu0 %3964
        %v3966 = vlaneseq
        %v3967 = vshrl.u32 %v3966, 7
        %v3968 = vsub.s32 7, %v3967
        %v3969 = vrot.slane %v2339, %v3968
        %3971 = vbcast.lane.b32.xlu0 %v3969, 256
        %v3972 = vpop.permute.xlu0 %3971
        %s3974 = sor.u32 256, 8
        %3975 = vbcast.lane.b32.xlu0 %v3969, %s3974
        %v3976 = vpop.permute.xlu0 %3975
        %s3978 = sor.u32 256, 16
        %3979 = vbcast.lane.b32.xlu0 %v3969, %s3978
        %v3980 = vpop.permute.xlu0 %3979
        %s3982 = sor.u32 256, 24
        %3983 = vbcast.lane.b32.xlu0 %v3969, %s3982
        %v3984 = vpop.permute.xlu0 %3983
        %s3986 = sor.u32 256, 32
        %3987 = vbcast.lane.b32.xlu0 %v3969, %s3986
        %v3988 = vpop.permute.xlu0 %3987
        %s3990 = sor.u32 256, 40
        %3991 = vbcast.lane.b32.xlu0 %v3969, %s3990
        %v3992 = vpop.permute.xlu0 %3991
        %s3994 = sor.u32 256, 48
        %3995 = vbcast.lane.b32.xlu0 %v3969, %s3994
        %v3996 = vpop.permute.xlu0 %3995
        %s3998 = sor.u32 256, 56
        %3999 = vbcast.lane.b32.xlu0 %v3969, %s3998
        %v4000 = vpop.permute.xlu0 %3999
        %v4001 = vlaneseq
        %v4002 = vshrl.u32 %v4001, 7
        %v4003 = vsub.s32 0, %v4002
        %v4004 = vrot.slane %v2340, %v4003
        %4006 = vbcast.lane.b32.xlu0 %v4004, 256
        %v4007 = vpop.permute.xlu0 %4006
        %s4009 = sor.u32 256, 8
        %4010 = vbcast.lane.b32.xlu0 %v4004, %s4009
        %v4011 = vpop.permute.xlu0 %4010
        %s4013 = sor.u32 256, 16
        %4014 = vbcast.lane.b32.xlu0 %v4004, %s4013
        %v4015 = vpop.permute.xlu0 %4014
        %s4017 = sor.u32 256, 24
        %4018 = vbcast.lane.b32.xlu0 %v4004, %s4017
        %v4019 = vpop.permute.xlu0 %4018
        %s4021 = sor.u32 256, 32
        %4022 = vbcast.lane.b32.xlu0 %v4004, %s4021
        %v4023 = vpop.permute.xlu0 %4022
        %s4025 = sor.u32 256, 40
        %4026 = vbcast.lane.b32.xlu0 %v4004, %s4025
        %v4027 = vpop.permute.xlu0 %4026
        %s4029 = sor.u32 256, 48
        %4030 = vbcast.lane.b32.xlu0 %v4004, %s4029
        %v4031 = vpop.permute.xlu0 %4030
        %s4033 = sor.u32 256, 56
        %4034 = vbcast.lane.b32.xlu0 %v4004, %s4033
        %v4035 = vpop.permute.xlu0 %4034
        %v4036 = vlaneseq
        %v4037 = vshrl.u32 %v4036, 7
        %v4038 = vsub.s32 1, %v4037
        %v4039 = vrot.slane %v2340, %v4038
        %4041 = vbcast.lane.b32.xlu0 %v4039, 256
        %v4042 = vpop.permute.xlu0 %4041
        %s4044 = sor.u32 256, 8
        %4045 = vbcast.lane.b32.xlu0 %v4039, %s4044
        %v4046 = vpop.permute.xlu0 %4045
        %s4048 = sor.u32 256, 16
        %4049 = vbcast.lane.b32.xlu0 %v4039, %s4048
        %v4050 = vpop.permute.xlu0 %4049
        %s4052 = sor.u32 256, 24
        %4053 = vbcast.lane.b32.xlu0 %v4039, %s4052
        %v4054 = vpop.permute.xlu0 %4053
        %s4056 = sor.u32 256, 32
        %4057 = vbcast.lane.b32.xlu0 %v4039, %s4056
        %v4058 = vpop.permute.xlu0 %4057
        %s4060 = sor.u32 256, 40
        %4061 = vbcast.lane.b32.xlu0 %v4039, %s4060
        %v4062 = vpop.permute.xlu0 %4061
        %s4064 = sor.u32 256, 48
        %4065 = vbcast.lane.b32.xlu0 %v4039, %s4064
        %v4066 = vpop.permute.xlu0 %4065
        %s4068 = sor.u32 256, 56
        %4069 = vbcast.lane.b32.xlu0 %v4039, %s4068
        %v4070 = vpop.permute.xlu0 %4069
        %v4071 = vlaneseq
        %v4072 = vshrl.u32 %v4071, 7
        %v4073 = vsub.s32 2, %v4072
        %v4074 = vrot.slane %v2340, %v4073
        %4076 = vbcast.lane.b32.xlu0 %v4074, 256
        %v4077 = vpop.permute.xlu0 %4076
        %s4079 = sor.u32 256, 8
        %4080 = vbcast.lane.b32.xlu0 %v4074, %s4079
        %v4081 = vpop.permute.xlu0 %4080
        %s4083 = sor.u32 256, 16
        %4084 = vbcast.lane.b32.xlu0 %v4074, %s4083
        %v4085 = vpop.permute.xlu0 %4084
        %s4087 = sor.u32 256, 24
        %4088 = vbcast.lane.b32.xlu0 %v4074, %s4087
        %v4089 = vpop.permute.xlu0 %4088
        %s4091 = sor.u32 256, 32
        %4092 = vbcast.lane.b32.xlu0 %v4074, %s4091
        %v4093 = vpop.permute.xlu0 %4092
        %s4095 = sor.u32 256, 40
        %4096 = vbcast.lane.b32.xlu0 %v4074, %s4095
        %v4097 = vpop.permute.xlu0 %4096
        %s4099 = sor.u32 256, 48
        %4100 = vbcast.lane.b32.xlu0 %v4074, %s4099
        %v4101 = vpop.permute.xlu0 %4100
        %s4103 = sor.u32 256, 56
        %4104 = vbcast.lane.b32.xlu0 %v4074, %s4103
        %v4105 = vpop.permute.xlu0 %4104
        %v4106 = vlaneseq
        %v4107 = vshrl.u32 %v4106, 7
        %v4108 = vsub.s32 3, %v4107
        %v4109 = vrot.slane %v2340, %v4108
        %4111 = vbcast.lane.b32.xlu0 %v4109, 256
        %v4112 = vpop.permute.xlu0 %4111
        %s4114 = sor.u32 256, 8
        %4115 = vbcast.lane.b32.xlu0 %v4109, %s4114
        %v4116 = vpop.permute.xlu0 %4115
        %s4118 = sor.u32 256, 16
        %4119 = vbcast.lane.b32.xlu0 %v4109, %s4118
        %v4120 = vpop.permute.xlu0 %4119
        %s4122 = sor.u32 256, 24
        %4123 = vbcast.lane.b32.xlu0 %v4109, %s4122
        %v4124 = vpop.permute.xlu0 %4123
        %s4126 = sor.u32 256, 32
        %4127 = vbcast.lane.b32.xlu0 %v4109, %s4126
        %v4128 = vpop.permute.xlu0 %4127
        %s4130 = sor.u32 256, 40
        %4131 = vbcast.lane.b32.xlu0 %v4109, %s4130
        %v4132 = vpop.permute.xlu0 %4131
        %s4134 = sor.u32 256, 48
        %4135 = vbcast.lane.b32.xlu0 %v4109, %s4134
        %v4136 = vpop.permute.xlu0 %4135
        %s4138 = sor.u32 256, 56
        %4139 = vbcast.lane.b32.xlu0 %v4109, %s4138
        %v4140 = vpop.permute.xlu0 %4139
        %v4141 = vlaneseq
        %v4142 = vshrl.u32 %v4141, 7
        %v4143 = vsub.s32 4, %v4142
        %v4144 = vrot.slane %v2340, %v4143
        %4146 = vbcast.lane.b32.xlu0 %v4144, 256
        %v4147 = vpop.permute.xlu0 %4146
        %s4149 = sor.u32 256, 8
        %4150 = vbcast.lane.b32.xlu0 %v4144, %s4149
        %v4151 = vpop.permute.xlu0 %4150
        %s4153 = sor.u32 256, 16
        %4154 = vbcast.lane.b32.xlu0 %v4144, %s4153
        %v4155 = vpop.permute.xlu0 %4154
        %s4157 = sor.u32 256, 24
        %4158 = vbcast.lane.b32.xlu0 %v4144, %s4157
        %v4159 = vpop.permute.xlu0 %4158
        %s4161 = sor.u32 256, 32
        %4162 = vbcast.lane.b32.xlu0 %v4144, %s4161
        %v4163 = vpop.permute.xlu0 %4162
        %s4165 = sor.u32 256, 40
        %4166 = vbcast.lane.b32.xlu0 %v4144, %s4165
        %v4167 = vpop.permute.xlu0 %4166
        %s4169 = sor.u32 256, 48
        %4170 = vbcast.lane.b32.xlu0 %v4144, %s4169
        %v4171 = vpop.permute.xlu0 %4170
        %s4173 = sor.u32 256, 56
        %4174 = vbcast.lane.b32.xlu0 %v4144, %s4173
        %v4175 = vpop.permute.xlu0 %4174
        %v4176 = vlaneseq
        %v4177 = vshrl.u32 %v4176, 7
        %v4178 = vsub.s32 5, %v4177
        %v4179 = vrot.slane %v2340, %v4178
        %4181 = vbcast.lane.b32.xlu0 %v4179, 256
        %v4182 = vpop.permute.xlu0 %4181
        %s4184 = sor.u32 256, 8
        %4185 = vbcast.lane.b32.xlu0 %v4179, %s4184
        %v4186 = vpop.permute.xlu0 %4185
        %s4188 = sor.u32 256, 16
        %4189 = vbcast.lane.b32.xlu0 %v4179, %s4188
        %v4190 = vpop.permute.xlu0 %4189
        %s4192 = sor.u32 256, 24
        %4193 = vbcast.lane.b32.xlu0 %v4179, %s4192
        %v4194 = vpop.permute.xlu0 %4193
        %s4196 = sor.u32 256, 32
        %4197 = vbcast.lane.b32.xlu0 %v4179, %s4196
        %v4198 = vpop.permute.xlu0 %4197
        %s4200 = sor.u32 256, 40
        %4201 = vbcast.lane.b32.xlu0 %v4179, %s4200
        %v4202 = vpop.permute.xlu0 %4201
        %s4204 = sor.u32 256, 48
        %4205 = vbcast.lane.b32.xlu0 %v4179, %s4204
        %v4206 = vpop.permute.xlu0 %4205
        %s4208 = sor.u32 256, 56
        %4209 = vbcast.lane.b32.xlu0 %v4179, %s4208
        %v4210 = vpop.permute.xlu0 %4209
        %v4211 = vlaneseq
        %v4212 = vshrl.u32 %v4211, 7
        %v4213 = vsub.s32 6, %v4212
        %v4214 = vrot.slane %v2340, %v4213
        %4216 = vbcast.lane.b32.xlu0 %v4214, 256
        %v4217 = vpop.permute.xlu0 %4216
        %s4219 = sor.u32 256, 8
        %4220 = vbcast.lane.b32.xlu0 %v4214, %s4219
        %v4221 = vpop.permute.xlu0 %4220
        %s4223 = sor.u32 256, 16
        %4224 = vbcast.lane.b32.xlu0 %v4214, %s4223
        %v4225 = vpop.permute.xlu0 %4224
        %s4227 = sor.u32 256, 24
        %4228 = vbcast.lane.b32.xlu0 %v4214, %s4227
        %v4229 = vpop.permute.xlu0 %4228
        %s4231 = sor.u32 256, 32
        %4232 = vbcast.lane.b32.xlu0 %v4214, %s4231
        %v4233 = vpop.permute.xlu0 %4232
        %s4235 = sor.u32 256, 40
        %4236 = vbcast.lane.b32.xlu0 %v4214, %s4235
        %v4237 = vpop.permute.xlu0 %4236
        %s4239 = sor.u32 256, 48
        %4240 = vbcast.lane.b32.xlu0 %v4214, %s4239
        %v4241 = vpop.permute.xlu0 %4240
        %s4243 = sor.u32 256, 56
        %4244 = vbcast.lane.b32.xlu0 %v4214, %s4243
        %v4245 = vpop.permute.xlu0 %4244
        %v4246 = vlaneseq
        %v4247 = vshrl.u32 %v4246, 7
        %v4248 = vsub.s32 7, %v4247
        %v4249 = vrot.slane %v2340, %v4248
        %4251 = vbcast.lane.b32.xlu0 %v4249, 256
        %v4252 = vpop.permute.xlu0 %4251
        %s4254 = sor.u32 256, 8
        %4255 = vbcast.lane.b32.xlu0 %v4249, %s4254
        %v4256 = vpop.permute.xlu0 %4255
        %s4258 = sor.u32 256, 16
        %4259 = vbcast.lane.b32.xlu0 %v4249, %s4258
        %v4260 = vpop.permute.xlu0 %4259
        %s4262 = sor.u32 256, 24
        %4263 = vbcast.lane.b32.xlu0 %v4249, %s4262
        %v4264 = vpop.permute.xlu0 %4263
        %s4266 = sor.u32 256, 32
        %4267 = vbcast.lane.b32.xlu0 %v4249, %s4266
        %v4268 = vpop.permute.xlu0 %4267
        %s4270 = sor.u32 256, 40
        %4271 = vbcast.lane.b32.xlu0 %v4249, %s4270
        %v4272 = vpop.permute.xlu0 %4271
        %s4274 = sor.u32 256, 48
        %4275 = vbcast.lane.b32.xlu0 %v4249, %s4274
        %v4276 = vpop.permute.xlu0 %4275
        %s4278 = sor.u32 256, 56
        %4279 = vbcast.lane.b32.xlu0 %v4249, %s4278
        %v4280 = vpop.permute.xlu0 %4279
        %v4281 = vlaneseq
        %v4282 = vshrl.u32 %v4281, 7
        %v4283 = vsub.s32 0, %v4282
        %v4284 = vrot.slane %v2341, %v4283
        %4286 = vbcast.lane.b32.xlu0 %v4284, 256
        %v4287 = vpop.permute.xlu0 %4286
        %s4289 = sor.u32 256, 8
        %4290 = vbcast.lane.b32.xlu0 %v4284, %s4289
        %v4291 = vpop.permute.xlu0 %4290
        %s4293 = sor.u32 256, 16
        %4294 = vbcast.lane.b32.xlu0 %v4284, %s4293
        %v4295 = vpop.permute.xlu0 %4294
        %s4297 = sor.u32 256, 24
        %4298 = vbcast.lane.b32.xlu0 %v4284, %s4297
        %v4299 = vpop.permute.xlu0 %4298
        %s4301 = sor.u32 256, 32
        %4302 = vbcast.lane.b32.xlu0 %v4284, %s4301
        %v4303 = vpop.permute.xlu0 %4302
        %s4305 = sor.u32 256, 40
        %4306 = vbcast.lane.b32.xlu0 %v4284, %s4305
        %v4307 = vpop.permute.xlu0 %4306
        %s4309 = sor.u32 256, 48
        %4310 = vbcast.lane.b32.xlu0 %v4284, %s4309
        %v4311 = vpop.permute.xlu0 %4310
        %s4313 = sor.u32 256, 56
        %4314 = vbcast.lane.b32.xlu0 %v4284, %s4313
        %v4315 = vpop.permute.xlu0 %4314
        %v4316 = vlaneseq
        %v4317 = vshrl.u32 %v4316, 7
        %v4318 = vsub.s32 1, %v4317
        %v4319 = vrot.slane %v2341, %v4318
        %4321 = vbcast.lane.b32.xlu0 %v4319, 256
        %v4322 = vpop.permute.xlu0 %4321
        %s4324 = sor.u32 256, 8
        %4325 = vbcast.lane.b32.xlu0 %v4319, %s4324
        %v4326 = vpop.permute.xlu0 %4325
        %s4328 = sor.u32 256, 16
        %4329 = vbcast.lane.b32.xlu0 %v4319, %s4328
        %v4330 = vpop.permute.xlu0 %4329
        %s4332 = sor.u32 256, 24
        %4333 = vbcast.lane.b32.xlu0 %v4319, %s4332
        %v4334 = vpop.permute.xlu0 %4333
        %s4336 = sor.u32 256, 32
        %4337 = vbcast.lane.b32.xlu0 %v4319, %s4336
        %v4338 = vpop.permute.xlu0 %4337
        %s4340 = sor.u32 256, 40
        %4341 = vbcast.lane.b32.xlu0 %v4319, %s4340
        %v4342 = vpop.permute.xlu0 %4341
        %s4344 = sor.u32 256, 48
        %4345 = vbcast.lane.b32.xlu0 %v4319, %s4344
        %v4346 = vpop.permute.xlu0 %4345
        %s4348 = sor.u32 256, 56
        %4349 = vbcast.lane.b32.xlu0 %v4319, %s4348
        %v4350 = vpop.permute.xlu0 %4349
        %v4351 = vlaneseq
        %v4352 = vshrl.u32 %v4351, 7
        %v4353 = vsub.s32 2, %v4352
        %v4354 = vrot.slane %v2341, %v4353
        %4356 = vbcast.lane.b32.xlu0 %v4354, 256
        %v4357 = vpop.permute.xlu0 %4356
        %s4359 = sor.u32 256, 8
        %4360 = vbcast.lane.b32.xlu0 %v4354, %s4359
        %v4361 = vpop.permute.xlu0 %4360
        %s4363 = sor.u32 256, 16
        %4364 = vbcast.lane.b32.xlu0 %v4354, %s4363
        %v4365 = vpop.permute.xlu0 %4364
        %s4367 = sor.u32 256, 24
        %4368 = vbcast.lane.b32.xlu0 %v4354, %s4367
        %v4369 = vpop.permute.xlu0 %4368
        %s4371 = sor.u32 256, 32
        %4372 = vbcast.lane.b32.xlu0 %v4354, %s4371
        %v4373 = vpop.permute.xlu0 %4372
        %s4375 = sor.u32 256, 40
        %4376 = vbcast.lane.b32.xlu0 %v4354, %s4375
        %v4377 = vpop.permute.xlu0 %4376
        %s4379 = sor.u32 256, 48
        %4380 = vbcast.lane.b32.xlu0 %v4354, %s4379
        %v4381 = vpop.permute.xlu0 %4380
        %s4383 = sor.u32 256, 56
        %4384 = vbcast.lane.b32.xlu0 %v4354, %s4383
        %v4385 = vpop.permute.xlu0 %4384
        %v4386 = vlaneseq
        %v4387 = vshrl.u32 %v4386, 7
        %v4388 = vsub.s32 3, %v4387
        %v4389 = vrot.slane %v2341, %v4388
        %4391 = vbcast.lane.b32.xlu0 %v4389, 256
        %v4392 = vpop.permute.xlu0 %4391
        %s4394 = sor.u32 256, 8
        %4395 = vbcast.lane.b32.xlu0 %v4389, %s4394
        %v4396 = vpop.permute.xlu0 %4395
        %s4398 = sor.u32 256, 16
        %4399 = vbcast.lane.b32.xlu0 %v4389, %s4398
        %v4400 = vpop.permute.xlu0 %4399
        %s4402 = sor.u32 256, 24
        %4403 = vbcast.lane.b32.xlu0 %v4389, %s4402
        %v4404 = vpop.permute.xlu0 %4403
        %s4406 = sor.u32 256, 32
        %4407 = vbcast.lane.b32.xlu0 %v4389, %s4406
        %v4408 = vpop.permute.xlu0 %4407
        %s4410 = sor.u32 256, 40
        %4411 = vbcast.lane.b32.xlu0 %v4389, %s4410
        %v4412 = vpop.permute.xlu0 %4411
        %s4414 = sor.u32 256, 48
        %4415 = vbcast.lane.b32.xlu0 %v4389, %s4414
        %v4416 = vpop.permute.xlu0 %4415
        %s4418 = sor.u32 256, 56
        %4419 = vbcast.lane.b32.xlu0 %v4389, %s4418
        %v4420 = vpop.permute.xlu0 %4419
        %v4421 = vlaneseq
        %v4422 = vshrl.u32 %v4421, 7
        %v4423 = vsub.s32 4, %v4422
        %v4424 = vrot.slane %v2341, %v4423
        %4426 = vbcast.lane.b32.xlu0 %v4424, 256
        %v4427 = vpop.permute.xlu0 %4426
        %s4429 = sor.u32 256, 8
        %4430 = vbcast.lane.b32.xlu0 %v4424, %s4429
        %v4431 = vpop.permute.xlu0 %4430
        %s4433 = sor.u32 256, 16
        %4434 = vbcast.lane.b32.xlu0 %v4424, %s4433
        %v4435 = vpop.permute.xlu0 %4434
        %s4437 = sor.u32 256, 24
        %4438 = vbcast.lane.b32.xlu0 %v4424, %s4437
        %v4439 = vpop.permute.xlu0 %4438
        %s4441 = sor.u32 256, 32
        %4442 = vbcast.lane.b32.xlu0 %v4424, %s4441
        %v4443 = vpop.permute.xlu0 %4442
        %s4445 = sor.u32 256, 40
        %4446 = vbcast.lane.b32.xlu0 %v4424, %s4445
        %v4447 = vpop.permute.xlu0 %4446
        %s4449 = sor.u32 256, 48
        %4450 = vbcast.lane.b32.xlu0 %v4424, %s4449
        %v4451 = vpop.permute.xlu0 %4450
        %s4453 = sor.u32 256, 56
        %4454 = vbcast.lane.b32.xlu0 %v4424, %s4453
        %v4455 = vpop.permute.xlu0 %4454
        %v4456 = vlaneseq
        %v4457 = vshrl.u32 %v4456, 7
        %v4458 = vsub.s32 5, %v4457
        %v4459 = vrot.slane %v2341, %v4458
        %4461 = vbcast.lane.b32.xlu0 %v4459, 256
        %v4462 = vpop.permute.xlu0 %4461
        %s4464 = sor.u32 256, 8
        %4465 = vbcast.lane.b32.xlu0 %v4459, %s4464
        %v4466 = vpop.permute.xlu0 %4465
        %s4468 = sor.u32 256, 16
        %4469 = vbcast.lane.b32.xlu0 %v4459, %s4468
        %v4470 = vpop.permute.xlu0 %4469
        %s4472 = sor.u32 256, 24
        %4473 = vbcast.lane.b32.xlu0 %v4459, %s4472
        %v4474 = vpop.permute.xlu0 %4473
        %s4476 = sor.u32 256, 32
        %4477 = vbcast.lane.b32.xlu0 %v4459, %s4476
        %v4478 = vpop.permute.xlu0 %4477
        %s4480 = sor.u32 256, 40
        %4481 = vbcast.lane.b32.xlu0 %v4459, %s4480
        %v4482 = vpop.permute.xlu0 %4481
        %s4484 = sor.u32 256, 48
        %4485 = vbcast.lane.b32.xlu0 %v4459, %s4484
        %v4486 = vpop.permute.xlu0 %4485
        %s4488 = sor.u32 256, 56
        %4489 = vbcast.lane.b32.xlu0 %v4459, %s4488
        %v4490 = vpop.permute.xlu0 %4489
        %v4491 = vlaneseq
        %v4492 = vshrl.u32 %v4491, 7
        %v4493 = vsub.s32 6, %v4492
        %v4494 = vrot.slane %v2341, %v4493
        %4496 = vbcast.lane.b32.xlu0 %v4494, 256
        %v4497 = vpop.permute.xlu0 %4496
        %s4499 = sor.u32 256, 8
        %4500 = vbcast.lane.b32.xlu0 %v4494, %s4499
        %v4501 = vpop.permute.xlu0 %4500
        %s4503 = sor.u32 256, 16
        %4504 = vbcast.lane.b32.xlu0 %v4494, %s4503
        %v4505 = vpop.permute.xlu0 %4504
        %s4507 = sor.u32 256, 24
        %4508 = vbcast.lane.b32.xlu0 %v4494, %s4507
        %v4509 = vpop.permute.xlu0 %4508
        %s4511 = sor.u32 256, 32
        %4512 = vbcast.lane.b32.xlu0 %v4494, %s4511
        %v4513 = vpop.permute.xlu0 %4512
        %s4515 = sor.u32 256, 40
        %4516 = vbcast.lane.b32.xlu0 %v4494, %s4515
        %v4517 = vpop.permute.xlu0 %4516
        %s4519 = sor.u32 256, 48
        %4520 = vbcast.lane.b32.xlu0 %v4494, %s4519
        %v4521 = vpop.permute.xlu0 %4520
        %s4523 = sor.u32 256, 56
        %4524 = vbcast.lane.b32.xlu0 %v4494, %s4523
        %v4525 = vpop.permute.xlu0 %4524
        %v4526 = vlaneseq
        %v4527 = vshrl.u32 %v4526, 7
        %v4528 = vsub.s32 7, %v4527
        %v4529 = vrot.slane %v2341, %v4528
        %4531 = vbcast.lane.b32.xlu0 %v4529, 256
        %v4532 = vpop.permute.xlu0 %4531
        %s4534 = sor.u32 256, 8
        %4535 = vbcast.lane.b32.xlu0 %v4529, %s4534
        %v4536 = vpop.permute.xlu0 %4535
        %s4538 = sor.u32 256, 16
        %4539 = vbcast.lane.b32.xlu0 %v4529, %s4538
        %v4540 = vpop.permute.xlu0 %4539
        %s4542 = sor.u32 256, 24
        %4543 = vbcast.lane.b32.xlu0 %v4529, %s4542
        %v4544 = vpop.permute.xlu0 %4543
        %s4546 = sor.u32 256, 32
        %4547 = vbcast.lane.b32.xlu0 %v4529, %s4546
        %v4548 = vpop.permute.xlu0 %4547
        %s4550 = sor.u32 256, 40
        %4551 = vbcast.lane.b32.xlu0 %v4529, %s4550
        %v4552 = vpop.permute.xlu0 %4551
        %s4554 = sor.u32 256, 48
        %4555 = vbcast.lane.b32.xlu0 %v4529, %s4554
        %v4556 = vpop.permute.xlu0 %4555
        %s4558 = sor.u32 256, 56
        %4559 = vbcast.lane.b32.xlu0 %v4529, %s4558
        %v4560 = vpop.permute.xlu0 %4559
        %v4561 = vlaneseq
        %v4562 = vshrl.u32 %v4561, 7
        %v4563 = vsub.s32 0, %v4562
        %v4564 = vrot.slane %v2342, %v4563
        %4566 = vbcast.lane.b32.xlu0 %v4564, 256
        %v4567 = vpop.permute.xlu0 %4566
        %s4569 = sor.u32 256, 8
        %4570 = vbcast.lane.b32.xlu0 %v4564, %s4569
        %v4571 = vpop.permute.xlu0 %4570
        %s4573 = sor.u32 256, 16
        %4574 = vbcast.lane.b32.xlu0 %v4564, %s4573
        %v4575 = vpop.permute.xlu0 %4574
        %s4577 = sor.u32 256, 24
        %4578 = vbcast.lane.b32.xlu0 %v4564, %s4577
        %v4579 = vpop.permute.xlu0 %4578
        %s4581 = sor.u32 256, 32
        %4582 = vbcast.lane.b32.xlu0 %v4564, %s4581
        %v4583 = vpop.permute.xlu0 %4582
        %s4585 = sor.u32 256, 40
        %4586 = vbcast.lane.b32.xlu0 %v4564, %s4585
        %v4587 = vpop.permute.xlu0 %4586
        %s4589 = sor.u32 256, 48
        %4590 = vbcast.lane.b32.xlu0 %v4564, %s4589
        %v4591 = vpop.permute.xlu0 %4590
        %s4593 = sor.u32 256, 56
        %4594 = vbcast.lane.b32.xlu0 %v4564, %s4593
        %v4595 = vpop.permute.xlu0 %4594
        %v4596 = vlaneseq
        %v4597 = vshrl.u32 %v4596, 7
        %v4598 = vsub.s32 1, %v4597
        %v4599 = vrot.slane %v2342, %v4598
        %4601 = vbcast.lane.b32.xlu0 %v4599, 256
        %v4602 = vpop.permute.xlu0 %4601
        %s4604 = sor.u32 256, 8
        %4605 = vbcast.lane.b32.xlu0 %v4599, %s4604
        %v4606 = vpop.permute.xlu0 %4605
        %s4608 = sor.u32 256, 16
        %4609 = vbcast.lane.b32.xlu0 %v4599, %s4608
        %v4610 = vpop.permute.xlu0 %4609
        %s4612 = sor.u32 256, 24
        %4613 = vbcast.lane.b32.xlu0 %v4599, %s4612
        %v4614 = vpop.permute.xlu0 %4613
        %s4616 = sor.u32 256, 32
        %4617 = vbcast.lane.b32.xlu0 %v4599, %s4616
        %v4618 = vpop.permute.xlu0 %4617
        %s4620 = sor.u32 256, 40
        %4621 = vbcast.lane.b32.xlu0 %v4599, %s4620
        %v4622 = vpop.permute.xlu0 %4621
        %s4624 = sor.u32 256, 48
        %4625 = vbcast.lane.b32.xlu0 %v4599, %s4624
        %v4626 = vpop.permute.xlu0 %4625
        %s4628 = sor.u32 256, 56
        %4629 = vbcast.lane.b32.xlu0 %v4599, %s4628
        %v4630 = vpop.permute.xlu0 %4629
        %v4631 = vlaneseq
        %v4632 = vshrl.u32 %v4631, 7
        %v4633 = vsub.s32 2, %v4632
        %v4634 = vrot.slane %v2342, %v4633
        %4636 = vbcast.lane.b32.xlu0 %v4634, 256
        %v4637 = vpop.permute.xlu0 %4636
        %s4639 = sor.u32 256, 8
        %4640 = vbcast.lane.b32.xlu0 %v4634, %s4639
        %v4641 = vpop.permute.xlu0 %4640
        %s4643 = sor.u32 256, 16
        %4644 = vbcast.lane.b32.xlu0 %v4634, %s4643
        %v4645 = vpop.permute.xlu0 %4644
        %s4647 = sor.u32 256, 24
        %4648 = vbcast.lane.b32.xlu0 %v4634, %s4647
        %v4649 = vpop.permute.xlu0 %4648
        %s4651 = sor.u32 256, 32
        %4652 = vbcast.lane.b32.xlu0 %v4634, %s4651
        %v4653 = vpop.permute.xlu0 %4652
        %s4655 = sor.u32 256, 40
        %4656 = vbcast.lane.b32.xlu0 %v4634, %s4655
        %v4657 = vpop.permute.xlu0 %4656
        %s4659 = sor.u32 256, 48
        %4660 = vbcast.lane.b32.xlu0 %v4634, %s4659
        %v4661 = vpop.permute.xlu0 %4660
        %s4663 = sor.u32 256, 56
        %4664 = vbcast.lane.b32.xlu0 %v4634, %s4663
        %v4665 = vpop.permute.xlu0 %4664
        %v4666 = vlaneseq
        %v4667 = vshrl.u32 %v4666, 7
        %v4668 = vsub.s32 3, %v4667
        %v4669 = vrot.slane %v2342, %v4668
        %4671 = vbcast.lane.b32.xlu0 %v4669, 256
        %v4672 = vpop.permute.xlu0 %4671
        %s4674 = sor.u32 256, 8
        %4675 = vbcast.lane.b32.xlu0 %v4669, %s4674
        %v4676 = vpop.permute.xlu0 %4675
        %s4678 = sor.u32 256, 16
        %4679 = vbcast.lane.b32.xlu0 %v4669, %s4678
        %v4680 = vpop.permute.xlu0 %4679
        %s4682 = sor.u32 256, 24
        %4683 = vbcast.lane.b32.xlu0 %v4669, %s4682
        %v4684 = vpop.permute.xlu0 %4683
        %s4686 = sor.u32 256, 32
        %4687 = vbcast.lane.b32.xlu0 %v4669, %s4686
        %v4688 = vpop.permute.xlu0 %4687
        %s4690 = sor.u32 256, 40
        %4691 = vbcast.lane.b32.xlu0 %v4669, %s4690
        %v4692 = vpop.permute.xlu0 %4691
        %s4694 = sor.u32 256, 48
        %4695 = vbcast.lane.b32.xlu0 %v4669, %s4694
        %v4696 = vpop.permute.xlu0 %4695
        %s4698 = sor.u32 256, 56
        %4699 = vbcast.lane.b32.xlu0 %v4669, %s4698
        %v4700 = vpop.permute.xlu0 %4699
        %v4701 = vlaneseq
        %v4702 = vshrl.u32 %v4701, 7
        %v4703 = vsub.s32 4, %v4702
        %v4704 = vrot.slane %v2342, %v4703
        %4706 = vbcast.lane.b32.xlu0 %v4704, 256
        %v4707 = vpop.permute.xlu0 %4706
        %s4709 = sor.u32 256, 8
        %4710 = vbcast.lane.b32.xlu0 %v4704, %s4709
        %v4711 = vpop.permute.xlu0 %4710
        %s4713 = sor.u32 256, 16
        %4714 = vbcast.lane.b32.xlu0 %v4704, %s4713
        %v4715 = vpop.permute.xlu0 %4714
        %s4717 = sor.u32 256, 24
        %4718 = vbcast.lane.b32.xlu0 %v4704, %s4717
        %v4719 = vpop.permute.xlu0 %4718
        %s4721 = sor.u32 256, 32
        %4722 = vbcast.lane.b32.xlu0 %v4704, %s4721
        %v4723 = vpop.permute.xlu0 %4722
        %s4725 = sor.u32 256, 40
        %4726 = vbcast.lane.b32.xlu0 %v4704, %s4725
        %v4727 = vpop.permute.xlu0 %4726
        %s4729 = sor.u32 256, 48
        %4730 = vbcast.lane.b32.xlu0 %v4704, %s4729
        %v4731 = vpop.permute.xlu0 %4730
        %s4733 = sor.u32 256, 56
        %4734 = vbcast.lane.b32.xlu0 %v4704, %s4733
        %v4735 = vpop.permute.xlu0 %4734
        %v4736 = vlaneseq
        %v4737 = vshrl.u32 %v4736, 7
        %v4738 = vsub.s32 5, %v4737
        %v4739 = vrot.slane %v2342, %v4738
        %4741 = vbcast.lane.b32.xlu0 %v4739, 256
        %v4742 = vpop.permute.xlu0 %4741
        %s4744 = sor.u32 256, 8
        %4745 = vbcast.lane.b32.xlu0 %v4739, %s4744
        %v4746 = vpop.permute.xlu0 %4745
        %s4748 = sor.u32 256, 16
        %4749 = vbcast.lane.b32.xlu0 %v4739, %s4748
        %v4750 = vpop.permute.xlu0 %4749
        %s4752 = sor.u32 256, 24
        %4753 = vbcast.lane.b32.xlu0 %v4739, %s4752
        %v4754 = vpop.permute.xlu0 %4753
        %s4756 = sor.u32 256, 32
        %4757 = vbcast.lane.b32.xlu0 %v4739, %s4756
        %v4758 = vpop.permute.xlu0 %4757
        %s4760 = sor.u32 256, 40
        %4761 = vbcast.lane.b32.xlu0 %v4739, %s4760
        %v4762 = vpop.permute.xlu0 %4761
        %s4764 = sor.u32 256, 48
        %4765 = vbcast.lane.b32.xlu0 %v4739, %s4764
        %v4766 = vpop.permute.xlu0 %4765
        %s4768 = sor.u32 256, 56
        %4769 = vbcast.lane.b32.xlu0 %v4739, %s4768
        %v4770 = vpop.permute.xlu0 %4769
        %v4771 = vlaneseq
        %v4772 = vshrl.u32 %v4771, 7
        %v4773 = vsub.s32 6, %v4772
        %v4774 = vrot.slane %v2342, %v4773
        %4776 = vbcast.lane.b32.xlu0 %v4774, 256
        %v4777 = vpop.permute.xlu0 %4776
        %s4779 = sor.u32 256, 8
        %4780 = vbcast.lane.b32.xlu0 %v4774, %s4779
        %v4781 = vpop.permute.xlu0 %4780
        %s4783 = sor.u32 256, 16
        %4784 = vbcast.lane.b32.xlu0 %v4774, %s4783
        %v4785 = vpop.permute.xlu0 %4784
        %s4787 = sor.u32 256, 24
        %4788 = vbcast.lane.b32.xlu0 %v4774, %s4787
        %v4789 = vpop.permute.xlu0 %4788
        %s4791 = sor.u32 256, 32
        %4792 = vbcast.lane.b32.xlu0 %v4774, %s4791
        %v4793 = vpop.permute.xlu0 %4792
        %s4795 = sor.u32 256, 40
        %4796 = vbcast.lane.b32.xlu0 %v4774, %s4795
        %v4797 = vpop.permute.xlu0 %4796
        %s4799 = sor.u32 256, 48
        %4800 = vbcast.lane.b32.xlu0 %v4774, %s4799
        %v4801 = vpop.permute.xlu0 %4800
        %s4803 = sor.u32 256, 56
        %4804 = vbcast.lane.b32.xlu0 %v4774, %s4803
        %v4805 = vpop.permute.xlu0 %4804
        %v4806 = vlaneseq
        %v4807 = vshrl.u32 %v4806, 7
        %v4808 = vsub.s32 7, %v4807
        %v4809 = vrot.slane %v2342, %v4808
        %4811 = vbcast.lane.b32.xlu0 %v4809, 256
        %v4812 = vpop.permute.xlu0 %4811
        %s4814 = sor.u32 256, 8
        %4815 = vbcast.lane.b32.xlu0 %v4809, %s4814
        %v4816 = vpop.permute.xlu0 %4815
        %s4818 = sor.u32 256, 16
        %4819 = vbcast.lane.b32.xlu0 %v4809, %s4818
        %v4820 = vpop.permute.xlu0 %4819
        %s4822 = sor.u32 256, 24
        %4823 = vbcast.lane.b32.xlu0 %v4809, %s4822
        %v4824 = vpop.permute.xlu0 %4823
        %s4826 = sor.u32 256, 32
        %4827 = vbcast.lane.b32.xlu0 %v4809, %s4826
        %v4828 = vpop.permute.xlu0 %4827
        %s4830 = sor.u32 256, 40
        %4831 = vbcast.lane.b32.xlu0 %v4809, %s4830
        %v4832 = vpop.permute.xlu0 %4831
        %s4834 = sor.u32 256, 48
        %4835 = vbcast.lane.b32.xlu0 %v4809, %s4834
        %v4836 = vpop.permute.xlu0 %4835
        %s4838 = sor.u32 256, 56
        %4839 = vbcast.lane.b32.xlu0 %v4809, %s4838
        %v4840 = vpop.permute.xlu0 %4839
        %v4841 = vsel %vm3465, %v3727, 0.0
        %v4842 = vsel %vm3466, %v3731, 0.0
        %v4843 = vsel %vm3467, %v3735, 0.0
        %v4844 = vsel %vm3468, %v3739, 0.0
        %v4845 = vsel %vm3469, %v3743, 0.0
        %v4846 = vsel %vm3470, %v3747, 0.0
        %v4847 = vsel %vm3471, %v3751, 0.0
        %v4848 = vsel %vm3472, %v3755, 0.0
        %v4849 = vsel %vm3473, %v3762, 0.0
        %v4850 = vsel %vm3474, %v3766, 0.0
        %v4851 = vsel %vm3475, %v3770, 0.0
        %v4852 = vsel %vm3476, %v3774, 0.0
        %v4853 = vsel %vm3477, %v3778, 0.0
        %v4854 = vsel %vm3478, %v3782, 0.0
        %v4855 = vsel %vm3479, %v3786, 0.0
        %v4856 = vsel %vm3480, %v3790, 0.0
        %v4857 = vsel %vm3481, %v3797, 0.0
        %v4858 = vsel %vm3482, %v3801, 0.0
        %v4859 = vsel %vm3483, %v3805, 0.0
        %v4860 = vsel %vm3484, %v3809, 0.0
        %v4861 = vsel %vm3485, %v3813, 0.0
        %v4862 = vsel %vm3486, %v3817, 0.0
        %v4863 = vsel %vm3487, %v3821, 0.0
        %v4864 = vsel %vm3488, %v3825, 0.0
        %v4865 = vsel %vm3489, %v3832, 0.0
        %v4866 = vsel %vm3490, %v3836, 0.0
        %v4867 = vsel %vm3491, %v3840, 0.0
        %v4868 = vsel %vm3492, %v3844, 0.0
        %v4869 = vsel %vm3493, %v3848, 0.0
        %v4870 = vsel %vm3494, %v3852, 0.0
        %v4871 = vsel %vm3495, %v3856, 0.0
        %v4872 = vsel %vm3496, %v3860, 0.0
        %v4873 = vsel %vm3497, %v3867, 0.0
        %v4874 = vsel %vm3498, %v3871, 0.0
        %v4875 = vsel %vm3499, %v3875, 0.0
        %v4876 = vsel %vm3500, %v3879, 0.0
        %v4877 = vsel %vm3501, %v3883, 0.0
        %v4878 = vsel %vm3502, %v3887, 0.0
        %v4879 = vsel %vm3503, %v3891, 0.0
        %v4880 = vsel %vm3504, %v3895, 0.0
        %v4881 = vsel %vm3505, %v3902, 0.0
        %v4882 = vsel %vm3506, %v3906, 0.0
        %v4883 = vsel %vm3507, %v3910, 0.0
        %v4884 = vsel %vm3508, %v3914, 0.0
        %v4885 = vsel %vm3509, %v3918, 0.0
        %v4886 = vsel %vm3510, %v3922, 0.0
        %v4887 = vsel %vm3511, %v3926, 0.0
        %v4888 = vsel %vm3512, %v3930, 0.0
        %v4889 = vsel %vm3513, %v3937, 0.0
        %v4890 = vsel %vm3514, %v3941, 0.0
        %v4891 = vsel %vm3515, %v3945, 0.0
        %v4892 = vsel %vm3516, %v3949, 0.0
        %v4893 = vsel %vm3517, %v3953, 0.0
        %v4894 = vsel %vm3518, %v3957, 0.0
        %v4895 = vsel %vm3519, %v3961, 0.0
        %v4896 = vsel %vm3520, %v3965, 0.0
        %v4897 = vsel %vm3521, %v3972, 0.0
        %v4898 = vsel %vm3522, %v3976, 0.0
        %v4899 = vsel %vm3523, %v3980, 0.0
        %v4900 = vsel %vm3524, %v3984, 0.0
        %v4901 = vsel %vm3525, %v3988, 0.0
        %v4902 = vsel %vm3526, %v3992, 0.0
        %v4903 = vsel %vm3527, %v3996, 0.0
        %v4904 = vsel %vm3528, %v4000, 0.0
        %v4905 = vsel %vm3529, %v4007, 0.0
        %v4906 = vsel %vm3530, %v4011, 0.0
        %v4907 = vsel %vm3531, %v4015, 0.0
        %v4908 = vsel %vm3532, %v4019, 0.0
        %v4909 = vsel %vm3533, %v4023, 0.0
        %v4910 = vsel %vm3534, %v4027, 0.0
        %v4911 = vsel %vm3535, %v4031, 0.0
        %v4912 = vsel %vm3536, %v4035, 0.0
        %v4913 = vsel %vm3537, %v4042, 0.0
        %v4914 = vsel %vm3538, %v4046, 0.0
        %v4915 = vsel %vm3539, %v4050, 0.0
        %v4916 = vsel %vm3540, %v4054, 0.0
        %v4917 = vsel %vm3541, %v4058, 0.0
        %v4918 = vsel %vm3542, %v4062, 0.0
        %v4919 = vsel %vm3543, %v4066, 0.0
        %v4920 = vsel %vm3544, %v4070, 0.0
        %v4921 = vsel %vm3545, %v4077, 0.0
        %v4922 = vsel %vm3546, %v4081, 0.0
        %v4923 = vsel %vm3547, %v4085, 0.0
        %v4924 = vsel %vm3548, %v4089, 0.0
        %v4925 = vsel %vm3549, %v4093, 0.0
        %v4926 = vsel %vm3550, %v4097, 0.0
        %v4927 = vsel %vm3551, %v4101, 0.0
        %v4928 = vsel %vm3552, %v4105, 0.0
        %v4929 = vsel %vm3553, %v4112, 0.0
        %v4930 = vsel %vm3554, %v4116, 0.0
        %v4931 = vsel %vm3555, %v4120, 0.0
        %v4932 = vsel %vm3556, %v4124, 0.0
        %v4933 = vsel %vm3557, %v4128, 0.0
        %v4934 = vsel %vm3558, %v4132, 0.0
        %v4935 = vsel %vm3559, %v4136, 0.0
        %v4936 = vsel %vm3560, %v4140, 0.0
        %v4937 = vsel %vm3561, %v4147, 0.0
        %v4938 = vsel %vm3562, %v4151, 0.0
        %v4939 = vsel %vm3563, %v4155, 0.0
        %v4940 = vsel %vm3564, %v4159, 0.0
        %v4941 = vsel %vm3565, %v4163, 0.0
        %v4942 = vsel %vm3566, %v4167, 0.0
        %v4943 = vsel %vm3567, %v4171, 0.0
        %v4944 = vsel %vm3568, %v4175, 0.0
        %v4945 = vsel %vm3569, %v4182, 0.0
        %v4946 = vsel %vm3570, %v4186, 0.0
        %v4947 = vsel %vm3571, %v4190, 0.0
        %v4948 = vsel %vm3572, %v4194, 0.0
        %v4949 = vsel %vm3573, %v4198, 0.0
        %v4950 = vsel %vm3574, %v4202, 0.0
        %v4951 = vsel %vm3575, %v4206, 0.0
        %v4952 = vsel %vm3576, %v4210, 0.0
        %v4953 = vsel %vm3577, %v4217, 0.0
        %v4954 = vsel %vm3578, %v4221, 0.0
        %v4955 = vsel %vm3579, %v4225, 0.0
        %v4956 = vsel %vm3580, %v4229, 0.0
        %v4957 = vsel %vm3581, %v4233, 0.0
        %v4958 = vsel %vm3582, %v4237, 0.0
        %v4959 = vsel %vm3583, %v4241, 0.0
        %v4960 = vsel %vm3584, %v4245, 0.0
        %v4961 = vsel %vm3585, %v4252, 0.0
        %v4962 = vsel %vm3586, %v4256, 0.0
        %v4963 = vsel %vm3587, %v4260, 0.0
        %v4964 = vsel %vm3588, %v4264, 0.0
        %v4965 = vsel %vm3589, %v4268, 0.0
        %v4966 = vsel %vm3590, %v4272, 0.0
        %v4967 = vsel %vm3591, %v4276, 0.0
        %v4968 = vsel %vm3592, %v4280, 0.0
        %v4969 = vsel %vm3593, %v4287, 0.0
        %v4970 = vsel %vm3594, %v4291, 0.0
        %v4971 = vsel %vm3595, %v4295, 0.0
        %v4972 = vsel %vm3596, %v4299, 0.0
        %v4973 = vsel %vm3597, %v4303, 0.0
        %v4974 = vsel %vm3598, %v4307, 0.0
        %v4975 = vsel %vm3599, %v4311, 0.0
        %v4976 = vsel %vm3600, %v4315, 0.0
        %v4977 = vsel %vm3601, %v4322, 0.0
        %v4978 = vsel %vm3602, %v4326, 0.0
        %v4979 = vsel %vm3603, %v4330, 0.0
        %v4980 = vsel %vm3604, %v4334, 0.0
        %v4981 = vsel %vm3605, %v4338, 0.0
        %v4982 = vsel %vm3606, %v4342, 0.0
        %v4983 = vsel %vm3607, %v4346, 0.0
        %v4984 = vsel %vm3608, %v4350, 0.0
        %v4985 = vsel %vm3609, %v4357, 0.0
        %v4986 = vsel %vm3610, %v4361, 0.0
        %v4987 = vsel %vm3611, %v4365, 0.0
        %v4988 = vsel %vm3612, %v4369, 0.0
        %v4989 = vsel %vm3613, %v4373, 0.0
        %v4990 = vsel %vm3614, %v4377, 0.0
        %v4991 = vsel %vm3615, %v4381, 0.0
        %v4992 = vsel %vm3616, %v4385, 0.0
        %v4993 = vsel %vm3617, %v4392, 0.0
        %v4994 = vsel %vm3618, %v4396, 0.0
        %v4995 = vsel %vm3619, %v4400, 0.0
        %v4996 = vsel %vm3620, %v4404, 0.0
        %v4997 = vsel %vm3621, %v4408, 0.0
        %v4998 = vsel %vm3622, %v4412, 0.0
        %v4999 = vsel %vm3623, %v4416, 0.0
        %v5000 = vsel %vm3624, %v4420, 0.0
        %v5001 = vsel %vm3625, %v4427, 0.0
        %v5002 = vsel %vm3626, %v4431, 0.0
        %v5003 = vsel %vm3627, %v4435, 0.0
        %v5004 = vsel %vm3628, %v4439, 0.0
        %v5005 = vsel %vm3629, %v4443, 0.0
        %v5006 = vsel %vm3630, %v4447, 0.0
        %v5007 = vsel %vm3631, %v4451, 0.0
        %v5008 = vsel %vm3632, %v4455, 0.0
        %v5009 = vsel %vm3633, %v4462, 0.0
        %v5010 = vsel %vm3634, %v4466, 0.0
        %v5011 = vsel %vm3635, %v4470, 0.0
        %v5012 = vsel %vm3636, %v4474, 0.0
        %v5013 = vsel %vm3637, %v4478, 0.0
        %v5014 = vsel %vm3638, %v4482, 0.0
        %v5015 = vsel %vm3639, %v4486, 0.0
        %v5016 = vsel %vm3640, %v4490, 0.0
        %v5017 = vsel %vm3641, %v4497, 0.0
        %v5018 = vsel %vm3642, %v4501, 0.0
        %v5019 = vsel %vm3643, %v4505, 0.0
        %v5020 = vsel %vm3644, %v4509, 0.0
        %v5021 = vsel %vm3645, %v4513, 0.0
        %v5022 = vsel %vm3646, %v4517, 0.0
        %v5023 = vsel %vm3647, %v4521, 0.0
        %v5024 = vsel %vm3648, %v4525, 0.0
        %v5025 = vsel %vm3649, %v4532, 0.0
        %v5026 = vsel %vm3650, %v4536, 0.0
        %v5027 = vsel %vm3651, %v4540, 0.0
        %v5028 = vsel %vm3652, %v4544, 0.0
        %v5029 = vsel %vm3653, %v4548, 0.0
        %v5030 = vsel %vm3654, %v4552, 0.0
        %v5031 = vsel %vm3655, %v4556, 0.0
        %v5032 = vsel %vm3656, %v4560, 0.0
        %v5033 = vsel %vm3657, %v4567, 0.0
        %v5034 = vsel %vm3658, %v4571, 0.0
        %v5035 = vsel %vm3659, %v4575, 0.0
        %v5036 = vsel %vm3660, %v4579, 0.0
        %v5037 = vsel %vm3661, %v4583, 0.0
        %v5038 = vsel %vm3662, %v4587, 0.0
        %v5039 = vsel %vm3663, %v4591, 0.0
        %v5040 = vsel %vm3664, %v4595, 0.0
        %v5041 = vsel %vm3665, %v4602, 0.0
        %v5042 = vsel %vm3666, %v4606, 0.0
        %v5043 = vsel %vm3667, %v4610, 0.0
        %v5044 = vsel %vm3668, %v4614, 0.0
        %v5045 = vsel %vm3669, %v4618, 0.0
        %v5046 = vsel %vm3670, %v4622, 0.0
        %v5047 = vsel %vm3671, %v4626, 0.0
        %v5048 = vsel %vm3672, %v4630, 0.0
        %v5049 = vsel %vm3673, %v4637, 0.0
        %v5050 = vsel %vm3674, %v4641, 0.0
        %v5051 = vsel %vm3675, %v4645, 0.0
        %v5052 = vsel %vm3676, %v4649, 0.0
        %v5053 = vsel %vm3677, %v4653, 0.0
        %v5054 = vsel %vm3678, %v4657, 0.0
        %v5055 = vsel %vm3679, %v4661, 0.0
        %v5056 = vsel %vm3680, %v4665, 0.0
        %v5057 = vsel %vm3681, %v4672, 0.0
        %v5058 = vsel %vm3682, %v4676, 0.0
        %v5059 = vsel %vm3683, %v4680, 0.0
        %v5060 = vsel %vm3684, %v4684, 0.0
        %v5061 = vsel %vm3685, %v4688, 0.0
        %v5062 = vsel %vm3686, %v4692, 0.0
        %v5063 = vsel %vm3687, %v4696, 0.0
        %v5064 = vsel %vm3688, %v4700, 0.0
        %v5065 = vsel %vm3689, %v4707, 0.0
        %v5066 = vsel %vm3690, %v4711, 0.0
        %v5067 = vsel %vm3691, %v4715, 0.0
        %v5068 = vsel %vm3692, %v4719, 0.0
        %v5069 = vsel %vm3693, %v4723, 0.0
        %v5070 = vsel %vm3694, %v4727, 0.0
        %v5071 = vsel %vm3695, %v4731, 0.0
        %v5072 = vsel %vm3696, %v4735, 0.0
        %v5073 = vsel %vm3697, %v4742, 0.0
        %v5074 = vsel %vm3698, %v4746, 0.0
        %v5075 = vsel %vm3699, %v4750, 0.0
        %v5076 = vsel %vm3700, %v4754, 0.0
        %v5077 = vsel %vm3701, %v4758, 0.0
        %v5078 = vsel %vm3702, %v4762, 0.0
        %v5079 = vsel %vm3703, %v4766, 0.0
        %v5080 = vsel %vm3704, %v4770, 0.0
        %v5081 = vsel %vm3705, %v4777, 0.0
        %v5082 = vsel %vm3706, %v4781, 0.0
        %v5083 = vsel %vm3707, %v4785, 0.0
        %v5084 = vsel %vm3708, %v4789, 0.0
        %v5085 = vsel %vm3709, %v4793, 0.0
        %v5086 = vsel %vm3710, %v4797, 0.0
        %v5087 = vsel %vm3711, %v4801, 0.0
        %v5088 = vsel %vm3712, %v4805, 0.0
        %v5089 = vsel %vm3713, %v4812, 0.0
        %v5090 = vsel %vm3714, %v4816, 0.0
        %v5091 = vsel %vm3715, %v4820, 0.0
        %v5092 = vsel %vm3716, %v4824, 0.0
        %v5093 = vsel %vm3717, %v4828, 0.0
        %v5094 = vsel %vm3718, %v4832, 0.0
        %v5095 = vsel %vm3719, %v4836, 0.0
        %v5096 = vsel %vm3720, %v4840, 0.0
        %vm5097 = vcmask 719872
        %v5098 = vsel %vm5097, %v4841, 0.0
        %v5099 = vsel %vm5097, %v4842, 0.0
        %v5100 = vadd.f32 %v5098, %v5099
        %v5101 = vsel %vm5097, %v4843, 0.0
        %v5102 = vadd.f32 %v5100, %v5101
        %v5103 = vsel %vm5097, %v4844, 0.0
        %v5104 = vadd.f32 %v5102, %v5103
        %v5105 = vsel %vm5097, %v4845, 0.0
        %v5106 = vadd.f32 %v5104, %v5105
        %v5107 = vsel %vm5097, %v4846, 0.0
        %v5108 = vadd.f32 %v5106, %v5107
        %v5109 = vsel %vm5097, %v4847, 0.0
        %v5110 = vadd.f32 %v5108, %v5109
        %v5111 = vsel %vm5097, %v4848, 0.0
        %v5112 = vadd.f32 %v5110, %v5111
        %v5113 = vrot.slane %v5112, 4
        %v5114 = vadd.f32 %v5112, %v5113
        %v5115 = vrot.slane %v5114, 2
        %v5116 = vadd.f32 %v5114, %v5115
        %v5117 = vrot.slane %v5116, 1
        %v5118 = vadd.f32 %v5116, %v5117
        %v5119 = vsel %vm5097, %v4849, 0.0
        %v5120 = vsel %vm5097, %v4850, 0.0
        %v5121 = vadd.f32 %v5119, %v5120
        %v5122 = vsel %vm5097, %v4851, 0.0
        %v5123 = vadd.f32 %v5121, %v5122
        %v5124 = vsel %vm5097, %v4852, 0.0
        %v5125 = vadd.f32 %v5123, %v5124
        %v5126 = vsel %vm5097, %v4853, 0.0
        %v5127 = vadd.f32 %v5125, %v5126
        %v5128 = vsel %vm5097, %v4854, 0.0
        %v5129 = vadd.f32 %v5127, %v5128
        %v5130 = vsel %vm5097, %v4855, 0.0
        %v5131 = vadd.f32 %v5129, %v5130
        %v5132 = vsel %vm5097, %v4856, 0.0
        %v5133 = vadd.f32 %v5131, %v5132
        %v5134 = vrot.slane %v5133, 4
        %v5135 = vadd.f32 %v5133, %v5134
        %v5136 = vrot.slane %v5135, 2
        %v5137 = vadd.f32 %v5135, %v5136
        %v5138 = vrot.slane %v5137, 1
        %v5139 = vadd.f32 %v5137, %v5138
        %v5140 = vsel %vm5097, %v4857, 0.0
        %v5141 = vsel %vm5097, %v4858, 0.0
        %v5142 = vadd.f32 %v5140, %v5141
        %v5143 = vsel %vm5097, %v4859, 0.0
        %v5144 = vadd.f32 %v5142, %v5143
        %v5145 = vsel %vm5097, %v4860, 0.0
        %v5146 = vadd.f32 %v5144, %v5145
        %v5147 = vsel %vm5097, %v4861, 0.0
        %v5148 = vadd.f32 %v5146, %v5147
        %v5149 = vsel %vm5097, %v4862, 0.0
        %v5150 = vadd.f32 %v5148, %v5149
        %v5151 = vsel %vm5097, %v4863, 0.0
        %v5152 = vadd.f32 %v5150, %v5151
        %v5153 = vsel %vm5097, %v4864, 0.0
        %v5154 = vadd.f32 %v5152, %v5153
        %v5155 = vrot.slane %v5154, 4
        %v5156 = vadd.f32 %v5154, %v5155
        %v5157 = vrot.slane %v5156, 2
        %v5158 = vadd.f32 %v5156, %v5157
        %v5159 = vrot.slane %v5158, 1
        %v5160 = vadd.f32 %v5158, %v5159
        %v5161 = vsel %vm5097, %v4865, 0.0
        %v5162 = vsel %vm5097, %v4866, 0.0
        %v5163 = vadd.f32 %v5161, %v5162
        %v5164 = vsel %vm5097, %v4867, 0.0
        %v5165 = vadd.f32 %v5163, %v5164
        %v5166 = vsel %vm5097, %v4868, 0.0
        %v5167 = vadd.f32 %v5165, %v5166
        %v5168 = vsel %vm5097, %v4869, 0.0
        %v5169 = vadd.f32 %v5167, %v5168
        %v5170 = vsel %vm5097, %v4870, 0.0
        %v5171 = vadd.f32 %v5169, %v5170
        %v5172 = vsel %vm5097, %v4871, 0.0
        %v5173 = vadd.f32 %v5171, %v5172
        %v5174 = vsel %vm5097, %v4872, 0.0
        %v5175 = vadd.f32 %v5173, %v5174
        %v5176 = vrot.slane %v5175, 4
        %v5177 = vadd.f32 %v5175, %v5176
        %v5178 = vrot.slane %v5177, 2
        %v5179 = vadd.f32 %v5177, %v5178
        %v5180 = vrot.slane %v5179, 1
        %v5181 = vadd.f32 %v5179, %v5180
        %v5182 = vsel %vm5097, %v4873, 0.0
        %v5183 = vsel %vm5097, %v4874, 0.0
        %v5184 = vadd.f32 %v5182, %v5183
        %v5185 = vsel %vm5097, %v4875, 0.0
        %v5186 = vadd.f32 %v5184, %v5185
        %v5187 = vsel %vm5097, %v4876, 0.0
        %v5188 = vadd.f32 %v5186, %v5187
        %v5189 = vsel %vm5097, %v4877, 0.0
        %v5190 = vadd.f32 %v5188, %v5189
        %v5191 = vsel %vm5097, %v4878, 0.0
        %v5192 = vadd.f32 %v5190, %v5191
        %v5193 = vsel %vm5097, %v4879, 0.0
        %v5194 = vadd.f32 %v5192, %v5193
        %v5195 = vsel %vm5097, %v4880, 0.0
        %v5196 = vadd.f32 %v5194, %v5195
        %v5197 = vrot.slane %v5196, 4
        %v5198 = vadd.f32 %v5196, %v5197
        %v5199 = vrot.slane %v5198, 2
        %v5200 = vadd.f32 %v5198, %v5199
        %v5201 = vrot.slane %v5200, 1
        %v5202 = vadd.f32 %v5200, %v5201
        %v5203 = vsel %vm5097, %v4881, 0.0
        %v5204 = vsel %vm5097, %v4882, 0.0
        %v5205 = vadd.f32 %v5203, %v5204
        %v5206 = vsel %vm5097, %v4883, 0.0
        %v5207 = vadd.f32 %v5205, %v5206
        %v5208 = vsel %vm5097, %v4884, 0.0
        %v5209 = vadd.f32 %v5207, %v5208
        %v5210 = vsel %vm5097, %v4885, 0.0
        %v5211 = vadd.f32 %v5209, %v5210
        %v5212 = vsel %vm5097, %v4886, 0.0
        %v5213 = vadd.f32 %v5211, %v5212
        %v5214 = vsel %vm5097, %v4887, 0.0
        %v5215 = vadd.f32 %v5213, %v5214
        %v5216 = vsel %vm5097, %v4888, 0.0
        %v5217 = vadd.f32 %v5215, %v5216
        %v5218 = vrot.slane %v5217, 4
        %v5219 = vadd.f32 %v5217, %v5218
        %v5220 = vrot.slane %v5219, 2
        %v5221 = vadd.f32 %v5219, %v5220
        %v5222 = vrot.slane %v5221, 1
        %v5223 = vadd.f32 %v5221, %v5222
        %v5224 = vsel %vm5097, %v4889, 0.0
        %v5225 = vsel %vm5097, %v4890, 0.0
        %v5226 = vadd.f32 %v5224, %v5225
        %v5227 = vsel %vm5097, %v4891, 0.0
        %v5228 = vadd.f32 %v5226, %v5227
        %v5229 = vsel %vm5097, %v4892, 0.0
        %v5230 = vadd.f32 %v5228, %v5229
        %v5231 = vsel %vm5097, %v4893, 0.0
        %v5232 = vadd.f32 %v5230, %v5231
        %v5233 = vsel %vm5097, %v4894, 0.0
        %v5234 = vadd.f32 %v5232, %v5233
        %v5235 = vsel %vm5097, %v4895, 0.0
        %v5236 = vadd.f32 %v5234, %v5235
        %v5237 = vsel %vm5097, %v4896, 0.0
        %v5238 = vadd.f32 %v5236, %v5237
        %v5239 = vrot.slane %v5238, 4
        %v5240 = vadd.f32 %v5238, %v5239
        %v5241 = vrot.slane %v5240, 2
        %v5242 = vadd.f32 %v5240, %v5241
        %v5243 = vrot.slane %v5242, 1
        %v5244 = vadd.f32 %v5242, %v5243
        %v5245 = vsel %vm5097, %v4897, 0.0
        %v5246 = vsel %vm5097, %v4898, 0.0
        %v5247 = vadd.f32 %v5245, %v5246
        %v5248 = vsel %vm5097, %v4899, 0.0
        %v5249 = vadd.f32 %v5247, %v5248
        %v5250 = vsel %vm5097, %v4900, 0.0
        %v5251 = vadd.f32 %v5249, %v5250
        %v5252 = vsel %vm5097, %v4901, 0.0
        %v5253 = vadd.f32 %v5251, %v5252
        %v5254 = vsel %vm5097, %v4902, 0.0
        %v5255 = vadd.f32 %v5253, %v5254
        %v5256 = vsel %vm5097, %v4903, 0.0
        %v5257 = vadd.f32 %v5255, %v5256
        %v5258 = vsel %vm5097, %v4904, 0.0
        %v5259 = vadd.f32 %v5257, %v5258
        %v5260 = vrot.slane %v5259, 4
        %v5261 = vadd.f32 %v5259, %v5260
        %v5262 = vrot.slane %v5261, 2
        %v5263 = vadd.f32 %v5261, %v5262
        %v5264 = vrot.slane %v5263, 1
        %v5265 = vadd.f32 %v5263, %v5264
        %v5266 = vsel %vm5097, %v4905, 0.0
        %v5267 = vsel %vm5097, %v4906, 0.0
        %v5268 = vadd.f32 %v5266, %v5267
        %v5269 = vsel %vm5097, %v4907, 0.0
        %v5270 = vadd.f32 %v5268, %v5269
        %v5271 = vsel %vm5097, %v4908, 0.0
        %v5272 = vadd.f32 %v5270, %v5271
        %v5273 = vsel %vm5097, %v4909, 0.0
        %v5274 = vadd.f32 %v5272, %v5273
        %v5275 = vsel %vm5097, %v4910, 0.0
        %v5276 = vadd.f32 %v5274, %v5275
        %v5277 = vsel %vm5097, %v4911, 0.0
        %v5278 = vadd.f32 %v5276, %v5277
        %v5279 = vsel %vm5097, %v4912, 0.0
        %v5280 = vadd.f32 %v5278, %v5279
        %v5281 = vrot.slane %v5280, 4
        %v5282 = vadd.f32 %v5280, %v5281
        %v5283 = vrot.slane %v5282, 2
        %v5284 = vadd.f32 %v5282, %v5283
        %v5285 = vrot.slane %v5284, 1
        %v5286 = vadd.f32 %v5284, %v5285
        %v5287 = vsel %vm5097, %v4913, 0.0
        %v5288 = vsel %vm5097, %v4914, 0.0
        %v5289 = vadd.f32 %v5287, %v5288
        %v5290 = vsel %vm5097, %v4915, 0.0
        %v5291 = vadd.f32 %v5289, %v5290
        %v5292 = vsel %vm5097, %v4916, 0.0
        %v5293 = vadd.f32 %v5291, %v5292
        %v5294 = vsel %vm5097, %v4917, 0.0
        %v5295 = vadd.f32 %v5293, %v5294
        %v5296 = vsel %vm5097, %v4918, 0.0
        %v5297 = vadd.f32 %v5295, %v5296
        %v5298 = vsel %vm5097, %v4919, 0.0
        %v5299 = vadd.f32 %v5297, %v5298
        %v5300 = vsel %vm5097, %v4920, 0.0
        %v5301 = vadd.f32 %v5299, %v5300
        %v5302 = vrot.slane %v5301, 4
        %v5303 = vadd.f32 %v5301, %v5302
        %v5304 = vrot.slane %v5303, 2
        %v5305 = vadd.f32 %v5303, %v5304
        %v5306 = vrot.slane %v5305, 1
        %v5307 = vadd.f32 %v5305, %v5306
        %v5308 = vsel %vm5097, %v4921, 0.0
        %v5309 = vsel %vm5097, %v4922, 0.0
        %v5310 = vadd.f32 %v5308, %v5309
        %v5311 = vsel %vm5097, %v4923, 0.0
        %v5312 = vadd.f32 %v5310, %v5311
        %v5313 = vsel %vm5097, %v4924, 0.0
        %v5314 = vadd.f32 %v5312, %v5313
        %v5315 = vsel %vm5097, %v4925, 0.0
        %v5316 = vadd.f32 %v5314, %v5315
        %v5317 = vsel %vm5097, %v4926, 0.0
        %v5318 = vadd.f32 %v5316, %v5317
        %v5319 = vsel %vm5097, %v4927, 0.0
        %v5320 = vadd.f32 %v5318, %v5319
        %v5321 = vsel %vm5097, %v4928, 0.0
        %v5322 = vadd.f32 %v5320, %v5321
        %v5323 = vrot.slane %v5322, 4
        %v5324 = vadd.f32 %v5322, %v5323
        %v5325 = vrot.slane %v5324, 2
        %v5326 = vadd.f32 %v5324, %v5325
        %v5327 = vrot.slane %v5326, 1
        %v5328 = vadd.f32 %v5326, %v5327
        %v5329 = vsel %vm5097, %v4929, 0.0
        %v5330 = vsel %vm5097, %v4930, 0.0
        %v5331 = vadd.f32 %v5329, %v5330
        %v5332 = vsel %vm5097, %v4931, 0.0
        %v5333 = vadd.f32 %v5331, %v5332
        %v5334 = vsel %vm5097, %v4932, 0.0
        %v5335 = vadd.f32 %v5333, %v5334
        %v5336 = vsel %vm5097, %v4933, 0.0
        %v5337 = vadd.f32 %v5335, %v5336
        %v5338 = vsel %vm5097, %v4934, 0.0
        %v5339 = vadd.f32 %v5337, %v5338
        %v5340 = vsel %vm5097, %v4935, 0.0
        %v5341 = vadd.f32 %v5339, %v5340
        %v5342 = vsel %vm5097, %v4936, 0.0
        %v5343 = vadd.f32 %v5341, %v5342
        %v5344 = vrot.slane %v5343, 4
        %v5345 = vadd.f32 %v5343, %v5344
        %v5346 = vrot.slane %v5345, 2
        %v5347 = vadd.f32 %v5345, %v5346
        %v5348 = vrot.slane %v5347, 1
        %v5349 = vadd.f32 %v5347, %v5348
        %v5350 = vsel %vm5097, %v4937, 0.0
        %v5351 = vsel %vm5097, %v4938, 0.0
        %v5352 = vadd.f32 %v5350, %v5351
        %v5353 = vsel %vm5097, %v4939, 0.0
        %v5354 = vadd.f32 %v5352, %v5353
        %v5355 = vsel %vm5097, %v4940, 0.0
        %v5356 = vadd.f32 %v5354, %v5355
        %v5357 = vsel %vm5097, %v4941, 0.0
        %v5358 = vadd.f32 %v5356, %v5357
        %v5359 = vsel %vm5097, %v4942, 0.0
        %v5360 = vadd.f32 %v5358, %v5359
        %v5361 = vsel %vm5097, %v4943, 0.0
        %v5362 = vadd.f32 %v5360, %v5361
        %v5363 = vsel %vm5097, %v4944, 0.0
        %v5364 = vadd.f32 %v5362, %v5363
        %v5365 = vrot.slane %v5364, 4
        %v5366 = vadd.f32 %v5364, %v5365
        %v5367 = vrot.slane %v5366, 2
        %v5368 = vadd.f32 %v5366, %v5367
        %v5369 = vrot.slane %v5368, 1
        %v5370 = vadd.f32 %v5368, %v5369
        %v5371 = vsel %vm5097, %v4945, 0.0
        %v5372 = vsel %vm5097, %v4946, 0.0
        %v5373 = vadd.f32 %v5371, %v5372
        %v5374 = vsel %vm5097, %v4947, 0.0
        %v5375 = vadd.f32 %v5373, %v5374
        %v5376 = vsel %vm5097, %v4948, 0.0
        %v5377 = vadd.f32 %v5375, %v5376
        %v5378 = vsel %vm5097, %v4949, 0.0
        %v5379 = vadd.f32 %v5377, %v5378
        %v5380 = vsel %vm5097, %v4950, 0.0
        %v5381 = vadd.f32 %v5379, %v5380
        %v5382 = vsel %vm5097, %v4951, 0.0
        %v5383 = vadd.f32 %v5381, %v5382
        %v5384 = vsel %vm5097, %v4952, 0.0
        %v5385 = vadd.f32 %v5383, %v5384
        %v5386 = vrot.slane %v5385, 4
        %v5387 = vadd.f32 %v5385, %v5386
        %v5388 = vrot.slane %v5387, 2
        %v5389 = vadd.f32 %v5387, %v5388
        %v5390 = vrot.slane %v5389, 1
        %v5391 = vadd.f32 %v5389, %v5390
        %v5392 = vsel %vm5097, %v4953, 0.0
        %v5393 = vsel %vm5097, %v4954, 0.0
        %v5394 = vadd.f32 %v5392, %v5393
        %v5395 = vsel %vm5097, %v4955, 0.0
        %v5396 = vadd.f32 %v5394, %v5395
        %v5397 = vsel %vm5097, %v4956, 0.0
        %v5398 = vadd.f32 %v5396, %v5397
        %v5399 = vsel %vm5097, %v4957, 0.0
        %v5400 = vadd.f32 %v5398, %v5399
        %v5401 = vsel %vm5097, %v4958, 0.0
        %v5402 = vadd.f32 %v5400, %v5401
        %v5403 = vsel %vm5097, %v4959, 0.0
        %v5404 = vadd.f32 %v5402, %v5403
        %v5405 = vsel %vm5097, %v4960, 0.0
        %v5406 = vadd.f32 %v5404, %v5405
        %v5407 = vrot.slane %v5406, 4
        %v5408 = vadd.f32 %v5406, %v5407
        %v5409 = vrot.slane %v5408, 2
        %v5410 = vadd.f32 %v5408, %v5409
        %v5411 = vrot.slane %v5410, 1
        %v5412 = vadd.f32 %v5410, %v5411
        %v5413 = vsel %vm5097, %v4961, 0.0
        %v5414 = vsel %vm5097, %v4962, 0.0
        %v5415 = vadd.f32 %v5413, %v5414
        %v5416 = vsel %vm5097, %v4963, 0.0
        %v5417 = vadd.f32 %v5415, %v5416
        %v5418 = vsel %vm5097, %v4964, 0.0
        %v5419 = vadd.f32 %v5417, %v5418
        %v5420 = vsel %vm5097, %v4965, 0.0
        %v5421 = vadd.f32 %v5419, %v5420
        %v5422 = vsel %vm5097, %v4966, 0.0
        %v5423 = vadd.f32 %v5421, %v5422
        %v5424 = vsel %vm5097, %v4967, 0.0
        %v5425 = vadd.f32 %v5423, %v5424
        %v5426 = vsel %vm5097, %v4968, 0.0
        %v5427 = vadd.f32 %v5425, %v5426
        %v5428 = vrot.slane %v5427, 4
        %v5429 = vadd.f32 %v5427, %v5428
        %v5430 = vrot.slane %v5429, 2
        %v5431 = vadd.f32 %v5429, %v5430
        %v5432 = vrot.slane %v5431, 1
        %v5433 = vadd.f32 %v5431, %v5432
        %v5434 = vsel %vm5097, %v4969, 0.0
        %v5435 = vsel %vm5097, %v4970, 0.0
        %v5436 = vadd.f32 %v5434, %v5435
        %v5437 = vsel %vm5097, %v4971, 0.0
        %v5438 = vadd.f32 %v5436, %v5437
        %v5439 = vsel %vm5097, %v4972, 0.0
        %v5440 = vadd.f32 %v5438, %v5439
        %v5441 = vsel %vm5097, %v4973, 0.0
        %v5442 = vadd.f32 %v5440, %v5441
        %v5443 = vsel %vm5097, %v4974, 0.0
        %v5444 = vadd.f32 %v5442, %v5443
        %v5445 = vsel %vm5097, %v4975, 0.0
        %v5446 = vadd.f32 %v5444, %v5445
        %v5447 = vsel %vm5097, %v4976, 0.0
        %v5448 = vadd.f32 %v5446, %v5447
        %v5449 = vrot.slane %v5448, 4
        %v5450 = vadd.f32 %v5448, %v5449
        %v5451 = vrot.slane %v5450, 2
        %v5452 = vadd.f32 %v5450, %v5451
        %v5453 = vrot.slane %v5452, 1
        %v5454 = vadd.f32 %v5452, %v5453
        %v5455 = vsel %vm5097, %v4977, 0.0
        %v5456 = vsel %vm5097, %v4978, 0.0
        %v5457 = vadd.f32 %v5455, %v5456
        %v5458 = vsel %vm5097, %v4979, 0.0
        %v5459 = vadd.f32 %v5457, %v5458
        %v5460 = vsel %vm5097, %v4980, 0.0
        %v5461 = vadd.f32 %v5459, %v5460
        %v5462 = vsel %vm5097, %v4981, 0.0
        %v5463 = vadd.f32 %v5461, %v5462
        %v5464 = vsel %vm5097, %v4982, 0.0
        %v5465 = vadd.f32 %v5463, %v5464
        %v5466 = vsel %vm5097, %v4983, 0.0
        %v5467 = vadd.f32 %v5465, %v5466
        %v5468 = vsel %vm5097, %v4984, 0.0
        %v5469 = vadd.f32 %v5467, %v5468
        %v5470 = vrot.slane %v5469, 4
        %v5471 = vadd.f32 %v5469, %v5470
        %v5472 = vrot.slane %v5471, 2
        %v5473 = vadd.f32 %v5471, %v5472
        %v5474 = vrot.slane %v5473, 1
        %v5475 = vadd.f32 %v5473, %v5474
        %v5476 = vsel %vm5097, %v4985, 0.0
        %v5477 = vsel %vm5097, %v4986, 0.0
        %v5478 = vadd.f32 %v5476, %v5477
        %v5479 = vsel %vm5097, %v4987, 0.0
        %v5480 = vadd.f32 %v5478, %v5479
        %v5481 = vsel %vm5097, %v4988, 0.0
        %v5482 = vadd.f32 %v5480, %v5481
        %v5483 = vsel %vm5097, %v4989, 0.0
        %v5484 = vadd.f32 %v5482, %v5483
        %v5485 = vsel %vm5097, %v4990, 0.0
        %v5486 = vadd.f32 %v5484, %v5485
        %v5487 = vsel %vm5097, %v4991, 0.0
        %v5488 = vadd.f32 %v5486, %v5487
        %v5489 = vsel %vm5097, %v4992, 0.0
        %v5490 = vadd.f32 %v5488, %v5489
        %v5491 = vrot.slane %v5490, 4
        %v5492 = vadd.f32 %v5490, %v5491
        %v5493 = vrot.slane %v5492, 2
        %v5494 = vadd.f32 %v5492, %v5493
        %v5495 = vrot.slane %v5494, 1
        %v5496 = vadd.f32 %v5494, %v5495
        %v5497 = vsel %vm5097, %v4993, 0.0
        %v5498 = vsel %vm5097, %v4994, 0.0
        %v5499 = vadd.f32 %v5497, %v5498
        %v5500 = vsel %vm5097, %v4995, 0.0
        %v5501 = vadd.f32 %v5499, %v5500
        %v5502 = vsel %vm5097, %v4996, 0.0
        %v5503 = vadd.f32 %v5501, %v5502
        %v5504 = vsel %vm5097, %v4997, 0.0
        %v5505 = vadd.f32 %v5503, %v5504
        %v5506 = vsel %vm5097, %v4998, 0.0
        %v5507 = vadd.f32 %v5505, %v5506
        %v5508 = vsel %vm5097, %v4999, 0.0
        %v5509 = vadd.f32 %v5507, %v5508
        %v5510 = vsel %vm5097, %v5000, 0.0
        %v5511 = vadd.f32 %v5509, %v5510
        %v5512 = vrot.slane %v5511, 4
        %v5513 = vadd.f32 %v5511, %v5512
        %v5514 = vrot.slane %v5513, 2
        %v5515 = vadd.f32 %v5513, %v5514
        %v5516 = vrot.slane %v5515, 1
        %v5517 = vadd.f32 %v5515, %v5516
        %v5518 = vsel %vm5097, %v5001, 0.0
        %v5519 = vsel %vm5097, %v5002, 0.0
        %v5520 = vadd.f32 %v5518, %v5519
        %v5521 = vsel %vm5097, %v5003, 0.0
        %v5522 = vadd.f32 %v5520, %v5521
        %v5523 = vsel %vm5097, %v5004, 0.0
        %v5524 = vadd.f32 %v5522, %v5523
        %v5525 = vsel %vm5097, %v5005, 0.0
        %v5526 = vadd.f32 %v5524, %v5525
        %v5527 = vsel %vm5097, %v5006, 0.0
        %v5528 = vadd.f32 %v5526, %v5527
        %v5529 = vsel %vm5097, %v5007, 0.0
        %v5530 = vadd.f32 %v5528, %v5529
        %v5531 = vsel %vm5097, %v5008, 0.0
        %v5532 = vadd.f32 %v5530, %v5531
        %v5533 = vrot.slane %v5532, 4
        %v5534 = vadd.f32 %v5532, %v5533
        %v5535 = vrot.slane %v5534, 2
        %v5536 = vadd.f32 %v5534, %v5535
        %v5537 = vrot.slane %v5536, 1
        %v5538 = vadd.f32 %v5536, %v5537
        %v5539 = vsel %vm5097, %v5009, 0.0
        %v5540 = vsel %vm5097, %v5010, 0.0
        %v5541 = vadd.f32 %v5539, %v5540
        %v5542 = vsel %vm5097, %v5011, 0.0
        %v5543 = vadd.f32 %v5541, %v5542
        %v5544 = vsel %vm5097, %v5012, 0.0
        %v5545 = vadd.f32 %v5543, %v5544
        %v5546 = vsel %vm5097, %v5013, 0.0
        %v5547 = vadd.f32 %v5545, %v5546
        %v5548 = vsel %vm5097, %v5014, 0.0
        %v5549 = vadd.f32 %v5547, %v5548
        %v5550 = vsel %vm5097, %v5015, 0.0
        %v5551 = vadd.f32 %v5549, %v5550
        %v5552 = vsel %vm5097, %v5016, 0.0
        %v5553 = vadd.f32 %v5551, %v5552
        %v5554 = vrot.slane %v5553, 4
        %v5555 = vadd.f32 %v5553, %v5554
        %v5556 = vrot.slane %v5555, 2
        %v5557 = vadd.f32 %v5555, %v5556
        %v5558 = vrot.slane %v5557, 1
        %v5559 = vadd.f32 %v5557, %v5558
        %v5560 = vsel %vm5097, %v5017, 0.0
        %v5561 = vsel %vm5097, %v5018, 0.0
        %v5562 = vadd.f32 %v5560, %v5561
        %v5563 = vsel %vm5097, %v5019, 0.0
        %v5564 = vadd.f32 %v5562, %v5563
        %v5565 = vsel %vm5097, %v5020, 0.0
        %v5566 = vadd.f32 %v5564, %v5565
        %v5567 = vsel %vm5097, %v5021, 0.0
        %v5568 = vadd.f32 %v5566, %v5567
        %v5569 = vsel %vm5097, %v5022, 0.0
        %v5570 = vadd.f32 %v5568, %v5569
        %v5571 = vsel %vm5097, %v5023, 0.0
        %v5572 = vadd.f32 %v5570, %v5571
        %v5573 = vsel %vm5097, %v5024, 0.0
        %v5574 = vadd.f32 %v5572, %v5573
        %v5575 = vrot.slane %v5574, 4
        %v5576 = vadd.f32 %v5574, %v5575
        %v5577 = vrot.slane %v5576, 2
        %v5578 = vadd.f32 %v5576, %v5577
        %v5579 = vrot.slane %v5578, 1
        %v5580 = vadd.f32 %v5578, %v5579
        %v5581 = vsel %vm5097, %v5025, 0.0
        %v5582 = vsel %vm5097, %v5026, 0.0
        %v5583 = vadd.f32 %v5581, %v5582
        %v5584 = vsel %vm5097, %v5027, 0.0
        %v5585 = vadd.f32 %v5583, %v5584
        %v5586 = vsel %vm5097, %v5028, 0.0
        %v5587 = vadd.f32 %v5585, %v5586
        %v5588 = vsel %vm5097, %v5029, 0.0
        %v5589 = vadd.f32 %v5587, %v5588
        %v5590 = vsel %vm5097, %v5030, 0.0
        %v5591 = vadd.f32 %v5589, %v5590
        %v5592 = vsel %vm5097, %v5031, 0.0
        %v5593 = vadd.f32 %v5591, %v5592
        %v5594 = vsel %vm5097, %v5032, 0.0
        %v5595 = vadd.f32 %v5593, %v5594
        %v5596 = vrot.slane %v5595, 4
        %v5597 = vadd.f32 %v5595, %v5596
        %v5598 = vrot.slane %v5597, 2
        %v5599 = vadd.f32 %v5597, %v5598
        %v5600 = vrot.slane %v5599, 1
        %v5601 = vadd.f32 %v5599, %v5600
        %v5602 = vsel %vm5097, %v5033, 0.0
        %v5603 = vsel %vm5097, %v5034, 0.0
        %v5604 = vadd.f32 %v5602, %v5603
        %v5605 = vsel %vm5097, %v5035, 0.0
        %v5606 = vadd.f32 %v5604, %v5605
        %v5607 = vsel %vm5097, %v5036, 0.0
        %v5608 = vadd.f32 %v5606, %v5607
        %v5609 = vsel %vm5097, %v5037, 0.0
        %v5610 = vadd.f32 %v5608, %v5609
        %v5611 = vsel %vm5097, %v5038, 0.0
        %v5612 = vadd.f32 %v5610, %v5611
        %v5613 = vsel %vm5097, %v5039, 0.0
        %v5614 = vadd.f32 %v5612, %v5613
        %v5615 = vsel %vm5097, %v5040, 0.0
        %v5616 = vadd.f32 %v5614, %v5615
        %v5617 = vrot.slane %v5616, 4
        %v5618 = vadd.f32 %v5616, %v5617
        %v5619 = vrot.slane %v5618, 2
        %v5620 = vadd.f32 %v5618, %v5619
        %v5621 = vrot.slane %v5620, 1
        %v5622 = vadd.f32 %v5620, %v5621
        %v5623 = vsel %vm5097, %v5041, 0.0
        %v5624 = vsel %vm5097, %v5042, 0.0
        %v5625 = vadd.f32 %v5623, %v5624
        %v5626 = vsel %vm5097, %v5043, 0.0
        %v5627 = vadd.f32 %v5625, %v5626
        %v5628 = vsel %vm5097, %v5044, 0.0
        %v5629 = vadd.f32 %v5627, %v5628
        %v5630 = vsel %vm5097, %v5045, 0.0
        %v5631 = vadd.f32 %v5629, %v5630
        %v5632 = vsel %vm5097, %v5046, 0.0
        %v5633 = vadd.f32 %v5631, %v5632
        %v5634 = vsel %vm5097, %v5047, 0.0
        %v5635 = vadd.f32 %v5633, %v5634
        %v5636 = vsel %vm5097, %v5048, 0.0
        %v5637 = vadd.f32 %v5635, %v5636
        %v5638 = vrot.slane %v5637, 4
        %v5639 = vadd.f32 %v5637, %v5638
        %v5640 = vrot.slane %v5639, 2
        %v5641 = vadd.f32 %v5639, %v5640
        %v5642 = vrot.slane %v5641, 1
        %v5643 = vadd.f32 %v5641, %v5642
        %v5644 = vsel %vm5097, %v5049, 0.0
        %v5645 = vsel %vm5097, %v5050, 0.0
        %v5646 = vadd.f32 %v5644, %v5645
        %v5647 = vsel %vm5097, %v5051, 0.0
        %v5648 = vadd.f32 %v5646, %v5647
        %v5649 = vsel %vm5097, %v5052, 0.0
        %v5650 = vadd.f32 %v5648, %v5649
        %v5651 = vsel %vm5097, %v5053, 0.0
        %v5652 = vadd.f32 %v5650, %v5651
        %v5653 = vsel %vm5097, %v5054, 0.0
        %v5654 = vadd.f32 %v5652, %v5653
        %v5655 = vsel %vm5097, %v5055, 0.0
        %v5656 = vadd.f32 %v5654, %v5655
        %v5657 = vsel %vm5097, %v5056, 0.0
        %v5658 = vadd.f32 %v5656, %v5657
        %v5659 = vrot.slane %v5658, 4
        %v5660 = vadd.f32 %v5658, %v5659
        %v5661 = vrot.slane %v5660, 2
        %v5662 = vadd.f32 %v5660, %v5661
        %v5663 = vrot.slane %v5662, 1
        %v5664 = vadd.f32 %v5662, %v5663
        %v5665 = vsel %vm5097, %v5057, 0.0
        %v5666 = vsel %vm5097, %v5058, 0.0
        %v5667 = vadd.f32 %v5665, %v5666
        %v5668 = vsel %vm5097, %v5059, 0.0
        %v5669 = vadd.f32 %v5667, %v5668
        %v5670 = vsel %vm5097, %v5060, 0.0
        %v5671 = vadd.f32 %v5669, %v5670
        %v5672 = vsel %vm5097, %v5061, 0.0
        %v5673 = vadd.f32 %v5671, %v5672
        %v5674 = vsel %vm5097, %v5062, 0.0
        %v5675 = vadd.f32 %v5673, %v5674
        %v5676 = vsel %vm5097, %v5063, 0.0
        %v5677 = vadd.f32 %v5675, %v5676
        %v5678 = vsel %vm5097, %v5064, 0.0
        %v5679 = vadd.f32 %v5677, %v5678
        %v5680 = vrot.slane %v5679, 4
        %v5681 = vadd.f32 %v5679, %v5680
        %v5682 = vrot.slane %v5681, 2
        %v5683 = vadd.f32 %v5681, %v5682
        %v5684 = vrot.slane %v5683, 1
        %v5685 = vadd.f32 %v5683, %v5684
        %v5686 = vsel %vm5097, %v5065, 0.0
        %v5687 = vsel %vm5097, %v5066, 0.0
        %v5688 = vadd.f32 %v5686, %v5687
        %v5689 = vsel %vm5097, %v5067, 0.0
        %v5690 = vadd.f32 %v5688, %v5689
        %v5691 = vsel %vm5097, %v5068, 0.0
        %v5692 = vadd.f32 %v5690, %v5691
        %v5693 = vsel %vm5097, %v5069, 0.0
        %v5694 = vadd.f32 %v5692, %v5693
        %v5695 = vsel %vm5097, %v5070, 0.0
        %v5696 = vadd.f32 %v5694, %v5695
        %v5697 = vsel %vm5097, %v5071, 0.0
        %v5698 = vadd.f32 %v5696, %v5697
        %v5699 = vsel %vm5097, %v5072, 0.0
        %v5700 = vadd.f32 %v5698, %v5699
        %v5701 = vrot.slane %v5700, 4
        %v5702 = vadd.f32 %v5700, %v5701
        %v5703 = vrot.slane %v5702, 2
        %v5704 = vadd.f32 %v5702, %v5703
        %v5705 = vrot.slane %v5704, 1
        %v5706 = vadd.f32 %v5704, %v5705
        %v5707 = vsel %vm5097, %v5073, 0.0
        %v5708 = vsel %vm5097, %v5074, 0.0
        %v5709 = vadd.f32 %v5707, %v5708
        %v5710 = vsel %vm5097, %v5075, 0.0
        %v5711 = vadd.f32 %v5709, %v5710
        %v5712 = vsel %vm5097, %v5076, 0.0
        %v5713 = vadd.f32 %v5711, %v5712
        %v5714 = vsel %vm5097, %v5077, 0.0
        %v5715 = vadd.f32 %v5713, %v5714
        %v5716 = vsel %vm5097, %v5078, 0.0
        %v5717 = vadd.f32 %v5715, %v5716
        %v5718 = vsel %vm5097, %v5079, 0.0
        %v5719 = vadd.f32 %v5717, %v5718
        %v5720 = vsel %vm5097, %v5080, 0.0
        %v5721 = vadd.f32 %v5719, %v5720
        %v5722 = vrot.slane %v5721, 4
        %v5723 = vadd.f32 %v5721, %v5722
        %v5724 = vrot.slane %v5723, 2
        %v5725 = vadd.f32 %v5723, %v5724
        %v5726 = vrot.slane %v5725, 1
        %v5727 = vadd.f32 %v5725, %v5726
        %v5728 = vsel %vm5097, %v5081, 0.0
        %v5729 = vsel %vm5097, %v5082, 0.0
        %v5730 = vadd.f32 %v5728, %v5729
        %v5731 = vsel %vm5097, %v5083, 0.0
        %v5732 = vadd.f32 %v5730, %v5731
        %v5733 = vsel %vm5097, %v5084, 0.0
        %v5734 = vadd.f32 %v5732, %v5733
        %v5735 = vsel %vm5097, %v5085, 0.0
        %v5736 = vadd.f32 %v5734, %v5735
        %v5737 = vsel %vm5097, %v5086, 0.0
        %v5738 = vadd.f32 %v5736, %v5737
        %v5739 = vsel %vm5097, %v5087, 0.0
        %v5740 = vadd.f32 %v5738, %v5739
        %v5741 = vsel %vm5097, %v5088, 0.0
        %v5742 = vadd.f32 %v5740, %v5741
        %v5743 = vrot.slane %v5742, 4
        %v5744 = vadd.f32 %v5742, %v5743
        %v5745 = vrot.slane %v5744, 2
        %v5746 = vadd.f32 %v5744, %v5745
        %v5747 = vrot.slane %v5746, 1
        %v5748 = vadd.f32 %v5746, %v5747
        %v5749 = vsel %vm5097, %v5089, 0.0
        %v5750 = vsel %vm5097, %v5090, 0.0
        %v5751 = vadd.f32 %v5749, %v5750
        %v5752 = vsel %vm5097, %v5091, 0.0
        %v5753 = vadd.f32 %v5751, %v5752
        %v5754 = vsel %vm5097, %v5092, 0.0
        %v5755 = vadd.f32 %v5753, %v5754
        %v5756 = vsel %vm5097, %v5093, 0.0
        %v5757 = vadd.f32 %v5755, %v5756
        %v5758 = vsel %vm5097, %v5094, 0.0
        %v5759 = vadd.f32 %v5757, %v5758
        %v5760 = vsel %vm5097, %v5095, 0.0
        %v5761 = vadd.f32 %v5759, %v5760
        %v5762 = vsel %vm5097, %v5096, 0.0
        %v5763 = vadd.f32 %v5761, %v5762
        %v5764 = vrot.slane %v5763, 4
        %v5765 = vadd.f32 %v5763, %v5764
        %v5766 = vrot.slane %v5765, 2
        %v5767 = vadd.f32 %v5765, %v5766
        %v5768 = vrot.slane %v5767, 1
        %v5769 = vadd.f32 %v5767, %v5768
        %5781 = vrot.lane.b32.xlu0 %v1705, 120
        %v5782 = vpop.permute.xlu0 %5781
        %5783 = vrot.lane.b32.xlu0 %v1708, 120
        %v5784 = vpop.permute.xlu0 %5783
        %5785 = vrot.lane.b32.xlu0 %v1713, 120
        %v5786 = vpop.permute.xlu0 %5785
        %5787 = vrot.lane.b32.xlu0 %v1716, 120
        %v5788 = vpop.permute.xlu0 %5787
        %5789 = vrot.lane.b32.xlu0 %v1721, 120
        %v5790 = vpop.permute.xlu0 %5789
        %5791 = vrot.lane.b32.xlu0 %v1724, 120
        %v5792 = vpop.permute.xlu0 %5791
        %5793 = vrot.lane.b32.xlu0 %v1729, 120
        %v5794 = vpop.permute.xlu0 %5793
        %5795 = vrot.lane.b32.xlu0 %v1732, 120
        %v5796 = vpop.permute.xlu0 %5795
        %5797 = vrot.lane.b32.xlu0 %v1737, 120
        %v5798 = vpop.permute.xlu0 %5797
        %5799 = vrot.lane.b32.xlu0 %v1740, 120
        %v5800 = vpop.permute.xlu0 %5799
        %5801 = vrot.lane.b32.xlu0 %v1745, 120
        %v5802 = vpop.permute.xlu0 %5801
        %5814 = vrot.lane.b32.xlu0 %v1705, 112
        %v5815 = vpop.permute.xlu0 %5814
        %5816 = vrot.lane.b32.xlu0 %v1708, 112
        %v5817 = vpop.permute.xlu0 %5816
        %5818 = vrot.lane.b32.xlu0 %v1713, 112
        %v5819 = vpop.permute.xlu0 %5818
        %5820 = vrot.lane.b32.xlu0 %v1716, 112
        %v5821 = vpop.permute.xlu0 %5820
        %5822 = vrot.lane.b32.xlu0 %v1721, 112
        %v5823 = vpop.permute.xlu0 %5822
        %5824 = vrot.lane.b32.xlu0 %v1724, 112
        %v5825 = vpop.permute.xlu0 %5824
        %5826 = vrot.lane.b32.xlu0 %v1729, 112
        %v5827 = vpop.permute.xlu0 %5826
        %5828 = vrot.lane.b32.xlu0 %v1732, 112
        %v5829 = vpop.permute.xlu0 %5828
        %5830 = vrot.lane.b32.xlu0 %v1737, 112
        %v5831 = vpop.permute.xlu0 %5830
        %5832 = vrot.lane.b32.xlu0 %v1740, 112
        %v5833 = vpop.permute.xlu0 %5832
        %5834 = vrot.lane.b32.xlu0 %v1745, 112
        %v5835 = vpop.permute.xlu0 %5834
        %5847 = vrot.lane.b32.xlu0 %v1705, 104
        %v5848 = vpop.permute.xlu0 %5847
        %5849 = vrot.lane.b32.xlu0 %v1708, 104
        %v5850 = vpop.permute.xlu0 %5849
        %5851 = vrot.lane.b32.xlu0 %v1713, 104
        %v5852 = vpop.permute.xlu0 %5851
        %5853 = vrot.lane.b32.xlu0 %v1716, 104
        %v5854 = vpop.permute.xlu0 %5853
        %5855 = vrot.lane.b32.xlu0 %v1721, 104
        %v5856 = vpop.permute.xlu0 %5855
        %5857 = vrot.lane.b32.xlu0 %v1724, 104
        %v5858 = vpop.permute.xlu0 %5857
        %5859 = vrot.lane.b32.xlu0 %v1729, 104
        %v5860 = vpop.permute.xlu0 %5859
        %5861 = vrot.lane.b32.xlu0 %v1732, 104
        %v5862 = vpop.permute.xlu0 %5861
        %5863 = vrot.lane.b32.xlu0 %v1737, 104
        %v5864 = vpop.permute.xlu0 %5863
        %5865 = vrot.lane.b32.xlu0 %v1740, 104
        %v5866 = vpop.permute.xlu0 %5865
        %5867 = vrot.lane.b32.xlu0 %v1745, 104
        %v5868 = vpop.permute.xlu0 %5867
        %v5880 = vpack.c.bf16 %v1708, %v1705
        %v5881 = vpack.c.bf16 %v1716, %v1713
        %v5882 = vpack.c.bf16 %v1724, %v1721
        %v5883 = vpack.c.bf16 %v1732, %v1729
        %v5884 = vpack.c.bf16 %v1740, %v1737
        %v5885 = vpack.c.bf16 %v1745, %v1745
        %v5886 = vpack.c.bf16 %v5784, %v5782
        %v5887 = vpack.c.bf16 %v5788, %v5786
        %v5888 = vpack.c.bf16 %v5792, %v5790
        %v5889 = vpack.c.bf16 %v5796, %v5794
        %v5890 = vpack.c.bf16 %v5800, %v5798
        %v5891 = vpack.c.bf16 %v5802, %v5802
        %v5892 = vpack.c.bf16 %v5817, %v5815
        %v5893 = vpack.c.bf16 %v5821, %v5819
        %v5894 = vpack.c.bf16 %v5825, %v5823
        %v5895 = vpack.c.bf16 %v5829, %v5827
        %v5896 = vpack.c.bf16 %v5833, %v5831
        %v5897 = vpack.c.bf16 %v5835, %v5835
        %v5898 = vpack.c.bf16 %v5850, %v5848
        %v5899 = vpack.c.bf16 %v5854, %v5852
        %v5900 = vpack.c.bf16 %v5858, %v5856
        %v5901 = vpack.c.bf16 %v5862, %v5860
        %v5902 = vpack.c.bf16 %v5866, %v5864
        %v5903 = vpack.c.bf16 %v5868, %v5868
        %v5904 = vpack.c.bf16 %v5118, %v5118
        %v5905 = vpack.c.bf16 %v5139, %v5139
        %v5906 = vpack.c.bf16 %v5160, %v5160
        %v5907 = vpack.c.bf16 %v5181, %v5181
        %v5908 = vpack.c.bf16 %v5202, %v5202
        %v5909 = vpack.c.bf16 %v5223, %v5223
        %v5910 = vpack.c.bf16 %v5244, %v5244
        %v5911 = vpack.c.bf16 %v5265, %v5265
        %v5912 = vpack.c.bf16 %v5286, %v5286
        %v5913 = vpack.c.bf16 %v5307, %v5307
        %v5914 = vpack.c.bf16 %v5328, %v5328
        %v5915 = vpack.c.bf16 %v5349, %v5349
        %v5916 = vpack.c.bf16 %v5370, %v5370
        %v5917 = vpack.c.bf16 %v5391, %v5391
        %v5918 = vpack.c.bf16 %v5412, %v5412
        %v5919 = vpack.c.bf16 %v5433, %v5433
        %v5920 = vpack.c.bf16 %v5454, %v5454
        %v5921 = vpack.c.bf16 %v5475, %v5475
        %v5922 = vpack.c.bf16 %v5496, %v5496
        %v5923 = vpack.c.bf16 %v5517, %v5517
        %v5924 = vpack.c.bf16 %v5538, %v5538
        %v5925 = vpack.c.bf16 %v5559, %v5559
        %v5926 = vpack.c.bf16 %v5580, %v5580
        %v5927 = vpack.c.bf16 %v5601, %v5601
        %v5928 = vpack.c.bf16 %v5622, %v5622
        %v5929 = vpack.c.bf16 %v5643, %v5643
        %v5930 = vpack.c.bf16 %v5664, %v5664
        %v5931 = vpack.c.bf16 %v5685, %v5685
        %v5932 = vpack.c.bf16 %v5706, %v5706
        %v5933 = vpack.c.bf16 %v5727, %v5727
        %v5934 = vpack.c.bf16 %v5748, %v5748
        %v5935 = vpack.c.bf16 %v5769, %v5769
        %v5944 = vunpack.c.l.b16 %v5904
        %v5945 = vunpack.c.l.b16 %v5905
        %v5946 = vunpack.c.l.b16 %v5906
        %v5947 = vunpack.c.l.b16 %v5907
        %v5948 = vunpack.c.l.b16 %v5908
        %v5949 = vunpack.c.l.b16 %v5909
        %v5950 = vunpack.c.l.b16 %v5910
        %v5951 = vunpack.c.l.b16 %v5911
        %vm5952 = vcmask 1041409
        %v5953 = vsel %vm5952, %v5945, %v5944
        %vm5954 = vcmask 1042434
        %v5955 = vsel %vm5954, %v5946, %v5953
        %vm5956 = vcmask 1043459
        %v5957 = vsel %vm5956, %v5947, %v5955
        %vm5958 = vcmask 1044484
        %v5959 = vsel %vm5958, %v5948, %v5957
        %vm5960 = vcmask 1045509
        %v5961 = vsel %vm5960, %v5949, %v5959
        %vm5962 = vcmask 1046534
        %v5963 = vsel %vm5962, %v5950, %v5961
        %vm5964 = vcmask 1047559
        %v5965 = vsel %vm5964, %v5951, %v5963
        %v5966 = vpack.c.b16 %v5965, %v5965
        %v5968 = vsel %vm5097, %v5966, 0
        %v5971 = vsel %vm1286, %v5885, 0
        %5973 = vmatprep.subr.bf16.mxu0 0
        %5974 = vmatpush1.bf16.msra.mxu0 0
        %5975 = vmatprep.subr.bf16.mxu0 0
        %5976 = vmatpush1.bf16.msra.mxu0 0
        %5977 = vmatprep.subr.bf16.mxu0 0
        %5978 = vmatpush1.bf16.msra.mxu0 %v5971
        %5979 = vmatprep.subr.bf16.mxu0 0
        %5980 = vmatpush1.bf16.msra.mxu0 %v5884
        %5981 = vmatprep.subr.bf16.mxu0 0
        %5982 = vmatpush1.bf16.msra.mxu0 %v5883
        %5983 = vmatprep.subr.bf16.mxu0 0
        %5984 = vmatpush1.bf16.msra.mxu0 %v5882
        %5985 = vmatprep.subr.bf16.mxu0 0
        %5986 = vmatpush1.bf16.msra.mxu0 %v5881
        %5987 = vmatprep.subr.bf16.mxu0 0
        %5988 = vmatpush1.bf16.msra.mxu0 %v5880
        %5989 = vmatprep.subr.bf16.mxu0 0
        %5990 = vmatpush2.bf16.msra.mxu0 0
        %5991 = vmatprep.subr.bf16.mxu0 0
        %5992 = vmatpush2.bf16.msra.mxu0 0
        %5993 = vmatprep.subr.bf16.mxu0 0
        %5994 = vmatpush2.bf16.msra.mxu0 0
        %5995 = vmatprep.subr.bf16.mxu0 0
        %5996 = vmatpush2.bf16.msra.mxu0 0
        %5997 = vmatprep.subr.bf16.mxu0 0
        %5998 = vmatpush2.bf16.msra.mxu0 0
        %5999 = vmatprep.subr.bf16.mxu0 0
        %6000 = vmatpush2.bf16.msra.mxu0 0
        %6001 = vmatprep.subr.bf16.mxu0 0
        %6002 = vmatpush2.bf16.msra.mxu0 0
        %6003 = vmatprep.subr.bf16.mxu0 0
        %6004 = vmatpush2.bf16.msra.mxu0 0
        %6005 = vmatprep.mubr.bf16.mxu0 0
        %6006 = vmatmul.mubr.bf16.gmra.mxu0 %v5968
        %v6007 = vpop.f32.mrf.mxu0
        %v6008 = vadd.f32 0.0, %v6007
        %v6009 = vpop.f32.mrf.mxu0
        %v6010 = vpop.f32.mrf.mxu0
        %v6011 = vpop.f32.mrf.mxu0
        %6012 = vdwg.mxu0
        %v6021 = vunpack.c.l.b16 %v5912
        %v6022 = vunpack.c.l.b16 %v5913
        %v6023 = vunpack.c.l.b16 %v5914
        %v6024 = vunpack.c.l.b16 %v5915
        %v6025 = vunpack.c.l.b16 %v5916
        %v6026 = vunpack.c.l.b16 %v5917
        %v6027 = vunpack.c.l.b16 %v5918
        %v6028 = vunpack.c.l.b16 %v5919
        %v6029 = vsel %vm5952, %v6022, %v6021
        %v6030 = vsel %vm5954, %v6023, %v6029
        %v6031 = vsel %vm5956, %v6024, %v6030
        %v6032 = vsel %vm5958, %v6025, %v6031
        %v6033 = vsel %vm5960, %v6026, %v6032
        %v6034 = vsel %vm5962, %v6027, %v6033
        %v6035 = vsel %vm5964, %v6028, %v6034
        %v6036 = vpack.c.b16 %v6035, %v6035
        %v6038 = vsel %vm5097, %v6036, 0
        %v6041 = vsel %vm1286, %v5891, 0
        %6043 = vmatprep.subr.bf16.mxu0 0
        %6044 = vmatpush1.bf16.msra.mxu0 0
        %6045 = vmatprep.subr.bf16.mxu0 0
        %6046 = vmatpush1.bf16.msra.mxu0 0
        %6047 = vmatprep.subr.bf16.mxu0 0
        %6048 = vmatpush1.bf16.msra.mxu0 %v6041
        %6049 = vmatprep.subr.bf16.mxu0 0
        %6050 = vmatpush1.bf16.msra.mxu0 %v5890
        %6051 = vmatprep.subr.bf16.mxu0 0
        %6052 = vmatpush1.bf16.msra.mxu0 %v5889
        %6053 = vmatprep.subr.bf16.mxu0 0
        %6054 = vmatpush1.bf16.msra.mxu0 %v5888
        %6055 = vmatprep.subr.bf16.mxu0 0
        %6056 = vmatpush1.bf16.msra.mxu0 %v5887
        %6057 = vmatprep.subr.bf16.mxu0 0
        %6058 = vmatpush1.bf16.msra.mxu0 %v5886
        %6059 = vmatprep.subr.bf16.mxu0 0
        %6060 = vmatpush2.bf16.msra.mxu0 0
        %6061 = vmatprep.subr.bf16.mxu0 0
        %6062 = vmatpush2.bf16.msra.mxu0 0
        %6063 = vmatprep.subr.bf16.mxu0 0
        %6064 = vmatpush2.bf16.msra.mxu0 0
        %6065 = vmatprep.subr.bf16.mxu0 0
        %6066 = vmatpush2.bf16.msra.mxu0 0
        %6067 = vmatprep.subr.bf16.mxu0 0
        %6068 = vmatpush2.bf16.msra.mxu0 0
        %6069 = vmatprep.subr.bf16.mxu0 0
        %6070 = vmatpush2.bf16.msra.mxu0 0
        %6071 = vmatprep.subr.bf16.mxu0 0
        %6072 = vmatpush2.bf16.msra.mxu0 0
        %6073 = vmatprep.subr.bf16.mxu0 0
        %6074 = vmatpush2.bf16.msra.mxu0 0
        %6075 = vmatprep.mubr.bf16.mxu0 0
        %6076 = vmatmul.mubr.bf16.gmra.mxu0 %v6038
        %v6077 = vpop.f32.mrf.mxu0
        %v6078 = vadd.f32 0.0, %v6077
        %v6079 = vpop.f32.mrf.mxu0
        %v6080 = vpop.f32.mrf.mxu0
        %v6081 = vpop.f32.mrf.mxu0
        %6082 = vdwg.mxu0
        %v6091 = vunpack.c.l.b16 %v5920
        %v6092 = vunpack.c.l.b16 %v5921
        %v6093 = vunpack.c.l.b16 %v5922
        %v6094 = vunpack.c.l.b16 %v5923
        %v6095 = vunpack.c.l.b16 %v5924
        %v6096 = vunpack.c.l.b16 %v5925
        %v6097 = vunpack.c.l.b16 %v5926
        %v6098 = vunpack.c.l.b16 %v5927
        %v6099 = vsel %vm5952, %v6092, %v6091
        %v6100 = vsel %vm5954, %v6093, %v6099
        %v6101 = vsel %vm5956, %v6094, %v6100
        %v6102 = vsel %vm5958, %v6095, %v6101
        %v6103 = vsel %vm5960, %v6096, %v6102
        %v6104 = vsel %vm5962, %v6097, %v6103
        %v6105 = vsel %vm5964, %v6098, %v6104
        %v6106 = vpack.c.b16 %v6105, %v6105
        %v6108 = vsel %vm5097, %v6106, 0
        %v6111 = vsel %vm1286, %v5897, 0
        %6113 = vmatprep.subr.bf16.mxu0 0
        %6114 = vmatpush1.bf16.msra.mxu0 0
        %6115 = vmatprep.subr.bf16.mxu0 0
        %6116 = vmatpush1.bf16.msra.mxu0 0
        %6117 = vmatprep.subr.bf16.mxu0 0
        %6118 = vmatpush1.bf16.msra.mxu0 %v6111
        %6119 = vmatprep.subr.bf16.mxu0 0
        %6120 = vmatpush1.bf16.msra.mxu0 %v5896
        %6121 = vmatprep.subr.bf16.mxu0 0
        %6122 = vmatpush1.bf16.msra.mxu0 %v5895
        %6123 = vmatprep.subr.bf16.mxu0 0
        %6124 = vmatpush1.bf16.msra.mxu0 %v5894
        %6125 = vmatprep.subr.bf16.mxu0 0
        %6126 = vmatpush1.bf16.msra.mxu0 %v5893
        %6127 = vmatprep.subr.bf16.mxu0 0
        %6128 = vmatpush1.bf16.msra.mxu0 %v5892
        %6129 = vmatprep.subr.bf16.mxu0 0
        %6130 = vmatpush2.bf16.msra.mxu0 0
        %6131 = vmatprep.subr.bf16.mxu0 0
        %6132 = vmatpush2.bf16.msra.mxu0 0
        %6133 = vmatprep.subr.bf16.mxu0 0
        %6134 = vmatpush2.bf16.msra.mxu0 0
        %6135 = vmatprep.subr.bf16.mxu0 0
        %6136 = vmatpush2.bf16.msra.mxu0 0
        %6137 = vmatprep.subr.bf16.mxu0 0
        %6138 = vmatpush2.bf16.msra.mxu0 0
        %6139 = vmatprep.subr.bf16.mxu0 0
        %6140 = vmatpush2.bf16.msra.mxu0 0
        %6141 = vmatprep.subr.bf16.mxu0 0
        %6142 = vmatpush2.bf16.msra.mxu0 0
        %6143 = vmatprep.subr.bf16.mxu0 0
        %6144 = vmatpush2.bf16.msra.mxu0 0
        %6145 = vmatprep.mubr.bf16.mxu0 0
        %6146 = vmatmul.mubr.bf16.gmra.mxu0 %v6108
        %v6147 = vpop.f32.mrf.mxu0
        %v6148 = vadd.f32 0.0, %v6147
        %v6149 = vpop.f32.mrf.mxu0
        %v6150 = vpop.f32.mrf.mxu0
        %v6151 = vpop.f32.mrf.mxu0
        %6152 = vdwg.mxu0
        %v6161 = vunpack.c.l.b16 %v5928
        %v6162 = vunpack.c.l.b16 %v5929
        %v6163 = vunpack.c.l.b16 %v5930
        %v6164 = vunpack.c.l.b16 %v5931
        %v6165 = vunpack.c.l.b16 %v5932
        %v6166 = vunpack.c.l.b16 %v5933
        %v6167 = vunpack.c.l.b16 %v5934
        %v6168 = vunpack.c.l.b16 %v5935
        %v6169 = vsel %vm5952, %v6162, %v6161
        %v6170 = vsel %vm5954, %v6163, %v6169
        %v6171 = vsel %vm5956, %v6164, %v6170
        %v6172 = vsel %vm5958, %v6165, %v6171
        %v6173 = vsel %vm5960, %v6166, %v6172
        %v6174 = vsel %vm5962, %v6167, %v6173
        %v6175 = vsel %vm5964, %v6168, %v6174
        %v6176 = vpack.c.b16 %v6175, %v6175
        %v6178 = vsel %vm5097, %v6176, 0
        %v6181 = vsel %vm1286, %v5903, 0
        %6183 = vmatprep.subr.bf16.mxu0 0
        %6184 = vmatpush1.bf16.msra.mxu0 0
        %6185 = vmatprep.subr.bf16.mxu0 0
        %6186 = vmatpush1.bf16.msra.mxu0 0
        %6187 = vmatprep.subr.bf16.mxu0 0
        %6188 = vmatpush1.bf16.msra.mxu0 %v6181
        %6189 = vmatprep.subr.bf16.mxu0 0
        %6190 = vmatpush1.bf16.msra.mxu0 %v5902
        %6191 = vmatprep.subr.bf16.mxu0 0
        %6192 = vmatpush1.bf16.msra.mxu0 %v5901
        %6193 = vmatprep.subr.bf16.mxu0 0
        %6194 = vmatpush1.bf16.msra.mxu0 %v5900
        %6195 = vmatprep.subr.bf16.mxu0 0
        %6196 = vmatpush1.bf16.msra.mxu0 %v5899
        %6197 = vmatprep.subr.bf16.mxu0 0
        %6198 = vmatpush1.bf16.msra.mxu0 %v5898
        %6199 = vmatprep.subr.bf16.mxu0 0
        %6200 = vmatpush2.bf16.msra.mxu0 0
        %6201 = vmatprep.subr.bf16.mxu0 0
        %6202 = vmatpush2.bf16.msra.mxu0 0
        %6203 = vmatprep.subr.bf16.mxu0 0
        %6204 = vmatpush2.bf16.msra.mxu0 0
        %6205 = vmatprep.subr.bf16.mxu0 0
        %6206 = vmatpush2.bf16.msra.mxu0 0
        %6207 = vmatprep.subr.bf16.mxu0 0
        %6208 = vmatpush2.bf16.msra.mxu0 0
        %6209 = vmatprep.subr.bf16.mxu0 0
        %6210 = vmatpush2.bf16.msra.mxu0 0
        %6211 = vmatprep.subr.bf16.mxu0 0
        %6212 = vmatpush2.bf16.msra.mxu0 0
        %6213 = vmatprep.subr.bf16.mxu0 0
        %6214 = vmatpush2.bf16.msra.mxu0 0
        %6215 = vmatprep.mubr.bf16.mxu0 0
        %6216 = vmatmul.mubr.bf16.gmra.mxu0 %v6178
        %v6217 = vpop.f32.mrf.mxu0
        %v6218 = vadd.f32 0.0, %v6217
        %v6219 = vpop.f32.mrf.mxu0
        %v6220 = vpop.f32.mrf.mxu0
        %v6221 = vpop.f32.mrf.mxu0
        %6222 = vdwg.mxu0
        %6224 = vrot.lane.b32.xlu0 %v6078, 8
        %v6225 = vpop.permute.xlu0 %6224
        %6228 = vrot.lane.b32.xlu0 %v6148, 16
        %v6229 = vpop.permute.xlu0 %6228
        %6232 = vrot.lane.b32.xlu0 %v6218, 24
        %v6233 = vpop.permute.xlu0 %6232
        %v6235 = vsel %vm1039, %v6008, %v6225
        %v6236 = vsel %vm1487, %v6235, %v6229
        %v6237 = vsel %vm1489, %v6236, %v6233
        %v6238 = vpack.c.bf16 %v6237, %v6237
        %v6239 = vld [vmem:[%s39] sm:$0xf]
        %v6240 = vld [vmem:[%s39 + $0x4] sm:$0xf]
        %v6241 = vld [vmem:[%s39 + $0x8] sm:$0xf]
        %v6242 = vld [vmem:[%s39 + $0xc] sm:$0xf]
        %v6243 = vld [vmem:[%s41] sm:$0x1]
        %v6245 = vlaneseq
        %v6246 = vshrl.u32 %v6245, 7
        %v6247 = vsub.s32 0, %v6246
        %v6248 = vrot.slane %v6243, %v6247
        %v6254 = vunpack.c.l.b16 %v6239
        %v6255 = vunpack.c.l.b16 %v6240
        %v6256 = vunpack.c.l.b16 %v6241
        %v6257 = vunpack.c.l.b16 %v6242
        %v6258 = vpack.c.b16 %v6255, %v6254
        %v6259 = vpack.c.b16 %v6257, %v6256
        %v6263 = vsel %vm978, %v6238, 0
        %6265 = vmatprep.subr.bf16.mxu0 0
        %6266 = vmatpush1.bf16.msra.mxu0 0
        %6267 = vmatprep.subr.bf16.mxu0 0
        %6268 = vmatpush1.bf16.msra.mxu0 0
        %6269 = vmatprep.subr.bf16.mxu0 0
        %6270 = vmatpush1.bf16.msra.mxu0 0
        %6271 = vmatprep.subr.bf16.mxu0 0
        %6272 = vmatpush1.bf16.msra.mxu0 0
        %6273 = vmatprep.subr.bf16.mxu0 0
        %6274 = vmatpush1.bf16.msra.mxu0 0
        %6275 = vmatprep.subr.bf16.mxu0 0
        %6276 = vmatpush1.bf16.msra.mxu0 0
        %6277 = vmatprep.subr.bf16.mxu0 0
        %6278 = vmatpush1.bf16.msra.mxu0 %v6259
        %6279 = vmatprep.subr.bf16.mxu0 0
        %6280 = vmatpush1.bf16.msra.mxu0 %v6258
        %6281 = vmatprep.subr.bf16.mxu0 0
        %6282 = vmatpush2.bf16.msra.mxu0 0
        %6283 = vmatprep.subr.bf16.mxu0 0
        %6284 = vmatpush2.bf16.msra.mxu0 0
        %6285 = vmatprep.subr.bf16.mxu0 0
        %6286 = vmatpush2.bf16.msra.mxu0 0
        %6287 = vmatprep.subr.bf16.mxu0 0
        %6288 = vmatpush2.bf16.msra.mxu0 0
        %6289 = vmatprep.subr.bf16.mxu0 0
        %6290 = vmatpush2.bf16.msra.mxu0 0
        %6291 = vmatprep.subr.bf16.mxu0 0
        %6292 = vmatpush2.bf16.msra.mxu0 0
        %6293 = vmatprep.subr.bf16.mxu0 0
        %6294 = vmatpush2.bf16.msra.mxu0 0
        %6295 = vmatprep.subr.bf16.mxu0 0
        %6296 = vmatpush2.bf16.msra.mxu0 0
        %6297 = vmatprep.mubr.bf16.mxu0 0
        %6298 = vmatmul.mubr.bf16.gmra.mxu0 %v6263
        %v6299 = vpop.f32.mrf.mxu0
        %v6300 = vadd.f32 %v6248, %v6299
        %v6301 = vpop.f32.mrf.mxu0
        %v6302 = vpop.f32.mrf.mxu0
        %v6303 = vpop.f32.mrf.mxu0
        %6304 = vdwg.mxu0
        %v6305 = vadd.f32 %v1588, %v6300
        %v6306 = vsel %vm978, %v6305, 0.0
        %6307 = vadd.xlane.f32.xlu0 %v6306
        %v6308 = vpop.xlane.xlu0 %6307
        %v6309 = vmul.f32 %v6308, %v1562
        %v6310 = vsub.f32 %v6305, %v6309
        %v6311 = vmul.f32 %v6310, %v6310
        %v6312 = vsel %vm978, %v6311, 0.0
        %6313 = vadd.xlane.f32.xlu0 %v6312
        %v6314 = vpop.xlane.xlu0 %6313
        %v6315 = vmul.f32 %v6314, %v1562
        %v6316 = vadd.f32 %v6315, 1e-05
        %v6317 = vrsqrt.pop %v6316
        %v6318 = vmul.f32 %v6310, %v6317
        %v6319 = vld [vmem:[%s43] sm:$0x1]
        %v6321 = vlaneseq
        %v6322 = vshrl.u32 %v6321, 7
        %v6323 = vsub.s32 0, %v6322
        %v6324 = vrot.slane %v6319, %v6323
        %v6326 = vmul.f32 %v6318, %v6324
        %v6327 = vld [vmem:[%s45] sm:$0x1]
        %v6329 = vlaneseq
        %v6330 = vshrl.u32 %v6329, 7
        %v6331 = vsub.s32 0, %v6330
        %v6332 = vrot.slane %v6327, %v6331
        %v6334 = vadd.f32 %v6326, %v6332
        %v6335 = vpack.c.bf16 %v6334, %v6334
        %v6336 = vld [vmem:[%s47] sm:$0xf]
        %v6337 = vld [vmem:[%s47 + $0x4] sm:$0xf]
        %v6338 = vld [vmem:[%s47 + $0x8] sm:$0xf]
        %v6339 = vld [vmem:[%s47 + $0xc] sm:$0xf]
        %v6340 = vld [vmem:[%s49] sm:$0x1]
        %v6342 = vlaneseq
        %v6343 = vshrl.u32 %v6342, 7
        %v6344 = vsub.s32 0, %v6343
        %v6345 = vrot.slane %v6340, %v6344
        %v6351 = vunpack.c.l.b16 %v6336
        %v6352 = vunpack.c.l.b16 %v6337
        %v6353 = vunpack.c.l.b16 %v6338
        %v6354 = vunpack.c.l.b16 %v6339
        %v6355 = vpack.c.b16 %v6352, %v6351
        %v6356 = vpack.c.b16 %v6354, %v6353
        %v6360 = vsel %vm978, %v6335, 0
        %6362 = vmatprep.subr.bf16.mxu0 0
        %6363 = vmatpush1.bf16.msra.mxu0 0
        %6364 = vmatprep.subr.bf16.mxu0 0
        %6365 = vmatpush1.bf16.msra.mxu0 0
        %6366 = vmatprep.subr.bf16.mxu0 0
        %6367 = vmatpush1.bf16.msra.mxu0 0
        %6368 = vmatprep.subr.bf16.mxu0 0
        %6369 = vmatpush1.bf16.msra.mxu0 0
        %6370 = vmatprep.subr.bf16.mxu0 0
        %6371 = vmatpush1.bf16.msra.mxu0 0
        %6372 = vmatprep.subr.bf16.mxu0 0
        %6373 = vmatpush1.bf16.msra.mxu0 0
        %6374 = vmatprep.subr.bf16.mxu0 0
        %6375 = vmatpush1.bf16.msra.mxu0 %v6356
        %6376 = vmatprep.subr.bf16.mxu0 0
        %6377 = vmatpush1.bf16.msra.mxu0 %v6355
        %6378 = vmatprep.subr.bf16.mxu0 0
        %6379 = vmatpush2.bf16.msra.mxu0 0
        %6380 = vmatprep.subr.bf16.mxu0 0
        %6381 = vmatpush2.bf16.msra.mxu0 0
        %6382 = vmatprep.subr.bf16.mxu0 0
        %6383 = vmatpush2.bf16.msra.mxu0 0
        %6384 = vmatprep.subr.bf16.mxu0 0
        %6385 = vmatpush2.bf16.msra.mxu0 0
        %6386 = vmatprep.subr.bf16.mxu0 0
        %6387 = vmatpush2.bf16.msra.mxu0 0
        %6388 = vmatprep.subr.bf16.mxu0 0
        %6389 = vmatpush2.bf16.msra.mxu0 0
        %6390 = vmatprep.subr.bf16.mxu0 0
        %6391 = vmatpush2.bf16.msra.mxu0 0
        %6392 = vmatprep.subr.bf16.mxu0 0
        %6393 = vmatpush2.bf16.msra.mxu0 0
        %6394 = vmatprep.mubr.bf16.mxu0 0
        %6395 = vmatmul.mubr.bf16.gmra.mxu0 %v6360
        %v6396 = vpop.f32.mrf.mxu0
        %v6397 = vadd.f32 %v6345, %v6396
        %v6398 = vpop.f32.mrf.mxu0
        %v6399 = vpop.f32.mrf.mxu0
        %v6400 = vpop.f32.mrf.mxu0
        %6401 = vdwg.mxu0
        %v6402 = vmax.f32 %v6397, 0.0
        %v6403 = vpack.c.bf16 %v6402, %v6402
        %v6404 = vld [vmem:[%s51] sm:$0xf]
        %v6405 = vld [vmem:[%s51 + $0x4] sm:$0xf]
        %v6406 = vld [vmem:[%s51 + $0x8] sm:$0xf]
        %v6407 = vld [vmem:[%s51 + $0xc] sm:$0xf]
        %v6408 = vld [vmem:[%s51 + $0x10] sm:$0xf]
        %v6409 = vld [vmem:[%s51 + $0x14] sm:$0xf]
        %v6410 = vld [vmem:[%s51 + $0x18] sm:$0xf]
        %v6411 = vld [vmem:[%s51 + $0x1c] sm:$0xf]
        %v6412 = vld [vmem:[%s53] sm:$0x1]
        %v6414 = vlaneseq
        %v6415 = vshrl.u32 %v6414, 7
        %v6416 = vsub.s32 0, %v6415
        %v6417 = vrot.slane %v6412, %v6416
        %v6427 = vunpack.c.l.b16 %v6404
        %v6428 = vunpack.c.l.b16 %v6405
        %v6429 = vunpack.c.l.b16 %v6406
        %v6430 = vunpack.c.l.b16 %v6407
        %v6431 = vunpack.c.l.b16 %v6408
        %v6432 = vunpack.c.l.b16 %v6409
        %v6433 = vunpack.c.l.b16 %v6410
        %v6434 = vunpack.c.l.b16 %v6411
        %v6435 = vpack.c.b16 %v6428, %v6427
        %v6436 = vpack.c.b16 %v6430, %v6429
        %v6437 = vpack.c.b16 %v6432, %v6431
        %v6438 = vpack.c.b16 %v6434, %v6433
        %vm6443 = vcmask 523264
        %v6445 = vsel %vm6443, %v6403, 0
        %6447 = vmatprep.subr.bf16.mxu0 0
        %6448 = vmatpush1.bf16.msra.mxu0 0
        %6449 = vmatprep.subr.bf16.mxu0 0
        %6450 = vmatpush1.bf16.msra.mxu0 0
        %6451 = vmatprep.subr.bf16.mxu0 0
        %6452 = vmatpush1.bf16.msra.mxu0 0
        %6453 = vmatprep.subr.bf16.mxu0 0
        %6454 = vmatpush1.bf16.msra.mxu0 0
        %6455 = vmatprep.subr.bf16.mxu0 0
        %6456 = vmatpush1.bf16.msra.mxu0 %v6438
        %6457 = vmatprep.subr.bf16.mxu0 0
        %6458 = vmatpush1.bf16.msra.mxu0 %v6437
        %6459 = vmatprep.subr.bf16.mxu0 0
        %6460 = vmatpush1.bf16.msra.mxu0 %v6436
        %6461 = vmatprep.subr.bf16.mxu0 0
        %6462 = vmatpush1.bf16.msra.mxu0 %v6435
        %6463 = vmatprep.subr.bf16.mxu0 0
        %6464 = vmatpush2.bf16.msra.mxu0 0
        %6465 = vmatprep.subr.bf16.mxu0 0
        %6466 = vmatpush2.bf16.msra.mxu0 0
        %6467 = vmatprep.subr.bf16.mxu0 0
        %6468 = vmatpush2.bf16.msra.mxu0 0
        %6469 = vmatprep.subr.bf16.mxu0 0
        %6470 = vmatpush2.bf16.msra.mxu0 0
        %6471 = vmatprep.subr.bf16.mxu0 0
        %6472 = vmatpush2.bf16.msra.mxu0 0
        %6473 = vmatprep.subr.bf16.mxu0 0
        %6474 = vmatpush2.bf16.msra.mxu0 0
        %6475 = vmatprep.subr.bf16.mxu0 0
        %6476 = vmatpush2.bf16.msra.mxu0 0
        %6477 = vmatprep.subr.bf16.mxu0 0
        %6478 = vmatpush2.bf16.msra.mxu0 0
        %6479 = vmatprep.mubr.bf16.mxu0 0
        %6480 = vmatmul.mubr.bf16.gmra.mxu0 %v6445
        %v6481 = vpop.f32.mrf.mxu0
        %v6482 = vadd.f32 %v6417, %v6481
        %v6483 = vpop.f32.mrf.mxu0
        %v6484 = vpop.f32.mrf.mxu0
        %v6485 = vpop.f32.mrf.mxu0
        %6486 = vdwg.mxu0
        %v6487 = vadd.f32 %v6334, %v6482
        %v6488 = vsel %vm978, %v6487, 0.0
        %6489 = vadd.xlane.f32.xlu0 %v6488
        %v6490 = vpop.xlane.xlu0 %6489
        %v6491 = vmul.f32 %v6490, %v1562
        %v6492 = vsub.f32 %v6487, %v6491
        %v6493 = vmul.f32 %v6492, %v6492
        %v6494 = vsel %vm978, %v6493, 0.0
        %6495 = vadd.xlane.f32.xlu0 %v6494
        %v6496 = vpop.xlane.xlu0 %6495
        %v6497 = vmul.f32 %v6496, %v1562
        %v6498 = vadd.f32 %v6497, 1e-05
        %v6499 = vrsqrt.pop %v6498
        %v6500 = vmul.f32 %v6492, %v6499
        %v6501 = vld [vmem:[%s55] sm:$0x1]
        %v6503 = vlaneseq
        %v6504 = vshrl.u32 %v6503, 7
        %v6505 = vsub.s32 0, %v6504
        %v6506 = vrot.slane %v6501, %v6505
        %v6508 = vmul.f32 %v6500, %v6506
        %v6509 = vld [vmem:[%s57] sm:$0x1]
        %v6511 = vlaneseq
        %v6512 = vshrl.u32 %v6511, 7
        %v6513 = vsub.s32 0, %v6512
        %v6514 = vrot.slane %v6509, %v6513
        %v6516 = vadd.f32 %v6508, %v6514
        %6517 = vst.msk [vmem:[%s934] sm:$0xff] %vm978, %v6516
        %s6518 = sand.u32 %s710, 1
        %s6519 = scalar_lea.sflag [#allocation3], %s6518
        %s6520 = sand.u32 %s710, 1
        %s6521 = smul.addr %s6520, 8
        %s6522 = scalar_lea.vmem [#allocation2], %s6521
        // Predicated region
        $region137: #{decoder_layer_forward.1} parent=135 // pred_check
          %p6523 = pneg %p720
        $region138: #{decoder_layer_forward.1} parent=135 // pred_check_branch
          %6525 = sbr.rel (%p6523) target = $region140
        $region139: #{decoder_layer_forward.1} parent=135 // pred_region
          %s6527 = ssub.s32 128, 128
          %6528 = vsyncadd %s6519, %s6527
          %s6529 = smul.addr %s73, 128
          %s6530 = scalar_lea.hbm %s59, %s6529
          %s6532 = sshll.u32 %s6522, 4
          %s6533 = int_to_ptr.vmem [resolvable:$true] %s6532
          %6535 = dma.vmem_to_hbm [thread:$0]  %s6533, 128, %s6530, %s6519
        $region140: #{decoder_layer_forward.1} parent=135 // pred_fallthru
          _
      $region136: #{decoder_layer_forward.1} parent=5 // pred_fallthru
        _
      %p6536 = scmp.le.s32.totalorder 2, %s68
      // Predicated region
      $region141: #{decoder_layer_forward.1} parent=5 // pred_check
        %p6537 = pneg %p6536
      $region142: #{decoder_layer_forward.1} parent=5 // pred_check_branch
        %6539 = sbr.rel (%p6537) target = $region144
      $region143: #{decoder_layer_forward.1} parent=5 // pred_region
        %s6540 = ssub.s32 %s68, 2
        // Predicated region
        $region145: #{decoder_layer_forward.1} parent=143 // pred_check
          %p6541 = pneg %p726
        $region146: #{decoder_layer_forward.1} parent=143 // pred_check_branch
          %6543 = sbr.rel (%p6541) target = $region148
        $region147: #{decoder_layer_forward.1} parent=143 // pred_region
          %s6544 = sand.u32 %s711, 1
          %s6545 = scalar_lea.sflag [#allocation3], %s6544
          %s6546 = sand.u32 %s711, 1
          %s6547 = smul.addr %s6546, 8
          %s6548 = scalar_lea.vmem [#allocation2], %s6547
          %6549 = dma.done %s6545, 128
        $region148: #{decoder_layer_forward.1} parent=143 // pred_fallthru
          _
      $region144: #{decoder_layer_forward.1} parent=5 // pred_fallthru
        _
    $region6: #{decoder_layer_forward.1} parent=1 // loop_footer
      %s72 = sadd.s32 1, %s68
    $region7: #{decoder_layer_forward.1} parent=1 // loop_footer_branch
      %67 = sbr.rel target = $region3
    $region8: #{decoder_layer_forward.1} parent=1 // loop_exit
      _
    %6550 = vsyncpa [#allocation3], 1
    %s6551 = scalar_lea.sflag [#allocation3], 1
    %6552 = vsyncpa %s6551, 1

</llo_original>
